<compile_context>
chip_gen: v5e
topology: v5e:2x2
jax: 0.10.0
libtpu: 0.0.40
codegen_flags: <defaults>
</compile_context>

<pallas_src>
import functools
import math
from typing import NamedTuple

import jax
import jax.numpy as jnp
from jax.experimental import pallas as pl
from jax.experimental.pallas import tpu as pltpu


# ----------------------------------------------------------------------------
# Static per-layer description (trace-time only).
# ----------------------------------------------------------------------------
class Layer(NamedTuple):
    K: int          # conv kernel size (taps along L)
    pad_left: int   # zero padding on the left; right pad = K - 1 - pad_left
    leaky: bool     # apply LeakyReLU(0.01) to the input before the conv
    residual: bool  # add the (un-activated) input back to the output (AddSkipConn)
    cin: int
    cout: int


def _res5(w):
    return Layer(5, 2, True, True, w, w)


# ----------------------------------------------------------------------------
# In-kernel conv layer: activations are (C, L) values (C on sublanes, L on lanes).
# ----------------------------------------------------------------------------
def _shifted_tap(x, s, lane_idx):
    """t[:, l] = x[:, l + s] with zeros outside [0, L). Lane shift via the XLU."""
    if s == 0:
        return x
    _, L = x.shape
    # jnp.roll semantics: rolled[:, l] = x[:, (l - shift) mod L]; shift = -s.
    rolled = pltpu.roll(x, shift=(-s) % L, axis=1)
    mask = (lane_idx >= -s) & (lane_idx < L - s)        # drop wrapped lanes -> zero pad
    return jnp.where(mask, rolled, 0.0)


def _conv_layer(x, w3, b, spec, lane_idx):
    """One Conv1d (+optional leading LeakyReLU, +optional residual add) on a (C, L) tile."""
    C, L = x.shape
    assert C == spec.cin, (C, spec)
    if spec.residual:
        assert spec.cin == spec.cout, spec

    xa = jnp.where(x >= 0.0, x, 0.01 * x) if spec.leaky else x   # LeakyReLU(0.01)

    acc = None
    for k in range(spec.K):
        tap = _shifted_tap(xa, k - spec.pad_left, lane_idx)       # (Cin, L)
        wk = w3[k]                                                # (Cout, Cin), static slice
        if spec.cin == 1:
            d = wk * tap                                          # (Cout,1)*(1,L) VPU bcast
        else:
            d = jnp.dot(wk, tap, preferred_element_type=jnp.float32)   # MXU
        acc = d if acc is None else acc + d
    out = acc + b                                                 # bias: (Cout,1) bcast add
    if spec.residual:
        out = out + x                                             # raw (un-activated) skip
    return out


def _chain_kernel(*refs, seg1, seg_skip, seg2, nin):
    """refs = nin inputs, 2*(n_layers) weights (w3, b per layer), 1 output."""
    n_layers = len(seg1) + len(seg_skip) + len(seg2)
    in_refs = refs[:nin]
    w_refs = refs[nin:nin + 2 * n_layers]
    out_ref = refs[nin + 2 * n_layers]

    L = in_refs[0].shape[-1]
    lane_idx = jax.lax.broadcasted_iota(jnp.int32, (1, L), 1)

    widx = [0]

    def next_params():
        i = widx[0]
        widx[0] += 1
        return w_refs[2 * i][...], w_refs[2 * i + 1][...]

    # segment 1: main chain on input 0
    x = in_refs[0][0].astype(jnp.float32)
    for spec in seg1:
        w3, b = next_params()
        x = _conv_layer(x, w3, b, spec, lane_idx)

    # optional skip branch on input 1 + in-kernel ConcatSkipConn ([skip, processed])
    if nin == 2:
        s = in_refs[1][0].astype(jnp.float32)
        for spec in seg_skip:
            w3, b = next_params()
            s = _conv_layer(s, w3, b, spec, lane_idx)
        x = jnp.concatenate([s, x], axis=0)

    # segment 2: merge conv + tail
    for spec in seg2:
        w3, b = next_params()
        x = _conv_layer(x, w3, b, spec, lane_idx)

    out_ref[0] = x.astype(out_ref.dtype)


def _run_chain(inputs, seg1, seg_skip=(), seg2=()):
    """ONE pallas_call running: seg1(in0) ; [concat(seg_skip(in1), .)] ; seg2.

    inputs : 1 or 2 arrays of shape (B, Ci, L), f32
    seg*   : sequences of (Layer, {"w": (K, cout, cin), "b": (cout, 1)})
    returns: (B, cout_last, L) f32
    """
    seg1, seg_skip, seg2 = tuple(seg1), tuple(seg_skip), tuple(seg2)
    nin = len(inputs)
    assert nin in (1, 2)
    if nin == 1:
        assert not seg_skip and not seg2

    B, _, L = inputs[0].shape
    for a in inputs:
        assert a.shape[0] == B and a.shape[2] == L, a.shape

    # static channel chaining checks
    c = inputs[0].shape[1]
    for lay, _ in seg1:
        assert lay.cin == c, (lay, c)
        c = lay.cout
    if nin == 2:
        cs = inputs[1].shape[1]
        for lay, _ in seg_skip:
            assert lay.cin == cs, (lay, cs)
            cs = lay.cout
        c = cs + c
    for lay, _ in seg2:
        assert lay.cin == c, (lay, c)
        c = lay.cout
    cout = c

    all_layers = seg1 + seg_skip + seg2

    in_specs = []
    for a in inputs:
        in_specs.append(pl.BlockSpec((1, a.shape[1], L), lambda b: (b, 0, 0)))

    weight_args = []
    for lay, p in all_layers:
        w3, bias = p["w"], p["b"]
        assert w3.shape == (lay.K, lay.cout, lay.cin), (w3.shape, lay)
        assert bias.shape == (lay.cout, 1), (bias.shape, lay)
        weight_args += [w3, bias]
        in_specs.append(pl.BlockSpec(w3.shape, lambda b: (0, 0, 0)))
        in_specs.append(pl.BlockSpec(bias.shape, lambda b: (0, 0)))

    out_shape = jax.ShapeDtypeStruct((B, cout, L), jnp.float32)
    out_spec = pl.BlockSpec((1, cout, L), lambda b: (b, 0, 0))

    flops = 2 * B * L * sum(lay.K * lay.cin * lay.cout for lay, _ in all_layers)
    bytes_accessed = 4 * (
        sum(math.prod(a.shape) for a in inputs)
        + sum(math.prod(w.shape) for w in weight_args)
        + B * cout * L)

    kernel = functools.partial(
        _chain_kernel,
        seg1=tuple(lay for lay, _ in seg1),
        seg_skip=tuple(lay for lay, _ in seg_skip),
        seg2=tuple(lay for lay, _ in seg2),
        nin=nin)

    return pl.pallas_call(
        kernel,
        grid=(B,),
        out_shape=out_shape,
        in_specs=in_specs,
        out_specs=out_spec,
        compiler_params=pltpu.CompilerParams(
            dimension_semantics=("parallel",),          # batch shards across TCs (v7x)
            vmem_limit_bytes=48 * 1024 * 1024,          # fits v7x 64 MiB/TC; raise on v6e
        ),
        cost_estimate=pl.CostEstimate(
            flops=flops, transcendentals=0, bytes_accessed=bytes_accessed),
    )(*inputs, *weight_args)


# ----------------------------------------------------------------------------
# Deterministic parameter init (PyTorch-like uniform bounds; synthetic weights).
# ----------------------------------------------------------------------------
def _init_conv(key, layer):
    kw, kb = jax.random.split(key)
    bound = 1.0 / math.sqrt(layer.cin * layer.K)
    w = jax.random.uniform(kw, (layer.cout, layer.cin, layer.K), jnp.float32, -bound, bound)
    b = jax.random.uniform(kb, (layer.cout,), jnp.float32, -bound, bound)
    # kernel layout: w3[k, co, ci] = w_torch[co, ci, k]
    return {"w": jnp.transpose(w, (2, 0, 1)), "b": b[:, None]}


def _init_level(key, widths, depth, scale, lvl):
    w = widths[lvl]
    if lvl == len(widths) - 1:
        keys = jax.random.split(key, depth)
        return {"block": [_init_conv(k, _res5(w)) for k in keys]}
    iw = widths[lvl + 1]
    k_pre, k_down, k_inner, k_up, k_post, k_merge = jax.random.split(key, 6)
    return {
        "pre": [_init_conv(k, _res5(w)) for k in jax.random.split(k_pre, depth)],
        "down": _init_conv(k_down, Layer(scale, 0, False, False, w, iw)),
        "inner": _init_level(k_inner, widths, depth, scale, lvl + 1),
        "up": _init_conv(k_up, Layer(1, 0, False, False, iw, w)),
        "post": [_init_conv(k, _res5(w)) for k in jax.random.split(k_post, depth)],
        "merge": _init_conv(k_merge, Layer(1, 0, False, False, 2 * w, w)),
    }


def init_multiscale_resnet(key, widths, depth, in_width, out_width, scale):
    k_in, k_lvl, k_out = jax.random.split(key, 3)
    return {
        "in": _init_conv(k_in, Layer(5, 2, False, False, in_width, widths[0])),
        "levels": _init_level(k_lvl, widths, depth, scale, 0),
        "out": _init_conv(k_out, Layer(5, 2, False, False, widths[0], out_width)),
    }


# ----------------------------------------------------------------------------
# Forward pass (mirrors the recursive nn.Sequential construction).
# ----------------------------------------------------------------------------
def _apply_level(lp, x, widths, depth, scale, lvl, head, tail):
    w = widths[lvl]
    if lvl == len(widths) - 1:                           # deepest level: one fused chain
        block = [(_res5(w), p) for p in lp["block"]]
        return _run_chain([x], list(head) + block + list(tail))

    iw = widths[lvl + 1]
    _, _, L = x.shape
    assert L % scale == 0, (L, scale)

    pre = [(_res5(w), p) for p in lp["pre"]]
    down = (Layer(scale, 0, False, False, w, iw), lp["down"])

    # chain A: [in_conv] + pre residual block + dense down-conv, one pallas_call
    fine = _run_chain([x], list(head) + pre + [down])
    # TODO(synk): fuse this stride-`scale` subsample and the nearest upsample below into
    #             the adjacent kernels (needs lane-strided VMEM access / halo-tiled L grid).
    x_dn = fine[:, :, ::scale]

    # inner level; its fused chain also applies this level's 1x1 up-conv (commuted before
    # the nearest upsample, which is pointwise along L)
    up = (Layer(1, 0, False, False, iw, w), lp["up"])
    u = _apply_level(lp["inner"], x_dn, widths, depth, scale, lvl + 1, head=(), tail=(up,))
    y = jnp.repeat(u, scale, axis=2)                     # nearest-neighbour upsample

    # fused chain B+C: post residual block on y, skip = head(x) recomputed in-kernel
    # (never stored), in-kernel channel concat [skip, post], 1x1 merge conv, level tail.
    post = [(_res5(w), p) for p in lp["post"]]
    merge = (Layer(1, 0, False, False, 2 * w, w), lp["merge"])
    return _run_chain([y, x], post, seg_skip=list(head), seg2=[merge] + list(tail))


@functools.partial(jax.jit, static_argnames=("widths", "depth", "scale"))
def multiscale_resnet_forward(params, x, *, widths, depth, scale):
    """x: (B, in_width, L) in the PyTorch NCL layout; returns (B, out_width, L)."""
    w0 = widths[0]
    in_width = x.shape[1]
    out_width = params["out"]["w"].shape[1]
    head = ((Layer(5, 2, False, False, in_width, w0), params["in"]),)
    tail = ((Layer(5, 2, False, False, w0, out_width), params["out"]),)
    return _apply_level(params["levels"], x, widths, depth, scale, 0, head, tail)


# ----------------------------------------------------------------------------
# Pure-jnp reference of the original PyTorch graph (exact f32), for the self-check.
# ----------------------------------------------------------------------------
def _ref_conv1d(x, p, pad, stride=1):
    w3, b = p["w"], p["b"]                               # (K, cout, cin), (cout, 1)
    K, cout, cin = w3.shape
    B, C, L = x.shape
    assert C == cin
    xp = jnp.pad(x, ((0, 0), (0, 0), (pad, pad)))
    lout = (L + 2 * pad - K) // stride + 1
    out = jnp.zeros((B, cout, lout), jnp.float32) + b[None, :, :]
    for k in range(K):
        xs = xp[:, :, k:k + 1 + stride * (lout - 1):stride]        # (B, cin, lout)
        out = out + jnp.einsum("oc,bcl->bol", w3[k], xs)
    return out


def _ref_block(x, plist):
    for p in plist:
        a = jnp.where(x >= 0, x, 0.01 * x)
        x = x + _ref_conv1d(a, p, 2)
    return x


def _ref_level(lp, x, widths, depth, scale, lvl):
    if lvl == len(widths) - 1:
        return _ref_block(x, lp["block"])
    a = _ref_block(x, lp["pre"])
    d = _ref_conv1d(a, lp["down"], 0, stride=scale)
    c = _ref_level(lp["inner"], d, widths, depth, scale, lvl + 1)
    u = jnp.repeat(c, scale, axis=2)
    u = _ref_conv1d(u, lp["up"], 0)
    e = _ref_block(u, lp["post"])
    f = jnp.concatenate([x, e], axis=1)
    return _ref_conv1d(f, lp["merge"], 0)


def _ref_forward(params, x, widths, depth, scale):
    h = _ref_conv1d(x, params["in"], 2)
    h = _ref_level(params["levels"], h, widths, depth, scale, 0)
    return _ref_conv1d(h, params["out"], 2)


# ----------------------------------------------------------------------------
if __name__ == "__main__":
    # MultiScaleResnet(block_widths=(4, 8), block_depth=2, in_width=1, out_width=1,
    #                  scale_factor=4, mode='waveunet_k5', norm_type='id')
    # L chosen as a multiple of 128 so every level's lane axis is tile-aligned.
    B, in_width, out_width, L = 2, 1, 1, 512
    widths, depth, scale = (4, 8), 2, 4

    key = jax.random.PRNGKey(0)
    k_params, k_x = jax.random.split(key)
    params = init_multiscale_resnet(k_params, widths, depth, in_width, out_width, scale)
    x = jax.random.normal(k_x, (B, in_width, L), jnp.float32)

    out = multiscale_resnet_forward(params, x, widths=widths, depth=depth, scale=scale)
    out = jax.block_until_ready(out)
    assert out.shape == (B, out_width, L), out.shape

    ref = _ref_forward(params, x, widths, depth, scale)
    err = float(jnp.max(jnp.abs(out - ref)))
    assert err < 1e-3, f"mismatch vs reference: max abs err {err}"

    print("KERNEL_OK")
</pallas_src>

<mosaic_0001>
module attributes {stable_mosaic.version = 11 : i64} {
  func.func @_chain_kernel(%arg0: i32, %arg1: memref<1x1x512xf32, #tpu.memory_space<vmem>>, %arg2: memref<5x4x1xf32, #tpu.memory_space<vmem>>, %arg3: memref<4x1xf32, #tpu.memory_space<vmem>>, %arg4: memref<5x4x4xf32, #tpu.memory_space<vmem>>, %arg5: memref<4x1xf32, #tpu.memory_space<vmem>>, %arg6: memref<5x4x4xf32, #tpu.memory_space<vmem>>, %arg7: memref<4x1xf32, #tpu.memory_space<vmem>>, %arg8: memref<4x8x4xf32, #tpu.memory_space<vmem>>, %arg9: memref<8x1xf32, #tpu.memory_space<vmem>>, %arg10: memref<1x8x512xf32, #tpu.memory_space<vmem>>) attributes {dimension_semantics = [#tpu.dimension_semantics<parallel>], iteration_bounds = array<i64: 2>, scalar_prefetch = 0 : i64, scratch_operands = 0 : i64, tpu.core_type = #tpu.core_type<tc>, window_params = [{transform_indices = @transform_0, window_bounds = array<i64: 1, 1, 512>}, {pipeline_mode = #tpu.pipeline_mode<synchronous>, transform_indices = @transform_1, window_bounds = array<i64: 5, 4, 1>}, {pipeline_mode = #tpu.pipeline_mode<synchronous>, transform_indices = @transform_2, window_bounds = array<i64: 4, 1>}, {pipeline_mode = #tpu.pipeline_mode<synchronous>, transform_indices = @transform_3, window_bounds = array<i64: 5, 4, 4>}, {pipeline_mode = #tpu.pipeline_mode<synchronous>, transform_indices = @transform_4, window_bounds = array<i64: 4, 1>}, {pipeline_mode = #tpu.pipeline_mode<synchronous>, transform_indices = @transform_5, window_bounds = array<i64: 5, 4, 4>}, {pipeline_mode = #tpu.pipeline_mode<synchronous>, transform_indices = @transform_6, window_bounds = array<i64: 4, 1>}, {pipeline_mode = #tpu.pipeline_mode<synchronous>, transform_indices = @transform_7, window_bounds = array<i64: 4, 8, 4>}, {pipeline_mode = #tpu.pipeline_mode<synchronous>, transform_indices = @transform_8, window_bounds = array<i64: 8, 1>}, {transform_indices = @transform_9, window_bounds = array<i64: 1, 8, 512>}]} {
    %0 = tpu.iota {dimensions = array<i32: 1>} : vector<1x512xi32>
    %c0 = arith.constant 0 : index
    %c0_0 = arith.constant 0 : index
    %c0_1 = arith.constant 0 : index
    %1 = vector.load %arg1[%c0, %c0_0, %c0_1] : memref<1x1x512xf32, #tpu.memory_space<vmem>>, vector<1x1x512xf32>
    %2 = vector.shape_cast %1 : vector<1x1x512xf32> to vector<1x512xf32>
    %c0_2 = arith.constant 0 : index
    %c0_3 = arith.constant 0 : index
    %c0_4 = arith.constant 0 : index
    %3 = vector.load %arg2[%c0_2, %c0_3, %c0_4] : memref<5x4x1xf32, #tpu.memory_space<vmem>>, vector<5x4x1xf32>
    %c0_5 = arith.constant 0 : index
    %c0_6 = arith.constant 0 : index
    %4 = vector.load %arg3[%c0_5, %c0_6] : memref<4x1xf32, #tpu.memory_space<vmem>>, vector<4x1xf32>
    %c2_i32 = arith.constant 2 : i32
    %5 = tpu.dynamic_rotate %2 by %c2_i32 dim 1 : vector<1x512xf32>, i32 -> vector<1x512xf32>
    %c2_i32_7 = arith.constant 2 : i32
    %6 = vector.broadcast %c2_i32_7 : i32 to vector<1x512xi32>
    %7 = arith.cmpi sge, %0, %6 : vector<1x512xi32>
    %c514_i32 = arith.constant 514 : i32
    %8 = vector.broadcast %c514_i32 : i32 to vector<1x512xi32>
    %9 = arith.cmpi slt, %0, %8 : vector<1x512xi32>
    %10 = arith.andi %7, %9 : vector<1x512xi1>
    %cst = arith.constant 0.000000e+00 : f32
    %11 = vector.broadcast %cst : f32 to vector<1x512xf32>
    %12 = arith.select %10, %5, %11 : vector<1x512xi1>, vector<1x512xf32>
    %13 = vector.extract_strided_slice %3 {offsets = [0, 0, 0], sizes = [1, 4, 1], strides = [1, 1, 1]} : vector<5x4x1xf32> to vector<1x4x1xf32>
    %14 = vector.shape_cast %13 : vector<1x4x1xf32> to vector<4x1xf32>
    %15 = vector.broadcast %14 : vector<4x1xf32> to vector<4x512xf32>
    %16 = vector.broadcast %12 : vector<1x512xf32> to vector<4x512xf32>
    %17 = arith.mulf %15, %16 : vector<4x512xf32>
    %c1_i32 = arith.constant 1 : i32
    %18 = tpu.dynamic_rotate %2 by %c1_i32 dim 1 : vector<1x512xf32>, i32 -> vector<1x512xf32>
    %c1_i32_8 = arith.constant 1 : i32
    %19 = vector.broadcast %c1_i32_8 : i32 to vector<1x512xi32>
    %20 = arith.cmpi sge, %0, %19 : vector<1x512xi32>
    %c513_i32 = arith.constant 513 : i32
    %21 = vector.broadcast %c513_i32 : i32 to vector<1x512xi32>
    %22 = arith.cmpi slt, %0, %21 : vector<1x512xi32>
    %23 = arith.andi %20, %22 : vector<1x512xi1>
    %cst_9 = arith.constant 0.000000e+00 : f32
    %24 = vector.broadcast %cst_9 : f32 to vector<1x512xf32>
    %25 = arith.select %23, %18, %24 : vector<1x512xi1>, vector<1x512xf32>
    %26 = vector.extract_strided_slice %3 {offsets = [1, 0, 0], sizes = [1, 4, 1], strides = [1, 1, 1]} : vector<5x4x1xf32> to vector<1x4x1xf32>
    %27 = vector.shape_cast %26 : vector<1x4x1xf32> to vector<4x1xf32>
    %28 = vector.broadcast %27 : vector<4x1xf32> to vector<4x512xf32>
    %29 = vector.broadcast %25 : vector<1x512xf32> to vector<4x512xf32>
    %30 = arith.mulf %28, %29 : vector<4x512xf32>
    %31 = arith.addf %17, %30 : vector<4x512xf32>
    %32 = vector.extract_strided_slice %3 {offsets = [2, 0, 0], sizes = [1, 4, 1], strides = [1, 1, 1]} : vector<5x4x1xf32> to vector<1x4x1xf32>
    %33 = vector.shape_cast %32 : vector<1x4x1xf32> to vector<4x1xf32>
    %34 = vector.broadcast %33 : vector<4x1xf32> to vector<4x512xf32>
    %35 = vector.broadcast %2 : vector<1x512xf32> to vector<4x512xf32>
    %36 = arith.mulf %34, %35 : vector<4x512xf32>
    %37 = arith.addf %31, %36 : vector<4x512xf32>
    %c511_i32 = arith.constant 511 : i32
    %38 = tpu.dynamic_rotate %2 by %c511_i32 dim 1 : vector<1x512xf32>, i32 -> vector<1x512xf32>
    %c-1_i32 = arith.constant -1 : i32
    %39 = vector.broadcast %c-1_i32 : i32 to vector<1x512xi32>
    %40 = arith.cmpi sge, %0, %39 : vector<1x512xi32>
    %c511_i32_10 = arith.constant 511 : i32
    %41 = vector.broadcast %c511_i32_10 : i32 to vector<1x512xi32>
    %42 = arith.cmpi slt, %0, %41 : vector<1x512xi32>
    %43 = arith.andi %40, %42 : vector<1x512xi1>
    %cst_11 = arith.constant 0.000000e+00 : f32
    %44 = vector.broadcast %cst_11 : f32 to vector<1x512xf32>
    %45 = arith.select %43, %38, %44 : vector<1x512xi1>, vector<1x512xf32>
    %46 = vector.extract_strided_slice %3 {offsets = [3, 0, 0], sizes = [1, 4, 1], strides = [1, 1, 1]} : vector<5x4x1xf32> to vector<1x4x1xf32>
    %47 = vector.shape_cast %46 : vector<1x4x1xf32> to vector<4x1xf32>
    %48 = vector.broadcast %47 : vector<4x1xf32> to vector<4x512xf32>
    %49 = vector.broadcast %45 : vector<1x512xf32> to vector<4x512xf32>
    %50 = arith.mulf %48, %49 : vector<4x512xf32>
    %51 = arith.addf %37, %50 : vector<4x512xf32>
    %c510_i32 = arith.constant 510 : i32
    %52 = tpu.dynamic_rotate %2 by %c510_i32 dim 1 : vector<1x512xf32>, i32 -> vector<1x512xf32>
    %c-2_i32 = arith.constant -2 : i32
    %53 = vector.broadcast %c-2_i32 : i32 to vector<1x512xi32>
    %54 = arith.cmpi sge, %0, %53 : vector<1x512xi32>
    %c510_i32_12 = arith.constant 510 : i32
    %55 = vector.broadcast %c510_i32_12 : i32 to vector<1x512xi32>
    %56 = arith.cmpi slt, %0, %55 : vector<1x512xi32>
    %57 = arith.andi %54, %56 : vector<1x512xi1>
    %cst_13 = arith.constant 0.000000e+00 : f32
    %58 = vector.broadcast %cst_13 : f32 to vector<1x512xf32>
    %59 = arith.select %57, %52, %58 : vector<1x512xi1>, vector<1x512xf32>
    %60 = vector.extract_strided_slice %3 {offsets = [4, 0, 0], sizes = [1, 4, 1], strides = [1, 1, 1]} : vector<5x4x1xf32> to vector<1x4x1xf32>
    %61 = vector.shape_cast %60 : vector<1x4x1xf32> to vector<4x1xf32>
    %62 = vector.broadcast %61 : vector<4x1xf32> to vector<4x512xf32>
    %63 = vector.broadcast %59 : vector<1x512xf32> to vector<4x512xf32>
    %64 = arith.mulf %62, %63 : vector<4x512xf32>
    %65 = arith.addf %51, %64 : vector<4x512xf32>
    %66 = vector.broadcast %4 : vector<4x1xf32> to vector<4x512xf32>
    %67 = arith.addf %65, %66 : vector<4x512xf32>
    %c0_14 = arith.constant 0 : index
    %c0_15 = arith.constant 0 : index
    %c0_16 = arith.constant 0 : index
    %68 = vector.load %arg4[%c0_14, %c0_15, %c0_16] : memref<5x4x4xf32, #tpu.memory_space<vmem>>, vector<5x4x4xf32>
    %c0_17 = arith.constant 0 : index
    %c0_18 = arith.constant 0 : index
    %69 = vector.load %arg5[%c0_17, %c0_18] : memref<4x1xf32, #tpu.memory_space<vmem>>, vector<4x1xf32>
    %cst_19 = arith.constant 0.000000e+00 : f32
    %70 = vector.broadcast %cst_19 : f32 to vector<4x512xf32>
    %71 = arith.cmpf oge, %67, %70 : vector<4x512xf32>
    %cst_20 = arith.constant 0.00999999977 : f32
    %72 = vector.broadcast %cst_20 : f32 to vector<4x512xf32>
    %73 = arith.mulf %72, %67 : vector<4x512xf32>
    %74 = arith.select %71, %67, %73 : vector<4x512xi1>, vector<4x512xf32>
    %c2_i32_21 = arith.constant 2 : i32
    %75 = tpu.dynamic_rotate %74 by %c2_i32_21 dim 1 : vector<4x512xf32>, i32 -> vector<4x512xf32>
    %c2_i32_22 = arith.constant 2 : i32
    %76 = vector.broadcast %c2_i32_22 : i32 to vector<1x512xi32>
    %77 = arith.cmpi sge, %0, %76 : vector<1x512xi32>
    %c514_i32_23 = arith.constant 514 : i32
    %78 = vector.broadcast %c514_i32_23 : i32 to vector<1x512xi32>
    %79 = arith.cmpi slt, %0, %78 : vector<1x512xi32>
    %80 = arith.andi %77, %79 : vector<1x512xi1>
    %cst_24 = arith.constant 0.000000e+00 : f32
    %81 = vector.shape_cast %80 : vector<1x512xi1> to vector<1x512xi1>
    %82 = vector.broadcast %81 : vector<1x512xi1> to vector<4x512xi1>
    %83 = vector.broadcast %cst_24 : f32 to vector<4x512xf32>
    %84 = arith.select %82, %75, %83 : vector<4x512xi1>, vector<4x512xf32>
    %85 = vector.extract_strided_slice %68 {offsets = [0, 0, 0], sizes = [1, 4, 4], strides = [1, 1, 1]} : vector<5x4x4xf32> to vector<1x4x4xf32>
    %86 = vector.shape_cast %85 : vector<1x4x4xf32> to vector<4x4xf32>
    %cst_25 = arith.constant dense<0.000000e+00> : vector<4x512xf32>
    %87 = tpu.matmul %86, %84, %cst_25 {dimension_numbers = #tpu.dot_dimension_numbers<[1], [0], [0], [1], [0, 0, 1, 1], [], []>} : vector<4x4xf32>, vector<4x512xf32>, vector<4x512xf32> -> vector<4x512xf32>
    %c1_i32_26 = arith.constant 1 : i32
    %88 = tpu.dynamic_rotate %74 by %c1_i32_26 dim 1 : vector<4x512xf32>, i32 -> vector<4x512xf32>
    %c1_i32_27 = arith.constant 1 : i32
    %89 = vector.broadcast %c1_i32_27 : i32 to vector<1x512xi32>
    %90 = arith.cmpi sge, %0, %89 : vector<1x512xi32>
    %c513_i32_28 = arith.constant 513 : i32
    %91 = vector.broadcast %c513_i32_28 : i32 to vector<1x512xi32>
    %92 = arith.cmpi slt, %0, %91 : vector<1x512xi32>
    %93 = arith.andi %90, %92 : vector<1x512xi1>
    %cst_29 = arith.constant 0.000000e+00 : f32
    %94 = vector.shape_cast %93 : vector<1x512xi1> to vector<1x512xi1>
    %95 = vector.broadcast %94 : vector<1x512xi1> to vector<4x512xi1>
    %96 = vector.broadcast %cst_29 : f32 to vector<4x512xf32>
    %97 = arith.select %95, %88, %96 : vector<4x512xi1>, vector<4x512xf32>
    %98 = vector.extract_strided_slice %68 {offsets = [1, 0, 0], sizes = [1, 4, 4], strides = [1, 1, 1]} : vector<5x4x4xf32> to vector<1x4x4xf32>
    %99 = vector.shape_cast %98 : vector<1x4x4xf32> to vector<4x4xf32>
    %cst_30 = arith.constant dense<0.000000e+00> : vector<4x512xf32>
    %100 = tpu.matmul %99, %97, %cst_30 {dimension_numbers = #tpu.dot_dimension_numbers<[1], [0], [0], [1], [0, 0, 1, 1], [], []>} : vector<4x4xf32>, vector<4x512xf32>, vector<4x512xf32> -> vector<4x512xf32>
    %101 = arith.addf %87, %100 : vector<4x512xf32>
    %102 = vector.extract_strided_slice %68 {offsets = [2, 0, 0], sizes = [1, 4, 4], strides = [1, 1, 1]} : vector<5x4x4xf32> to vector<1x4x4xf32>
    %103 = vector.shape_cast %102 : vector<1x4x4xf32> to vector<4x4xf32>
    %cst_31 = arith.constant dense<0.000000e+00> : vector<4x512xf32>
    %104 = tpu.matmul %103, %74, %cst_31 {dimension_numbers = #tpu.dot_dimension_numbers<[1], [0], [0], [1], [0, 0, 1, 1], [], []>} : vector<4x4xf32>, vector<4x512xf32>, vector<4x512xf32> -> vector<4x512xf32>
    %105 = arith.addf %101, %104 : vector<4x512xf32>
    %c511_i32_32 = arith.constant 511 : i32
    %106 = tpu.dynamic_rotate %74 by %c511_i32_32 dim 1 : vector<4x512xf32>, i32 -> vector<4x512xf32>
    %c-1_i32_33 = arith.constant -1 : i32
    %107 = vector.broadcast %c-1_i32_33 : i32 to vector<1x512xi32>
    %108 = arith.cmpi sge, %0, %107 : vector<1x512xi32>
    %c511_i32_34 = arith.constant 511 : i32
    %109 = vector.broadcast %c511_i32_34 : i32 to vector<1x512xi32>
    %110 = arith.cmpi slt, %0, %109 : vector<1x512xi32>
    %111 = arith.andi %108, %110 : vector<1x512xi1>
    %cst_35 = arith.constant 0.000000e+00 : f32
    %112 = vector.shape_cast %111 : vector<1x512xi1> to vector<1x512xi1>
    %113 = vector.broadcast %112 : vector<1x512xi1> to vector<4x512xi1>
    %114 = vector.broadcast %cst_35 : f32 to vector<4x512xf32>
    %115 = arith.select %113, %106, %114 : vector<4x512xi1>, vector<4x512xf32>
    %116 = vector.extract_strided_slice %68 {offsets = [3, 0, 0], sizes = [1, 4, 4], strides = [1, 1, 1]} : vector<5x4x4xf32> to vector<1x4x4xf32>
    %117 = vector.shape_cast %116 : vector<1x4x4xf32> to vector<4x4xf32>
    %cst_36 = arith.constant dense<0.000000e+00> : vector<4x512xf32>
    %118 = tpu.matmul %117, %115, %cst_36 {dimension_numbers = #tpu.dot_dimension_numbers<[1], [0], [0], [1], [0, 0, 1, 1], [], []>} : vector<4x4xf32>, vector<4x512xf32>, vector<4x512xf32> -> vector<4x512xf32>
    %119 = arith.addf %105, %118 : vector<4x512xf32>
    %c510_i32_37 = arith.constant 510 : i32
    %120 = tpu.dynamic_rotate %74 by %c510_i32_37 dim 1 : vector<4x512xf32>, i32 -> vector<4x512xf32>
    %c-2_i32_38 = arith.constant -2 : i32
    %121 = vector.broadcast %c-2_i32_38 : i32 to vector<1x512xi32>
    %122 = arith.cmpi sge, %0, %121 : vector<1x512xi32>
    %c510_i32_39 = arith.constant 510 : i32
    %123 = vector.broadcast %c510_i32_39 : i32 to vector<1x512xi32>
    %124 = arith.cmpi slt, %0, %123 : vector<1x512xi32>
    %125 = arith.andi %122, %124 : vector<1x512xi1>
    %cst_40 = arith.constant 0.000000e+00 : f32
    %126 = vector.shape_cast %125 : vector<1x512xi1> to vector<1x512xi1>
    %127 = vector.broadcast %126 : vector<1x512xi1> to vector<4x512xi1>
    %128 = vector.broadcast %cst_40 : f32 to vector<4x512xf32>
    %129 = arith.select %127, %120, %128 : vector<4x512xi1>, vector<4x512xf32>
    %130 = vector.extract_strided_slice %68 {offsets = [4, 0, 0], sizes = [1, 4, 4], strides = [1, 1, 1]} : vector<5x4x4xf32> to vector<1x4x4xf32>
    %131 = vector.shape_cast %130 : vector<1x4x4xf32> to vector<4x4xf32>
    %cst_41 = arith.constant dense<0.000000e+00> : vector<4x512xf32>
    %132 = tpu.matmul %131, %129, %cst_41 {dimension_numbers = #tpu.dot_dimension_numbers<[1], [0], [0], [1], [0, 0, 1, 1], [], []>} : vector<4x4xf32>, vector<4x512xf32>, vector<4x512xf32> -> vector<4x512xf32>
    %133 = arith.addf %119, %132 : vector<4x512xf32>
    %134 = vector.broadcast %69 : vector<4x1xf32> to vector<4x512xf32>
    %135 = arith.addf %133, %134 : vector<4x512xf32>
    %136 = arith.addf %135, %67 : vector<4x512xf32>
    %c0_42 = arith.constant 0 : index
    %c0_43 = arith.constant 0 : index
    %c0_44 = arith.constant 0 : index
    %137 = vector.load %arg6[%c0_42, %c0_43, %c0_44] : memref<5x4x4xf32, #tpu.memory_space<vmem>>, vector<5x4x4xf32>
    %c0_45 = arith.constant 0 : index
    %c0_46 = arith.constant 0 : index
    %138 = vector.load %arg7[%c0_45, %c0_46] : memref<4x1xf32, #tpu.memory_space<vmem>>, vector<4x1xf32>
    %cst_47 = arith.constant 0.000000e+00 : f32
    %139 = vector.broadcast %cst_47 : f32 to vector<4x512xf32>
    %140 = arith.cmpf oge, %136, %139 : vector<4x512xf32>
    %cst_48 = arith.constant 0.00999999977 : f32
    %141 = vector.broadcast %cst_48 : f32 to vector<4x512xf32>
    %142 = arith.mulf %141, %136 : vector<4x512xf32>
    %143 = arith.select %140, %136, %142 : vector<4x512xi1>, vector<4x512xf32>
    %c2_i32_49 = arith.constant 2 : i32
    %144 = tpu.dynamic_rotate %143 by %c2_i32_49 dim 1 : vector<4x512xf32>, i32 -> vector<4x512xf32>
    %c2_i32_50 = arith.constant 2 : i32
    %145 = vector.broadcast %c2_i32_50 : i32 to vector<1x512xi32>
    %146 = arith.cmpi sge, %0, %145 : vector<1x512xi32>
    %c514_i32_51 = arith.constant 514 : i32
    %147 = vector.broadcast %c514_i32_51 : i32 to vector<1x512xi32>
    %148 = arith.cmpi slt, %0, %147 : vector<1x512xi32>
    %149 = arith.andi %146, %148 : vector<1x512xi1>
    %cst_52 = arith.constant 0.000000e+00 : f32
    %150 = vector.shape_cast %149 : vector<1x512xi1> to vector<1x512xi1>
    %151 = vector.broadcast %150 : vector<1x512xi1> to vector<4x512xi1>
    %152 = vector.broadcast %cst_52 : f32 to vector<4x512xf32>
    %153 = arith.select %151, %144, %152 : vector<4x512xi1>, vector<4x512xf32>
    %154 = vector.extract_strided_slice %137 {offsets = [0, 0, 0], sizes = [1, 4, 4], strides = [1, 1, 1]} : vector<5x4x4xf32> to vector<1x4x4xf32>
    %155 = vector.shape_cast %154 : vector<1x4x4xf32> to vector<4x4xf32>
    %cst_53 = arith.constant dense<0.000000e+00> : vector<4x512xf32>
    %156 = tpu.matmul %155, %153, %cst_53 {dimension_numbers = #tpu.dot_dimension_numbers<[1], [0], [0], [1], [0, 0, 1, 1], [], []>} : vector<4x4xf32>, vector<4x512xf32>, vector<4x512xf32> -> vector<4x512xf32>
    %c1_i32_54 = arith.constant 1 : i32
    %157 = tpu.dynamic_rotate %143 by %c1_i32_54 dim 1 : vector<4x512xf32>, i32 -> vector<4x512xf32>
    %c1_i32_55 = arith.constant 1 : i32
    %158 = vector.broadcast %c1_i32_55 : i32 to vector<1x512xi32>
    %159 = arith.cmpi sge, %0, %158 : vector<1x512xi32>
    %c513_i32_56 = arith.constant 513 : i32
    %160 = vector.broadcast %c513_i32_56 : i32 to vector<1x512xi32>
    %161 = arith.cmpi slt, %0, %160 : vector<1x512xi32>
    %162 = arith.andi %159, %161 : vector<1x512xi1>
    %cst_57 = arith.constant 0.000000e+00 : f32
    %163 = vector.shape_cast %162 : vector<1x512xi1> to vector<1x512xi1>
    %164 = vector.broadcast %163 : vector<1x512xi1> to vector<4x512xi1>
    %165 = vector.broadcast %cst_57 : f32 to vector<4x512xf32>
    %166 = arith.select %164, %157, %165 : vector<4x512xi1>, vector<4x512xf32>
    %167 = vector.extract_strided_slice %137 {offsets = [1, 0, 0], sizes = [1, 4, 4], strides = [1, 1, 1]} : vector<5x4x4xf32> to vector<1x4x4xf32>
    %168 = vector.shape_cast %167 : vector<1x4x4xf32> to vector<4x4xf32>
    %cst_58 = arith.constant dense<0.000000e+00> : vector<4x512xf32>
    %169 = tpu.matmul %168, %166, %cst_58 {dimension_numbers = #tpu.dot_dimension_numbers<[1], [0], [0], [1], [0, 0, 1, 1], [], []>} : vector<4x4xf32>, vector<4x512xf32>, vector<4x512xf32> -> vector<4x512xf32>
    %170 = arith.addf %156, %169 : vector<4x512xf32>
    %171 = vector.extract_strided_slice %137 {offsets = [2, 0, 0], sizes = [1, 4, 4], strides = [1, 1, 1]} : vector<5x4x4xf32> to vector<1x4x4xf32>
    %172 = vector.shape_cast %171 : vector<1x4x4xf32> to vector<4x4xf32>
    %cst_59 = arith.constant dense<0.000000e+00> : vector<4x512xf32>
    %173 = tpu.matmul %172, %143, %cst_59 {dimension_numbers = #tpu.dot_dimension_numbers<[1], [0], [0], [1], [0, 0, 1, 1], [], []>} : vector<4x4xf32>, vector<4x512xf32>, vector<4x512xf32> -> vector<4x512xf32>
    %174 = arith.addf %170, %173 : vector<4x512xf32>
    %c511_i32_60 = arith.constant 511 : i32
    %175 = tpu.dynamic_rotate %143 by %c511_i32_60 dim 1 : vector<4x512xf32>, i32 -> vector<4x512xf32>
    %c-1_i32_61 = arith.constant -1 : i32
    %176 = vector.broadcast %c-1_i32_61 : i32 to vector<1x512xi32>
    %177 = arith.cmpi sge, %0, %176 : vector<1x512xi32>
    %c511_i32_62 = arith.constant 511 : i32
    %178 = vector.broadcast %c511_i32_62 : i32 to vector<1x512xi32>
    %179 = arith.cmpi slt, %0, %178 : vector<1x512xi32>
    %180 = arith.andi %177, %179 : vector<1x512xi1>
    %cst_63 = arith.constant 0.000000e+00 : f32
    %181 = vector.shape_cast %180 : vector<1x512xi1> to vector<1x512xi1>
    %182 = vector.broadcast %181 : vector<1x512xi1> to vector<4x512xi1>
    %183 = vector.broadcast %cst_63 : f32 to vector<4x512xf32>
    %184 = arith.select %182, %175, %183 : vector<4x512xi1>, vector<4x512xf32>
    %185 = vector.extract_strided_slice %137 {offsets = [3, 0, 0], sizes = [1, 4, 4], strides = [1, 1, 1]} : vector<5x4x4xf32> to vector<1x4x4xf32>
    %186 = vector.shape_cast %185 : vector<1x4x4xf32> to vector<4x4xf32>
    %cst_64 = arith.constant dense<0.000000e+00> : vector<4x512xf32>
    %187 = tpu.matmul %186, %184, %cst_64 {dimension_numbers = #tpu.dot_dimension_numbers<[1], [0], [0], [1], [0, 0, 1, 1], [], []>} : vector<4x4xf32>, vector<4x512xf32>, vector<4x512xf32> -> vector<4x512xf32>
    %188 = arith.addf %174, %187 : vector<4x512xf32>
    %c510_i32_65 = arith.constant 510 : i32
    %189 = tpu.dynamic_rotate %143 by %c510_i32_65 dim 1 : vector<4x512xf32>, i32 -> vector<4x512xf32>
    %c-2_i32_66 = arith.constant -2 : i32
    %190 = vector.broadcast %c-2_i32_66 : i32 to vector<1x512xi32>
    %191 = arith.cmpi sge, %0, %190 : vector<1x512xi32>
    %c510_i32_67 = arith.constant 510 : i32
    %192 = vector.broadcast %c510_i32_67 : i32 to vector<1x512xi32>
    %193 = arith.cmpi slt, %0, %192 : vector<1x512xi32>
    %194 = arith.andi %191, %193 : vector<1x512xi1>
    %cst_68 = arith.constant 0.000000e+00 : f32
    %195 = vector.shape_cast %194 : vector<1x512xi1> to vector<1x512xi1>
    %196 = vector.broadcast %195 : vector<1x512xi1> to vector<4x512xi1>
    %197 = vector.broadcast %cst_68 : f32 to vector<4x512xf32>
    %198 = arith.select %196, %189, %197 : vector<4x512xi1>, vector<4x512xf32>
    %199 = vector.extract_strided_slice %137 {offsets = [4, 0, 0], sizes = [1, 4, 4], strides = [1, 1, 1]} : vector<5x4x4xf32> to vector<1x4x4xf32>
    %200 = vector.shape_cast %199 : vector<1x4x4xf32> to vector<4x4xf32>
    %cst_69 = arith.constant dense<0.000000e+00> : vector<4x512xf32>
    %201 = tpu.matmul %200, %198, %cst_69 {dimension_numbers = #tpu.dot_dimension_numbers<[1], [0], [0], [1], [0, 0, 1, 1], [], []>} : vector<4x4xf32>, vector<4x512xf32>, vector<4x512xf32> -> vector<4x512xf32>
    %202 = arith.addf %188, %201 : vector<4x512xf32>
    %203 = vector.broadcast %138 : vector<4x1xf32> to vector<4x512xf32>
    %204 = arith.addf %202, %203 : vector<4x512xf32>
    %205 = arith.addf %204, %136 : vector<4x512xf32>
    %c0_70 = arith.constant 0 : index
    %c0_71 = arith.constant 0 : index
    %c0_72 = arith.constant 0 : index
    %206 = vector.load %arg8[%c0_70, %c0_71, %c0_72] : memref<4x8x4xf32, #tpu.memory_space<vmem>>, vector<4x8x4xf32>
    %c0_73 = arith.constant 0 : index
    %c0_74 = arith.constant 0 : index
    %207 = vector.load %arg9[%c0_73, %c0_74] : memref<8x1xf32, #tpu.memory_space<vmem>>, vector<8x1xf32>
    %208 = vector.extract_strided_slice %206 {offsets = [0, 0, 0], sizes = [1, 8, 4], strides = [1, 1, 1]} : vector<4x8x4xf32> to vector<1x8x4xf32>
    %209 = vector.shape_cast %208 : vector<1x8x4xf32> to vector<8x4xf32>
    %cst_75 = arith.constant dense<0.000000e+00> : vector<8x512xf32>
    %210 = tpu.matmul %209, %205, %cst_75 {dimension_numbers = #tpu.dot_dimension_numbers<[1], [0], [0], [1], [0, 0, 1, 1], [], []>} : vector<8x4xf32>, vector<4x512xf32>, vector<8x512xf32> -> vector<8x512xf32>
    %c511_i32_76 = arith.constant 511 : i32
    %211 = tpu.dynamic_rotate %205 by %c511_i32_76 dim 1 : vector<4x512xf32>, i32 -> vector<4x512xf32>
    %c-1_i32_77 = arith.constant -1 : i32
    %212 = vector.broadcast %c-1_i32_77 : i32 to vector<1x512xi32>
    %213 = arith.cmpi sge, %0, %212 : vector<1x512xi32>
    %c511_i32_78 = arith.constant 511 : i32
    %214 = vector.broadcast %c511_i32_78 : i32 to vector<1x512xi32>
    %215 = arith.cmpi slt, %0, %214 : vector<1x512xi32>
    %216 = arith.andi %213, %215 : vector<1x512xi1>
    %cst_79 = arith.constant 0.000000e+00 : f32
    %217 = vector.shape_cast %216 : vector<1x512xi1> to vector<1x512xi1>
    %218 = vector.broadcast %217 : vector<1x512xi1> to vector<4x512xi1>
    %219 = vector.broadcast %cst_79 : f32 to vector<4x512xf32>
    %220 = arith.select %218, %211, %219 : vector<4x512xi1>, vector<4x512xf32>
    %221 = vector.extract_strided_slice %206 {offsets = [1, 0, 0], sizes = [1, 8, 4], strides = [1, 1, 1]} : vector<4x8x4xf32> to vector<1x8x4xf32>
    %222 = vector.shape_cast %221 : vector<1x8x4xf32> to vector<8x4xf32>
    %cst_80 = arith.constant dense<0.000000e+00> : vector<8x512xf32>
    %223 = tpu.matmul %222, %220, %cst_80 {dimension_numbers = #tpu.dot_dimension_numbers<[1], [0], [0], [1], [0, 0, 1, 1], [], []>} : vector<8x4xf32>, vector<4x512xf32>, vector<8x512xf32> -> vector<8x512xf32>
    %224 = arith.addf %210, %223 : vector<8x512xf32>
    %c510_i32_81 = arith.constant 510 : i32
    %225 = tpu.dynamic_rotate %205 by %c510_i32_81 dim 1 : vector<4x512xf32>, i32 -> vector<4x512xf32>
    %c-2_i32_82 = arith.constant -2 : i32
    %226 = vector.broadcast %c-2_i32_82 : i32 to vector<1x512xi32>
    %227 = arith.cmpi sge, %0, %226 : vector<1x512xi32>
    %c510_i32_83 = arith.constant 510 : i32
    %228 = vector.broadcast %c510_i32_83 : i32 to vector<1x512xi32>
    %229 = arith.cmpi slt, %0, %228 : vector<1x512xi32>
    %230 = arith.andi %227, %229 : vector<1x512xi1>
    %cst_84 = arith.constant 0.000000e+00 : f32
    %231 = vector.shape_cast %230 : vector<1x512xi1> to vector<1x512xi1>
    %232 = vector.broadcast %231 : vector<1x512xi1> to vector<4x512xi1>
    %233 = vector.broadcast %cst_84 : f32 to vector<4x512xf32>
    %234 = arith.select %232, %225, %233 : vector<4x512xi1>, vector<4x512xf32>
    %235 = vector.extract_strided_slice %206 {offsets = [2, 0, 0], sizes = [1, 8, 4], strides = [1, 1, 1]} : vector<4x8x4xf32> to vector<1x8x4xf32>
    %236 = vector.shape_cast %235 : vector<1x8x4xf32> to vector<8x4xf32>
    %cst_85 = arith.constant dense<0.000000e+00> : vector<8x512xf32>
    %237 = tpu.matmul %236, %234, %cst_85 {dimension_numbers = #tpu.dot_dimension_numbers<[1], [0], [0], [1], [0, 0, 1, 1], [], []>} : vector<8x4xf32>, vector<4x512xf32>, vector<8x512xf32> -> vector<8x512xf32>
    %238 = arith.addf %224, %237 : vector<8x512xf32>
    %c509_i32 = arith.constant 509 : i32
    %239 = tpu.dynamic_rotate %205 by %c509_i32 dim 1 : vector<4x512xf32>, i32 -> vector<4x512xf32>
    %c-3_i32 = arith.constant -3 : i32
    %240 = vector.broadcast %c-3_i32 : i32 to vector<1x512xi32>
    %241 = arith.cmpi sge, %0, %240 : vector<1x512xi32>
    %c509_i32_86 = arith.constant 509 : i32
    %242 = vector.broadcast %c509_i32_86 : i32 to vector<1x512xi32>
    %243 = arith.cmpi slt, %0, %242 : vector<1x512xi32>
    %244 = arith.andi %241, %243 : vector<1x512xi1>
    %cst_87 = arith.constant 0.000000e+00 : f32
    %245 = vector.shape_cast %244 : vector<1x512xi1> to vector<1x512xi1>
    %246 = vector.broadcast %245 : vector<1x512xi1> to vector<4x512xi1>
    %247 = vector.broadcast %cst_87 : f32 to vector<4x512xf32>
    %248 = arith.select %246, %239, %247 : vector<4x512xi1>, vector<4x512xf32>
    %249 = vector.extract_strided_slice %206 {offsets = [3, 0, 0], sizes = [1, 8, 4], strides = [1, 1, 1]} : vector<4x8x4xf32> to vector<1x8x4xf32>
    %250 = vector.shape_cast %249 : vector<1x8x4xf32> to vector<8x4xf32>
    %cst_88 = arith.constant dense<0.000000e+00> : vector<8x512xf32>
    %251 = tpu.matmul %250, %248, %cst_88 {dimension_numbers = #tpu.dot_dimension_numbers<[1], [0], [0], [1], [0, 0, 1, 1], [], []>} : vector<8x4xf32>, vector<4x512xf32>, vector<8x512xf32> -> vector<8x512xf32>
    %252 = arith.addf %238, %251 : vector<8x512xf32>
    %253 = vector.broadcast %207 : vector<8x1xf32> to vector<8x512xf32>
    %254 = arith.addf %252, %253 : vector<8x512xf32>
    %c0_89 = arith.constant 0 : index
    %c0_90 = arith.constant 0 : index
    %c0_91 = arith.constant 0 : index
    %255 = vector.load %arg10[%c0_89, %c0_90, %c0_91] : memref<1x8x512xf32, #tpu.memory_space<vmem>>, vector<1x8x512xf32>
    %256 = vector.shape_cast %255 : vector<1x8x512xf32> to vector<8x512xf32>
    %257 = vector.shape_cast %254 : vector<8x512xf32> to vector<1x8x512xf32>
    tpu.vector_store %arg10[%c0_89, %c0_90, %c0_91], %257 {strides = array<i32>} : memref<1x8x512xf32, #tpu.memory_space<vmem>>, vector<1x8x512xf32>,
    return
  }
  func.func @transform_0(%arg0: i32) -> (i32, i32, i32) {
    %c0_i32 = arith.constant 0 : i32
    %c0_i32_0 = arith.constant 0 : i32
    %c0_i32_1 = arith.constant 0 : i32
    return %arg0, %c0_i32, %c0_i32_0 : i32, i32, i32
  }
  func.func @transform_1(%arg0: i32) -> (i32, i32, i32) {
    %c0_i32 = arith.constant 0 : i32
    %c0_i32_0 = arith.constant 0 : i32
    %c0_i32_1 = arith.constant 0 : i32
    %c0_i32_2 = arith.constant 0 : i32
    return %c0_i32, %c0_i32_0, %c0_i32_1 : i32, i32, i32
  }
  func.func @transform_2(%arg0: i32) -> (i32, i32) {
    %c0_i32 = arith.constant 0 : i32
    %c0_i32_0 = arith.constant 0 : i32
    %c0_i32_1 = arith.constant 0 : i32
    return %c0_i32, %c0_i32_0 : i32, i32
  }
  func.func @transform_3(%arg0: i32) -> (i32, i32, i32) {
    %c0_i32 = arith.constant 0 : i32
    %c0_i32_0 = arith.constant 0 : i32
    %c0_i32_1 = arith.constant 0 : i32
    %c0_i32_2 = arith.constant 0 : i32
    return %c0_i32, %c0_i32_0, %c0_i32_1 : i32, i32, i32
  }
  func.func @transform_4(%arg0: i32) -> (i32, i32) {
    %c0_i32 = arith.constant 0 : i32
    %c0_i32_0 = arith.constant 0 : i32
    %c0_i32_1 = arith.constant 0 : i32
    return %c0_i32, %c0_i32_0 : i32, i32
  }
  func.func @transform_5(%arg0: i32) -> (i32, i32, i32) {
    %c0_i32 = arith.constant 0 : i32
    %c0_i32_0 = arith.constant 0 : i32
    %c0_i32_1 = arith.constant 0 : i32
    %c0_i32_2 = arith.constant 0 : i32
    return %c0_i32, %c0_i32_0, %c0_i32_1 : i32, i32, i32
  }
  func.func @transform_6(%arg0: i32) -> (i32, i32) {
    %c0_i32 = arith.constant 0 : i32
    %c0_i32_0 = arith.constant 0 : i32
    %c0_i32_1 = arith.constant 0 : i32
    return %c0_i32, %c0_i32_0 : i32, i32
  }
  func.func @transform_7(%arg0: i32) -> (i32, i32, i32) {
    %c0_i32 = arith.constant 0 : i32
    %c0_i32_0 = arith.constant 0 : i32
    %c0_i32_1 = arith.constant 0 : i32
    %c0_i32_2 = arith.constant 0 : i32
    return %c0_i32, %c0_i32_0, %c0_i32_1 : i32, i32, i32
  }
  func.func @transform_8(%arg0: i32) -> (i32, i32) {
    %c0_i32 = arith.constant 0 : i32
    %c0_i32_0 = arith.constant 0 : i32
    %c0_i32_1 = arith.constant 0 : i32
    return %c0_i32, %c0_i32_0 : i32, i32
  }
  func.func @transform_9(%arg0: i32) -> (i32, i32, i32) {
    %c0_i32 = arith.constant 0 : i32
    %c0_i32_0 = arith.constant 0 : i32
    %c0_i32_1 = arith.constant 0 : i32
    return %arg0, %c0_i32, %c0_i32_0 : i32, i32, i32
  }
}

module attributes {stable_mosaic.version = 11 : i64} {
  func.func @_chain_kernel(%arg0: i32, %arg1: memref<1x8x128xf32, #tpu.memory_space<vmem>>, %arg2: memref<5x8x8xf32, #tpu.memory_space<vmem>>, %arg3: memref<8x1xf32, #tpu.memory_space<vmem>>, %arg4: memref<5x8x8xf32, #tpu.memory_space<vmem>>, %arg5: memref<8x1xf32, #tpu.memory_space<vmem>>, %arg6: memref<1x4x8xf32, #tpu.memory_space<vmem>>, %arg7: memref<4x1xf32, #tpu.memory_space<vmem>>, %arg8: memref<1x4x128xf32, #tpu.memory_space<vmem>>) attributes {dimension_semantics = [#tpu.dimension_semantics<parallel>], iteration_bounds = array<i64: 2>, scalar_prefetch = 0 : i64, scratch_operands = 0 : i64, tpu.core_type = #tpu.core_type<tc>, window_params = [{transform_indices = @transform_0, window_bounds = array<i64: 1, 8, 128>}, {pipeline_mode = #tpu.pipeline_mode<synchronous>, transform_indices = @transform_1, window_bounds = array<i64: 5, 8, 8>}, {pipeline_mode = #tpu.pipeline_mode<synchronous>, transform_indices = @transform_2, window_bounds = array<i64: 8, 1>}, {pipeline_mode = #tpu.pipeline_mode<synchronous>, transform_indices = @transform_3, window_bounds = array<i64: 5, 8, 8>}, {pipeline_mode = #tpu.pipeline_mode<synchronous>, transform_indices = @transform_4, window_bounds = array<i64: 8, 1>}, {pipeline_mode = #tpu.pipeline_mode<synchronous>, transform_indices = @transform_5, window_bounds = array<i64: 1, 4, 8>}, {pipeline_mode = #tpu.pipeline_mode<synchronous>, transform_indices = @transform_6, window_bounds = array<i64: 4, 1>}, {transform_indices = @transform_7, window_bounds = array<i64: 1, 4, 128>}]} {
    %0 = tpu.iota {dimensions = array<i32: 1>} : vector<1x128xi32>
    %c0 = arith.constant 0 : index
    %c0_0 = arith.constant 0 : index
    %c0_1 = arith.constant 0 : index
    %1 = vector.load %arg1[%c0, %c0_0, %c0_1] : memref<1x8x128xf32, #tpu.memory_space<vmem>>, vector<1x8x128xf32>
    %2 = vector.shape_cast %1 : vector<1x8x128xf32> to vector<8x128xf32>
    %c0_2 = arith.constant 0 : index
    %c0_3 = arith.constant 0 : index
    %c0_4 = arith.constant 0 : index
    %3 = vector.load %arg2[%c0_2, %c0_3, %c0_4] : memref<5x8x8xf32, #tpu.memory_space<vmem>>, vector<5x8x8xf32>
    %c0_5 = arith.constant 0 : index
    %c0_6 = arith.constant 0 : index
    %4 = vector.load %arg3[%c0_5, %c0_6] : memref<8x1xf32, #tpu.memory_space<vmem>>, vector<8x1xf32>
    %cst = arith.constant 0.000000e+00 : f32
    %5 = vector.broadcast %cst : f32 to vector<8x128xf32>
    %6 = arith.cmpf oge, %2, %5 : vector<8x128xf32>
    %cst_7 = arith.constant 0.00999999977 : f32
    %7 = vector.broadcast %cst_7 : f32 to vector<8x128xf32>
    %8 = arith.mulf %7, %2 : vector<8x128xf32>
    %9 = arith.select %6, %2, %8 : vector<8x128xi1>, vector<8x128xf32>
    %c2_i32 = arith.constant 2 : i32
    %10 = tpu.dynamic_rotate %9 by %c2_i32 dim 1 : vector<8x128xf32>, i32 -> vector<8x128xf32>
    %c2_i32_8 = arith.constant 2 : i32
    %11 = vector.broadcast %c2_i32_8 : i32 to vector<1x128xi32>
    %12 = arith.cmpi sge, %0, %11 : vector<1x128xi32>
    %c130_i32 = arith.constant 130 : i32
    %13 = vector.broadcast %c130_i32 : i32 to vector<1x128xi32>
    %14 = arith.cmpi slt, %0, %13 : vector<1x128xi32>
    %15 = arith.andi %12, %14 : vector<1x128xi1>
    %cst_9 = arith.constant 0.000000e+00 : f32
    %16 = vector.shape_cast %15 : vector<1x128xi1> to vector<1x128xi1>
    %17 = vector.broadcast %16 : vector<1x128xi1> to vector<8x128xi1>
    %18 = vector.broadcast %cst_9 : f32 to vector<8x128xf32>
    %19 = arith.select %17, %10, %18 : vector<8x128xi1>, vector<8x128xf32>
    %20 = vector.extract_strided_slice %3 {offsets = [0, 0, 0], sizes = [1, 8, 8], strides = [1, 1, 1]} : vector<5x8x8xf32> to vector<1x8x8xf32>
    %21 = vector.shape_cast %20 : vector<1x8x8xf32> to vector<8x8xf32>
    %cst_10 = arith.constant dense<0.000000e+00> : vector<8x128xf32>
    %22 = tpu.matmul %21, %19, %cst_10 {dimension_numbers = #tpu.dot_dimension_numbers<[1], [0], [0], [1], [0, 0, 1, 1], [], []>} : vector<8x8xf32>, vector<8x128xf32>, vector<8x128xf32> -> vector<8x128xf32>
    %c1_i32 = arith.constant 1 : i32
    %23 = tpu.dynamic_rotate %9 by %c1_i32 dim 1 : vector<8x128xf32>, i32 -> vector<8x128xf32>
    %c1_i32_11 = arith.constant 1 : i32
    %24 = vector.broadcast %c1_i32_11 : i32 to vector<1x128xi32>
    %25 = arith.cmpi sge, %0, %24 : vector<1x128xi32>
    %c129_i32 = arith.constant 129 : i32
    %26 = vector.broadcast %c129_i32 : i32 to vector<1x128xi32>
    %27 = arith.cmpi slt, %0, %26 : vector<1x128xi32>
    %28 = arith.andi %25, %27 : vector<1x128xi1>
    %cst_12 = arith.constant 0.000000e+00 : f32
    %29 = vector.shape_cast %28 : vector<1x128xi1> to vector<1x128xi1>
    %30 = vector.broadcast %29 : vector<1x128xi1> to vector<8x128xi1>
    %31 = vector.broadcast %cst_12 : f32 to vector<8x128xf32>
    %32 = arith.select %30, %23, %31 : vector<8x128xi1>, vector<8x128xf32>
    %33 = vector.extract_strided_slice %3 {offsets = [1, 0, 0], sizes = [1, 8, 8], strides = [1, 1, 1]} : vector<5x8x8xf32> to vector<1x8x8xf32>
    %34 = vector.shape_cast %33 : vector<1x8x8xf32> to vector<8x8xf32>
    %cst_13 = arith.constant dense<0.000000e+00> : vector<8x128xf32>
    %35 = tpu.matmul %34, %32, %cst_13 {dimension_numbers = #tpu.dot_dimension_numbers<[1], [0], [0], [1], [0, 0, 1, 1], [], []>} : vector<8x8xf32>, vector<8x128xf32>, vector<8x128xf32> -> vector<8x128xf32>
    %36 = arith.addf %22, %35 : vector<8x128xf32>
    %37 = vector.extract_strided_slice %3 {offsets = [2, 0, 0], sizes = [1, 8, 8], strides = [1, 1, 1]} : vector<5x8x8xf32> to vector<1x8x8xf32>
    %38 = vector.shape_cast %37 : vector<1x8x8xf32> to vector<8x8xf32>
    %cst_14 = arith.constant dense<0.000000e+00> : vector<8x128xf32>
    %39 = tpu.matmul %38, %9, %cst_14 {dimension_numbers = #tpu.dot_dimension_numbers<[1], [0], [0], [1], [0, 0, 1, 1], [], []>} : vector<8x8xf32>, vector<8x128xf32>, vector<8x128xf32> -> vector<8x128xf32>
    %40 = arith.addf %36, %39 : vector<8x128xf32>
    %c127_i32 = arith.constant 127 : i32
    %41 = tpu.dynamic_rotate %9 by %c127_i32 dim 1 : vector<8x128xf32>, i32 -> vector<8x128xf32>
    %c-1_i32 = arith.constant -1 : i32
    %42 = vector.broadcast %c-1_i32 : i32 to vector<1x128xi32>
    %43 = arith.cmpi sge, %0, %42 : vector<1x128xi32>
    %c127_i32_15 = arith.constant 127 : i32
    %44 = vector.broadcast %c127_i32_15 : i32 to vector<1x128xi32>
    %45 = arith.cmpi slt, %0, %44 : vector<1x128xi32>
    %46 = arith.andi %43, %45 : vector<1x128xi1>
    %cst_16 = arith.constant 0.000000e+00 : f32
    %47 = vector.shape_cast %46 : vector<1x128xi1> to vector<1x128xi1>
    %48 = vector.broadcast %47 : vector<1x128xi1> to vector<8x128xi1>
    %49 = vector.broadcast %cst_16 : f32 to vector<8x128xf32>
    %50 = arith.select %48, %41, %49 : vector<8x128xi1>, vector<8x128xf32>
    %51 = vector.extract_strided_slice %3 {offsets = [3, 0, 0], sizes = [1, 8, 8], strides = [1, 1, 1]} : vector<5x8x8xf32> to vector<1x8x8xf32>
    %52 = vector.shape_cast %51 : vector<1x8x8xf32> to vector<8x8xf32>
    %cst_17 = arith.constant dense<0.000000e+00> : vector<8x128xf32>
    %53 = tpu.matmul %52, %50, %cst_17 {dimension_numbers = #tpu.dot_dimension_numbers<[1], [0], [0], [1], [0, 0, 1, 1], [], []>} : vector<8x8xf32>, vector<8x128xf32>, vector<8x128xf32> -> vector<8x128xf32>
    %54 = arith.addf %40, %53 : vector<8x128xf32>
    %c126_i32 = arith.constant 126 : i32
    %55 = tpu.dynamic_rotate %9 by %c126_i32 dim 1 : vector<8x128xf32>, i32 -> vector<8x128xf32>
    %c-2_i32 = arith.constant -2 : i32
    %56 = vector.broadcast %c-2_i32 : i32 to vector<1x128xi32>
    %57 = arith.cmpi sge, %0, %56 : vector<1x128xi32>
    %c126_i32_18 = arith.constant 126 : i32
    %58 = vector.broadcast %c126_i32_18 : i32 to vector<1x128xi32>
    %59 = arith.cmpi slt, %0, %58 : vector<1x128xi32>
    %60 = arith.andi %57, %59 : vector<1x128xi1>
    %cst_19 = arith.constant 0.000000e+00 : f32
    %61 = vector.shape_cast %60 : vector<1x128xi1> to vector<1x128xi1>
    %62 = vector.broadcast %61 : vector<1x128xi1> to vector<8x128xi1>
    %63 = vector.broadcast %cst_19 : f32 to vector<8x128xf32>
    %64 = arith.select %62, %55, %63 : vector<8x128xi1>, vector<8x128xf32>
    %65 = vector.extract_strided_slice %3 {offsets = [4, 0, 0], sizes = [1, 8, 8], strides = [1, 1, 1]} : vector<5x8x8xf32> to vector<1x8x8xf32>
    %66 = vector.shape_cast %65 : vector<1x8x8xf32> to vector<8x8xf32>
    %cst_20 = arith.constant dense<0.000000e+00> : vector<8x128xf32>
    %67 = tpu.matmul %66, %64, %cst_20 {dimension_numbers = #tpu.dot_dimension_numbers<[1], [0], [0], [1], [0, 0, 1, 1], [], []>} : vector<8x8xf32>, vector<8x128xf32>, vector<8x128xf32> -> vector<8x128xf32>
    %68 = arith.addf %54, %67 : vector<8x128xf32>
    %69 = vector.broadcast %4 : vector<8x1xf32> to vector<8x128xf32>
    %70 = arith.addf %68, %69 : vector<8x128xf32>
    %71 = arith.addf %70, %2 : vector<8x128xf32>
    %c0_21 = arith.constant 0 : index
    %c0_22 = arith.constant 0 : index
    %c0_23 = arith.constant 0 : index
    %72 = vector.load %arg4[%c0_21, %c0_22, %c0_23] : memref<5x8x8xf32, #tpu.memory_space<vmem>>, vector<5x8x8xf32>
    %c0_24 = arith.constant 0 : index
    %c0_25 = arith.constant 0 : index
    %73 = vector.load %arg5[%c0_24, %c0_25] : memref<8x1xf32, #tpu.memory_space<vmem>>, vector<8x1xf32>
    %cst_26 = arith.constant 0.000000e+00 : f32
    %74 = vector.broadcast %cst_26 : f32 to vector<8x128xf32>
    %75 = arith.cmpf oge, %71, %74 : vector<8x128xf32>
    %cst_27 = arith.constant 0.00999999977 : f32
    %76 = vector.broadcast %cst_27 : f32 to vector<8x128xf32>
    %77 = arith.mulf %76, %71 : vector<8x128xf32>
    %78 = arith.select %75, %71, %77 : vector<8x128xi1>, vector<8x128xf32>
    %c2_i32_28 = arith.constant 2 : i32
    %79 = tpu.dynamic_rotate %78 by %c2_i32_28 dim 1 : vector<8x128xf32>, i32 -> vector<8x128xf32>
    %c2_i32_29 = arith.constant 2 : i32
    %80 = vector.broadcast %c2_i32_29 : i32 to vector<1x128xi32>
    %81 = arith.cmpi sge, %0, %80 : vector<1x128xi32>
    %c130_i32_30 = arith.constant 130 : i32
    %82 = vector.broadcast %c130_i32_30 : i32 to vector<1x128xi32>
    %83 = arith.cmpi slt, %0, %82 : vector<1x128xi32>
    %84 = arith.andi %81, %83 : vector<1x128xi1>
    %cst_31 = arith.constant 0.000000e+00 : f32
    %85 = vector.shape_cast %84 : vector<1x128xi1> to vector<1x128xi1>
    %86 = vector.broadcast %85 : vector<1x128xi1> to vector<8x128xi1>
    %87 = vector.broadcast %cst_31 : f32 to vector<8x128xf32>
    %88 = arith.select %86, %79, %87 : vector<8x128xi1>, vector<8x128xf32>
    %89 = vector.extract_strided_slice %72 {offsets = [0, 0, 0], sizes = [1, 8, 8], strides = [1, 1, 1]} : vector<5x8x8xf32> to vector<1x8x8xf32>
    %90 = vector.shape_cast %89 : vector<1x8x8xf32> to vector<8x8xf32>
    %cst_32 = arith.constant dense<0.000000e+00> : vector<8x128xf32>
    %91 = tpu.matmul %90, %88, %cst_32 {dimension_numbers = #tpu.dot_dimension_numbers<[1], [0], [0], [1], [0, 0, 1, 1], [], []>} : vector<8x8xf32>, vector<8x128xf32>, vector<8x128xf32> -> vector<8x128xf32>
    %c1_i32_33 = arith.constant 1 : i32
    %92 = tpu.dynamic_rotate %78 by %c1_i32_33 dim 1 : vector<8x128xf32>, i32 -> vector<8x128xf32>
    %c1_i32_34 = arith.constant 1 : i32
    %93 = vector.broadcast %c1_i32_34 : i32 to vector<1x128xi32>
    %94 = arith.cmpi sge, %0, %93 : vector<1x128xi32>
    %c129_i32_35 = arith.constant 129 : i32
    %95 = vector.broadcast %c129_i32_35 : i32 to vector<1x128xi32>
    %96 = arith.cmpi slt, %0, %95 : vector<1x128xi32>
    %97 = arith.andi %94, %96 : vector<1x128xi1>
    %cst_36 = arith.constant 0.000000e+00 : f32
    %98 = vector.shape_cast %97 : vector<1x128xi1> to vector<1x128xi1>
    %99 = vector.broadcast %98 : vector<1x128xi1> to vector<8x128xi1>
    %100 = vector.broadcast %cst_36 : f32 to vector<8x128xf32>
    %101 = arith.select %99, %92, %100 : vector<8x128xi1>, vector<8x128xf32>
    %102 = vector.extract_strided_slice %72 {offsets = [1, 0, 0], sizes = [1, 8, 8], strides = [1, 1, 1]} : vector<5x8x8xf32> to vector<1x8x8xf32>
    %103 = vector.shape_cast %102 : vector<1x8x8xf32> to vector<8x8xf32>
    %cst_37 = arith.constant dense<0.000000e+00> : vector<8x128xf32>
    %104 = tpu.matmul %103, %101, %cst_37 {dimension_numbers = #tpu.dot_dimension_numbers<[1], [0], [0], [1], [0, 0, 1, 1], [], []>} : vector<8x8xf32>, vector<8x128xf32>, vector<8x128xf32> -> vector<8x128xf32>
    %105 = arith.addf %91, %104 : vector<8x128xf32>
    %106 = vector.extract_strided_slice %72 {offsets = [2, 0, 0], sizes = [1, 8, 8], strides = [1, 1, 1]} : vector<5x8x8xf32> to vector<1x8x8xf32>
    %107 = vector.shape_cast %106 : vector<1x8x8xf32> to vector<8x8xf32>
    %cst_38 = arith.constant dense<0.000000e+00> : vector<8x128xf32>
    %108 = tpu.matmul %107, %78, %cst_38 {dimension_numbers = #tpu.dot_dimension_numbers<[1], [0], [0], [1], [0, 0, 1, 1], [], []>} : vector<8x8xf32>, vector<8x128xf32>, vector<8x128xf32> -> vector<8x128xf32>
    %109 = arith.addf %105, %108 : vector<8x128xf32>
    %c127_i32_39 = arith.constant 127 : i32
    %110 = tpu.dynamic_rotate %78 by %c127_i32_39 dim 1 : vector<8x128xf32>, i32 -> vector<8x128xf32>
    %c-1_i32_40 = arith.constant -1 : i32
    %111 = vector.broadcast %c-1_i32_40 : i32 to vector<1x128xi32>
    %112 = arith.cmpi sge, %0, %111 : vector<1x128xi32>
    %c127_i32_41 = arith.constant 127 : i32
    %113 = vector.broadcast %c127_i32_41 : i32 to vector<1x128xi32>
    %114 = arith.cmpi slt, %0, %113 : vector<1x128xi32>
    %115 = arith.andi %112, %114 : vector<1x128xi1>
    %cst_42 = arith.constant 0.000000e+00 : f32
    %116 = vector.shape_cast %115 : vector<1x128xi1> to vector<1x128xi1>
    %117 = vector.broadcast %116 : vector<1x128xi1> to vector<8x128xi1>
    %118 = vector.broadcast %cst_42 : f32 to vector<8x128xf32>
    %119 = arith.select %117, %110, %118 : vector<8x128xi1>, vector<8x128xf32>
    %120 = vector.extract_strided_slice %72 {offsets = [3, 0, 0], sizes = [1, 8, 8], strides = [1, 1, 1]} : vector<5x8x8xf32> to vector<1x8x8xf32>
    %121 = vector.shape_cast %120 : vector<1x8x8xf32> to vector<8x8xf32>
    %cst_43 = arith.constant dense<0.000000e+00> : vector<8x128xf32>
    %122 = tpu.matmul %121, %119, %cst_43 {dimension_numbers = #tpu.dot_dimension_numbers<[1], [0], [0], [1], [0, 0, 1, 1], [], []>} : vector<8x8xf32>, vector<8x128xf32>, vector<8x128xf32> -> vector<8x128xf32>
    %123 = arith.addf %109, %122 : vector<8x128xf32>
    %c126_i32_44 = arith.constant 126 : i32
    %124 = tpu.dynamic_rotate %78 by %c126_i32_44 dim 1 : vector<8x128xf32>, i32 -> vector<8x128xf32>
    %c-2_i32_45 = arith.constant -2 : i32
    %125 = vector.broadcast %c-2_i32_45 : i32 to vector<1x128xi32>
    %126 = arith.cmpi sge, %0, %125 : vector<1x128xi32>
    %c126_i32_46 = arith.constant 126 : i32
    %127 = vector.broadcast %c126_i32_46 : i32 to vector<1x128xi32>
    %128 = arith.cmpi slt, %0, %127 : vector<1x128xi32>
    %129 = arith.andi %126, %128 : vector<1x128xi1>
    %cst_47 = arith.constant 0.000000e+00 : f32
    %130 = vector.shape_cast %129 : vector<1x128xi1> to vector<1x128xi1>
    %131 = vector.broadcast %130 : vector<1x128xi1> to vector<8x128xi1>
    %132 = vector.broadcast %cst_47 : f32 to vector<8x128xf32>
    %133 = arith.select %131, %124, %132 : vector<8x128xi1>, vector<8x128xf32>
    %134 = vector.extract_strided_slice %72 {offsets = [4, 0, 0], sizes = [1, 8, 8], strides = [1, 1, 1]} : vector<5x8x8xf32> to vector<1x8x8xf32>
    %135 = vector.shape_cast %134 : vector<1x8x8xf32> to vector<8x8xf32>
    %cst_48 = arith.constant dense<0.000000e+00> : vector<8x128xf32>
    %136 = tpu.matmul %135, %133, %cst_48 {dimension_numbers = #tpu.dot_dimension_numbers<[1], [0], [0], [1], [0, 0, 1, 1], [], []>} : vector<8x8xf32>, vector<8x128xf32>, vector<8x128xf32> -> vector<8x128xf32>
    %137 = arith.addf %123, %136 : vector<8x128xf32>
    %138 = vector.broadcast %73 : vector<8x1xf32> to vector<8x128xf32>
    %139 = arith.addf %137, %138 : vector<8x128xf32>
    %140 = arith.addf %139, %71 : vector<8x128xf32>
    %c0_49 = arith.constant 0 : index
    %c0_50 = arith.constant 0 : index
    %c0_51 = arith.constant 0 : index
    %141 = vector.load %arg6[%c0_49, %c0_50, %c0_51] : memref<1x4x8xf32, #tpu.memory_space<vmem>>, vector<1x4x8xf32>
    %c0_52 = arith.constant 0 : index
    %c0_53 = arith.constant 0 : index
    %142 = vector.load %arg7[%c0_52, %c0_53] : memref<4x1xf32, #tpu.memory_space<vmem>>, vector<4x1xf32>
    %143 = vector.shape_cast %141 : vector<1x4x8xf32> to vector<4x8xf32>
    %cst_54 = arith.constant dense<0.000000e+00> : vector<4x128xf32>
    %144 = tpu.matmul %143, %140, %cst_54 {dimension_numbers = #tpu.dot_dimension_numbers<[1], [0], [0], [1], [0, 0, 1, 1], [], []>} : vector<4x8xf32>, vector<8x128xf32>, vector<4x128xf32> -> vector<4x128xf32>
    %145 = vector.broadcast %142 : vector<4x1xf32> to vector<4x128xf32>
    %146 = arith.addf %144, %145 : vector<4x128xf32>
    %c0_55 = arith.constant 0 : index
    %c0_56 = arith.constant 0 : index
    %c0_57 = arith.constant 0 : index
    %147 = vector.load %arg8[%c0_55, %c0_56, %c0_57] : memref<1x4x128xf32, #tpu.memory_space<vmem>>, vector<1x4x128xf32>
    %148 = vector.shape_cast %147 : vector<1x4x128xf32> to vector<4x128xf32>
    %149 = vector.shape_cast %146 : vector<4x128xf32> to vector<1x4x128xf32>
    tpu.vector_store %arg8[%c0_55, %c0_56, %c0_57], %149 {strides = array<i32>} : memref<1x4x128xf32, #tpu.memory_space<vmem>>, vector<1x4x128xf32>,
    return
  }
  func.func @transform_0(%arg0: i32) -> (i32, i32, i32) {
    %c0_i32 = arith.constant 0 : i32
    %c0_i32_0 = arith.constant 0 : i32
    %c0_i32_1 = arith.constant 0 : i32
    return %arg0, %c0_i32, %c0_i32_0 : i32, i32, i32
  }
  func.func @transform_1(%arg0: i32) -> (i32, i32, i32) {
    %c0_i32 = arith.constant 0 : i32
    %c0_i32_0 = arith.constant 0 : i32
    %c0_i32_1 = arith.constant 0 : i32
    %c0_i32_2 = arith.constant 0 : i32
    return %c0_i32, %c0_i32_0, %c0_i32_1 : i32, i32, i32
  }
  func.func @transform_2(%arg0: i32) -> (i32, i32) {
    %c0_i32 = arith.constant 0 : i32
    %c0_i32_0 = arith.constant 0 : i32
    %c0_i32_1 = arith.constant 0 : i32
    return %c0_i32, %c0_i32_0 : i32, i32
  }
  func.func @transform_3(%arg0: i32) -> (i32, i32, i32) {
    %c0_i32 = arith.constant 0 : i32
    %c0_i32_0 = arith.constant 0 : i32
    %c0_i32_1 = arith.constant 0 : i32
    %c0_i32_2 = arith.constant 0 : i32
    return %c0_i32, %c0_i32_0, %c0_i32_1 : i32, i32, i32
  }
  func.func @transform_4(%arg0: i32) -> (i32, i32) {
    %c0_i32 = arith.constant 0 : i32
    %c0_i32_0 = arith.constant 0 : i32
    %c0_i32_1 = arith.constant 0 : i32
    return %c0_i32, %c0_i32_0 : i32, i32
  }
  func.func @transform_5(%arg0: i32) -> (i32, i32, i32) {
    %c0_i32 = arith.constant 0 : i32
    %c0_i32_0 = arith.constant 0 : i32
    %c0_i32_1 = arith.constant 0 : i32
    %c0_i32_2 = arith.constant 0 : i32
    return %c0_i32, %c0_i32_0, %c0_i32_1 : i32, i32, i32
  }
  func.func @transform_6(%arg0: i32) -> (i32, i32) {
    %c0_i32 = arith.constant 0 : i32
    %c0_i32_0 = arith.constant 0 : i32
    %c0_i32_1 = arith.constant 0 : i32
    return %c0_i32, %c0_i32_0 : i32, i32
  }
  func.func @transform_7(%arg0: i32) -> (i32, i32, i32) {
    %c0_i32 = arith.constant 0 : i32
    %c0_i32_0 = arith.constant 0 : i32
    %c0_i32_1 = arith.constant 0 : i32
    return %arg0, %c0_i32, %c0_i32_0 : i32, i32, i32
  }
}

module attributes {stable_mosaic.version = 11 : i64} {
  func.func @_chain_kernel(%arg0: i32, %arg1: memref<1x4x512xf32, #tpu.memory_space<vmem>>, %arg2: memref<1x1x512xf32, #tpu.memory_space<vmem>>, %arg3: memref<5x4x4xf32, #tpu.memory_space<vmem>>, %arg4: memref<4x1xf32, #tpu.memory_space<vmem>>, %arg5: memref<5x4x4xf32, #tpu.memory_space<vmem>>, %arg6: memref<4x1xf32, #tpu.memory_space<vmem>>, %arg7: memref<5x4x1xf32, #tpu.memory_space<vmem>>, %arg8: memref<4x1xf32, #tpu.memory_space<vmem>>, %arg9: memref<1x4x8xf32, #tpu.memory_space<vmem>>, %arg10: memref<4x1xf32, #tpu.memory_space<vmem>>, %arg11: memref<5x1x4xf32, #tpu.memory_space<vmem>>, %arg12: memref<1x1xf32, #tpu.memory_space<vmem>>, %arg13: memref<1x1x512xf32, #tpu.memory_space<vmem>>) attributes {dimension_semantics = [#tpu.dimension_semantics<parallel>], iteration_bounds = array<i64: 2>, scalar_prefetch = 0 : i64, scratch_operands = 0 : i64, tpu.core_type = #tpu.core_type<tc>, window_params = [{transform_indices = @transform_0, window_bounds = array<i64: 1, 4, 512>}, {transform_indices = @transform_1, window_bounds = array<i64: 1, 1, 512>}, {pipeline_mode = #tpu.pipeline_mode<synchronous>, transform_indices = @transform_2, window_bounds = array<i64: 5, 4, 4>}, {pipeline_mode = #tpu.pipeline_mode<synchronous>, transform_indices = @transform_3, window_bounds = array<i64: 4, 1>}, {pipeline_mode = #tpu.pipeline_mode<synchronous>, transform_indices = @transform_4, window_bounds = array<i64: 5, 4, 4>}, {pipeline_mode = #tpu.pipeline_mode<synchronous>, transform_indices = @transform_5, window_bounds = array<i64: 4, 1>}, {pipeline_mode = #tpu.pipeline_mode<synchronous>, transform_indices = @transform_6, window_bounds = array<i64: 5, 4, 1>}, {pipeline_mode = #tpu.pipeline_mode<synchronous>, transform_indices = @transform_7, window_bounds = array<i64: 4, 1>}, {pipeline_mode = #tpu.pipeline_mode<synchronous>, transform_indices = @transform_8, window_bounds = array<i64: 1, 4, 8>}, {pipeline_mode = #tpu.pipeline_mode<synchronous>, transform_indices = @transform_9, window_bounds = array<i64: 4, 1>}, {pipeline_mode = #tpu.pipeline_mode<synchronous>, transform_indices = @transform_10, window_bounds = array<i64: 5, 1, 4>}, {pipeline_mode = #tpu.pipeline_mode<synchronous>, transform_indices = @transform_11, window_bounds = array<i64: 1, 1>}, {transform_indices = @transform_12, window_bounds = array<i64: 1, 1, 512>}]} {
    %0 = tpu.iota {dimensions = array<i32: 1>} : vector<1x512xi32>
    %c0 = arith.constant 0 : index
    %c0_0 = arith.constant 0 : index
    %c0_1 = arith.constant 0 : index
    %1 = vector.load %arg1[%c0, %c0_0, %c0_1] : memref<1x4x512xf32, #tpu.memory_space<vmem>>, vector<1x4x512xf32>
    %2 = vector.shape_cast %1 : vector<1x4x512xf32> to vector<4x512xf32>
    %c0_2 = arith.constant 0 : index
    %c0_3 = arith.constant 0 : index
    %c0_4 = arith.constant 0 : index
    %3 = vector.load %arg3[%c0_2, %c0_3, %c0_4] : memref<5x4x4xf32, #tpu.memory_space<vmem>>, vector<5x4x4xf32>
    %c0_5 = arith.constant 0 : index
    %c0_6 = arith.constant 0 : index
    %4 = vector.load %arg4[%c0_5, %c0_6] : memref<4x1xf32, #tpu.memory_space<vmem>>, vector<4x1xf32>
    %cst = arith.constant 0.000000e+00 : f32
    %5 = vector.broadcast %cst : f32 to vector<4x512xf32>
    %6 = arith.cmpf oge, %2, %5 : vector<4x512xf32>
    %cst_7 = arith.constant 0.00999999977 : f32
    %7 = vector.broadcast %cst_7 : f32 to vector<4x512xf32>
    %8 = arith.mulf %7, %2 : vector<4x512xf32>
    %9 = arith.select %6, %2, %8 : vector<4x512xi1>, vector<4x512xf32>
    %c2_i32 = arith.constant 2 : i32
    %10 = tpu.dynamic_rotate %9 by %c2_i32 dim 1 : vector<4x512xf32>, i32 -> vector<4x512xf32>
    %c2_i32_8 = arith.constant 2 : i32
    %11 = vector.broadcast %c2_i32_8 : i32 to vector<1x512xi32>
    %12 = arith.cmpi sge, %0, %11 : vector<1x512xi32>
    %c514_i32 = arith.constant 514 : i32
    %13 = vector.broadcast %c514_i32 : i32 to vector<1x512xi32>
    %14 = arith.cmpi slt, %0, %13 : vector<1x512xi32>
    %15 = arith.andi %12, %14 : vector<1x512xi1>
    %cst_9 = arith.constant 0.000000e+00 : f32
    %16 = vector.shape_cast %15 : vector<1x512xi1> to vector<1x512xi1>
    %17 = vector.broadcast %16 : vector<1x512xi1> to vector<4x512xi1>
    %18 = vector.broadcast %cst_9 : f32 to vector<4x512xf32>
    %19 = arith.select %17, %10, %18 : vector<4x512xi1>, vector<4x512xf32>
    %20 = vector.extract_strided_slice %3 {offsets = [0, 0, 0], sizes = [1, 4, 4], strides = [1, 1, 1]} : vector<5x4x4xf32> to vector<1x4x4xf32>
    %21 = vector.shape_cast %20 : vector<1x4x4xf32> to vector<4x4xf32>
    %cst_10 = arith.constant dense<0.000000e+00> : vector<4x512xf32>
    %22 = tpu.matmul %21, %19, %cst_10 {dimension_numbers = #tpu.dot_dimension_numbers<[1], [0], [0], [1], [0, 0, 1, 1], [], []>} : vector<4x4xf32>, vector<4x512xf32>, vector<4x512xf32> -> vector<4x512xf32>
    %c1_i32 = arith.constant 1 : i32
    %23 = tpu.dynamic_rotate %9 by %c1_i32 dim 1 : vector<4x512xf32>, i32 -> vector<4x512xf32>
    %c1_i32_11 = arith.constant 1 : i32
    %24 = vector.broadcast %c1_i32_11 : i32 to vector<1x512xi32>
    %25 = arith.cmpi sge, %0, %24 : vector<1x512xi32>
    %c513_i32 = arith.constant 513 : i32
    %26 = vector.broadcast %c513_i32 : i32 to vector<1x512xi32>
    %27 = arith.cmpi slt, %0, %26 : vector<1x512xi32>
    %28 = arith.andi %25, %27 : vector<1x512xi1>
    %cst_12 = arith.constant 0.000000e+00 : f32
    %29 = vector.shape_cast %28 : vector<1x512xi1> to vector<1x512xi1>
    %30 = vector.broadcast %29 : vector<1x512xi1> to vector<4x512xi1>
    %31 = vector.broadcast %cst_12 : f32 to vector<4x512xf32>
    %32 = arith.select %30, %23, %31 : vector<4x512xi1>, vector<4x512xf32>
    %33 = vector.extract_strided_slice %3 {offsets = [1, 0, 0], sizes = [1, 4, 4], strides = [1, 1, 1]} : vector<5x4x4xf32> to vector<1x4x4xf32>
    %34 = vector.shape_cast %33 : vector<1x4x4xf32> to vector<4x4xf32>
    %cst_13 = arith.constant dense<0.000000e+00> : vector<4x512xf32>
    %35 = tpu.matmul %34, %32, %cst_13 {dimension_numbers = #tpu.dot_dimension_numbers<[1], [0], [0], [1], [0, 0, 1, 1], [], []>} : vector<4x4xf32>, vector<4x512xf32>, vector<4x512xf32> -> vector<4x512xf32>
    %36 = arith.addf %22, %35 : vector<4x512xf32>
    %37 = vector.extract_strided_slice %3 {offsets = [2, 0, 0], sizes = [1, 4, 4], strides = [1, 1, 1]} : vector<5x4x4xf32> to vector<1x4x4xf32>
    %38 = vector.shape_cast %37 : vector<1x4x4xf32> to vector<4x4xf32>
    %cst_14 = arith.constant dense<0.000000e+00> : vector<4x512xf32>
    %39 = tpu.matmul %38, %9, %cst_14 {dimension_numbers = #tpu.dot_dimension_numbers<[1], [0], [0], [1], [0, 0, 1, 1], [], []>} : vector<4x4xf32>, vector<4x512xf32>, vector<4x512xf32> -> vector<4x512xf32>
    %40 = arith.addf %36, %39 : vector<4x512xf32>
    %c511_i32 = arith.constant 511 : i32
    %41 = tpu.dynamic_rotate %9 by %c511_i32 dim 1 : vector<4x512xf32>, i32 -> vector<4x512xf32>
    %c-1_i32 = arith.constant -1 : i32
    %42 = vector.broadcast %c-1_i32 : i32 to vector<1x512xi32>
    %43 = arith.cmpi sge, %0, %42 : vector<1x512xi32>
    %c511_i32_15 = arith.constant 511 : i32
    %44 = vector.broadcast %c511_i32_15 : i32 to vector<1x512xi32>
    %45 = arith.cmpi slt, %0, %44 : vector<1x512xi32>
    %46 = arith.andi %43, %45 : vector<1x512xi1>
    %cst_16 = arith.constant 0.000000e+00 : f32
    %47 = vector.shape_cast %46 : vector<1x512xi1> to vector<1x512xi1>
    %48 = vector.broadcast %47 : vector<1x512xi1> to vector<4x512xi1>
    %49 = vector.broadcast %cst_16 : f32 to vector<4x512xf32>
    %50 = arith.select %48, %41, %49 : vector<4x512xi1>, vector<4x512xf32>
    %51 = vector.extract_strided_slice %3 {offsets = [3, 0, 0], sizes = [1, 4, 4], strides = [1, 1, 1]} : vector<5x4x4xf32> to vector<1x4x4xf32>
    %52 = vector.shape_cast %51 : vector<1x4x4xf32> to vector<4x4xf32>
    %cst_17 = arith.constant dense<0.000000e+00> : vector<4x512xf32>
    %53 = tpu.matmul %52, %50, %cst_17 {dimension_numbers = #tpu.dot_dimension_numbers<[1], [0], [0], [1], [0, 0, 1, 1], [], []>} : vector<4x4xf32>, vector<4x512xf32>, vector<4x512xf32> -> vector<4x512xf32>
    %54 = arith.addf %40, %53 : vector<4x512xf32>
    %c510_i32 = arith.constant 510 : i32
    %55 = tpu.dynamic_rotate %9 by %c510_i32 dim 1 : vector<4x512xf32>, i32 -> vector<4x512xf32>
    %c-2_i32 = arith.constant -2 : i32
    %56 = vector.broadcast %c-2_i32 : i32 to vector<1x512xi32>
    %57 = arith.cmpi sge, %0, %56 : vector<1x512xi32>
    %c510_i32_18 = arith.constant 510 : i32
    %58 = vector.broadcast %c510_i32_18 : i32 to vector<1x512xi32>
    %59 = arith.cmpi slt, %0, %58 : vector<1x512xi32>
    %60 = arith.andi %57, %59 : vector<1x512xi1>
    %cst_19 = arith.constant 0.000000e+00 : f32
    %61 = vector.shape_cast %60 : vector<1x512xi1> to vector<1x512xi1>
    %62 = vector.broadcast %61 : vector<1x512xi1> to vector<4x512xi1>
    %63 = vector.broadcast %cst_19 : f32 to vector<4x512xf32>
    %64 = arith.select %62, %55, %63 : vector<4x512xi1>, vector<4x512xf32>
    %65 = vector.extract_strided_slice %3 {offsets = [4, 0, 0], sizes = [1, 4, 4], strides = [1, 1, 1]} : vector<5x4x4xf32> to vector<1x4x4xf32>
    %66 = vector.shape_cast %65 : vector<1x4x4xf32> to vector<4x4xf32>
    %cst_20 = arith.constant dense<0.000000e+00> : vector<4x512xf32>
    %67 = tpu.matmul %66, %64, %cst_20 {dimension_numbers = #tpu.dot_dimension_numbers<[1], [0], [0], [1], [0, 0, 1, 1], [], []>} : vector<4x4xf32>, vector<4x512xf32>, vector<4x512xf32> -> vector<4x512xf32>
    %68 = arith.addf %54, %67 : vector<4x512xf32>
    %69 = vector.broadcast %4 : vector<4x1xf32> to vector<4x512xf32>
    %70 = arith.addf %68, %69 : vector<4x512xf32>
    %71 = arith.addf %70, %2 : vector<4x512xf32>
    %c0_21 = arith.constant 0 : index
    %c0_22 = arith.constant 0 : index
    %c0_23 = arith.constant 0 : index
    %72 = vector.load %arg5[%c0_21, %c0_22, %c0_23] : memref<5x4x4xf32, #tpu.memory_space<vmem>>, vector<5x4x4xf32>
    %c0_24 = arith.constant 0 : index
    %c0_25 = arith.constant 0 : index
    %73 = vector.load %arg6[%c0_24, %c0_25] : memref<4x1xf32, #tpu.memory_space<vmem>>, vector<4x1xf32>
    %cst_26 = arith.constant 0.000000e+00 : f32
    %74 = vector.broadcast %cst_26 : f32 to vector<4x512xf32>
    %75 = arith.cmpf oge, %71, %74 : vector<4x512xf32>
    %cst_27 = arith.constant 0.00999999977 : f32
    %76 = vector.broadcast %cst_27 : f32 to vector<4x512xf32>
    %77 = arith.mulf %76, %71 : vector<4x512xf32>
    %78 = arith.select %75, %71, %77 : vector<4x512xi1>, vector<4x512xf32>
    %c2_i32_28 = arith.constant 2 : i32
    %79 = tpu.dynamic_rotate %78 by %c2_i32_28 dim 1 : vector<4x512xf32>, i32 -> vector<4x512xf32>
    %c2_i32_29 = arith.constant 2 : i32
    %80 = vector.broadcast %c2_i32_29 : i32 to vector<1x512xi32>
    %81 = arith.cmpi sge, %0, %80 : vector<1x512xi32>
    %c514_i32_30 = arith.constant 514 : i32
    %82 = vector.broadcast %c514_i32_30 : i32 to vector<1x512xi32>
    %83 = arith.cmpi slt, %0, %82 : vector<1x512xi32>
    %84 = arith.andi %81, %83 : vector<1x512xi1>
    %cst_31 = arith.constant 0.000000e+00 : f32
    %85 = vector.shape_cast %84 : vector<1x512xi1> to vector<1x512xi1>
    %86 = vector.broadcast %85 : vector<1x512xi1> to vector<4x512xi1>
    %87 = vector.broadcast %cst_31 : f32 to vector<4x512xf32>
    %88 = arith.select %86, %79, %87 : vector<4x512xi1>, vector<4x512xf32>
    %89 = vector.extract_strided_slice %72 {offsets = [0, 0, 0], sizes = [1, 4, 4], strides = [1, 1, 1]} : vector<5x4x4xf32> to vector<1x4x4xf32>
    %90 = vector.shape_cast %89 : vector<1x4x4xf32> to vector<4x4xf32>
    %cst_32 = arith.constant dense<0.000000e+00> : vector<4x512xf32>
    %91 = tpu.matmul %90, %88, %cst_32 {dimension_numbers = #tpu.dot_dimension_numbers<[1], [0], [0], [1], [0, 0, 1, 1], [], []>} : vector<4x4xf32>, vector<4x512xf32>, vector<4x512xf32> -> vector<4x512xf32>
    %c1_i32_33 = arith.constant 1 : i32
    %92 = tpu.dynamic_rotate %78 by %c1_i32_33 dim 1 : vector<4x512xf32>, i32 -> vector<4x512xf32>
    %c1_i32_34 = arith.constant 1 : i32
    %93 = vector.broadcast %c1_i32_34 : i32 to vector<1x512xi32>
    %94 = arith.cmpi sge, %0, %93 : vector<1x512xi32>
    %c513_i32_35 = arith.constant 513 : i32
    %95 = vector.broadcast %c513_i32_35 : i32 to vector<1x512xi32>
    %96 = arith.cmpi slt, %0, %95 : vector<1x512xi32>
    %97 = arith.andi %94, %96 : vector<1x512xi1>
    %cst_36 = arith.constant 0.000000e+00 : f32
    %98 = vector.shape_cast %97 : vector<1x512xi1> to vector<1x512xi1>
    %99 = vector.broadcast %98 : vector<1x512xi1> to vector<4x512xi1>
    %100 = vector.broadcast %cst_36 : f32 to vector<4x512xf32>
    %101 = arith.select %99, %92, %100 : vector<4x512xi1>, vector<4x512xf32>
    %102 = vector.extract_strided_slice %72 {offsets = [1, 0, 0], sizes = [1, 4, 4], strides = [1, 1, 1]} : vector<5x4x4xf32> to vector<1x4x4xf32>
    %103 = vector.shape_cast %102 : vector<1x4x4xf32> to vector<4x4xf32>
    %cst_37 = arith.constant dense<0.000000e+00> : vector<4x512xf32>
    %104 = tpu.matmul %103, %101, %cst_37 {dimension_numbers = #tpu.dot_dimension_numbers<[1], [0], [0], [1], [0, 0, 1, 1], [], []>} : vector<4x4xf32>, vector<4x512xf32>, vector<4x512xf32> -> vector<4x512xf32>
    %105 = arith.addf %91, %104 : vector<4x512xf32>
    %106 = vector.extract_strided_slice %72 {offsets = [2, 0, 0], sizes = [1, 4, 4], strides = [1, 1, 1]} : vector<5x4x4xf32> to vector<1x4x4xf32>
    %107 = vector.shape_cast %106 : vector<1x4x4xf32> to vector<4x4xf32>
    %cst_38 = arith.constant dense<0.000000e+00> : vector<4x512xf32>
    %108 = tpu.matmul %107, %78, %cst_38 {dimension_numbers = #tpu.dot_dimension_numbers<[1], [0], [0], [1], [0, 0, 1, 1], [], []>} : vector<4x4xf32>, vector<4x512xf32>, vector<4x512xf32> -> vector<4x512xf32>
    %109 = arith.addf %105, %108 : vector<4x512xf32>
    %c511_i32_39 = arith.constant 511 : i32
    %110 = tpu.dynamic_rotate %78 by %c511_i32_39 dim 1 : vector<4x512xf32>, i32 -> vector<4x512xf32>
    %c-1_i32_40 = arith.constant -1 : i32
    %111 = vector.broadcast %c-1_i32_40 : i32 to vector<1x512xi32>
    %112 = arith.cmpi sge, %0, %111 : vector<1x512xi32>
    %c511_i32_41 = arith.constant 511 : i32
    %113 = vector.broadcast %c511_i32_41 : i32 to vector<1x512xi32>
    %114 = arith.cmpi slt, %0, %113 : vector<1x512xi32>
    %115 = arith.andi %112, %114 : vector<1x512xi1>
    %cst_42 = arith.constant 0.000000e+00 : f32
    %116 = vector.shape_cast %115 : vector<1x512xi1> to vector<1x512xi1>
    %117 = vector.broadcast %116 : vector<1x512xi1> to vector<4x512xi1>
    %118 = vector.broadcast %cst_42 : f32 to vector<4x512xf32>
    %119 = arith.select %117, %110, %118 : vector<4x512xi1>, vector<4x512xf32>
    %120 = vector.extract_strided_slice %72 {offsets = [3, 0, 0], sizes = [1, 4, 4], strides = [1, 1, 1]} : vector<5x4x4xf32> to vector<1x4x4xf32>
    %121 = vector.shape_cast %120 : vector<1x4x4xf32> to vector<4x4xf32>
    %cst_43 = arith.constant dense<0.000000e+00> : vector<4x512xf32>
    %122 = tpu.matmul %121, %119, %cst_43 {dimension_numbers = #tpu.dot_dimension_numbers<[1], [0], [0], [1], [0, 0, 1, 1], [], []>} : vector<4x4xf32>, vector<4x512xf32>, vector<4x512xf32> -> vector<4x512xf32>
    %123 = arith.addf %109, %122 : vector<4x512xf32>
    %c510_i32_44 = arith.constant 510 : i32
    %124 = tpu.dynamic_rotate %78 by %c510_i32_44 dim 1 : vector<4x512xf32>, i32 -> vector<4x512xf32>
    %c-2_i32_45 = arith.constant -2 : i32
    %125 = vector.broadcast %c-2_i32_45 : i32 to vector<1x512xi32>
    %126 = arith.cmpi sge, %0, %125 : vector<1x512xi32>
    %c510_i32_46 = arith.constant 510 : i32
    %127 = vector.broadcast %c510_i32_46 : i32 to vector<1x512xi32>
    %128 = arith.cmpi slt, %0, %127 : vector<1x512xi32>
    %129 = arith.andi %126, %128 : vector<1x512xi1>
    %cst_47 = arith.constant 0.000000e+00 : f32
    %130 = vector.shape_cast %129 : vector<1x512xi1> to vector<1x512xi1>
    %131 = vector.broadcast %130 : vector<1x512xi1> to vector<4x512xi1>
    %132 = vector.broadcast %cst_47 : f32 to vector<4x512xf32>
    %133 = arith.select %131, %124, %132 : vector<4x512xi1>, vector<4x512xf32>
    %134 = vector.extract_strided_slice %72 {offsets = [4, 0, 0], sizes = [1, 4, 4], strides = [1, 1, 1]} : vector<5x4x4xf32> to vector<1x4x4xf32>
    %135 = vector.shape_cast %134 : vector<1x4x4xf32> to vector<4x4xf32>
    %cst_48 = arith.constant dense<0.000000e+00> : vector<4x512xf32>
    %136 = tpu.matmul %135, %133, %cst_48 {dimension_numbers = #tpu.dot_dimension_numbers<[1], [0], [0], [1], [0, 0, 1, 1], [], []>} : vector<4x4xf32>, vector<4x512xf32>, vector<4x512xf32> -> vector<4x512xf32>
    %137 = arith.addf %123, %136 : vector<4x512xf32>
    %138 = vector.broadcast %73 : vector<4x1xf32> to vector<4x512xf32>
    %139 = arith.addf %137, %138 : vector<4x512xf32>
    %140 = arith.addf %139, %71 : vector<4x512xf32>
    %c0_49 = arith.constant 0 : index
    %c0_50 = arith.constant 0 : index
    %c0_51 = arith.constant 0 : index
    %141 = vector.load %arg2[%c0_49, %c0_50, %c0_51] : memref<1x1x512xf32, #tpu.memory_space<vmem>>, vector<1x1x512xf32>
    %142 = vector.shape_cast %141 : vector<1x1x512xf32> to vector<1x512xf32>
    %c0_52 = arith.constant 0 : index
    %c0_53 = arith.constant 0 : index
    %c0_54 = arith.constant 0 : index
    %143 = vector.load %arg7[%c0_52, %c0_53, %c0_54] : memref<5x4x1xf32, #tpu.memory_space<vmem>>, vector<5x4x1xf32>
    %c0_55 = arith.constant 0 : index
    %c0_56 = arith.constant 0 : index
    %144 = vector.load %arg8[%c0_55, %c0_56] : memref<4x1xf32, #tpu.memory_space<vmem>>, vector<4x1xf32>
    %c2_i32_57 = arith.constant 2 : i32
    %145 = tpu.dynamic_rotate %142 by %c2_i32_57 dim 1 : vector<1x512xf32>, i32 -> vector<1x512xf32>
    %c2_i32_58 = arith.constant 2 : i32
    %146 = vector.broadcast %c2_i32_58 : i32 to vector<1x512xi32>
    %147 = arith.cmpi sge, %0, %146 : vector<1x512xi32>
    %c514_i32_59 = arith.constant 514 : i32
    %148 = vector.broadcast %c514_i32_59 : i32 to vector<1x512xi32>
    %149 = arith.cmpi slt, %0, %148 : vector<1x512xi32>
    %150 = arith.andi %147, %149 : vector<1x512xi1>
    %cst_60 = arith.constant 0.000000e+00 : f32
    %151 = vector.broadcast %cst_60 : f32 to vector<1x512xf32>
    %152 = arith.select %150, %145, %151 : vector<1x512xi1>, vector<1x512xf32>
    %153 = vector.extract_strided_slice %143 {offsets = [0, 0, 0], sizes = [1, 4, 1], strides = [1, 1, 1]} : vector<5x4x1xf32> to vector<1x4x1xf32>
    %154 = vector.shape_cast %153 : vector<1x4x1xf32> to vector<4x1xf32>
    %155 = vector.broadcast %154 : vector<4x1xf32> to vector<4x512xf32>
    %156 = vector.broadcast %152 : vector<1x512xf32> to vector<4x512xf32>
    %157 = arith.mulf %155, %156 : vector<4x512xf32>
    %c1_i32_61 = arith.constant 1 : i32
    %158 = tpu.dynamic_rotate %142 by %c1_i32_61 dim 1 : vector<1x512xf32>, i32 -> vector<1x512xf32>
    %c1_i32_62 = arith.constant 1 : i32
    %159 = vector.broadcast %c1_i32_62 : i32 to vector<1x512xi32>
    %160 = arith.cmpi sge, %0, %159 : vector<1x512xi32>
    %c513_i32_63 = arith.constant 513 : i32
    %161 = vector.broadcast %c513_i32_63 : i32 to vector<1x512xi32>
    %162 = arith.cmpi slt, %0, %161 : vector<1x512xi32>
    %163 = arith.andi %160, %162 : vector<1x512xi1>
    %cst_64 = arith.constant 0.000000e+00 : f32
    %164 = vector.broadcast %cst_64 : f32 to vector<1x512xf32>
    %165 = arith.select %163, %158, %164 : vector<1x512xi1>, vector<1x512xf32>
    %166 = vector.extract_strided_slice %143 {offsets = [1, 0, 0], sizes = [1, 4, 1], strides = [1, 1, 1]} : vector<5x4x1xf32> to vector<1x4x1xf32>
    %167 = vector.shape_cast %166 : vector<1x4x1xf32> to vector<4x1xf32>
    %168 = vector.broadcast %167 : vector<4x1xf32> to vector<4x512xf32>
    %169 = vector.broadcast %165 : vector<1x512xf32> to vector<4x512xf32>
    %170 = arith.mulf %168, %169 : vector<4x512xf32>
    %171 = arith.addf %157, %170 : vector<4x512xf32>
    %172 = vector.extract_strided_slice %143 {offsets = [2, 0, 0], sizes = [1, 4, 1], strides = [1, 1, 1]} : vector<5x4x1xf32> to vector<1x4x1xf32>
    %173 = vector.shape_cast %172 : vector<1x4x1xf32> to vector<4x1xf32>
    %174 = vector.broadcast %173 : vector<4x1xf32> to vector<4x512xf32>
    %175 = vector.broadcast %142 : vector<1x512xf32> to vector<4x512xf32>
    %176 = arith.mulf %174, %175 : vector<4x512xf32>
    %177 = arith.addf %171, %176 : vector<4x512xf32>
    %c511_i32_65 = arith.constant 511 : i32
    %178 = tpu.dynamic_rotate %142 by %c511_i32_65 dim 1 : vector<1x512xf32>, i32 -> vector<1x512xf32>
    %c-1_i32_66 = arith.constant -1 : i32
    %179 = vector.broadcast %c-1_i32_66 : i32 to vector<1x512xi32>
    %180 = arith.cmpi sge, %0, %179 : vector<1x512xi32>
    %c511_i32_67 = arith.constant 511 : i32
    %181 = vector.broadcast %c511_i32_67 : i32 to vector<1x512xi32>
    %182 = arith.cmpi slt, %0, %181 : vector<1x512xi32>
    %183 = arith.andi %180, %182 : vector<1x512xi1>
    %cst_68 = arith.constant 0.000000e+00 : f32
    %184 = vector.broadcast %cst_68 : f32 to vector<1x512xf32>
    %185 = arith.select %183, %178, %184 : vector<1x512xi1>, vector<1x512xf32>
    %186 = vector.extract_strided_slice %143 {offsets = [3, 0, 0], sizes = [1, 4, 1], strides = [1, 1, 1]} : vector<5x4x1xf32> to vector<1x4x1xf32>
    %187 = vector.shape_cast %186 : vector<1x4x1xf32> to vector<4x1xf32>
    %188 = vector.broadcast %187 : vector<4x1xf32> to vector<4x512xf32>
    %189 = vector.broadcast %185 : vector<1x512xf32> to vector<4x512xf32>
    %190 = arith.mulf %188, %189 : vector<4x512xf32>
    %191 = arith.addf %177, %190 : vector<4x512xf32>
    %c510_i32_69 = arith.constant 510 : i32
    %192 = tpu.dynamic_rotate %142 by %c510_i32_69 dim 1 : vector<1x512xf32>, i32 -> vector<1x512xf32>
    %c-2_i32_70 = arith.constant -2 : i32
    %193 = vector.broadcast %c-2_i32_70 : i32 to vector<1x512xi32>
    %194 = arith.cmpi sge, %0, %193 : vector<1x512xi32>
    %c510_i32_71 = arith.constant 510 : i32
    %195 = vector.broadcast %c510_i32_71 : i32 to vector<1x512xi32>
    %196 = arith.cmpi slt, %0, %195 : vector<1x512xi32>
    %197 = arith.andi %194, %196 : vector<1x512xi1>
    %cst_72 = arith.constant 0.000000e+00 : f32
    %198 = vector.broadcast %cst_72 : f32 to vector<1x512xf32>
    %199 = arith.select %197, %192, %198 : vector<1x512xi1>, vector<1x512xf32>
    %200 = vector.extract_strided_slice %143 {offsets = [4, 0, 0], sizes = [1, 4, 1], strides = [1, 1, 1]} : vector<5x4x1xf32> to vector<1x4x1xf32>
    %201 = vector.shape_cast %200 : vector<1x4x1xf32> to vector<4x1xf32>
    %202 = vector.broadcast %201 : vector<4x1xf32> to vector<4x512xf32>
    %203 = vector.broadcast %199 : vector<1x512xf32> to vector<4x512xf32>
    %204 = arith.mulf %202, %203 : vector<4x512xf32>
    %205 = arith.addf %191, %204 : vector<4x512xf32>
    %206 = vector.broadcast %144 : vector<4x1xf32> to vector<4x512xf32>
    %207 = arith.addf %205, %206 : vector<4x512xf32>
    %208 = tpu.concatenate %207, %140 in 0 : vector<4x512xf32>, vector<4x512xf32> -> vector<8x512xf32>
    %c0_73 = arith.constant 0 : index
    %c0_74 = arith.constant 0 : index
    %c0_75 = arith.constant 0 : index
    %209 = vector.load %arg9[%c0_73, %c0_74, %c0_75] : memref<1x4x8xf32, #tpu.memory_space<vmem>>, vector<1x4x8xf32>
    %c0_76 = arith.constant 0 : index
    %c0_77 = arith.constant 0 : index
    %210 = vector.load %arg10[%c0_76, %c0_77] : memref<4x1xf32, #tpu.memory_space<vmem>>, vector<4x1xf32>
    %211 = vector.shape_cast %209 : vector<1x4x8xf32> to vector<4x8xf32>
    %cst_78 = arith.constant dense<0.000000e+00> : vector<4x512xf32>
    %212 = tpu.matmul %211, %208, %cst_78 {dimension_numbers = #tpu.dot_dimension_numbers<[1], [0], [0], [1], [0, 0, 1, 1], [], []>} : vector<4x8xf32>, vector<8x512xf32>, vector<4x512xf32> -> vector<4x512xf32>
    %213 = vector.broadcast %210 : vector<4x1xf32> to vector<4x512xf32>
    %214 = arith.addf %212, %213 : vector<4x512xf32>
    %c0_79 = arith.constant 0 : index
    %c0_80 = arith.constant 0 : index
    %c0_81 = arith.constant 0 : index
    %215 = vector.load %arg11[%c0_79, %c0_80, %c0_81] : memref<5x1x4xf32, #tpu.memory_space<vmem>>, vector<5x1x4xf32>
    %c0_82 = arith.constant 0 : index
    %c0_83 = arith.constant 0 : index
    %216 = vector.load %arg12[%c0_82, %c0_83] : memref<1x1xf32, #tpu.memory_space<vmem>>, vector<1x1xf32>
    %c2_i32_84 = arith.constant 2 : i32
    %217 = tpu.dynamic_rotate %214 by %c2_i32_84 dim 1 : vector<4x512xf32>, i32 -> vector<4x512xf32>
    %c2_i32_85 = arith.constant 2 : i32
    %218 = vector.broadcast %c2_i32_85 : i32 to vector<1x512xi32>
    %219 = arith.cmpi sge, %0, %218 : vector<1x512xi32>
    %c514_i32_86 = arith.constant 514 : i32
    %220 = vector.broadcast %c514_i32_86 : i32 to vector<1x512xi32>
    %221 = arith.cmpi slt, %0, %220 : vector<1x512xi32>
    %222 = arith.andi %219, %221 : vector<1x512xi1>
    %cst_87 = arith.constant 0.000000e+00 : f32
    %223 = vector.shape_cast %222 : vector<1x512xi1> to vector<1x512xi1>
    %224 = vector.broadcast %223 : vector<1x512xi1> to vector<4x512xi1>
    %225 = vector.broadcast %cst_87 : f32 to vector<4x512xf32>
    %226 = arith.select %224, %217, %225 : vector<4x512xi1>, vector<4x512xf32>
    %227 = vector.extract_strided_slice %215 {offsets = [0, 0, 0], sizes = [1, 1, 4], strides = [1, 1, 1]} : vector<5x1x4xf32> to vector<1x1x4xf32>
    %228 = vector.shape_cast %227 : vector<1x1x4xf32> to vector<1x4xf32>
    %cst_88 = arith.constant dense<0.000000e+00> : vector<1x512xf32>
    %229 = tpu.matmul %228, %226, %cst_88 {dimension_numbers = #tpu.dot_dimension_numbers<[1], [0], [0], [1], [0, 0, 1, 1], [], []>} : vector<1x4xf32>, vector<4x512xf32>, vector<1x512xf32> -> vector<1x512xf32>
    %c1_i32_89 = arith.constant 1 : i32
    %230 = tpu.dynamic_rotate %214 by %c1_i32_89 dim 1 : vector<4x512xf32>, i32 -> vector<4x512xf32>
    %c1_i32_90 = arith.constant 1 : i32
    %231 = vector.broadcast %c1_i32_90 : i32 to vector<1x512xi32>
    %232 = arith.cmpi sge, %0, %231 : vector<1x512xi32>
    %c513_i32_91 = arith.constant 513 : i32
    %233 = vector.broadcast %c513_i32_91 : i32 to vector<1x512xi32>
    %234 = arith.cmpi slt, %0, %233 : vector<1x512xi32>
    %235 = arith.andi %232, %234 : vector<1x512xi1>
    %cst_92 = arith.constant 0.000000e+00 : f32
    %236 = vector.shape_cast %235 : vector<1x512xi1> to vector<1x512xi1>
    %237 = vector.broadcast %236 : vector<1x512xi1> to vector<4x512xi1>
    %238 = vector.broadcast %cst_92 : f32 to vector<4x512xf32>
    %239 = arith.select %237, %230, %238 : vector<4x512xi1>, vector<4x512xf32>
    %240 = vector.extract_strided_slice %215 {offsets = [1, 0, 0], sizes = [1, 1, 4], strides = [1, 1, 1]} : vector<5x1x4xf32> to vector<1x1x4xf32>
    %241 = vector.shape_cast %240 : vector<1x1x4xf32> to vector<1x4xf32>
    %cst_93 = arith.constant dense<0.000000e+00> : vector<1x512xf32>
    %242 = tpu.matmul %241, %239, %cst_93 {dimension_numbers = #tpu.dot_dimension_numbers<[1], [0], [0], [1], [0, 0, 1, 1], [], []>} : vector<1x4xf32>, vector<4x512xf32>, vector<1x512xf32> -> vector<1x512xf32>
    %243 = arith.addf %229, %242 : vector<1x512xf32>
    %244 = vector.extract_strided_slice %215 {offsets = [2, 0, 0], sizes = [1, 1, 4], strides = [1, 1, 1]} : vector<5x1x4xf32> to vector<1x1x4xf32>
    %245 = vector.shape_cast %244 : vector<1x1x4xf32> to vector<1x4xf32>
    %cst_94 = arith.constant dense<0.000000e+00> : vector<1x512xf32>
    %246 = tpu.matmul %245, %214, %cst_94 {dimension_numbers = #tpu.dot_dimension_numbers<[1], [0], [0], [1], [0, 0, 1, 1], [], []>} : vector<1x4xf32>, vector<4x512xf32>, vector<1x512xf32> -> vector<1x512xf32>
    %247 = arith.addf %243, %246 : vector<1x512xf32>
    %c511_i32_95 = arith.constant 511 : i32
    %248 = tpu.dynamic_rotate %214 by %c511_i32_95 dim 1 : vector<4x512xf32>, i32 -> vector<4x512xf32>
    %c-1_i32_96 = arith.constant -1 : i32
    %249 = vector.broadcast %c-1_i32_96 : i32 to vector<1x512xi32>
    %250 = arith.cmpi sge, %0, %249 : vector<1x512xi32>
    %c511_i32_97 = arith.constant 511 : i32
    %251 = vector.broadcast %c511_i32_97 : i32 to vector<1x512xi32>
    %252 = arith.cmpi slt, %0, %251 : vector<1x512xi32>
    %253 = arith.andi %250, %252 : vector<1x512xi1>
    %cst_98 = arith.constant 0.000000e+00 : f32
    %254 = vector.shape_cast %253 : vector<1x512xi1> to vector<1x512xi1>
    %255 = vector.broadcast %254 : vector<1x512xi1> to vector<4x512xi1>
    %256 = vector.broadcast %cst_98 : f32 to vector<4x512xf32>
    %257 = arith.select %255, %248, %256 : vector<4x512xi1>, vector<4x512xf32>
    %258 = vector.extract_strided_slice %215 {offsets = [3, 0, 0], sizes = [1, 1, 4], strides = [1, 1, 1]} : vector<5x1x4xf32> to vector<1x1x4xf32>
    %259 = vector.shape_cast %258 : vector<1x1x4xf32> to vector<1x4xf32>
    %cst_99 = arith.constant dense<0.000000e+00> : vector<1x512xf32>
    %260 = tpu.matmul %259, %257, %cst_99 {dimension_numbers = #tpu.dot_dimension_numbers<[1], [0], [0], [1], [0, 0, 1, 1], [], []>} : vector<1x4xf32>, vector<4x512xf32>, vector<1x512xf32> -> vector<1x512xf32>
    %261 = arith.addf %247, %260 : vector<1x512xf32>
    %c510_i32_100 = arith.constant 510 : i32
    %262 = tpu.dynamic_rotate %214 by %c510_i32_100 dim 1 : vector<4x512xf32>, i32 -> vector<4x512xf32>
    %c-2_i32_101 = arith.constant -2 : i32
    %263 = vector.broadcast %c-2_i32_101 : i32 to vector<1x512xi32>
    %264 = arith.cmpi sge, %0, %263 : vector<1x512xi32>
    %c510_i32_102 = arith.constant 510 : i32
    %265 = vector.broadcast %c510_i32_102 : i32 to vector<1x512xi32>
    %266 = arith.cmpi slt, %0, %265 : vector<1x512xi32>
    %267 = arith.andi %264, %266 : vector<1x512xi1>
    %cst_103 = arith.constant 0.000000e+00 : f32
    %268 = vector.shape_cast %267 : vector<1x512xi1> to vector<1x512xi1>
    %269 = vector.broadcast %268 : vector<1x512xi1> to vector<4x512xi1>
    %270 = vector.broadcast %cst_103 : f32 to vector<4x512xf32>
    %271 = arith.select %269, %262, %270 : vector<4x512xi1>, vector<4x512xf32>
    %272 = vector.extract_strided_slice %215 {offsets = [4, 0, 0], sizes = [1, 1, 4], strides = [1, 1, 1]} : vector<5x1x4xf32> to vector<1x1x4xf32>
    %273 = vector.shape_cast %272 : vector<1x1x4xf32> to vector<1x4xf32>
    %cst_104 = arith.constant dense<0.000000e+00> : vector<1x512xf32>
    %274 = tpu.matmul %273, %271, %cst_104 {dimension_numbers = #tpu.dot_dimension_numbers<[1], [0], [0], [1], [0, 0, 1, 1], [], []>} : vector<1x4xf32>, vector<4x512xf32>, vector<1x512xf32> -> vector<1x512xf32>
    %275 = arith.addf %261, %274 : vector<1x512xf32>
    %276 = vector.broadcast %216 : vector<1x1xf32> to vector<1x512xf32>
    %277 = arith.addf %275, %276 : vector<1x512xf32>
    %c0_105 = arith.constant 0 : index
    %c0_106 = arith.constant 0 : index
    %c0_107 = arith.constant 0 : index
    %278 = vector.load %arg13[%c0_105, %c0_106, %c0_107] : memref<1x1x512xf32, #tpu.memory_space<vmem>>, vector<1x1x512xf32>
    %279 = vector.shape_cast %278 : vector<1x1x512xf32> to vector<1x512xf32>
    %280 = vector.shape_cast %277 : vector<1x512xf32> to vector<1x1x512xf32>
    tpu.vector_store %arg13[%c0_105, %c0_106, %c0_107], %280 {strides = array<i32>} : memref<1x1x512xf32, #tpu.memory_space<vmem>>, vector<1x1x512xf32>,
    return
  }
  func.func @transform_0(%arg0: i32) -> (i32, i32, i32) {
    %c0_i32 = arith.constant 0 : i32
    %c0_i32_0 = arith.constant 0 : i32
    %c0_i32_1 = arith.constant 0 : i32
    return %arg0, %c0_i32, %c0_i32_0 : i32, i32, i32
  }
  func.func @transform_1(%arg0: i32) -> (i32, i32, i32) {
    %c0_i32 = arith.constant 0 : i32
    %c0_i32_0 = arith.constant 0 : i32
    %c0_i32_1 = arith.constant 0 : i32
    return %arg0, %c0_i32, %c0_i32_0 : i32, i32, i32
  }
  func.func @transform_2(%arg0: i32) -> (i32, i32, i32) {
    %c0_i32 = arith.constant 0 : i32
    %c0_i32_0 = arith.constant 0 : i32
    %c0_i32_1 = arith.constant 0 : i32
    %c0_i32_2 = arith.constant 0 : i32
    return %c0_i32, %c0_i32_0, %c0_i32_1 : i32, i32, i32
  }
  func.func @transform_3(%arg0: i32) -> (i32, i32) {
    %c0_i32 = arith.constant 0 : i32
    %c0_i32_0 = arith.constant 0 : i32
    %c0_i32_1 = arith.constant 0 : i32
    return %c0_i32, %c0_i32_0 : i32, i32
  }
  func.func @transform_4(%arg0: i32) -> (i32, i32, i32) {
    %c0_i32 = arith.constant 0 : i32
    %c0_i32_0 = arith.constant 0 : i32
    %c0_i32_1 = arith.constant 0 : i32
    %c0_i32_2 = arith.constant 0 : i32
    return %c0_i32, %c0_i32_0, %c0_i32_1 : i32, i32, i32
  }
  func.func @transform_5(%arg0: i32) -> (i32, i32) {
    %c0_i32 = arith.constant 0 : i32
    %c0_i32_0 = arith.constant 0 : i32
    %c0_i32_1 = arith.constant 0 : i32
    return %c0_i32, %c0_i32_0 : i32, i32
  }
  func.func @transform_6(%arg0: i32) -> (i32, i32, i32) {
    %c0_i32 = arith.constant 0 : i32
    %c0_i32_0 = arith.constant 0 : i32
    %c0_i32_1 = arith.constant 0 : i32
    %c0_i32_2 = arith.constant 0 : i32
    return %c0_i32, %c0_i32_0, %c0_i32_1 : i32, i32, i32
  }
  func.func @transform_7(%arg0: i32) -> (i32, i32) {
    %c0_i32 = arith.constant 0 : i32
    %c0_i32_0 = arith.constant 0 : i32
    %c0_i32_1 = arith.constant 0 : i32
    return %c0_i32, %c0_i32_0 : i32, i32
  }
  func.func @transform_8(%arg0: i32) -> (i32, i32, i32) {
    %c0_i32 = arith.constant 0 : i32
    %c0_i32_0 = arith.constant 0 : i32
    %c0_i32_1 = arith.constant 0 : i32
    %c0_i32_2 = arith.constant 0 : i32
    return %c0_i32, %c0_i32_0, %c0_i32_1 : i32, i32, i32
  }
  func.func @transform_9(%arg0: i32) -> (i32, i32) {
    %c0_i32 = arith.constant 0 : i32
    %c0_i32_0 = arith.constant 0 : i32
    %c0_i32_1 = arith.constant 0 : i32
    return %c0_i32, %c0_i32_0 : i32, i32
  }
  func.func @transform_10(%arg0: i32) -> (i32, i32, i32) {
    %c0_i32 = arith.constant 0 : i32
    %c0_i32_0 = arith.constant 0 : i32
    %c0_i32_1 = arith.constant 0 : i32
    %c0_i32_2 = arith.constant 0 : i32
    return %c0_i32, %c0_i32_0, %c0_i32_1 : i32, i32, i32
  }
  func.func @transform_11(%arg0: i32) -> (i32, i32) {
    %c0_i32 = arith.constant 0 : i32
    %c0_i32_0 = arith.constant 0 : i32
    %c0_i32_1 = arith.constant 0 : i32
    return %c0_i32, %c0_i32_0 : i32, i32
  }
  func.func @transform_12(%arg0: i32) -> (i32, i32, i32) {
    %c0_i32 = arith.constant 0 : i32
    %c0_i32_0 = arith.constant 0 : i32
    %c0_i32_1 = arith.constant 0 : i32
    return %arg0, %c0_i32, %c0_i32_0 : i32, i32, i32
  }
}

</mosaic_0001>

<llo_original>
// kernel: multiscale_resnet_forward.4
$region0: #{multiscale_resnet_forward.4}
  #allocation0 [shape = 'u32[]', space=smem, size = 0x4, offset = 0x4, fixed_abs, tag = 'smem constant byte address 0x4 - core index']
  #allocation1 [shape = 'u32[72,128]{1,0:T(1,128)}', space=vmem, size = 0x9000, scoped, tag = 'internal scratch']
  %s0 = inlined_call_operand.vmem [shape: f32[2,8,128], index: 0, kind: input, shape index: {}]
  %s1 = inlined_call_operand.vmem [shape: f32[5,8,8], index: 1, kind: input, shape index: {}]
  %s2 = inlined_call_operand.vmem [shape: f32[8,1], index: 2, kind: input, shape index: {}]
  %s3 = inlined_call_operand.vmem [shape: f32[5,8,8], index: 3, kind: input, shape index: {}]
  %s4 = inlined_call_operand.vmem [shape: f32[8,1], index: 4, kind: input, shape index: {}]
  %s5 = inlined_call_operand.vmem [shape: f32[1,4,8], index: 5, kind: input, shape index: {}]
  %s6 = inlined_call_operand.vmem [shape: f32[4,1], index: 6, kind: input, shape index: {}]
  %s7 = inlined_call_operand.vmem [shape: f32[2,4,128], index: 7, kind: output, shape index: {}]
  %s8 = sld [smem:[#allocation0]]
  $region61: #{multiscale_resnet_forward.4} parent=0
    _
  %s10 = ssub.s32 1, %s8
  %s11 = scalar_select 0, %s10, %s8
  loop: start=0, step=1, limit=4
  $region2: #{multiscale_resnet_forward.4} parent=0 // loop_pre_header
    _
  $region3: #{multiscale_resnet_forward.4} parent=0 // loop_header
    %s13 = sphi 0, %s17
    %p14 = scmp.ge.s32.totalorder %s13, 4
    %s23 = sphi 0, %s25
    %s26 = sphi 0, %s23
    %s27 = sphi 0, %s26
    %s43 = sphi 0, %s27
    %s47 = sphi 0, %s47
    %s49 = sphi 0, %s47
    %s50 = sphi 0, %s49
    %s64 = sphi 0, %s50
    %s68 = sphi 0, %s68
    %s70 = sphi 0, %s68
    %s71 = sphi 0, %s70
    %s85 = sphi 0, %s71
    %s89 = sphi 0, %s89
    %s91 = sphi 0, %s89
    %s92 = sphi 0, %s91
    %s106 = sphi 0, %s92
    %s110 = sphi 0, %s110
    %s112 = sphi 0, %s110
    %s113 = sphi 0, %s112
    %s127 = sphi 0, %s113
    %s131 = sphi 0, %s131
    %s133 = sphi 0, %s131
    %s134 = sphi 0, %s133
    %s148 = sphi 0, %s134
    %s152 = sphi 0, %s152
    %s154 = sphi 0, %s152
    %s155 = sphi 0, %s154
    %s169 = sphi 0, %s155
    %s175 = sphi 0, %s177
    %s178 = sphi 0, %s175
    %s179 = sphi 0, %s178
    %s195 = sphi 0, %s179
  $region4: #{multiscale_resnet_forward.4} parent=0 // loop_header_branch
    %16 = sbr.rel (%p14) target = $region8
  $region5: #{multiscale_resnet_forward.4} parent=0 // loop_body
    %s18 = ssub.s32 %s13, 1
    %s19 = ssub.s32 %s13, 2
    %s20 = sadd.s32 %s13, 1
    %s21 = ssub.s32 %s13, %s20
    %p22 = scmp.eq.s32.totalorder %s21, 0
    %s24 = sadd.s32 %s23, 1
    %s25 = scalar_select %p22, %s23, %s24
    %p28 = pneg %p22
    %p29 = scmp.eq.s32.totalorder %s13, 1
    %p30 = por %p28, %p29
    %p31 = scmp.ne.s32.totalorder %s23, %s26
    %p32 = scmp.eq.s32.totalorder %s13, 0
    %p33 = por %p31, %p32
    %p34 = scmp.ne.s32.totalorder %s23, %s26
    %p35 = scmp.eq.s32.totalorder %s18, 1
    %p36 = por %p34, %p35
    %p37 = scmp.ne.s32.totalorder %s26, %s27
    %p38 = scmp.eq.s32.totalorder %s18, 0
    %p39 = por %p37, %p38
    %p40 = scmp.ne.s32.totalorder %s26, %s27
    %p41 = scmp.eq.s32.totalorder %s19, 1
    %p42 = por %p40, %p41
    %p44 = scmp.ne.s32.totalorder %s27, %s43
    %p45 = scmp.eq.s32.totalorder %s19, 0
    %p46 = por %p44, %p45
    %s48 = sadd.s32 %s47, 1
    %p51 = scmp.eq.s32.totalorder %s13, 1
    %p52 = scmp.ne.s32.totalorder %s47, %s49
    %p53 = scmp.eq.s32.totalorder %s13, 0
    %p54 = por %p52, %p53
    %p55 = scmp.ne.s32.totalorder %s47, %s49
    %p56 = scmp.eq.s32.totalorder %s18, 1
    %p57 = por %p55, %p56
    %p58 = scmp.ne.s32.totalorder %s49, %s50
    %p59 = scmp.eq.s32.totalorder %s18, 0
    %p60 = por %p58, %p59
    %p61 = scmp.ne.s32.totalorder %s49, %s50
    %p62 = scmp.eq.s32.totalorder %s19, 1
    %p63 = por %p61, %p62
    %p65 = scmp.ne.s32.totalorder %s50, %s64
    %p66 = scmp.eq.s32.totalorder %s19, 0
    %p67 = por %p65, %p66
    %s69 = sadd.s32 %s68, 1
    %p72 = scmp.eq.s32.totalorder %s13, 1
    %p73 = scmp.ne.s32.totalorder %s68, %s70
    %p74 = scmp.eq.s32.totalorder %s13, 0
    %p75 = por %p73, %p74
    %p76 = scmp.ne.s32.totalorder %s68, %s70
    %p77 = scmp.eq.s32.totalorder %s18, 1
    %p78 = por %p76, %p77
    %p79 = scmp.ne.s32.totalorder %s70, %s71
    %p80 = scmp.eq.s32.totalorder %s18, 0
    %p81 = por %p79, %p80
    %p82 = scmp.ne.s32.totalorder %s70, %s71
    %p83 = scmp.eq.s32.totalorder %s19, 1
    %p84 = por %p82, %p83
    %p86 = scmp.ne.s32.totalorder %s71, %s85
    %p87 = scmp.eq.s32.totalorder %s19, 0
    %p88 = por %p86, %p87
    %s90 = sadd.s32 %s89, 1
    %p93 = scmp.eq.s32.totalorder %s13, 1
    %p94 = scmp.ne.s32.totalorder %s89, %s91
    %p95 = scmp.eq.s32.totalorder %s13, 0
    %p96 = por %p94, %p95
    %p97 = scmp.ne.s32.totalorder %s89, %s91
    %p98 = scmp.eq.s32.totalorder %s18, 1
    %p99 = por %p97, %p98
    %p100 = scmp.ne.s32.totalorder %s91, %s92
    %p101 = scmp.eq.s32.totalorder %s18, 0
    %p102 = por %p100, %p101
    %p103 = scmp.ne.s32.totalorder %s91, %s92
    %p104 = scmp.eq.s32.totalorder %s19, 1
    %p105 = por %p103, %p104
    %p107 = scmp.ne.s32.totalorder %s92, %s106
    %p108 = scmp.eq.s32.totalorder %s19, 0
    %p109 = por %p107, %p108
    %s111 = sadd.s32 %s110, 1
    %p114 = scmp.eq.s32.totalorder %s13, 1
    %p115 = scmp.ne.s32.totalorder %s110, %s112
    %p116 = scmp.eq.s32.totalorder %s13, 0
    %p117 = por %p115, %p116
    %p118 = scmp.ne.s32.totalorder %s110, %s112
    %p119 = scmp.eq.s32.totalorder %s18, 1
    %p120 = por %p118, %p119
    %p121 = scmp.ne.s32.totalorder %s112, %s113
    %p122 = scmp.eq.s32.totalorder %s18, 0
    %p123 = por %p121, %p122
    %p124 = scmp.ne.s32.totalorder %s112, %s113
    %p125 = scmp.eq.s32.totalorder %s19, 1
    %p126 = por %p124, %p125
    %p128 = scmp.ne.s32.totalorder %s113, %s127
    %p129 = scmp.eq.s32.totalorder %s19, 0
    %p130 = por %p128, %p129
    %s132 = sadd.s32 %s131, 1
    %p135 = scmp.eq.s32.totalorder %s13, 1
    %p136 = scmp.ne.s32.totalorder %s131, %s133
    %p137 = scmp.eq.s32.totalorder %s13, 0
    %p138 = por %p136, %p137
    %p139 = scmp.ne.s32.totalorder %s131, %s133
    %p140 = scmp.eq.s32.totalorder %s18, 1
    %p141 = por %p139, %p140
    %p142 = scmp.ne.s32.totalorder %s133, %s134
    %p143 = scmp.eq.s32.totalorder %s18, 0
    %p144 = por %p142, %p143
    %p145 = scmp.ne.s32.totalorder %s133, %s134
    %p146 = scmp.eq.s32.totalorder %s19, 1
    %p147 = por %p145, %p146
    %p149 = scmp.ne.s32.totalorder %s134, %s148
    %p150 = scmp.eq.s32.totalorder %s19, 0
    %p151 = por %p149, %p150
    %s153 = sadd.s32 %s152, 1
    %p156 = scmp.eq.s32.totalorder %s13, 1
    %p157 = scmp.ne.s32.totalorder %s152, %s154
    %p158 = scmp.eq.s32.totalorder %s13, 0
    %p159 = por %p157, %p158
    %p160 = scmp.ne.s32.totalorder %s152, %s154
    %p161 = scmp.eq.s32.totalorder %s18, 1
    %p162 = por %p160, %p161
    %p163 = scmp.ne.s32.totalorder %s154, %s155
    %p164 = scmp.eq.s32.totalorder %s18, 0
    %p165 = por %p163, %p164
    %p166 = scmp.ne.s32.totalorder %s154, %s155
    %p167 = scmp.eq.s32.totalorder %s19, 1
    %p168 = por %p166, %p167
    %p170 = scmp.ne.s32.totalorder %s155, %s169
    %p171 = scmp.eq.s32.totalorder %s19, 0
    %p172 = por %p170, %p171
    %s173 = ssub.s32 %s13, %s20
    %p174 = scmp.eq.s32.totalorder %s173, 0
    %s176 = sadd.s32 %s175, 1
    %s177 = scalar_select %p174, %s175, %s176
    %p180 = pneg %p174
    %p181 = scmp.eq.s32.totalorder %s13, 1
    %p182 = por %p180, %p181
    %p183 = scmp.ne.s32.totalorder %s175, %s178
    %p184 = scmp.eq.s32.totalorder %s13, 0
    %p185 = por %p183, %p184
    %p186 = scmp.ne.s32.totalorder %s175, %s178
    %p187 = scmp.eq.s32.totalorder %s18, 1
    %p188 = por %p186, %p187
    %p189 = scmp.ne.s32.totalorder %s178, %s179
    %p190 = scmp.eq.s32.totalorder %s18, 0
    %p191 = por %p189, %p190
    %p192 = scmp.ne.s32.totalorder %s178, %s179
    %p193 = scmp.eq.s32.totalorder %s19, 1
    %p194 = por %p192, %p193
    %p196 = scmp.ne.s32.totalorder %s179, %s195
    %p197 = scmp.eq.s32.totalorder %s19, 0
    %p198 = por %p196, %p197
    %p199 = scmp.le.s32.totalorder 1, %s13
    %p200 = scmp.lt.s32.totalorder %s13, 3
    %p201 = pnand %p199, %p200
    %p202 = pneg %p201
    // Predicated region
    $region9: #{multiscale_resnet_forward.4} parent=5 // pred_check
      _
    $region10: #{multiscale_resnet_forward.4} parent=5 // pred_check_branch
      %204 = sbr.rel (%p201) target = $region12
    $region11: #{multiscale_resnet_forward.4} parent=5 // pred_region
      %s205 = ssub.s32 %s13, 1
      // Predicated region
      $region13: #{multiscale_resnet_forward.4} parent=11 // pred_check
        %p206 = pneg %p60
      $region14: #{multiscale_resnet_forward.4} parent=11 // pred_check_branch
        %208 = sbr.rel (%p206) target = $region16
      $region15: #{multiscale_resnet_forward.4} parent=11 // pred_region
        _
      $region16: #{multiscale_resnet_forward.4} parent=11 // pred_fallthru
        _
      // Predicated region
      $region17: #{multiscale_resnet_forward.4} parent=11 // pred_check
        %p209 = pneg %p81
      $region18: #{multiscale_resnet_forward.4} parent=11 // pred_check_branch
        %211 = sbr.rel (%p209) target = $region20
      $region19: #{multiscale_resnet_forward.4} parent=11 // pred_region
        _
      $region20: #{multiscale_resnet_forward.4} parent=11 // pred_fallthru
        _
      // Predicated region
      $region21: #{multiscale_resnet_forward.4} parent=11 // pred_check
        %p212 = pneg %p102
      $region22: #{multiscale_resnet_forward.4} parent=11 // pred_check_branch
        %214 = sbr.rel (%p212) target = $region24
      $region23: #{multiscale_resnet_forward.4} parent=11 // pred_region
        _
      $region24: #{multiscale_resnet_forward.4} parent=11 // pred_fallthru
        _
      // Predicated region
      $region25: #{multiscale_resnet_forward.4} parent=11 // pred_check
        %p215 = pneg %p123
      $region26: #{multiscale_resnet_forward.4} parent=11 // pred_check_branch
        %217 = sbr.rel (%p215) target = $region28
      $region27: #{multiscale_resnet_forward.4} parent=11 // pred_region
        _
      $region28: #{multiscale_resnet_forward.4} parent=11 // pred_fallthru
        _
      // Predicated region
      $region29: #{multiscale_resnet_forward.4} parent=11 // pred_check
        %p218 = pneg %p144
      $region30: #{multiscale_resnet_forward.4} parent=11 // pred_check_branch
        %220 = sbr.rel (%p218) target = $region32
      $region31: #{multiscale_resnet_forward.4} parent=11 // pred_region
        _
      $region32: #{multiscale_resnet_forward.4} parent=11 // pred_fallthru
        _
      // Predicated region
      $region33: #{multiscale_resnet_forward.4} parent=11 // pred_check
        %p221 = pneg %p165
      $region34: #{multiscale_resnet_forward.4} parent=11 // pred_check_branch
        %223 = sbr.rel (%p221) target = $region36
      $region35: #{multiscale_resnet_forward.4} parent=11 // pred_region
        _
      $region36: #{multiscale_resnet_forward.4} parent=11 // pred_fallthru
        _
    $region12: #{multiscale_resnet_forward.4} parent=5 // pred_fallthru
      _
    %p224 = scmp.lt.s32.totalorder %s13, 2
    // Predicated region
    $region37: #{multiscale_resnet_forward.4} parent=5 // pred_check
      %p225 = pneg %p224
    $region38: #{multiscale_resnet_forward.4} parent=5 // pred_check_branch
      %227 = sbr.rel (%p225) target = $region40
    $region39: #{multiscale_resnet_forward.4} parent=5 // pred_region
      // Predicated region
      $region41: #{multiscale_resnet_forward.4} parent=39 // pred_check
        %p228 = pneg %p33
      $region42: #{multiscale_resnet_forward.4} parent=39 // pred_check_branch
        %230 = sbr.rel (%p228) target = $region44
      $region43: #{multiscale_resnet_forward.4} parent=39 // pred_region
        %p231 = scmp.lt.s32.totalorder %s13, 1
        %s232 = scalar_select %p231, %s13, 1
        %s233 = smul.addr %s232, 8
        %s234 = scalar_lea.vmem %s0, %s233
      $region44: #{multiscale_resnet_forward.4} parent=39 // pred_fallthru
        _
    $region40: #{multiscale_resnet_forward.4} parent=5 // pred_fallthru
      _
    %p235 = scmp.le.s32.totalorder 1, %s13
    %p236 = scmp.lt.s32.totalorder %s13, 3
    %p237 = pnand %p235, %p236
    %p238 = pneg %p237
    // Predicated region
    $region45: #{multiscale_resnet_forward.4} parent=5 // pred_check
      _
    $region46: #{multiscale_resnet_forward.4} parent=5 // pred_check_branch
      %240 = sbr.rel (%p237) target = $region48
    $region47: #{multiscale_resnet_forward.4} parent=5 // pred_region
      %s241 = ssub.s32 %s13, 1
      %p242 = scmp.lt.s32.totalorder %s18, 1
      %s243 = scalar_select %p242, %s18, 1
      %s244 = smul.addr %s243, 8
      %s245 = scalar_lea.vmem %s0, %s244
      %p246 = pneg %p39
      %p247 = pneg %p36
      %p248 = pneg %p60
      %p249 = pneg %p57
      %p250 = pneg %p81
      %p251 = pneg %p78
      %p252 = pneg %p102
      %p253 = pneg %p99
      %p254 = pneg %p123
      %p255 = pneg %p120
      %p256 = pneg %p144
      %p257 = pneg %p141
      %p258 = pneg %p165
      %p259 = pneg %p162
      %p260 = pneg %p191
      %p261 = pneg %p188
      %p262 = scmp.lt.s32.totalorder %s18, 1
      %s263 = scalar_select %p262, %s18, 1
      %s264 = smul.addr %s263, 4
      %s265 = scalar_lea.vmem %s7, %s264
      %p266 = scmp.lt.s32.totalorder %s18, 1
      %s267 = scalar_select %p266, %s18, 1
      %s268 = smul.addr %s267, 8
      %s269 = scalar_lea.vmem %s0, %s268
      %p270 = scmp.lt.s32.totalorder %s18, 1
      %s271 = scalar_select %p270, %s18, 1
      %s272 = smul.addr %s271, 4
      %s273 = scalar_lea.vmem %s7, %s272
      %v274 = vlaneseq
      %v275 = vand.u32 %v274, 127
      %v276 = vld [vmem:[%s269] sm:$0xff]
      %v277 = vld [vmem:[%s1] sm:$0xff]
      %v278 = vld [vmem:[%s1 + $0x8] sm:$0xff]
      %v279 = vld [vmem:[%s1 + $0x10] sm:$0xff]
      %v280 = vld [vmem:[%s1 + $0x18] sm:$0xff]
      %v281 = vld [vmem:[%s1 + $0x20] sm:$0xff]
      %v282 = vld [vmem:[%s2] sm:$0xff]
      %vm283 = vcmp.ge.f32.partialorder %v276, 0.0
      %v284 = vmul.f32 %v276, 0.01
      %v285 = vsel %vm283, %v276, %v284
      %286 = vrot.lane.b32.xlu0 %v285, 2
      %v287 = vpop.permute.xlu0 %286
      %vm288 = vcmp.ge.s32.totalorder %v275, 2
      %vm289 = vcmp.lt.s32.totalorder %v275, 130
      %vm290 = vmand %vm288, %vm289
      %v291 = vsel %vm290, 1, 0
      %vm292 = vcmp.eq.s32.totalorder %v291, 1
      %v293 = vsel %vm292, %v287, 0.0
      %294 = vrot.lane.b32.xlu0 %v285, 1
      %v295 = vpop.permute.xlu0 %294
      %vm296 = vcmp.ge.s32.totalorder %v275, 1
      %vm297 = vcmp.lt.s32.totalorder %v275, 129
      %vm298 = vmand %vm296, %vm297
      %v299 = vsel %vm298, 1, 0
      %vm300 = vcmp.eq.s32.totalorder %v299, 1
      %v301 = vsel %vm300, %v295, 0.0
      %vm302 = vcmask 64512
      %v304 = vsel %vm302, %v278, 0
      %306 = vmatpush.msra.mxu0 0.0
      %307 = vmatpush.msra.mxu0 0.0
      %308 = vmatpush.msra.mxu0 0.0
      %309 = vmatpush.msra.mxu0 0.0
      %310 = vmatpush.msra.mxu0 0.0
      %311 = vmatpush.msra.mxu0 0.0
      %312 = vmatpush.msra.mxu0 0.0
      %313 = vmatpush.msra.mxu0 0.0
      %314 = vmatpush.msra.mxu0 0.0
      %315 = vmatpush.msra.mxu0 0.0
      %316 = vmatpush.msra.mxu0 0.0
      %317 = vmatpush.msra.mxu0 0.0
      %318 = vmatpush.msra.mxu0 0.0
      %319 = vmatpush.msra.mxu0 0.0
      %320 = vmatpush.msra.mxu0 0.0
      %321 = vmatpush.msra.mxu0 %v301
      %322 = vmatmul.f32.gmra.mxu0 %v304
      %v323 = vpop.f32.mrf.mxu0
      %v324 = vadd.f32 0.0, %v323
      %325 = vdwg.mxu0
      %v327 = vsel %vm302, %v277, 0
      %329 = vmatpush.msra.mxu0 0.0
      %330 = vmatpush.msra.mxu0 0.0
      %331 = vmatpush.msra.mxu0 0.0
      %332 = vmatpush.msra.mxu0 0.0
      %333 = vmatpush.msra.mxu0 0.0
      %334 = vmatpush.msra.mxu0 0.0
      %335 = vmatpush.msra.mxu0 0.0
      %336 = vmatpush.msra.mxu0 0.0
      %337 = vmatpush.msra.mxu0 0.0
      %338 = vmatpush.msra.mxu0 0.0
      %339 = vmatpush.msra.mxu0 0.0
      %340 = vmatpush.msra.mxu0 0.0
      %341 = vmatpush.msra.mxu0 0.0
      %342 = vmatpush.msra.mxu0 0.0
      %343 = vmatpush.msra.mxu0 0.0
      %344 = vmatpush.msra.mxu0 %v293
      %345 = vmatmul.f32.gmra.mxu0 %v327
      %v346 = vpop.f32.mrf.mxu0
      %v347 = vadd.f32 %v324, %v346
      %348 = vdwg.mxu0
      %v350 = vsel %vm302, %v279, 0
      %352 = vmatpush.msra.mxu0 0.0
      %353 = vmatpush.msra.mxu0 0.0
      %354 = vmatpush.msra.mxu0 0.0
      %355 = vmatpush.msra.mxu0 0.0
      %356 = vmatpush.msra.mxu0 0.0
      %357 = vmatpush.msra.mxu0 0.0
      %358 = vmatpush.msra.mxu0 0.0
      %359 = vmatpush.msra.mxu0 0.0
      %360 = vmatpush.msra.mxu0 0.0
      %361 = vmatpush.msra.mxu0 0.0
      %362 = vmatpush.msra.mxu0 0.0
      %363 = vmatpush.msra.mxu0 0.0
      %364 = vmatpush.msra.mxu0 0.0
      %365 = vmatpush.msra.mxu0 0.0
      %366 = vmatpush.msra.mxu0 0.0
      %367 = vmatpush.msra.mxu0 %v285
      %368 = vmatmul.f32.gmra.mxu0 %v350
      %v369 = vpop.f32.mrf.mxu0
      %v370 = vadd.f32 0.0, %v369
      %371 = vdwg.mxu0
      %v372 = vadd.f32 %v347, %v370
      %373 = vrot.lane.b32.xlu0 %v285, 127
      %v374 = vpop.permute.xlu0 %373
      %vm375 = vcmp.ge.s32.totalorder %v275, 4294967295
      %vm376 = vcmp.lt.s32.totalorder %v275, 127
      %vm377 = vmand %vm375, %vm376
      %v378 = vsel %vm377, 1, 0
      %vm379 = vcmp.eq.s32.totalorder %v378, 1
      %v380 = vsel %vm379, %v374, 0.0
      %v382 = vsel %vm302, %v280, 0
      %384 = vmatpush.msra.mxu0 0.0
      %385 = vmatpush.msra.mxu0 0.0
      %386 = vmatpush.msra.mxu0 0.0
      %387 = vmatpush.msra.mxu0 0.0
      %388 = vmatpush.msra.mxu0 0.0
      %389 = vmatpush.msra.mxu0 0.0
      %390 = vmatpush.msra.mxu0 0.0
      %391 = vmatpush.msra.mxu0 0.0
      %392 = vmatpush.msra.mxu0 0.0
      %393 = vmatpush.msra.mxu0 0.0
      %394 = vmatpush.msra.mxu0 0.0
      %395 = vmatpush.msra.mxu0 0.0
      %396 = vmatpush.msra.mxu0 0.0
      %397 = vmatpush.msra.mxu0 0.0
      %398 = vmatpush.msra.mxu0 0.0
      %399 = vmatpush.msra.mxu0 %v380
      %400 = vmatmul.f32.gmra.mxu0 %v382
      %v401 = vpop.f32.mrf.mxu0
      %v402 = vadd.f32 0.0, %v401
      %403 = vdwg.mxu0
      %v404 = vadd.f32 %v372, %v402
      %405 = vrot.lane.b32.xlu0 %v285, 126
      %v406 = vpop.permute.xlu0 %405
      %vm407 = vcmp.ge.s32.totalorder %v275, 4294967294
      %vm408 = vcmp.lt.s32.totalorder %v275, 126
      %vm409 = vmand %vm407, %vm408
      %v410 = vsel %vm409, 1, 0
      %vm411 = vcmp.eq.s32.totalorder %v410, 1
      %v412 = vsel %vm411, %v406, 0.0
      %v414 = vsel %vm302, %v281, 0
      %416 = vmatpush.msra.mxu0 0.0
      %417 = vmatpush.msra.mxu0 0.0
      %418 = vmatpush.msra.mxu0 0.0
      %419 = vmatpush.msra.mxu0 0.0
      %420 = vmatpush.msra.mxu0 0.0
      %421 = vmatpush.msra.mxu0 0.0
      %422 = vmatpush.msra.mxu0 0.0
      %423 = vmatpush.msra.mxu0 0.0
      %424 = vmatpush.msra.mxu0 0.0
      %425 = vmatpush.msra.mxu0 0.0
      %426 = vmatpush.msra.mxu0 0.0
      %427 = vmatpush.msra.mxu0 0.0
      %428 = vmatpush.msra.mxu0 0.0
      %429 = vmatpush.msra.mxu0 0.0
      %430 = vmatpush.msra.mxu0 0.0
      %431 = vmatpush.msra.mxu0 %v412
      %432 = vmatmul.f32.gmra.mxu0 %v414
      %v433 = vpop.f32.mrf.mxu0
      %v434 = vadd.f32 0.0, %v433
      %435 = vdwg.mxu0
      %v436 = vadd.f32 %v404, %v434
      %438 = vset.pattern.permute.xlu0 0
      %439 = vperm.xlu0 %438, %v282
      %v440 = vpop.permute.xlu0 %439
      %v442 = vadd.f32 %v436, %v440
      %v443 = vadd.f32 %v442, %v276
      %v444 = vld [vmem:[%s3] sm:$0xff]
      %v445 = vld [vmem:[%s3 + $0x8] sm:$0xff]
      %v446 = vld [vmem:[%s3 + $0x10] sm:$0xff]
      %v447 = vld [vmem:[%s3 + $0x18] sm:$0xff]
      %v448 = vld [vmem:[%s3 + $0x20] sm:$0xff]
      %v449 = vld [vmem:[%s4] sm:$0xff]
      %vm450 = vcmp.ge.f32.partialorder %v443, 0.0
      %v451 = vmul.f32 %v443, 0.01
      %v452 = vsel %vm450, %v443, %v451
      %453 = vrot.lane.b32.xlu0 %v452, 2
      %v454 = vpop.permute.xlu0 %453
      %v455 = vsel %vm292, %v454, 0.0
      %456 = vrot.lane.b32.xlu0 %v452, 1
      %v457 = vpop.permute.xlu0 %456
      %v458 = vsel %vm300, %v457, 0.0
      %v460 = vsel %vm302, %v445, 0
      %462 = vmatpush.msra.mxu0 0.0
      %463 = vmatpush.msra.mxu0 0.0
      %464 = vmatpush.msra.mxu0 0.0
      %465 = vmatpush.msra.mxu0 0.0
      %466 = vmatpush.msra.mxu0 0.0
      %467 = vmatpush.msra.mxu0 0.0
      %468 = vmatpush.msra.mxu0 0.0
      %469 = vmatpush.msra.mxu0 0.0
      %470 = vmatpush.msra.mxu0 0.0
      %471 = vmatpush.msra.mxu0 0.0
      %472 = vmatpush.msra.mxu0 0.0
      %473 = vmatpush.msra.mxu0 0.0
      %474 = vmatpush.msra.mxu0 0.0
      %475 = vmatpush.msra.mxu0 0.0
      %476 = vmatpush.msra.mxu0 0.0
      %477 = vmatpush.msra.mxu0 %v458
      %478 = vmatmul.f32.gmra.mxu0 %v460
      %v479 = vpop.f32.mrf.mxu0
      %v480 = vadd.f32 0.0, %v479
      %481 = vdwg.mxu0
      %v483 = vsel %vm302, %v444, 0
      %485 = vmatpush.msra.mxu0 0.0
      %486 = vmatpush.msra.mxu0 0.0
      %487 = vmatpush.msra.mxu0 0.0
      %488 = vmatpush.msra.mxu0 0.0
      %489 = vmatpush.msra.mxu0 0.0
      %490 = vmatpush.msra.mxu0 0.0
      %491 = vmatpush.msra.mxu0 0.0
      %492 = vmatpush.msra.mxu0 0.0
      %493 = vmatpush.msra.mxu0 0.0
      %494 = vmatpush.msra.mxu0 0.0
      %495 = vmatpush.msra.mxu0 0.0
      %496 = vmatpush.msra.mxu0 0.0
      %497 = vmatpush.msra.mxu0 0.0
      %498 = vmatpush.msra.mxu0 0.0
      %499 = vmatpush.msra.mxu0 0.0
      %500 = vmatpush.msra.mxu0 %v455
      %501 = vmatmul.f32.gmra.mxu0 %v483
      %v502 = vpop.f32.mrf.mxu0
      %v503 = vadd.f32 %v480, %v502
      %504 = vdwg.mxu0
      %v506 = vsel %vm302, %v446, 0
      %508 = vmatpush.msra.mxu0 0.0
      %509 = vmatpush.msra.mxu0 0.0
      %510 = vmatpush.msra.mxu0 0.0
      %511 = vmatpush.msra.mxu0 0.0
      %512 = vmatpush.msra.mxu0 0.0
      %513 = vmatpush.msra.mxu0 0.0
      %514 = vmatpush.msra.mxu0 0.0
      %515 = vmatpush.msra.mxu0 0.0
      %516 = vmatpush.msra.mxu0 0.0
      %517 = vmatpush.msra.mxu0 0.0
      %518 = vmatpush.msra.mxu0 0.0
      %519 = vmatpush.msra.mxu0 0.0
      %520 = vmatpush.msra.mxu0 0.0
      %521 = vmatpush.msra.mxu0 0.0
      %522 = vmatpush.msra.mxu0 0.0
      %523 = vmatpush.msra.mxu0 %v452
      %524 = vmatmul.f32.gmra.mxu0 %v506
      %v525 = vpop.f32.mrf.mxu0
      %v526 = vadd.f32 0.0, %v525
      %527 = vdwg.mxu0
      %v528 = vadd.f32 %v503, %v526
      %529 = vrot.lane.b32.xlu0 %v452, 127
      %v530 = vpop.permute.xlu0 %529
      %v531 = vsel %vm379, %v530, 0.0
      %v533 = vsel %vm302, %v447, 0
      %535 = vmatpush.msra.mxu0 0.0
      %536 = vmatpush.msra.mxu0 0.0
      %537 = vmatpush.msra.mxu0 0.0
      %538 = vmatpush.msra.mxu0 0.0
      %539 = vmatpush.msra.mxu0 0.0
      %540 = vmatpush.msra.mxu0 0.0
      %541 = vmatpush.msra.mxu0 0.0
      %542 = vmatpush.msra.mxu0 0.0
      %543 = vmatpush.msra.mxu0 0.0
      %544 = vmatpush.msra.mxu0 0.0
      %545 = vmatpush.msra.mxu0 0.0
      %546 = vmatpush.msra.mxu0 0.0
      %547 = vmatpush.msra.mxu0 0.0
      %548 = vmatpush.msra.mxu0 0.0
      %549 = vmatpush.msra.mxu0 0.0
      %550 = vmatpush.msra.mxu0 %v531
      %551 = vmatmul.f32.gmra.mxu0 %v533
      %v552 = vpop.f32.mrf.mxu0
      %v553 = vadd.f32 0.0, %v552
      %554 = vdwg.mxu0
      %v555 = vadd.f32 %v528, %v553
      %556 = vrot.lane.b32.xlu0 %v452, 126
      %v557 = vpop.permute.xlu0 %556
      %v558 = vsel %vm411, %v557, 0.0
      %v560 = vsel %vm302, %v448, 0
      %562 = vmatpush.msra.mxu0 0.0
      %563 = vmatpush.msra.mxu0 0.0
      %564 = vmatpush.msra.mxu0 0.0
      %565 = vmatpush.msra.mxu0 0.0
      %566 = vmatpush.msra.mxu0 0.0
      %567 = vmatpush.msra.mxu0 0.0
      %568 = vmatpush.msra.mxu0 0.0
      %569 = vmatpush.msra.mxu0 0.0
      %570 = vmatpush.msra.mxu0 0.0
      %571 = vmatpush.msra.mxu0 0.0
      %572 = vmatpush.msra.mxu0 0.0
      %573 = vmatpush.msra.mxu0 0.0
      %574 = vmatpush.msra.mxu0 0.0
      %575 = vmatpush.msra.mxu0 0.0
      %576 = vmatpush.msra.mxu0 0.0
      %577 = vmatpush.msra.mxu0 %v558
      %578 = vmatmul.f32.gmra.mxu0 %v560
      %v579 = vpop.f32.mrf.mxu0
      %v580 = vadd.f32 0.0, %v579
      %581 = vdwg.mxu0
      %v582 = vadd.f32 %v555, %v580
      %584 = vset.pattern.permute.xlu0 0
      %585 = vperm.xlu0 %584, %v449
      %v586 = vpop.permute.xlu0 %585
      %v588 = vadd.f32 %v582, %v586
      %v589 = vadd.f32 %v588, %v443
      %v590 = vld [vmem:[%s5] sm:$0xf]
      %v591 = vld [vmem:[%s6] sm:$0xf]
      %593 = vset.pattern.permute.xlu0 0
      %594 = vperm.xlu0 %593, %v591
      %v595 = vpop.permute.xlu0 %594
      %v598 = vsel %vm302, %v590, 0
      %600 = vmatpush.msra.mxu0 0.0
      %601 = vmatpush.msra.mxu0 0.0
      %602 = vmatpush.msra.mxu0 0.0
      %603 = vmatpush.msra.mxu0 0.0
      %604 = vmatpush.msra.mxu0 0.0
      %605 = vmatpush.msra.mxu0 0.0
      %606 = vmatpush.msra.mxu0 0.0
      %607 = vmatpush.msra.mxu0 0.0
      %608 = vmatpush.msra.mxu0 0.0
      %609 = vmatpush.msra.mxu0 0.0
      %610 = vmatpush.msra.mxu0 0.0
      %611 = vmatpush.msra.mxu0 0.0
      %612 = vmatpush.msra.mxu0 0.0
      %613 = vmatpush.msra.mxu0 0.0
      %614 = vmatpush.msra.mxu0 0.0
      %615 = vmatpush.msra.mxu0 %v589
      %616 = vmatmul.f32.gmra.mxu0 %v598
      %v617 = vpop.f32.mrf.mxu0
      %v618 = vadd.f32 %v595, %v617
      %619 = vdwg.mxu0
      %620 = vst [vmem:[%s273] sm:$0xf] %v618
      %p621 = scmp.lt.s32.totalorder %s18, 1
      %s622 = scalar_select %p621, %s18, 1
      %s623 = smul.addr %s622, 4
      %s624 = scalar_lea.vmem %s7, %s623
      // Predicated region
      $region49: #{multiscale_resnet_forward.4} parent=47 // pred_check
        %p625 = pneg %p188
      $region50: #{multiscale_resnet_forward.4} parent=47 // pred_check_branch
        %627 = sbr.rel (%p625) target = $region52
      $region51: #{multiscale_resnet_forward.4} parent=47 // pred_region
        _
      $region52: #{multiscale_resnet_forward.4} parent=47 // pred_fallthru
        _
    $region48: #{multiscale_resnet_forward.4} parent=5 // pred_fallthru
      _
    %p628 = scmp.le.s32.totalorder 2, %s13
    // Predicated region
    $region53: #{multiscale_resnet_forward.4} parent=5 // pred_check
      %p629 = pneg %p628
    $region54: #{multiscale_resnet_forward.4} parent=5 // pred_check_branch
      %631 = sbr.rel (%p629) target = $region56
    $region55: #{multiscale_resnet_forward.4} parent=5 // pred_region
      %s632 = ssub.s32 %s13, 2
      // Predicated region
      $region57: #{multiscale_resnet_forward.4} parent=55 // pred_check
        %p633 = pneg %p194
      $region58: #{multiscale_resnet_forward.4} parent=55 // pred_check_branch
        %635 = sbr.rel (%p633) target = $region60
      $region59: #{multiscale_resnet_forward.4} parent=55 // pred_region
        %p636 = scmp.lt.s32.totalorder %s19, 1
        %s637 = scalar_select %p636, %s19, 1
        %s638 = smul.addr %s637, 4
        %s639 = scalar_lea.vmem %s7, %s638
      $region60: #{multiscale_resnet_forward.4} parent=55 // pred_fallthru
        _
    $region56: #{multiscale_resnet_forward.4} parent=5 // pred_fallthru
      _
  $region6: #{multiscale_resnet_forward.4} parent=0 // loop_footer
    %s17 = sadd.s32 1, %s13
  $region7: #{multiscale_resnet_forward.4} parent=0 // loop_footer_branch
    %12 = sbr.rel target = $region3
  $region8: #{multiscale_resnet_forward.4} parent=0 // loop_exit
    _

// kernel: multiscale_resnet_forward.3
$region0: #{multiscale_resnet_forward.3}
  #allocation0 [shape = 'u32[]', space=smem, size = 0x4, offset = 0x4, fixed_abs, tag = 'smem constant byte address 0x4 - core index']
  #allocation1 [shape = 'u32[72,128]{1,0:T(1,128)}', space=vmem, size = 0x9000, scoped, tag = 'internal scratch']
  %s0 = inlined_call_operand.vmem [shape: f32[2,1,512], index: 0, kind: input, shape index: {}]
  %s1 = inlined_call_operand.vmem [shape: f32[5,4,1], index: 1, kind: input, shape index: {}]
  %s2 = inlined_call_operand.vmem [shape: f32[4,1], index: 2, kind: input, shape index: {}]
  %s3 = inlined_call_operand.vmem [shape: f32[5,4,4], index: 3, kind: input, shape index: {}]
  %s4 = inlined_call_operand.vmem [shape: f32[4,1], index: 4, kind: input, shape index: {}]
  %s5 = inlined_call_operand.vmem [shape: f32[5,4,4], index: 5, kind: input, shape index: {}]
  %s6 = inlined_call_operand.vmem [shape: f32[4,1], index: 6, kind: input, shape index: {}]
  %s7 = inlined_call_operand.vmem [shape: f32[4,8,4], index: 7, kind: input, shape index: {}]
  %s8 = inlined_call_operand.vmem [shape: f32[8,1], index: 8, kind: input, shape index: {}]
  %s9 = inlined_call_operand.vmem [shape: f32[2,8,512], index: 9, kind: output, shape index: {}]
  %s10 = sld [smem:[#allocation0]]
  $region69: #{multiscale_resnet_forward.3} parent=0
    _
  %s12 = ssub.s32 1, %s10
  %s13 = scalar_select 0, %s12, %s10
  loop: start=0, step=1, limit=4
  $region2: #{multiscale_resnet_forward.3} parent=0 // loop_pre_header
    _
  $region3: #{multiscale_resnet_forward.3} parent=0 // loop_header
    %s15 = sphi 0, %s19
    %p16 = scmp.ge.s32.totalorder %s15, 4
    %s25 = sphi 0, %s27
    %s28 = sphi 0, %s25
    %s29 = sphi 0, %s28
    %s45 = sphi 0, %s29
    %s49 = sphi 0, %s49
    %s51 = sphi 0, %s49
    %s52 = sphi 0, %s51
    %s66 = sphi 0, %s52
    %s70 = sphi 0, %s70
    %s72 = sphi 0, %s70
    %s73 = sphi 0, %s72
    %s87 = sphi 0, %s73
    %s91 = sphi 0, %s91
    %s93 = sphi 0, %s91
    %s94 = sphi 0, %s93
    %s108 = sphi 0, %s94
    %s112 = sphi 0, %s112
    %s114 = sphi 0, %s112
    %s115 = sphi 0, %s114
    %s129 = sphi 0, %s115
    %s133 = sphi 0, %s133
    %s135 = sphi 0, %s133
    %s136 = sphi 0, %s135
    %s150 = sphi 0, %s136
    %s154 = sphi 0, %s154
    %s156 = sphi 0, %s154
    %s157 = sphi 0, %s156
    %s171 = sphi 0, %s157
    %s175 = sphi 0, %s175
    %s177 = sphi 0, %s175
    %s178 = sphi 0, %s177
    %s192 = sphi 0, %s178
    %s196 = sphi 0, %s196
    %s198 = sphi 0, %s196
    %s199 = sphi 0, %s198
    %s213 = sphi 0, %s199
    %s219 = sphi 0, %s221
    %s222 = sphi 0, %s219
    %s223 = sphi 0, %s222
    %s239 = sphi 0, %s223
  $region4: #{multiscale_resnet_forward.3} parent=0 // loop_header_branch
    %18 = sbr.rel (%p16) target = $region8
  $region5: #{multiscale_resnet_forward.3} parent=0 // loop_body
    %s20 = ssub.s32 %s15, 1
    %s21 = ssub.s32 %s15, 2
    %s22 = sadd.s32 %s15, 1
    %s23 = ssub.s32 %s15, %s22
    %p24 = scmp.eq.s32.totalorder %s23, 0
    %s26 = sadd.s32 %s25, 1
    %s27 = scalar_select %p24, %s25, %s26
    %p30 = pneg %p24
    %p31 = scmp.eq.s32.totalorder %s15, 1
    %p32 = por %p30, %p31
    %p33 = scmp.ne.s32.totalorder %s25, %s28
    %p34 = scmp.eq.s32.totalorder %s15, 0
    %p35 = por %p33, %p34
    %p36 = scmp.ne.s32.totalorder %s25, %s28
    %p37 = scmp.eq.s32.totalorder %s20, 1
    %p38 = por %p36, %p37
    %p39 = scmp.ne.s32.totalorder %s28, %s29
    %p40 = scmp.eq.s32.totalorder %s20, 0
    %p41 = por %p39, %p40
    %p42 = scmp.ne.s32.totalorder %s28, %s29
    %p43 = scmp.eq.s32.totalorder %s21, 1
    %p44 = por %p42, %p43
    %p46 = scmp.ne.s32.totalorder %s29, %s45
    %p47 = scmp.eq.s32.totalorder %s21, 0
    %p48 = por %p46, %p47
    %s50 = sadd.s32 %s49, 1
    %p53 = scmp.eq.s32.totalorder %s15, 1
    %p54 = scmp.ne.s32.totalorder %s49, %s51
    %p55 = scmp.eq.s32.totalorder %s15, 0
    %p56 = por %p54, %p55
    %p57 = scmp.ne.s32.totalorder %s49, %s51
    %p58 = scmp.eq.s32.totalorder %s20, 1
    %p59 = por %p57, %p58
    %p60 = scmp.ne.s32.totalorder %s51, %s52
    %p61 = scmp.eq.s32.totalorder %s20, 0
    %p62 = por %p60, %p61
    %p63 = scmp.ne.s32.totalorder %s51, %s52
    %p64 = scmp.eq.s32.totalorder %s21, 1
    %p65 = por %p63, %p64
    %p67 = scmp.ne.s32.totalorder %s52, %s66
    %p68 = scmp.eq.s32.totalorder %s21, 0
    %p69 = por %p67, %p68
    %s71 = sadd.s32 %s70, 1
    %p74 = scmp.eq.s32.totalorder %s15, 1
    %p75 = scmp.ne.s32.totalorder %s70, %s72
    %p76 = scmp.eq.s32.totalorder %s15, 0
    %p77 = por %p75, %p76
    %p78 = scmp.ne.s32.totalorder %s70, %s72
    %p79 = scmp.eq.s32.totalorder %s20, 1
    %p80 = por %p78, %p79
    %p81 = scmp.ne.s32.totalorder %s72, %s73
    %p82 = scmp.eq.s32.totalorder %s20, 0
    %p83 = por %p81, %p82
    %p84 = scmp.ne.s32.totalorder %s72, %s73
    %p85 = scmp.eq.s32.totalorder %s21, 1
    %p86 = por %p84, %p85
    %p88 = scmp.ne.s32.totalorder %s73, %s87
    %p89 = scmp.eq.s32.totalorder %s21, 0
    %p90 = por %p88, %p89
    %s92 = sadd.s32 %s91, 1
    %p95 = scmp.eq.s32.totalorder %s15, 1
    %p96 = scmp.ne.s32.totalorder %s91, %s93
    %p97 = scmp.eq.s32.totalorder %s15, 0
    %p98 = por %p96, %p97
    %p99 = scmp.ne.s32.totalorder %s91, %s93
    %p100 = scmp.eq.s32.totalorder %s20, 1
    %p101 = por %p99, %p100
    %p102 = scmp.ne.s32.totalorder %s93, %s94
    %p103 = scmp.eq.s32.totalorder %s20, 0
    %p104 = por %p102, %p103
    %p105 = scmp.ne.s32.totalorder %s93, %s94
    %p106 = scmp.eq.s32.totalorder %s21, 1
    %p107 = por %p105, %p106
    %p109 = scmp.ne.s32.totalorder %s94, %s108
    %p110 = scmp.eq.s32.totalorder %s21, 0
    %p111 = por %p109, %p110
    %s113 = sadd.s32 %s112, 1
    %p116 = scmp.eq.s32.totalorder %s15, 1
    %p117 = scmp.ne.s32.totalorder %s112, %s114
    %p118 = scmp.eq.s32.totalorder %s15, 0
    %p119 = por %p117, %p118
    %p120 = scmp.ne.s32.totalorder %s112, %s114
    %p121 = scmp.eq.s32.totalorder %s20, 1
    %p122 = por %p120, %p121
    %p123 = scmp.ne.s32.totalorder %s114, %s115
    %p124 = scmp.eq.s32.totalorder %s20, 0
    %p125 = por %p123, %p124
    %p126 = scmp.ne.s32.totalorder %s114, %s115
    %p127 = scmp.eq.s32.totalorder %s21, 1
    %p128 = por %p126, %p127
    %p130 = scmp.ne.s32.totalorder %s115, %s129
    %p131 = scmp.eq.s32.totalorder %s21, 0
    %p132 = por %p130, %p131
    %s134 = sadd.s32 %s133, 1
    %p137 = scmp.eq.s32.totalorder %s15, 1
    %p138 = scmp.ne.s32.totalorder %s133, %s135
    %p139 = scmp.eq.s32.totalorder %s15, 0
    %p140 = por %p138, %p139
    %p141 = scmp.ne.s32.totalorder %s133, %s135
    %p142 = scmp.eq.s32.totalorder %s20, 1
    %p143 = por %p141, %p142
    %p144 = scmp.ne.s32.totalorder %s135, %s136
    %p145 = scmp.eq.s32.totalorder %s20, 0
    %p146 = por %p144, %p145
    %p147 = scmp.ne.s32.totalorder %s135, %s136
    %p148 = scmp.eq.s32.totalorder %s21, 1
    %p149 = por %p147, %p148
    %p151 = scmp.ne.s32.totalorder %s136, %s150
    %p152 = scmp.eq.s32.totalorder %s21, 0
    %p153 = por %p151, %p152
    %s155 = sadd.s32 %s154, 1
    %p158 = scmp.eq.s32.totalorder %s15, 1
    %p159 = scmp.ne.s32.totalorder %s154, %s156
    %p160 = scmp.eq.s32.totalorder %s15, 0
    %p161 = por %p159, %p160
    %p162 = scmp.ne.s32.totalorder %s154, %s156
    %p163 = scmp.eq.s32.totalorder %s20, 1
    %p164 = por %p162, %p163
    %p165 = scmp.ne.s32.totalorder %s156, %s157
    %p166 = scmp.eq.s32.totalorder %s20, 0
    %p167 = por %p165, %p166
    %p168 = scmp.ne.s32.totalorder %s156, %s157
    %p169 = scmp.eq.s32.totalorder %s21, 1
    %p170 = por %p168, %p169
    %p172 = scmp.ne.s32.totalorder %s157, %s171
    %p173 = scmp.eq.s32.totalorder %s21, 0
    %p174 = por %p172, %p173
    %s176 = sadd.s32 %s175, 1
    %p179 = scmp.eq.s32.totalorder %s15, 1
    %p180 = scmp.ne.s32.totalorder %s175, %s177
    %p181 = scmp.eq.s32.totalorder %s15, 0
    %p182 = por %p180, %p181
    %p183 = scmp.ne.s32.totalorder %s175, %s177
    %p184 = scmp.eq.s32.totalorder %s20, 1
    %p185 = por %p183, %p184
    %p186 = scmp.ne.s32.totalorder %s177, %s178
    %p187 = scmp.eq.s32.totalorder %s20, 0
    %p188 = por %p186, %p187
    %p189 = scmp.ne.s32.totalorder %s177, %s178
    %p190 = scmp.eq.s32.totalorder %s21, 1
    %p191 = por %p189, %p190
    %p193 = scmp.ne.s32.totalorder %s178, %s192
    %p194 = scmp.eq.s32.totalorder %s21, 0
    %p195 = por %p193, %p194
    %s197 = sadd.s32 %s196, 1
    %p200 = scmp.eq.s32.totalorder %s15, 1
    %p201 = scmp.ne.s32.totalorder %s196, %s198
    %p202 = scmp.eq.s32.totalorder %s15, 0
    %p203 = por %p201, %p202
    %p204 = scmp.ne.s32.totalorder %s196, %s198
    %p205 = scmp.eq.s32.totalorder %s20, 1
    %p206 = por %p204, %p205
    %p207 = scmp.ne.s32.totalorder %s198, %s199
    %p208 = scmp.eq.s32.totalorder %s20, 0
    %p209 = por %p207, %p208
    %p210 = scmp.ne.s32.totalorder %s198, %s199
    %p211 = scmp.eq.s32.totalorder %s21, 1
    %p212 = por %p210, %p211
    %p214 = scmp.ne.s32.totalorder %s199, %s213
    %p215 = scmp.eq.s32.totalorder %s21, 0
    %p216 = por %p214, %p215
    %s217 = ssub.s32 %s15, %s22
    %p218 = scmp.eq.s32.totalorder %s217, 0
    %s220 = sadd.s32 %s219, 1
    %s221 = scalar_select %p218, %s219, %s220
    %p224 = pneg %p218
    %p225 = scmp.eq.s32.totalorder %s15, 1
    %p226 = por %p224, %p225
    %p227 = scmp.ne.s32.totalorder %s219, %s222
    %p228 = scmp.eq.s32.totalorder %s15, 0
    %p229 = por %p227, %p228
    %p230 = scmp.ne.s32.totalorder %s219, %s222
    %p231 = scmp.eq.s32.totalorder %s20, 1
    %p232 = por %p230, %p231
    %p233 = scmp.ne.s32.totalorder %s222, %s223
    %p234 = scmp.eq.s32.totalorder %s20, 0
    %p235 = por %p233, %p234
    %p236 = scmp.ne.s32.totalorder %s222, %s223
    %p237 = scmp.eq.s32.totalorder %s21, 1
    %p238 = por %p236, %p237
    %p240 = scmp.ne.s32.totalorder %s223, %s239
    %p241 = scmp.eq.s32.totalorder %s21, 0
    %p242 = por %p240, %p241
    %p243 = scmp.le.s32.totalorder 1, %s15
    %p244 = scmp.lt.s32.totalorder %s15, 3
    %p245 = pnand %p243, %p244
    %p246 = pneg %p245
    // Predicated region
    $region9: #{multiscale_resnet_forward.3} parent=5 // pred_check
      _
    $region10: #{multiscale_resnet_forward.3} parent=5 // pred_check_branch
      %248 = sbr.rel (%p245) target = $region12
    $region11: #{multiscale_resnet_forward.3} parent=5 // pred_region
      %s249 = ssub.s32 %s15, 1
      // Predicated region
      $region13: #{multiscale_resnet_forward.3} parent=11 // pred_check
        %p250 = pneg %p62
      $region14: #{multiscale_resnet_forward.3} parent=11 // pred_check_branch
        %252 = sbr.rel (%p250) target = $region16
      $region15: #{multiscale_resnet_forward.3} parent=11 // pred_region
        _
      $region16: #{multiscale_resnet_forward.3} parent=11 // pred_fallthru
        _
      // Predicated region
      $region17: #{multiscale_resnet_forward.3} parent=11 // pred_check
        %p253 = pneg %p83
      $region18: #{multiscale_resnet_forward.3} parent=11 // pred_check_branch
        %255 = sbr.rel (%p253) target = $region20
      $region19: #{multiscale_resnet_forward.3} parent=11 // pred_region
        _
      $region20: #{multiscale_resnet_forward.3} parent=11 // pred_fallthru
        _
      // Predicated region
      $region21: #{multiscale_resnet_forward.3} parent=11 // pred_check
        %p256 = pneg %p104
      $region22: #{multiscale_resnet_forward.3} parent=11 // pred_check_branch
        %258 = sbr.rel (%p256) target = $region24
      $region23: #{multiscale_resnet_forward.3} parent=11 // pred_region
        _
      $region24: #{multiscale_resnet_forward.3} parent=11 // pred_fallthru
        _
      // Predicated region
      $region25: #{multiscale_resnet_forward.3} parent=11 // pred_check
        %p259 = pneg %p125
      $region26: #{multiscale_resnet_forward.3} parent=11 // pred_check_branch
        %261 = sbr.rel (%p259) target = $region28
      $region27: #{multiscale_resnet_forward.3} parent=11 // pred_region
        _
      $region28: #{multiscale_resnet_forward.3} parent=11 // pred_fallthru
        _
      // Predicated region
      $region29: #{multiscale_resnet_forward.3} parent=11 // pred_check
        %p262 = pneg %p146
      $region30: #{multiscale_resnet_forward.3} parent=11 // pred_check_branch
        %264 = sbr.rel (%p262) target = $region32
      $region31: #{multiscale_resnet_forward.3} parent=11 // pred_region
        _
      $region32: #{multiscale_resnet_forward.3} parent=11 // pred_fallthru
        _
      // Predicated region
      $region33: #{multiscale_resnet_forward.3} parent=11 // pred_check
        %p265 = pneg %p167
      $region34: #{multiscale_resnet_forward.3} parent=11 // pred_check_branch
        %267 = sbr.rel (%p265) target = $region36
      $region35: #{multiscale_resnet_forward.3} parent=11 // pred_region
        _
      $region36: #{multiscale_resnet_forward.3} parent=11 // pred_fallthru
        _
      // Predicated region
      $region37: #{multiscale_resnet_forward.3} parent=11 // pred_check
        %p268 = pneg %p188
      $region38: #{multiscale_resnet_forward.3} parent=11 // pred_check_branch
        %270 = sbr.rel (%p268) target = $region40
      $region39: #{multiscale_resnet_forward.3} parent=11 // pred_region
        _
      $region40: #{multiscale_resnet_forward.3} parent=11 // pred_fallthru
        _
      // Predicated region
      $region41: #{multiscale_resnet_forward.3} parent=11 // pred_check
        %p271 = pneg %p209
      $region42: #{multiscale_resnet_forward.3} parent=11 // pred_check_branch
        %273 = sbr.rel (%p271) target = $region44
      $region43: #{multiscale_resnet_forward.3} parent=11 // pred_region
        _
      $region44: #{multiscale_resnet_forward.3} parent=11 // pred_fallthru
        _
    $region12: #{multiscale_resnet_forward.3} parent=5 // pred_fallthru
      _
    %p274 = scmp.lt.s32.totalorder %s15, 2
    // Predicated region
    $region45: #{multiscale_resnet_forward.3} parent=5 // pred_check
      %p275 = pneg %p274
    $region46: #{multiscale_resnet_forward.3} parent=5 // pred_check_branch
      %277 = sbr.rel (%p275) target = $region48
    $region47: #{multiscale_resnet_forward.3} parent=5 // pred_region
      // Predicated region
      $region49: #{multiscale_resnet_forward.3} parent=47 // pred_check
        %p278 = pneg %p35
      $region50: #{multiscale_resnet_forward.3} parent=47 // pred_check_branch
        %280 = sbr.rel (%p278) target = $region52
      $region51: #{multiscale_resnet_forward.3} parent=47 // pred_region
        %p281 = scmp.lt.s32.totalorder %s15, 1
        %s282 = scalar_select %p281, %s15, 1
        %s283 = smul.addr %s282, 4
        %s284 = scalar_lea.vmem %s0, %s283
      $region52: #{multiscale_resnet_forward.3} parent=47 // pred_fallthru
        _
    $region48: #{multiscale_resnet_forward.3} parent=5 // pred_fallthru
      _
    %p285 = scmp.le.s32.totalorder 1, %s15
    %p286 = scmp.lt.s32.totalorder %s15, 3
    %p287 = pnand %p285, %p286
    %p288 = pneg %p287
    // Predicated region
    $region53: #{multiscale_resnet_forward.3} parent=5 // pred_check
      _
    $region54: #{multiscale_resnet_forward.3} parent=5 // pred_check_branch
      %290 = sbr.rel (%p287) target = $region56
    $region55: #{multiscale_resnet_forward.3} parent=5 // pred_region
      %s291 = ssub.s32 %s15, 1
      %p292 = scmp.lt.s32.totalorder %s20, 1
      %s293 = scalar_select %p292, %s20, 1
      %s294 = smul.addr %s293, 4
      %s295 = scalar_lea.vmem %s0, %s294
      %p296 = pneg %p41
      %p297 = pneg %p38
      %p298 = pneg %p62
      %p299 = pneg %p59
      %p300 = pneg %p83
      %p301 = pneg %p80
      %p302 = pneg %p104
      %p303 = pneg %p101
      %p304 = pneg %p125
      %p305 = pneg %p122
      %p306 = pneg %p146
      %p307 = pneg %p143
      %p308 = pneg %p167
      %p309 = pneg %p164
      %p310 = pneg %p188
      %p311 = pneg %p185
      %p312 = pneg %p209
      %p313 = pneg %p206
      %p314 = pneg %p235
      %p315 = pneg %p232
      %p316 = scmp.lt.s32.totalorder %s20, 1
      %s317 = scalar_select %p316, %s20, 1
      %s318 = smul.addr %s317, 4
      %s319 = smul.addr %s318, 8
      %s320 = scalar_lea.vmem %s9, %s319
      %p321 = scmp.lt.s32.totalorder %s20, 1
      %s322 = scalar_select %p321, %s20, 1
      %s323 = smul.addr %s322, 4
      %s324 = scalar_lea.vmem %s0, %s323
      %p325 = scmp.lt.s32.totalorder %s20, 1
      %s326 = scalar_select %p325, %s20, 1
      %s327 = smul.addr %s326, 4
      %s328 = smul.addr %s327, 8
      %s329 = scalar_lea.vmem %s9, %s328
      %v330 = vlaneseq
      %v331 = vand.u32 %v330, 127
      %v332 = vadd.s32 %v331, 128
      %v333 = vadd.s32 %v331, 256
      %v334 = vadd.s32 %v331, 384
      %v335 = vld [vmem:[%s324] sm:$0xf]
      %v336 = vld [vmem:[%s1] sm:$0xf]
      %v337 = vld [vmem:[%s1 + $0x4] sm:$0xf]
      %v338 = vld [vmem:[%s1 + $0x8] sm:$0xf]
      %v339 = vld [vmem:[%s1 + $0xc] sm:$0xf]
      %v340 = vld [vmem:[%s1 + $0x10] sm:$0xf]
      %v341 = vld [vmem:[%s2] sm:$0xf]
      %v343 = vperm.slane %v335, 0
      %v344 = vperm.slane %v335, 1
      %v345 = vperm.slane %v335, 2
      %v346 = vperm.slane %v335, 3
      %351 = vrot.lane.b32.xlu0 %v343, 2
      %v352 = vpop.permute.xlu0 %351
      %353 = vrot.lane.b32.xlu0 %v344, 2
      %v354 = vpop.permute.xlu0 %353
      %355 = vrot.lane.b32.xlu0 %v345, 2
      %v356 = vpop.permute.xlu0 %355
      %357 = vrot.lane.b32.xlu0 %v346, 2
      %v358 = vpop.permute.xlu0 %357
      %vm359 = vcmp.lt.s32.totalorder %v331, 2
      %v360 = vsel %vm359, %v356, %v358
      %v361 = vsel %vm359, %v354, %v356
      %v362 = vsel %vm359, %v352, %v354
      %v363 = vsel %vm359, %v358, %v352
      %vm364 = vcmp.ge.s32.totalorder %v331, 2
      %vm365 = vcmp.ge.s32.totalorder %v332, 2
      %vm366 = vcmp.ge.s32.totalorder %v333, 2
      %vm367 = vcmp.ge.s32.totalorder %v334, 2
      %vm368 = vcmp.lt.s32.totalorder %v331, 514
      %vm369 = vcmp.lt.s32.totalorder %v332, 514
      %vm370 = vcmp.lt.s32.totalorder %v333, 514
      %vm371 = vcmp.lt.s32.totalorder %v334, 514
      %vm372 = vmand %vm364, %vm368
      %vm373 = vmand %vm365, %vm369
      %vm374 = vmand %vm366, %vm370
      %vm375 = vmand %vm367, %vm371
      %v376 = vsel %vm372, %v363, 0.0
      %v377 = vsel %vm373, %v362, 0.0
      %v378 = vsel %vm374, %v361, 0.0
      %v379 = vsel %vm375, %v360, 0.0
      %381 = vset.pattern.permute.xlu0 0
      %382 = vperm.xlu0 %381, %v336
      %v383 = vpop.permute.xlu0 %382
      %v385 = vperm.slane %v376, 0
      %v386 = vperm.slane %v377, 0
      %v387 = vperm.slane %v378, 0
      %v388 = vperm.slane %v379, 0
      %v389 = vmul.f32 %v383, %v385
      %v390 = vmul.f32 %v383, %v386
      %v391 = vmul.f32 %v383, %v387
      %v392 = vmul.f32 %v383, %v388
      %393 = vrot.lane.b32.xlu0 %v343, 1
      %v394 = vpop.permute.xlu0 %393
      %395 = vrot.lane.b32.xlu0 %v344, 1
      %v396 = vpop.permute.xlu0 %395
      %397 = vrot.lane.b32.xlu0 %v345, 1
      %v398 = vpop.permute.xlu0 %397
      %399 = vrot.lane.b32.xlu0 %v346, 1
      %v400 = vpop.permute.xlu0 %399
      %vm401 = vcmp.lt.s32.totalorder %v331, 1
      %v402 = vsel %vm401, %v398, %v400
      %v403 = vsel %vm401, %v396, %v398
      %v404 = vsel %vm401, %v394, %v396
      %v405 = vsel %vm401, %v400, %v394
      %vm406 = vcmp.ge.s32.totalorder %v331, 1
      %vm407 = vcmp.ge.s32.totalorder %v332, 1
      %vm408 = vcmp.ge.s32.totalorder %v333, 1
      %vm409 = vcmp.ge.s32.totalorder %v334, 1
      %vm410 = vcmp.lt.s32.totalorder %v331, 513
      %vm411 = vcmp.lt.s32.totalorder %v332, 513
      %vm412 = vcmp.lt.s32.totalorder %v333, 513
      %vm413 = vcmp.lt.s32.totalorder %v334, 513
      %vm414 = vmand %vm406, %vm410
      %vm415 = vmand %vm407, %vm411
      %vm416 = vmand %vm408, %vm412
      %vm417 = vmand %vm409, %vm413
      %v418 = vsel %vm414, %v405, 0.0
      %v419 = vsel %vm415, %v404, 0.0
      %v420 = vsel %vm416, %v403, 0.0
      %v421 = vsel %vm417, %v402, 0.0
      %423 = vset.pattern.permute.xlu0 0
      %424 = vperm.xlu0 %423, %v337
      %v425 = vpop.permute.xlu0 %424
      %v427 = vperm.slane %v418, 0
      %v428 = vperm.slane %v419, 0
      %v429 = vperm.slane %v420, 0
      %v430 = vperm.slane %v421, 0
      %v431 = vmul.f32 %v425, %v427
      %v432 = vmul.f32 %v425, %v428
      %v433 = vmul.f32 %v425, %v429
      %v434 = vmul.f32 %v425, %v430
      %v435 = vadd.f32 %v389, %v431
      %v436 = vadd.f32 %v390, %v432
      %v437 = vadd.f32 %v391, %v433
      %v438 = vadd.f32 %v392, %v434
      %440 = vset.pattern.permute.xlu0 0
      %441 = vperm.xlu0 %440, %v338
      %v442 = vpop.permute.xlu0 %441
      %v444 = vmul.f32 %v442, %v343
      %v445 = vmul.f32 %v442, %v344
      %v446 = vmul.f32 %v442, %v345
      %v447 = vmul.f32 %v442, %v346
      %v448 = vadd.f32 %v435, %v444
      %v449 = vadd.f32 %v436, %v445
      %v450 = vadd.f32 %v437, %v446
      %v451 = vadd.f32 %v438, %v447
      %452 = vrot.lane.b32.xlu0 %v343, 127
      %v453 = vpop.permute.xlu0 %452
      %454 = vrot.lane.b32.xlu0 %v344, 127
      %v455 = vpop.permute.xlu0 %454
      %456 = vrot.lane.b32.xlu0 %v345, 127
      %v457 = vpop.permute.xlu0 %456
      %458 = vrot.lane.b32.xlu0 %v346, 127
      %v459 = vpop.permute.xlu0 %458
      %vm460 = vcmp.lt.s32.totalorder %v331, 127
      %v461 = vsel %vm460, %v457, %v459
      %v462 = vsel %vm460, %v455, %v457
      %v463 = vsel %vm460, %v453, %v455
      %v464 = vsel %vm460, %v459, %v453
      %vm465 = vcmp.ge.s32.totalorder %v331, 4294967295
      %vm466 = vcmp.ge.s32.totalorder %v332, 4294967295
      %vm467 = vcmp.ge.s32.totalorder %v333, 4294967295
      %vm468 = vcmp.ge.s32.totalorder %v334, 4294967295
      %vm469 = vcmp.lt.s32.totalorder %v331, 511
      %vm470 = vcmp.lt.s32.totalorder %v332, 511
      %vm471 = vcmp.lt.s32.totalorder %v333, 511
      %vm472 = vcmp.lt.s32.totalorder %v334, 511
      %vm473 = vmand %vm465, %vm469
      %vm474 = vmand %vm466, %vm470
      %vm475 = vmand %vm467, %vm471
      %vm476 = vmand %vm468, %vm472
      %v477 = vsel %vm473, %v463, 0.0
      %v478 = vsel %vm474, %v462, 0.0
      %v479 = vsel %vm475, %v461, 0.0
      %v480 = vsel %vm476, %v464, 0.0
      %482 = vset.pattern.permute.xlu0 0
      %483 = vperm.xlu0 %482, %v339
      %v484 = vpop.permute.xlu0 %483
      %v486 = vperm.slane %v477, 0
      %v487 = vperm.slane %v478, 0
      %v488 = vperm.slane %v479, 0
      %v489 = vperm.slane %v480, 0
      %v490 = vmul.f32 %v484, %v486
      %v491 = vmul.f32 %v484, %v487
      %v492 = vmul.f32 %v484, %v488
      %v493 = vmul.f32 %v484, %v489
      %v494 = vadd.f32 %v448, %v490
      %v495 = vadd.f32 %v449, %v491
      %v496 = vadd.f32 %v450, %v492
      %v497 = vadd.f32 %v451, %v493
      %498 = vrot.lane.b32.xlu0 %v343, 126
      %v499 = vpop.permute.xlu0 %498
      %500 = vrot.lane.b32.xlu0 %v344, 126
      %v501 = vpop.permute.xlu0 %500
      %502 = vrot.lane.b32.xlu0 %v345, 126
      %v503 = vpop.permute.xlu0 %502
      %504 = vrot.lane.b32.xlu0 %v346, 126
      %v505 = vpop.permute.xlu0 %504
      %vm506 = vcmp.lt.s32.totalorder %v331, 126
      %v507 = vsel %vm506, %v503, %v505
      %v508 = vsel %vm506, %v501, %v503
      %v509 = vsel %vm506, %v499, %v501
      %v510 = vsel %vm506, %v505, %v499
      %vm511 = vcmp.ge.s32.totalorder %v331, 4294967294
      %vm512 = vcmp.ge.s32.totalorder %v332, 4294967294
      %vm513 = vcmp.ge.s32.totalorder %v333, 4294967294
      %vm514 = vcmp.ge.s32.totalorder %v334, 4294967294
      %vm515 = vcmp.lt.s32.totalorder %v331, 510
      %vm516 = vcmp.lt.s32.totalorder %v332, 510
      %vm517 = vcmp.lt.s32.totalorder %v333, 510
      %vm518 = vcmp.lt.s32.totalorder %v334, 510
      %vm519 = vmand %vm511, %vm515
      %vm520 = vmand %vm512, %vm516
      %vm521 = vmand %vm513, %vm517
      %vm522 = vmand %vm514, %vm518
      %v523 = vsel %vm519, %v509, 0.0
      %v524 = vsel %vm520, %v508, 0.0
      %v525 = vsel %vm521, %v507, 0.0
      %v526 = vsel %vm522, %v510, 0.0
      %528 = vset.pattern.permute.xlu0 0
      %529 = vperm.xlu0 %528, %v340
      %v530 = vpop.permute.xlu0 %529
      %v532 = vperm.slane %v523, 0
      %v533 = vperm.slane %v524, 0
      %v534 = vperm.slane %v525, 0
      %v535 = vperm.slane %v526, 0
      %v536 = vmul.f32 %v530, %v532
      %v537 = vmul.f32 %v530, %v533
      %v538 = vmul.f32 %v530, %v534
      %v539 = vmul.f32 %v530, %v535
      %v540 = vadd.f32 %v494, %v536
      %v541 = vadd.f32 %v495, %v537
      %v542 = vadd.f32 %v496, %v538
      %v543 = vadd.f32 %v497, %v539
      %545 = vset.pattern.permute.xlu0 0
      %546 = vperm.xlu0 %545, %v341
      %v547 = vpop.permute.xlu0 %546
      %v549 = vadd.f32 %v540, %v547
      %v550 = vadd.f32 %v541, %v547
      %v551 = vadd.f32 %v542, %v547
      %v552 = vadd.f32 %v543, %v547
      %v553 = vld [vmem:[%s3] sm:$0xf]
      %v554 = vld [vmem:[%s3 + $0x4] sm:$0xf]
      %v555 = vld [vmem:[%s3 + $0x8] sm:$0xf]
      %v556 = vld [vmem:[%s3 + $0xc] sm:$0xf]
      %v557 = vld [vmem:[%s3 + $0x10] sm:$0xf]
      %v558 = vld [vmem:[%s4] sm:$0xf]
      %vm559 = vcmp.ge.f32.partialorder %v549, 0.0
      %vm560 = vcmp.ge.f32.partialorder %v550, 0.0
      %vm561 = vcmp.ge.f32.partialorder %v551, 0.0
      %vm562 = vcmp.ge.f32.partialorder %v552, 0.0
      %v563 = vmul.f32 %v549, 0.01
      %v564 = vmul.f32 %v550, 0.01
      %v565 = vmul.f32 %v551, 0.01
      %v566 = vmul.f32 %v552, 0.01
      %v567 = vsel %vm559, %v549, %v563
      %v568 = vsel %vm560, %v550, %v564
      %v569 = vsel %vm561, %v551, %v565
      %v570 = vsel %vm562, %v552, %v566
      %571 = vrot.lane.b32.xlu0 %v567, 2
      %v572 = vpop.permute.xlu0 %571
      %573 = vrot.lane.b32.xlu0 %v568, 2
      %v574 = vpop.permute.xlu0 %573
      %575 = vrot.lane.b32.xlu0 %v569, 2
      %v576 = vpop.permute.xlu0 %575
      %577 = vrot.lane.b32.xlu0 %v570, 2
      %v578 = vpop.permute.xlu0 %577
      %v579 = vsel %vm359, %v576, %v578
      %v580 = vsel %vm359, %v574, %v576
      %v581 = vsel %vm359, %v572, %v574
      %v582 = vsel %vm359, %v578, %v572
      %v583 = vsel %vm372, 1, 0
      %v584 = vsel %vm373, 1, 0
      %v585 = vsel %vm374, 1, 0
      %v586 = vsel %vm375, 1, 0
      %vm587 = vcmp.eq.s32.totalorder %v583, 1
      %vm588 = vcmp.eq.s32.totalorder %v584, 1
      %vm589 = vcmp.eq.s32.totalorder %v585, 1
      %vm590 = vcmp.eq.s32.totalorder %v586, 1
      %v591 = vsel %vm587, %v582, 0.0
      %v592 = vsel %vm588, %v581, 0.0
      %v593 = vsel %vm589, %v580, 0.0
      %v594 = vsel %vm590, %v579, 0.0
      %595 = vrot.lane.b32.xlu0 %v567, 1
      %v596 = vpop.permute.xlu0 %595
      %597 = vrot.lane.b32.xlu0 %v568, 1
      %v598 = vpop.permute.xlu0 %597
      %599 = vrot.lane.b32.xlu0 %v569, 1
      %v600 = vpop.permute.xlu0 %599
      %601 = vrot.lane.b32.xlu0 %v570, 1
      %v602 = vpop.permute.xlu0 %601
      %v603 = vsel %vm401, %v600, %v602
      %v604 = vsel %vm401, %v598, %v600
      %v605 = vsel %vm401, %v596, %v598
      %v606 = vsel %vm401, %v602, %v596
      %v607 = vsel %vm414, 1, 0
      %v608 = vsel %vm415, 1, 0
      %v609 = vsel %vm416, 1, 0
      %v610 = vsel %vm417, 1, 0
      %vm611 = vcmp.eq.s32.totalorder %v607, 1
      %vm612 = vcmp.eq.s32.totalorder %v608, 1
      %vm613 = vcmp.eq.s32.totalorder %v609, 1
      %vm614 = vcmp.eq.s32.totalorder %v610, 1
      %v615 = vsel %vm611, %v606, 0.0
      %v616 = vsel %vm612, %v605, 0.0
      %v617 = vsel %vm613, %v604, 0.0
      %v618 = vsel %vm614, %v603, 0.0
      %vm619 = vcmask 31744
      %v621 = vsel %vm619, %v554, 0
      %vm623 = vcmask 1043456
      %v625 = vsel %vm623, %v615, 0
      %v628 = vsel %vm623, %v616, 0
      %v631 = vsel %vm623, %v617, 0
      %v634 = vsel %vm623, %v618, 0
      %636 = vmatpush.msra.mxu0 0.0
      %637 = vmatpush.msra.mxu0 0.0
      %638 = vmatpush.msra.mxu0 0.0
      %639 = vmatpush.msra.mxu0 0.0
      %640 = vmatpush.msra.mxu0 0.0
      %641 = vmatpush.msra.mxu0 0.0
      %642 = vmatpush.msra.mxu0 0.0
      %643 = vmatpush.msra.mxu0 0.0
      %644 = vmatpush.msra.mxu0 0.0
      %645 = vmatpush.msra.mxu0 0.0
      %646 = vmatpush.msra.mxu0 0.0
      %647 = vmatpush.msra.mxu0 0.0
      %648 = vmatpush.msra.mxu0 0.0
      %649 = vmatpush.msra.mxu0 0.0
      %650 = vmatpush.msra.mxu0 0.0
      %651 = vmatpush.msra.mxu0 %v625
      %652 = vmatmul.f32.gmra.mxu0 %v621
      %v653 = vpop.f32.mrf.mxu0
      %v654 = vadd.f32 0.0, %v653
      %655 = vdwg.mxu0
      %656 = vmatpush.msra.mxu0 0.0
      %657 = vmatpush.msra.mxu0 0.0
      %658 = vmatpush.msra.mxu0 0.0
      %659 = vmatpush.msra.mxu0 0.0
      %660 = vmatpush.msra.mxu0 0.0
      %661 = vmatpush.msra.mxu0 0.0
      %662 = vmatpush.msra.mxu0 0.0
      %663 = vmatpush.msra.mxu0 0.0
      %664 = vmatpush.msra.mxu0 0.0
      %665 = vmatpush.msra.mxu0 0.0
      %666 = vmatpush.msra.mxu0 0.0
      %667 = vmatpush.msra.mxu0 0.0
      %668 = vmatpush.msra.mxu0 0.0
      %669 = vmatpush.msra.mxu0 0.0
      %670 = vmatpush.msra.mxu0 0.0
      %671 = vmatpush.msra.mxu0 %v628
      %672 = vmatmul.f32.gmra.mxu0 %v621
      %v673 = vpop.f32.mrf.mxu0
      %v674 = vadd.f32 0.0, %v673
      %675 = vdwg.mxu0
      %676 = vmatpush.msra.mxu0 0.0
      %677 = vmatpush.msra.mxu0 0.0
      %678 = vmatpush.msra.mxu0 0.0
      %679 = vmatpush.msra.mxu0 0.0
      %680 = vmatpush.msra.mxu0 0.0
      %681 = vmatpush.msra.mxu0 0.0
      %682 = vmatpush.msra.mxu0 0.0
      %683 = vmatpush.msra.mxu0 0.0
      %684 = vmatpush.msra.mxu0 0.0
      %685 = vmatpush.msra.mxu0 0.0
      %686 = vmatpush.msra.mxu0 0.0
      %687 = vmatpush.msra.mxu0 0.0
      %688 = vmatpush.msra.mxu0 0.0
      %689 = vmatpush.msra.mxu0 0.0
      %690 = vmatpush.msra.mxu0 0.0
      %691 = vmatpush.msra.mxu0 %v631
      %692 = vmatmul.f32.gmra.mxu0 %v621
      %v693 = vpop.f32.mrf.mxu0
      %v694 = vadd.f32 0.0, %v693
      %695 = vdwg.mxu0
      %696 = vmatpush.msra.mxu0 0.0
      %697 = vmatpush.msra.mxu0 0.0
      %698 = vmatpush.msra.mxu0 0.0
      %699 = vmatpush.msra.mxu0 0.0
      %700 = vmatpush.msra.mxu0 0.0
      %701 = vmatpush.msra.mxu0 0.0
      %702 = vmatpush.msra.mxu0 0.0
      %703 = vmatpush.msra.mxu0 0.0
      %704 = vmatpush.msra.mxu0 0.0
      %705 = vmatpush.msra.mxu0 0.0
      %706 = vmatpush.msra.mxu0 0.0
      %707 = vmatpush.msra.mxu0 0.0
      %708 = vmatpush.msra.mxu0 0.0
      %709 = vmatpush.msra.mxu0 0.0
      %710 = vmatpush.msra.mxu0 0.0
      %711 = vmatpush.msra.mxu0 %v634
      %712 = vmatmul.f32.gmra.mxu0 %v621
      %v713 = vpop.f32.mrf.mxu0
      %v714 = vadd.f32 0.0, %v713
      %715 = vdwg.mxu0
      %v717 = vsel %vm619, %v553, 0
      %v720 = vsel %vm623, %v591, 0
      %v723 = vsel %vm623, %v592, 0
      %v726 = vsel %vm623, %v593, 0
      %v729 = vsel %vm623, %v594, 0
      %731 = vmatpush.msra.mxu0 0.0
      %732 = vmatpush.msra.mxu0 0.0
      %733 = vmatpush.msra.mxu0 0.0
      %734 = vmatpush.msra.mxu0 0.0
      %735 = vmatpush.msra.mxu0 0.0
      %736 = vmatpush.msra.mxu0 0.0
      %737 = vmatpush.msra.mxu0 0.0
      %738 = vmatpush.msra.mxu0 0.0
      %739 = vmatpush.msra.mxu0 0.0
      %740 = vmatpush.msra.mxu0 0.0
      %741 = vmatpush.msra.mxu0 0.0
      %742 = vmatpush.msra.mxu0 0.0
      %743 = vmatpush.msra.mxu0 0.0
      %744 = vmatpush.msra.mxu0 0.0
      %745 = vmatpush.msra.mxu0 0.0
      %746 = vmatpush.msra.mxu0 %v720
      %747 = vmatmul.f32.gmra.mxu0 %v717
      %v748 = vpop.f32.mrf.mxu0
      %v749 = vadd.f32 %v654, %v748
      %750 = vdwg.mxu0
      %751 = vmatpush.msra.mxu0 0.0
      %752 = vmatpush.msra.mxu0 0.0
      %753 = vmatpush.msra.mxu0 0.0
      %754 = vmatpush.msra.mxu0 0.0
      %755 = vmatpush.msra.mxu0 0.0
      %756 = vmatpush.msra.mxu0 0.0
      %757 = vmatpush.msra.mxu0 0.0
      %758 = vmatpush.msra.mxu0 0.0
      %759 = vmatpush.msra.mxu0 0.0
      %760 = vmatpush.msra.mxu0 0.0
      %761 = vmatpush.msra.mxu0 0.0
      %762 = vmatpush.msra.mxu0 0.0
      %763 = vmatpush.msra.mxu0 0.0
      %764 = vmatpush.msra.mxu0 0.0
      %765 = vmatpush.msra.mxu0 0.0
      %766 = vmatpush.msra.mxu0 %v723
      %767 = vmatmul.f32.gmra.mxu0 %v717
      %v768 = vpop.f32.mrf.mxu0
      %v769 = vadd.f32 %v674, %v768
      %770 = vdwg.mxu0
      %771 = vmatpush.msra.mxu0 0.0
      %772 = vmatpush.msra.mxu0 0.0
      %773 = vmatpush.msra.mxu0 0.0
      %774 = vmatpush.msra.mxu0 0.0
      %775 = vmatpush.msra.mxu0 0.0
      %776 = vmatpush.msra.mxu0 0.0
      %777 = vmatpush.msra.mxu0 0.0
      %778 = vmatpush.msra.mxu0 0.0
      %779 = vmatpush.msra.mxu0 0.0
      %780 = vmatpush.msra.mxu0 0.0
      %781 = vmatpush.msra.mxu0 0.0
      %782 = vmatpush.msra.mxu0 0.0
      %783 = vmatpush.msra.mxu0 0.0
      %784 = vmatpush.msra.mxu0 0.0
      %785 = vmatpush.msra.mxu0 0.0
      %786 = vmatpush.msra.mxu0 %v726
      %787 = vmatmul.f32.gmra.mxu0 %v717
      %v788 = vpop.f32.mrf.mxu0
      %v789 = vadd.f32 %v694, %v788
      %790 = vdwg.mxu0
      %791 = vmatpush.msra.mxu0 0.0
      %792 = vmatpush.msra.mxu0 0.0
      %793 = vmatpush.msra.mxu0 0.0
      %794 = vmatpush.msra.mxu0 0.0
      %795 = vmatpush.msra.mxu0 0.0
      %796 = vmatpush.msra.mxu0 0.0
      %797 = vmatpush.msra.mxu0 0.0
      %798 = vmatpush.msra.mxu0 0.0
      %799 = vmatpush.msra.mxu0 0.0
      %800 = vmatpush.msra.mxu0 0.0
      %801 = vmatpush.msra.mxu0 0.0
      %802 = vmatpush.msra.mxu0 0.0
      %803 = vmatpush.msra.mxu0 0.0
      %804 = vmatpush.msra.mxu0 0.0
      %805 = vmatpush.msra.mxu0 0.0
      %806 = vmatpush.msra.mxu0 %v729
      %807 = vmatmul.f32.gmra.mxu0 %v717
      %v808 = vpop.f32.mrf.mxu0
      %v809 = vadd.f32 %v714, %v808
      %810 = vdwg.mxu0
      %v812 = vsel %vm619, %v555, 0
      %v815 = vsel %vm623, %v567, 0
      %v818 = vsel %vm623, %v568, 0
      %v821 = vsel %vm623, %v569, 0
      %v824 = vsel %vm623, %v570, 0
      %826 = vmatpush.msra.mxu0 0.0
      %827 = vmatpush.msra.mxu0 0.0
      %828 = vmatpush.msra.mxu0 0.0
      %829 = vmatpush.msra.mxu0 0.0
      %830 = vmatpush.msra.mxu0 0.0
      %831 = vmatpush.msra.mxu0 0.0
      %832 = vmatpush.msra.mxu0 0.0
      %833 = vmatpush.msra.mxu0 0.0
      %834 = vmatpush.msra.mxu0 0.0
      %835 = vmatpush.msra.mxu0 0.0
      %836 = vmatpush.msra.mxu0 0.0
      %837 = vmatpush.msra.mxu0 0.0
      %838 = vmatpush.msra.mxu0 0.0
      %839 = vmatpush.msra.mxu0 0.0
      %840 = vmatpush.msra.mxu0 0.0
      %841 = vmatpush.msra.mxu0 %v815
      %842 = vmatmul.f32.gmra.mxu0 %v812
      %v843 = vpop.f32.mrf.mxu0
      %v844 = vadd.f32 0.0, %v843
      %845 = vdwg.mxu0
      %846 = vmatpush.msra.mxu0 0.0
      %847 = vmatpush.msra.mxu0 0.0
      %848 = vmatpush.msra.mxu0 0.0
      %849 = vmatpush.msra.mxu0 0.0
      %850 = vmatpush.msra.mxu0 0.0
      %851 = vmatpush.msra.mxu0 0.0
      %852 = vmatpush.msra.mxu0 0.0
      %853 = vmatpush.msra.mxu0 0.0
      %854 = vmatpush.msra.mxu0 0.0
      %855 = vmatpush.msra.mxu0 0.0
      %856 = vmatpush.msra.mxu0 0.0
      %857 = vmatpush.msra.mxu0 0.0
      %858 = vmatpush.msra.mxu0 0.0
      %859 = vmatpush.msra.mxu0 0.0
      %860 = vmatpush.msra.mxu0 0.0
      %861 = vmatpush.msra.mxu0 %v818
      %862 = vmatmul.f32.gmra.mxu0 %v812
      %v863 = vpop.f32.mrf.mxu0
      %v864 = vadd.f32 0.0, %v863
      %865 = vdwg.mxu0
      %866 = vmatpush.msra.mxu0 0.0
      %867 = vmatpush.msra.mxu0 0.0
      %868 = vmatpush.msra.mxu0 0.0
      %869 = vmatpush.msra.mxu0 0.0
      %870 = vmatpush.msra.mxu0 0.0
      %871 = vmatpush.msra.mxu0 0.0
      %872 = vmatpush.msra.mxu0 0.0
      %873 = vmatpush.msra.mxu0 0.0
      %874 = vmatpush.msra.mxu0 0.0
      %875 = vmatpush.msra.mxu0 0.0
      %876 = vmatpush.msra.mxu0 0.0
      %877 = vmatpush.msra.mxu0 0.0
      %878 = vmatpush.msra.mxu0 0.0
      %879 = vmatpush.msra.mxu0 0.0
      %880 = vmatpush.msra.mxu0 0.0
      %881 = vmatpush.msra.mxu0 %v821
      %882 = vmatmul.f32.gmra.mxu0 %v812
      %v883 = vpop.f32.mrf.mxu0
      %v884 = vadd.f32 0.0, %v883
      %885 = vdwg.mxu0
      %886 = vmatpush.msra.mxu0 0.0
      %887 = vmatpush.msra.mxu0 0.0
      %888 = vmatpush.msra.mxu0 0.0
      %889 = vmatpush.msra.mxu0 0.0
      %890 = vmatpush.msra.mxu0 0.0
      %891 = vmatpush.msra.mxu0 0.0
      %892 = vmatpush.msra.mxu0 0.0
      %893 = vmatpush.msra.mxu0 0.0
      %894 = vmatpush.msra.mxu0 0.0
      %895 = vmatpush.msra.mxu0 0.0
      %896 = vmatpush.msra.mxu0 0.0
      %897 = vmatpush.msra.mxu0 0.0
      %898 = vmatpush.msra.mxu0 0.0
      %899 = vmatpush.msra.mxu0 0.0
      %900 = vmatpush.msra.mxu0 0.0
      %901 = vmatpush.msra.mxu0 %v824
      %902 = vmatmul.f32.gmra.mxu0 %v812
      %v903 = vpop.f32.mrf.mxu0
      %v904 = vadd.f32 0.0, %v903
      %905 = vdwg.mxu0
      %v906 = vadd.f32 %v749, %v844
      %v907 = vadd.f32 %v769, %v864
      %v908 = vadd.f32 %v789, %v884
      %v909 = vadd.f32 %v809, %v904
      %910 = vrot.lane.b32.xlu0 %v567, 127
      %v911 = vpop.permute.xlu0 %910
      %912 = vrot.lane.b32.xlu0 %v568, 127
      %v913 = vpop.permute.xlu0 %912
      %914 = vrot.lane.b32.xlu0 %v569, 127
      %v915 = vpop.permute.xlu0 %914
      %916 = vrot.lane.b32.xlu0 %v570, 127
      %v917 = vpop.permute.xlu0 %916
      %v918 = vsel %vm460, %v915, %v917
      %v919 = vsel %vm460, %v913, %v915
      %v920 = vsel %vm460, %v911, %v913
      %v921 = vsel %vm460, %v917, %v911
      %v922 = vsel %vm473, 1, 0
      %v923 = vsel %vm474, 1, 0
      %v924 = vsel %vm475, 1, 0
      %v925 = vsel %vm476, 1, 0
      %vm926 = vcmp.eq.s32.totalorder %v922, 1
      %vm927 = vcmp.eq.s32.totalorder %v923, 1
      %vm928 = vcmp.eq.s32.totalorder %v924, 1
      %vm929 = vcmp.eq.s32.totalorder %v925, 1
      %v930 = vsel %vm926, %v920, 0.0
      %v931 = vsel %vm927, %v919, 0.0
      %v932 = vsel %vm928, %v918, 0.0
      %v933 = vsel %vm929, %v921, 0.0
      %v935 = vsel %vm619, %v556, 0
      %v938 = vsel %vm623, %v930, 0
      %v941 = vsel %vm623, %v931, 0
      %v944 = vsel %vm623, %v932, 0
      %v947 = vsel %vm623, %v933, 0
      %949 = vmatpush.msra.mxu0 0.0
      %950 = vmatpush.msra.mxu0 0.0
      %951 = vmatpush.msra.mxu0 0.0
      %952 = vmatpush.msra.mxu0 0.0
      %953 = vmatpush.msra.mxu0 0.0
      %954 = vmatpush.msra.mxu0 0.0
      %955 = vmatpush.msra.mxu0 0.0
      %956 = vmatpush.msra.mxu0 0.0
      %957 = vmatpush.msra.mxu0 0.0
      %958 = vmatpush.msra.mxu0 0.0
      %959 = vmatpush.msra.mxu0 0.0
      %960 = vmatpush.msra.mxu0 0.0
      %961 = vmatpush.msra.mxu0 0.0
      %962 = vmatpush.msra.mxu0 0.0
      %963 = vmatpush.msra.mxu0 0.0
      %964 = vmatpush.msra.mxu0 %v938
      %965 = vmatmul.f32.gmra.mxu0 %v935
      %v966 = vpop.f32.mrf.mxu0
      %v967 = vadd.f32 0.0, %v966
      %968 = vdwg.mxu0
      %969 = vmatpush.msra.mxu0 0.0
      %970 = vmatpush.msra.mxu0 0.0
      %971 = vmatpush.msra.mxu0 0.0
      %972 = vmatpush.msra.mxu0 0.0
      %973 = vmatpush.msra.mxu0 0.0
      %974 = vmatpush.msra.mxu0 0.0
      %975 = vmatpush.msra.mxu0 0.0
      %976 = vmatpush.msra.mxu0 0.0
      %977 = vmatpush.msra.mxu0 0.0
      %978 = vmatpush.msra.mxu0 0.0
      %979 = vmatpush.msra.mxu0 0.0
      %980 = vmatpush.msra.mxu0 0.0
      %981 = vmatpush.msra.mxu0 0.0
      %982 = vmatpush.msra.mxu0 0.0
      %983 = vmatpush.msra.mxu0 0.0
      %984 = vmatpush.msra.mxu0 %v941
      %985 = vmatmul.f32.gmra.mxu0 %v935
      %v986 = vpop.f32.mrf.mxu0
      %v987 = vadd.f32 0.0, %v986
      %988 = vdwg.mxu0
      %989 = vmatpush.msra.mxu0 0.0
      %990 = vmatpush.msra.mxu0 0.0
      %991 = vmatpush.msra.mxu0 0.0
      %992 = vmatpush.msra.mxu0 0.0
      %993 = vmatpush.msra.mxu0 0.0
      %994 = vmatpush.msra.mxu0 0.0
      %995 = vmatpush.msra.mxu0 0.0
      %996 = vmatpush.msra.mxu0 0.0
      %997 = vmatpush.msra.mxu0 0.0
      %998 = vmatpush.msra.mxu0 0.0
      %999 = vmatpush.msra.mxu0 0.0
      %1000 = vmatpush.msra.mxu0 0.0
      %1001 = vmatpush.msra.mxu0 0.0
      %1002 = vmatpush.msra.mxu0 0.0
      %1003 = vmatpush.msra.mxu0 0.0
      %1004 = vmatpush.msra.mxu0 %v944
      %1005 = vmatmul.f32.gmra.mxu0 %v935
      %v1006 = vpop.f32.mrf.mxu0
      %v1007 = vadd.f32 0.0, %v1006
      %1008 = vdwg.mxu0
      %1009 = vmatpush.msra.mxu0 0.0
      %1010 = vmatpush.msra.mxu0 0.0
      %1011 = vmatpush.msra.mxu0 0.0
      %1012 = vmatpush.msra.mxu0 0.0
      %1013 = vmatpush.msra.mxu0 0.0
      %1014 = vmatpush.msra.mxu0 0.0
      %1015 = vmatpush.msra.mxu0 0.0
      %1016 = vmatpush.msra.mxu0 0.0
      %1017 = vmatpush.msra.mxu0 0.0
      %1018 = vmatpush.msra.mxu0 0.0
      %1019 = vmatpush.msra.mxu0 0.0
      %1020 = vmatpush.msra.mxu0 0.0
      %1021 = vmatpush.msra.mxu0 0.0
      %1022 = vmatpush.msra.mxu0 0.0
      %1023 = vmatpush.msra.mxu0 0.0
      %1024 = vmatpush.msra.mxu0 %v947
      %1025 = vmatmul.f32.gmra.mxu0 %v935
      %v1026 = vpop.f32.mrf.mxu0
      %v1027 = vadd.f32 0.0, %v1026
      %1028 = vdwg.mxu0
      %v1029 = vadd.f32 %v906, %v967
      %v1030 = vadd.f32 %v907, %v987
      %v1031 = vadd.f32 %v908, %v1007
      %v1032 = vadd.f32 %v909, %v1027
      %1033 = vrot.lane.b32.xlu0 %v567, 126
      %v1034 = vpop.permute.xlu0 %1033
      %1035 = vrot.lane.b32.xlu0 %v568, 126
      %v1036 = vpop.permute.xlu0 %1035
      %1037 = vrot.lane.b32.xlu0 %v569, 126
      %v1038 = vpop.permute.xlu0 %1037
      %1039 = vrot.lane.b32.xlu0 %v570, 126
      %v1040 = vpop.permute.xlu0 %1039
      %v1041 = vsel %vm506, %v1038, %v1040
      %v1042 = vsel %vm506, %v1036, %v1038
      %v1043 = vsel %vm506, %v1034, %v1036
      %v1044 = vsel %vm506, %v1040, %v1034
      %v1045 = vsel %vm519, 1, 0
      %v1046 = vsel %vm520, 1, 0
      %v1047 = vsel %vm521, 1, 0
      %v1048 = vsel %vm522, 1, 0
      %vm1049 = vcmp.eq.s32.totalorder %v1045, 1
      %vm1050 = vcmp.eq.s32.totalorder %v1046, 1
      %vm1051 = vcmp.eq.s32.totalorder %v1047, 1
      %vm1052 = vcmp.eq.s32.totalorder %v1048, 1
      %v1053 = vsel %vm1049, %v1043, 0.0
      %v1054 = vsel %vm1050, %v1042, 0.0
      %v1055 = vsel %vm1051, %v1041, 0.0
      %v1056 = vsel %vm1052, %v1044, 0.0
      %v1058 = vsel %vm619, %v557, 0
      %v1061 = vsel %vm623, %v1053, 0
      %v1064 = vsel %vm623, %v1054, 0
      %v1067 = vsel %vm623, %v1055, 0
      %v1070 = vsel %vm623, %v1056, 0
      %1072 = vmatpush.msra.mxu0 0.0
      %1073 = vmatpush.msra.mxu0 0.0
      %1074 = vmatpush.msra.mxu0 0.0
      %1075 = vmatpush.msra.mxu0 0.0
      %1076 = vmatpush.msra.mxu0 0.0
      %1077 = vmatpush.msra.mxu0 0.0
      %1078 = vmatpush.msra.mxu0 0.0
      %1079 = vmatpush.msra.mxu0 0.0
      %1080 = vmatpush.msra.mxu0 0.0
      %1081 = vmatpush.msra.mxu0 0.0
      %1082 = vmatpush.msra.mxu0 0.0
      %1083 = vmatpush.msra.mxu0 0.0
      %1084 = vmatpush.msra.mxu0 0.0
      %1085 = vmatpush.msra.mxu0 0.0
      %1086 = vmatpush.msra.mxu0 0.0
      %1087 = vmatpush.msra.mxu0 %v1061
      %1088 = vmatmul.f32.gmra.mxu0 %v1058
      %v1089 = vpop.f32.mrf.mxu0
      %v1090 = vadd.f32 0.0, %v1089
      %1091 = vdwg.mxu0
      %1092 = vmatpush.msra.mxu0 0.0
      %1093 = vmatpush.msra.mxu0 0.0
      %1094 = vmatpush.msra.mxu0 0.0
      %1095 = vmatpush.msra.mxu0 0.0
      %1096 = vmatpush.msra.mxu0 0.0
      %1097 = vmatpush.msra.mxu0 0.0
      %1098 = vmatpush.msra.mxu0 0.0
      %1099 = vmatpush.msra.mxu0 0.0
      %1100 = vmatpush.msra.mxu0 0.0
      %1101 = vmatpush.msra.mxu0 0.0
      %1102 = vmatpush.msra.mxu0 0.0
      %1103 = vmatpush.msra.mxu0 0.0
      %1104 = vmatpush.msra.mxu0 0.0
      %1105 = vmatpush.msra.mxu0 0.0
      %1106 = vmatpush.msra.mxu0 0.0
      %1107 = vmatpush.msra.mxu0 %v1064
      %1108 = vmatmul.f32.gmra.mxu0 %v1058
      %v1109 = vpop.f32.mrf.mxu0
      %v1110 = vadd.f32 0.0, %v1109
      %1111 = vdwg.mxu0
      %1112 = vmatpush.msra.mxu0 0.0
      %1113 = vmatpush.msra.mxu0 0.0
      %1114 = vmatpush.msra.mxu0 0.0
      %1115 = vmatpush.msra.mxu0 0.0
      %1116 = vmatpush.msra.mxu0 0.0
      %1117 = vmatpush.msra.mxu0 0.0
      %1118 = vmatpush.msra.mxu0 0.0
      %1119 = vmatpush.msra.mxu0 0.0
      %1120 = vmatpush.msra.mxu0 0.0
      %1121 = vmatpush.msra.mxu0 0.0
      %1122 = vmatpush.msra.mxu0 0.0
      %1123 = vmatpush.msra.mxu0 0.0
      %1124 = vmatpush.msra.mxu0 0.0
      %1125 = vmatpush.msra.mxu0 0.0
      %1126 = vmatpush.msra.mxu0 0.0
      %1127 = vmatpush.msra.mxu0 %v1067
      %1128 = vmatmul.f32.gmra.mxu0 %v1058
      %v1129 = vpop.f32.mrf.mxu0
      %v1130 = vadd.f32 0.0, %v1129
      %1131 = vdwg.mxu0
      %1132 = vmatpush.msra.mxu0 0.0
      %1133 = vmatpush.msra.mxu0 0.0
      %1134 = vmatpush.msra.mxu0 0.0
      %1135 = vmatpush.msra.mxu0 0.0
      %1136 = vmatpush.msra.mxu0 0.0
      %1137 = vmatpush.msra.mxu0 0.0
      %1138 = vmatpush.msra.mxu0 0.0
      %1139 = vmatpush.msra.mxu0 0.0
      %1140 = vmatpush.msra.mxu0 0.0
      %1141 = vmatpush.msra.mxu0 0.0
      %1142 = vmatpush.msra.mxu0 0.0
      %1143 = vmatpush.msra.mxu0 0.0
      %1144 = vmatpush.msra.mxu0 0.0
      %1145 = vmatpush.msra.mxu0 0.0
      %1146 = vmatpush.msra.mxu0 0.0
      %1147 = vmatpush.msra.mxu0 %v1070
      %1148 = vmatmul.f32.gmra.mxu0 %v1058
      %v1149 = vpop.f32.mrf.mxu0
      %v1150 = vadd.f32 0.0, %v1149
      %1151 = vdwg.mxu0
      %v1152 = vadd.f32 %v1029, %v1090
      %v1153 = vadd.f32 %v1030, %v1110
      %v1154 = vadd.f32 %v1031, %v1130
      %v1155 = vadd.f32 %v1032, %v1150
      %1157 = vset.pattern.permute.xlu0 0
      %1158 = vperm.xlu0 %1157, %v558
      %v1159 = vpop.permute.xlu0 %1158
      %v1161 = vadd.f32 %v1152, %v1159
      %v1162 = vadd.f32 %v1153, %v1159
      %v1163 = vadd.f32 %v1154, %v1159
      %v1164 = vadd.f32 %v1155, %v1159
      %v1165 = vadd.f32 %v1161, %v549
      %v1166 = vadd.f32 %v1162, %v550
      %v1167 = vadd.f32 %v1163, %v551
      %v1168 = vadd.f32 %v1164, %v552
      %v1169 = vld [vmem:[%s5] sm:$0xf]
      %v1170 = vld [vmem:[%s5 + $0x4] sm:$0xf]
      %v1171 = vld [vmem:[%s5 + $0x8] sm:$0xf]
      %v1172 = vld [vmem:[%s5 + $0xc] sm:$0xf]
      %v1173 = vld [vmem:[%s5 + $0x10] sm:$0xf]
      %v1174 = vld [vmem:[%s6] sm:$0xf]
      %vm1175 = vcmp.ge.f32.partialorder %v1165, 0.0
      %vm1176 = vcmp.ge.f32.partialorder %v1166, 0.0
      %vm1177 = vcmp.ge.f32.partialorder %v1167, 0.0
      %vm1178 = vcmp.ge.f32.partialorder %v1168, 0.0
      %v1179 = vmul.f32 %v1165, 0.01
      %v1180 = vmul.f32 %v1166, 0.01
      %v1181 = vmul.f32 %v1167, 0.01
      %v1182 = vmul.f32 %v1168, 0.01
      %v1183 = vsel %vm1175, %v1165, %v1179
      %v1184 = vsel %vm1176, %v1166, %v1180
      %v1185 = vsel %vm1177, %v1167, %v1181
      %v1186 = vsel %vm1178, %v1168, %v1182
      %1187 = vrot.lane.b32.xlu0 %v1183, 2
      %v1188 = vpop.permute.xlu0 %1187
      %1189 = vrot.lane.b32.xlu0 %v1184, 2
      %v1190 = vpop.permute.xlu0 %1189
      %1191 = vrot.lane.b32.xlu0 %v1185, 2
      %v1192 = vpop.permute.xlu0 %1191
      %1193 = vrot.lane.b32.xlu0 %v1186, 2
      %v1194 = vpop.permute.xlu0 %1193
      %v1195 = vsel %vm359, %v1192, %v1194
      %v1196 = vsel %vm359, %v1190, %v1192
      %v1197 = vsel %vm359, %v1188, %v1190
      %v1198 = vsel %vm359, %v1194, %v1188
      %v1199 = vsel %vm587, %v1198, 0.0
      %v1200 = vsel %vm588, %v1197, 0.0
      %v1201 = vsel %vm589, %v1196, 0.0
      %v1202 = vsel %vm590, %v1195, 0.0
      %1203 = vrot.lane.b32.xlu0 %v1183, 1
      %v1204 = vpop.permute.xlu0 %1203
      %1205 = vrot.lane.b32.xlu0 %v1184, 1
      %v1206 = vpop.permute.xlu0 %1205
      %1207 = vrot.lane.b32.xlu0 %v1185, 1
      %v1208 = vpop.permute.xlu0 %1207
      %1209 = vrot.lane.b32.xlu0 %v1186, 1
      %v1210 = vpop.permute.xlu0 %1209
      %v1211 = vsel %vm401, %v1208, %v1210
      %v1212 = vsel %vm401, %v1206, %v1208
      %v1213 = vsel %vm401, %v1204, %v1206
      %v1214 = vsel %vm401, %v1210, %v1204
      %v1215 = vsel %vm611, %v1214, 0.0
      %v1216 = vsel %vm612, %v1213, 0.0
      %v1217 = vsel %vm613, %v1212, 0.0
      %v1218 = vsel %vm614, %v1211, 0.0
      %v1220 = vsel %vm619, %v1170, 0
      %v1223 = vsel %vm623, %v1215, 0
      %v1226 = vsel %vm623, %v1216, 0
      %v1229 = vsel %vm623, %v1217, 0
      %v1232 = vsel %vm623, %v1218, 0
      %1234 = vmatpush.msra.mxu0 0.0
      %1235 = vmatpush.msra.mxu0 0.0
      %1236 = vmatpush.msra.mxu0 0.0
      %1237 = vmatpush.msra.mxu0 0.0
      %1238 = vmatpush.msra.mxu0 0.0
      %1239 = vmatpush.msra.mxu0 0.0
      %1240 = vmatpush.msra.mxu0 0.0
      %1241 = vmatpush.msra.mxu0 0.0
      %1242 = vmatpush.msra.mxu0 0.0
      %1243 = vmatpush.msra.mxu0 0.0
      %1244 = vmatpush.msra.mxu0 0.0
      %1245 = vmatpush.msra.mxu0 0.0
      %1246 = vmatpush.msra.mxu0 0.0
      %1247 = vmatpush.msra.mxu0 0.0
      %1248 = vmatpush.msra.mxu0 0.0
      %1249 = vmatpush.msra.mxu0 %v1223
      %1250 = vmatmul.f32.gmra.mxu0 %v1220
      %v1251 = vpop.f32.mrf.mxu0
      %v1252 = vadd.f32 0.0, %v1251
      %1253 = vdwg.mxu0
      %1254 = vmatpush.msra.mxu0 0.0
      %1255 = vmatpush.msra.mxu0 0.0
      %1256 = vmatpush.msra.mxu0 0.0
      %1257 = vmatpush.msra.mxu0 0.0
      %1258 = vmatpush.msra.mxu0 0.0
      %1259 = vmatpush.msra.mxu0 0.0
      %1260 = vmatpush.msra.mxu0 0.0
      %1261 = vmatpush.msra.mxu0 0.0
      %1262 = vmatpush.msra.mxu0 0.0
      %1263 = vmatpush.msra.mxu0 0.0
      %1264 = vmatpush.msra.mxu0 0.0
      %1265 = vmatpush.msra.mxu0 0.0
      %1266 = vmatpush.msra.mxu0 0.0
      %1267 = vmatpush.msra.mxu0 0.0
      %1268 = vmatpush.msra.mxu0 0.0
      %1269 = vmatpush.msra.mxu0 %v1226
      %1270 = vmatmul.f32.gmra.mxu0 %v1220
      %v1271 = vpop.f32.mrf.mxu0
      %v1272 = vadd.f32 0.0, %v1271
      %1273 = vdwg.mxu0
      %1274 = vmatpush.msra.mxu0 0.0
      %1275 = vmatpush.msra.mxu0 0.0
      %1276 = vmatpush.msra.mxu0 0.0
      %1277 = vmatpush.msra.mxu0 0.0
      %1278 = vmatpush.msra.mxu0 0.0
      %1279 = vmatpush.msra.mxu0 0.0
      %1280 = vmatpush.msra.mxu0 0.0
      %1281 = vmatpush.msra.mxu0 0.0
      %1282 = vmatpush.msra.mxu0 0.0
      %1283 = vmatpush.msra.mxu0 0.0
      %1284 = vmatpush.msra.mxu0 0.0
      %1285 = vmatpush.msra.mxu0 0.0
      %1286 = vmatpush.msra.mxu0 0.0
      %1287 = vmatpush.msra.mxu0 0.0
      %1288 = vmatpush.msra.mxu0 0.0
      %1289 = vmatpush.msra.mxu0 %v1229
      %1290 = vmatmul.f32.gmra.mxu0 %v1220
      %v1291 = vpop.f32.mrf.mxu0
      %v1292 = vadd.f32 0.0, %v1291
      %1293 = vdwg.mxu0
      %1294 = vmatpush.msra.mxu0 0.0
      %1295 = vmatpush.msra.mxu0 0.0
      %1296 = vmatpush.msra.mxu0 0.0
      %1297 = vmatpush.msra.mxu0 0.0
      %1298 = vmatpush.msra.mxu0 0.0
      %1299 = vmatpush.msra.mxu0 0.0
      %1300 = vmatpush.msra.mxu0 0.0
      %1301 = vmatpush.msra.mxu0 0.0
      %1302 = vmatpush.msra.mxu0 0.0
      %1303 = vmatpush.msra.mxu0 0.0
      %1304 = vmatpush.msra.mxu0 0.0
      %1305 = vmatpush.msra.mxu0 0.0
      %1306 = vmatpush.msra.mxu0 0.0
      %1307 = vmatpush.msra.mxu0 0.0
      %1308 = vmatpush.msra.mxu0 0.0
      %1309 = vmatpush.msra.mxu0 %v1232
      %1310 = vmatmul.f32.gmra.mxu0 %v1220
      %v1311 = vpop.f32.mrf.mxu0
      %v1312 = vadd.f32 0.0, %v1311
      %1313 = vdwg.mxu0
      %v1315 = vsel %vm619, %v1169, 0
      %v1318 = vsel %vm623, %v1199, 0
      %v1321 = vsel %vm623, %v1200, 0
      %v1324 = vsel %vm623, %v1201, 0
      %v1327 = vsel %vm623, %v1202, 0
      %1329 = vmatpush.msra.mxu0 0.0
      %1330 = vmatpush.msra.mxu0 0.0
      %1331 = vmatpush.msra.mxu0 0.0
      %1332 = vmatpush.msra.mxu0 0.0
      %1333 = vmatpush.msra.mxu0 0.0
      %1334 = vmatpush.msra.mxu0 0.0
      %1335 = vmatpush.msra.mxu0 0.0
      %1336 = vmatpush.msra.mxu0 0.0
      %1337 = vmatpush.msra.mxu0 0.0
      %1338 = vmatpush.msra.mxu0 0.0
      %1339 = vmatpush.msra.mxu0 0.0
      %1340 = vmatpush.msra.mxu0 0.0
      %1341 = vmatpush.msra.mxu0 0.0
      %1342 = vmatpush.msra.mxu0 0.0
      %1343 = vmatpush.msra.mxu0 0.0
      %1344 = vmatpush.msra.mxu0 %v1318
      %1345 = vmatmul.f32.gmra.mxu0 %v1315
      %v1346 = vpop.f32.mrf.mxu0
      %v1347 = vadd.f32 %v1252, %v1346
      %1348 = vdwg.mxu0
      %1349 = vmatpush.msra.mxu0 0.0
      %1350 = vmatpush.msra.mxu0 0.0
      %1351 = vmatpush.msra.mxu0 0.0
      %1352 = vmatpush.msra.mxu0 0.0
      %1353 = vmatpush.msra.mxu0 0.0
      %1354 = vmatpush.msra.mxu0 0.0
      %1355 = vmatpush.msra.mxu0 0.0
      %1356 = vmatpush.msra.mxu0 0.0
      %1357 = vmatpush.msra.mxu0 0.0
      %1358 = vmatpush.msra.mxu0 0.0
      %1359 = vmatpush.msra.mxu0 0.0
      %1360 = vmatpush.msra.mxu0 0.0
      %1361 = vmatpush.msra.mxu0 0.0
      %1362 = vmatpush.msra.mxu0 0.0
      %1363 = vmatpush.msra.mxu0 0.0
      %1364 = vmatpush.msra.mxu0 %v1321
      %1365 = vmatmul.f32.gmra.mxu0 %v1315
      %v1366 = vpop.f32.mrf.mxu0
      %v1367 = vadd.f32 %v1272, %v1366
      %1368 = vdwg.mxu0
      %1369 = vmatpush.msra.mxu0 0.0
      %1370 = vmatpush.msra.mxu0 0.0
      %1371 = vmatpush.msra.mxu0 0.0
      %1372 = vmatpush.msra.mxu0 0.0
      %1373 = vmatpush.msra.mxu0 0.0
      %1374 = vmatpush.msra.mxu0 0.0
      %1375 = vmatpush.msra.mxu0 0.0
      %1376 = vmatpush.msra.mxu0 0.0
      %1377 = vmatpush.msra.mxu0 0.0
      %1378 = vmatpush.msra.mxu0 0.0
      %1379 = vmatpush.msra.mxu0 0.0
      %1380 = vmatpush.msra.mxu0 0.0
      %1381 = vmatpush.msra.mxu0 0.0
      %1382 = vmatpush.msra.mxu0 0.0
      %1383 = vmatpush.msra.mxu0 0.0
      %1384 = vmatpush.msra.mxu0 %v1324
      %1385 = vmatmul.f32.gmra.mxu0 %v1315
      %v1386 = vpop.f32.mrf.mxu0
      %v1387 = vadd.f32 %v1292, %v1386
      %1388 = vdwg.mxu0
      %1389 = vmatpush.msra.mxu0 0.0
      %1390 = vmatpush.msra.mxu0 0.0
      %1391 = vmatpush.msra.mxu0 0.0
      %1392 = vmatpush.msra.mxu0 0.0
      %1393 = vmatpush.msra.mxu0 0.0
      %1394 = vmatpush.msra.mxu0 0.0
      %1395 = vmatpush.msra.mxu0 0.0
      %1396 = vmatpush.msra.mxu0 0.0
      %1397 = vmatpush.msra.mxu0 0.0
      %1398 = vmatpush.msra.mxu0 0.0
      %1399 = vmatpush.msra.mxu0 0.0
      %1400 = vmatpush.msra.mxu0 0.0
      %1401 = vmatpush.msra.mxu0 0.0
      %1402 = vmatpush.msra.mxu0 0.0
      %1403 = vmatpush.msra.mxu0 0.0
      %1404 = vmatpush.msra.mxu0 %v1327
      %1405 = vmatmul.f32.gmra.mxu0 %v1315
      %v1406 = vpop.f32.mrf.mxu0
      %v1407 = vadd.f32 %v1312, %v1406
      %1408 = vdwg.mxu0
      %v1410 = vsel %vm619, %v1171, 0
      %v1413 = vsel %vm623, %v1183, 0
      %v1416 = vsel %vm623, %v1184, 0
      %v1419 = vsel %vm623, %v1185, 0
      %v1422 = vsel %vm623, %v1186, 0
      %1424 = vmatpush.msra.mxu0 0.0
      %1425 = vmatpush.msra.mxu0 0.0
      %1426 = vmatpush.msra.mxu0 0.0
      %1427 = vmatpush.msra.mxu0 0.0
      %1428 = vmatpush.msra.mxu0 0.0
      %1429 = vmatpush.msra.mxu0 0.0
      %1430 = vmatpush.msra.mxu0 0.0
      %1431 = vmatpush.msra.mxu0 0.0
      %1432 = vmatpush.msra.mxu0 0.0
      %1433 = vmatpush.msra.mxu0 0.0
      %1434 = vmatpush.msra.mxu0 0.0
      %1435 = vmatpush.msra.mxu0 0.0
      %1436 = vmatpush.msra.mxu0 0.0
      %1437 = vmatpush.msra.mxu0 0.0
      %1438 = vmatpush.msra.mxu0 0.0
      %1439 = vmatpush.msra.mxu0 %v1413
      %1440 = vmatmul.f32.gmra.mxu0 %v1410
      %v1441 = vpop.f32.mrf.mxu0
      %v1442 = vadd.f32 0.0, %v1441
      %1443 = vdwg.mxu0
      %1444 = vmatpush.msra.mxu0 0.0
      %1445 = vmatpush.msra.mxu0 0.0
      %1446 = vmatpush.msra.mxu0 0.0
      %1447 = vmatpush.msra.mxu0 0.0
      %1448 = vmatpush.msra.mxu0 0.0
      %1449 = vmatpush.msra.mxu0 0.0
      %1450 = vmatpush.msra.mxu0 0.0
      %1451 = vmatpush.msra.mxu0 0.0
      %1452 = vmatpush.msra.mxu0 0.0
      %1453 = vmatpush.msra.mxu0 0.0
      %1454 = vmatpush.msra.mxu0 0.0
      %1455 = vmatpush.msra.mxu0 0.0
      %1456 = vmatpush.msra.mxu0 0.0
      %1457 = vmatpush.msra.mxu0 0.0
      %1458 = vmatpush.msra.mxu0 0.0
      %1459 = vmatpush.msra.mxu0 %v1416
      %1460 = vmatmul.f32.gmra.mxu0 %v1410
      %v1461 = vpop.f32.mrf.mxu0
      %v1462 = vadd.f32 0.0, %v1461
      %1463 = vdwg.mxu0
      %1464 = vmatpush.msra.mxu0 0.0
      %1465 = vmatpush.msra.mxu0 0.0
      %1466 = vmatpush.msra.mxu0 0.0
      %1467 = vmatpush.msra.mxu0 0.0
      %1468 = vmatpush.msra.mxu0 0.0
      %1469 = vmatpush.msra.mxu0 0.0
      %1470 = vmatpush.msra.mxu0 0.0
      %1471 = vmatpush.msra.mxu0 0.0
      %1472 = vmatpush.msra.mxu0 0.0
      %1473 = vmatpush.msra.mxu0 0.0
      %1474 = vmatpush.msra.mxu0 0.0
      %1475 = vmatpush.msra.mxu0 0.0
      %1476 = vmatpush.msra.mxu0 0.0
      %1477 = vmatpush.msra.mxu0 0.0
      %1478 = vmatpush.msra.mxu0 0.0
      %1479 = vmatpush.msra.mxu0 %v1419
      %1480 = vmatmul.f32.gmra.mxu0 %v1410
      %v1481 = vpop.f32.mrf.mxu0
      %v1482 = vadd.f32 0.0, %v1481
      %1483 = vdwg.mxu0
      %1484 = vmatpush.msra.mxu0 0.0
      %1485 = vmatpush.msra.mxu0 0.0
      %1486 = vmatpush.msra.mxu0 0.0
      %1487 = vmatpush.msra.mxu0 0.0
      %1488 = vmatpush.msra.mxu0 0.0
      %1489 = vmatpush.msra.mxu0 0.0
      %1490 = vmatpush.msra.mxu0 0.0
      %1491 = vmatpush.msra.mxu0 0.0
      %1492 = vmatpush.msra.mxu0 0.0
      %1493 = vmatpush.msra.mxu0 0.0
      %1494 = vmatpush.msra.mxu0 0.0
      %1495 = vmatpush.msra.mxu0 0.0
      %1496 = vmatpush.msra.mxu0 0.0
      %1497 = vmatpush.msra.mxu0 0.0
      %1498 = vmatpush.msra.mxu0 0.0
      %1499 = vmatpush.msra.mxu0 %v1422
      %1500 = vmatmul.f32.gmra.mxu0 %v1410
      %v1501 = vpop.f32.mrf.mxu0
      %v1502 = vadd.f32 0.0, %v1501
      %1503 = vdwg.mxu0
      %v1504 = vadd.f32 %v1347, %v1442
      %v1505 = vadd.f32 %v1367, %v1462
      %v1506 = vadd.f32 %v1387, %v1482
      %v1507 = vadd.f32 %v1407, %v1502
      %1508 = vrot.lane.b32.xlu0 %v1183, 127
      %v1509 = vpop.permute.xlu0 %1508
      %1510 = vrot.lane.b32.xlu0 %v1184, 127
      %v1511 = vpop.permute.xlu0 %1510
      %1512 = vrot.lane.b32.xlu0 %v1185, 127
      %v1513 = vpop.permute.xlu0 %1512
      %1514 = vrot.lane.b32.xlu0 %v1186, 127
      %v1515 = vpop.permute.xlu0 %1514
      %v1516 = vsel %vm460, %v1513, %v1515
      %v1517 = vsel %vm460, %v1511, %v1513
      %v1518 = vsel %vm460, %v1509, %v1511
      %v1519 = vsel %vm460, %v1515, %v1509
      %v1520 = vsel %vm926, %v1518, 0.0
      %v1521 = vsel %vm927, %v1517, 0.0
      %v1522 = vsel %vm928, %v1516, 0.0
      %v1523 = vsel %vm929, %v1519, 0.0
      %v1525 = vsel %vm619, %v1172, 0
      %v1528 = vsel %vm623, %v1520, 0
      %v1531 = vsel %vm623, %v1521, 0
      %v1534 = vsel %vm623, %v1522, 0
      %v1537 = vsel %vm623, %v1523, 0
      %1539 = vmatpush.msra.mxu0 0.0
      %1540 = vmatpush.msra.mxu0 0.0
      %1541 = vmatpush.msra.mxu0 0.0
      %1542 = vmatpush.msra.mxu0 0.0
      %1543 = vmatpush.msra.mxu0 0.0
      %1544 = vmatpush.msra.mxu0 0.0
      %1545 = vmatpush.msra.mxu0 0.0
      %1546 = vmatpush.msra.mxu0 0.0
      %1547 = vmatpush.msra.mxu0 0.0
      %1548 = vmatpush.msra.mxu0 0.0
      %1549 = vmatpush.msra.mxu0 0.0
      %1550 = vmatpush.msra.mxu0 0.0
      %1551 = vmatpush.msra.mxu0 0.0
      %1552 = vmatpush.msra.mxu0 0.0
      %1553 = vmatpush.msra.mxu0 0.0
      %1554 = vmatpush.msra.mxu0 %v1528
      %1555 = vmatmul.f32.gmra.mxu0 %v1525
      %v1556 = vpop.f32.mrf.mxu0
      %v1557 = vadd.f32 0.0, %v1556
      %1558 = vdwg.mxu0
      %1559 = vmatpush.msra.mxu0 0.0
      %1560 = vmatpush.msra.mxu0 0.0
      %1561 = vmatpush.msra.mxu0 0.0
      %1562 = vmatpush.msra.mxu0 0.0
      %1563 = vmatpush.msra.mxu0 0.0
      %1564 = vmatpush.msra.mxu0 0.0
      %1565 = vmatpush.msra.mxu0 0.0
      %1566 = vmatpush.msra.mxu0 0.0
      %1567 = vmatpush.msra.mxu0 0.0
      %1568 = vmatpush.msra.mxu0 0.0
      %1569 = vmatpush.msra.mxu0 0.0
      %1570 = vmatpush.msra.mxu0 0.0
      %1571 = vmatpush.msra.mxu0 0.0
      %1572 = vmatpush.msra.mxu0 0.0
      %1573 = vmatpush.msra.mxu0 0.0
      %1574 = vmatpush.msra.mxu0 %v1531
      %1575 = vmatmul.f32.gmra.mxu0 %v1525
      %v1576 = vpop.f32.mrf.mxu0
      %v1577 = vadd.f32 0.0, %v1576
      %1578 = vdwg.mxu0
      %1579 = vmatpush.msra.mxu0 0.0
      %1580 = vmatpush.msra.mxu0 0.0
      %1581 = vmatpush.msra.mxu0 0.0
      %1582 = vmatpush.msra.mxu0 0.0
      %1583 = vmatpush.msra.mxu0 0.0
      %1584 = vmatpush.msra.mxu0 0.0
      %1585 = vmatpush.msra.mxu0 0.0
      %1586 = vmatpush.msra.mxu0 0.0
      %1587 = vmatpush.msra.mxu0 0.0
      %1588 = vmatpush.msra.mxu0 0.0
      %1589 = vmatpush.msra.mxu0 0.0
      %1590 = vmatpush.msra.mxu0 0.0
      %1591 = vmatpush.msra.mxu0 0.0
      %1592 = vmatpush.msra.mxu0 0.0
      %1593 = vmatpush.msra.mxu0 0.0
      %1594 = vmatpush.msra.mxu0 %v1534
      %1595 = vmatmul.f32.gmra.mxu0 %v1525
      %v1596 = vpop.f32.mrf.mxu0
      %v1597 = vadd.f32 0.0, %v1596
      %1598 = vdwg.mxu0
      %1599 = vmatpush.msra.mxu0 0.0
      %1600 = vmatpush.msra.mxu0 0.0
      %1601 = vmatpush.msra.mxu0 0.0
      %1602 = vmatpush.msra.mxu0 0.0
      %1603 = vmatpush.msra.mxu0 0.0
      %1604 = vmatpush.msra.mxu0 0.0
      %1605 = vmatpush.msra.mxu0 0.0
      %1606 = vmatpush.msra.mxu0 0.0
      %1607 = vmatpush.msra.mxu0 0.0
      %1608 = vmatpush.msra.mxu0 0.0
      %1609 = vmatpush.msra.mxu0 0.0
      %1610 = vmatpush.msra.mxu0 0.0
      %1611 = vmatpush.msra.mxu0 0.0
      %1612 = vmatpush.msra.mxu0 0.0
      %1613 = vmatpush.msra.mxu0 0.0
      %1614 = vmatpush.msra.mxu0 %v1537
      %1615 = vmatmul.f32.gmra.mxu0 %v1525
      %v1616 = vpop.f32.mrf.mxu0
      %v1617 = vadd.f32 0.0, %v1616
      %1618 = vdwg.mxu0
      %v1619 = vadd.f32 %v1504, %v1557
      %v1620 = vadd.f32 %v1505, %v1577
      %v1621 = vadd.f32 %v1506, %v1597
      %v1622 = vadd.f32 %v1507, %v1617
      %1623 = vrot.lane.b32.xlu0 %v1183, 126
      %v1624 = vpop.permute.xlu0 %1623
      %1625 = vrot.lane.b32.xlu0 %v1184, 126
      %v1626 = vpop.permute.xlu0 %1625
      %1627 = vrot.lane.b32.xlu0 %v1185, 126
      %v1628 = vpop.permute.xlu0 %1627
      %1629 = vrot.lane.b32.xlu0 %v1186, 126
      %v1630 = vpop.permute.xlu0 %1629
      %v1631 = vsel %vm506, %v1628, %v1630
      %v1632 = vsel %vm506, %v1626, %v1628
      %v1633 = vsel %vm506, %v1624, %v1626
      %v1634 = vsel %vm506, %v1630, %v1624
      %v1635 = vsel %vm1049, %v1633, 0.0
      %v1636 = vsel %vm1050, %v1632, 0.0
      %v1637 = vsel %vm1051, %v1631, 0.0
      %v1638 = vsel %vm1052, %v1634, 0.0
      %v1640 = vsel %vm619, %v1173, 0
      %v1643 = vsel %vm623, %v1635, 0
      %v1646 = vsel %vm623, %v1636, 0
      %v1649 = vsel %vm623, %v1637, 0
      %v1652 = vsel %vm623, %v1638, 0
      %1654 = vmatpush.msra.mxu0 0.0
      %1655 = vmatpush.msra.mxu0 0.0
      %1656 = vmatpush.msra.mxu0 0.0
      %1657 = vmatpush.msra.mxu0 0.0
      %1658 = vmatpush.msra.mxu0 0.0
      %1659 = vmatpush.msra.mxu0 0.0
      %1660 = vmatpush.msra.mxu0 0.0
      %1661 = vmatpush.msra.mxu0 0.0
      %1662 = vmatpush.msra.mxu0 0.0
      %1663 = vmatpush.msra.mxu0 0.0
      %1664 = vmatpush.msra.mxu0 0.0
      %1665 = vmatpush.msra.mxu0 0.0
      %1666 = vmatpush.msra.mxu0 0.0
      %1667 = vmatpush.msra.mxu0 0.0
      %1668 = vmatpush.msra.mxu0 0.0
      %1669 = vmatpush.msra.mxu0 %v1643
      %1670 = vmatmul.f32.gmra.mxu0 %v1640
      %v1671 = vpop.f32.mrf.mxu0
      %v1672 = vadd.f32 0.0, %v1671
      %1673 = vdwg.mxu0
      %1674 = vmatpush.msra.mxu0 0.0
      %1675 = vmatpush.msra.mxu0 0.0
      %1676 = vmatpush.msra.mxu0 0.0
      %1677 = vmatpush.msra.mxu0 0.0
      %1678 = vmatpush.msra.mxu0 0.0
      %1679 = vmatpush.msra.mxu0 0.0
      %1680 = vmatpush.msra.mxu0 0.0
      %1681 = vmatpush.msra.mxu0 0.0
      %1682 = vmatpush.msra.mxu0 0.0
      %1683 = vmatpush.msra.mxu0 0.0
      %1684 = vmatpush.msra.mxu0 0.0
      %1685 = vmatpush.msra.mxu0 0.0
      %1686 = vmatpush.msra.mxu0 0.0
      %1687 = vmatpush.msra.mxu0 0.0
      %1688 = vmatpush.msra.mxu0 0.0
      %1689 = vmatpush.msra.mxu0 %v1646
      %1690 = vmatmul.f32.gmra.mxu0 %v1640
      %v1691 = vpop.f32.mrf.mxu0
      %v1692 = vadd.f32 0.0, %v1691
      %1693 = vdwg.mxu0
      %1694 = vmatpush.msra.mxu0 0.0
      %1695 = vmatpush.msra.mxu0 0.0
      %1696 = vmatpush.msra.mxu0 0.0
      %1697 = vmatpush.msra.mxu0 0.0
      %1698 = vmatpush.msra.mxu0 0.0
      %1699 = vmatpush.msra.mxu0 0.0
      %1700 = vmatpush.msra.mxu0 0.0
      %1701 = vmatpush.msra.mxu0 0.0
      %1702 = vmatpush.msra.mxu0 0.0
      %1703 = vmatpush.msra.mxu0 0.0
      %1704 = vmatpush.msra.mxu0 0.0
      %1705 = vmatpush.msra.mxu0 0.0
      %1706 = vmatpush.msra.mxu0 0.0
      %1707 = vmatpush.msra.mxu0 0.0
      %1708 = vmatpush.msra.mxu0 0.0
      %1709 = vmatpush.msra.mxu0 %v1649
      %1710 = vmatmul.f32.gmra.mxu0 %v1640
      %v1711 = vpop.f32.mrf.mxu0
      %v1712 = vadd.f32 0.0, %v1711
      %1713 = vdwg.mxu0
      %1714 = vmatpush.msra.mxu0 0.0
      %1715 = vmatpush.msra.mxu0 0.0
      %1716 = vmatpush.msra.mxu0 0.0
      %1717 = vmatpush.msra.mxu0 0.0
      %1718 = vmatpush.msra.mxu0 0.0
      %1719 = vmatpush.msra.mxu0 0.0
      %1720 = vmatpush.msra.mxu0 0.0
      %1721 = vmatpush.msra.mxu0 0.0
      %1722 = vmatpush.msra.mxu0 0.0
      %1723 = vmatpush.msra.mxu0 0.0
      %1724 = vmatpush.msra.mxu0 0.0
      %1725 = vmatpush.msra.mxu0 0.0
      %1726 = vmatpush.msra.mxu0 0.0
      %1727 = vmatpush.msra.mxu0 0.0
      %1728 = vmatpush.msra.mxu0 0.0
      %1729 = vmatpush.msra.mxu0 %v1652
      %1730 = vmatmul.f32.gmra.mxu0 %v1640
      %v1731 = vpop.f32.mrf.mxu0
      %v1732 = vadd.f32 0.0, %v1731
      %1733 = vdwg.mxu0
      %v1734 = vadd.f32 %v1619, %v1672
      %v1735 = vadd.f32 %v1620, %v1692
      %v1736 = vadd.f32 %v1621, %v1712
      %v1737 = vadd.f32 %v1622, %v1732
      %1739 = vset.pattern.permute.xlu0 0
      %1740 = vperm.xlu0 %1739, %v1174
      %v1741 = vpop.permute.xlu0 %1740
      %v1743 = vadd.f32 %v1734, %v1741
      %v1744 = vadd.f32 %v1735, %v1741
      %v1745 = vadd.f32 %v1736, %v1741
      %v1746 = vadd.f32 %v1737, %v1741
      %v1747 = vadd.f32 %v1743, %v1165
      %v1748 = vadd.f32 %v1744, %v1166
      %v1749 = vadd.f32 %v1745, %v1167
      %v1750 = vadd.f32 %v1746, %v1168
      %v1751 = vld [vmem:[%s7] sm:$0xff]
      %v1752 = vld [vmem:[%s7 + $0x8] sm:$0xff]
      %v1753 = vld [vmem:[%s7 + $0x10] sm:$0xff]
      %v1754 = vld [vmem:[%s7 + $0x18] sm:$0xff]
      %v1755 = vld [vmem:[%s8] sm:$0xff]
      %1756 = vrot.lane.b32.xlu0 %v1747, 127
      %v1757 = vpop.permute.xlu0 %1756
      %1758 = vrot.lane.b32.xlu0 %v1748, 127
      %v1759 = vpop.permute.xlu0 %1758
      %1760 = vrot.lane.b32.xlu0 %v1749, 127
      %v1761 = vpop.permute.xlu0 %1760
      %1762 = vrot.lane.b32.xlu0 %v1750, 127
      %v1763 = vpop.permute.xlu0 %1762
      %v1764 = vsel %vm460, %v1761, %v1763
      %v1765 = vsel %vm460, %v1759, %v1761
      %v1766 = vsel %vm460, %v1757, %v1759
      %v1767 = vsel %vm460, %v1763, %v1757
      %v1768 = vsel %vm926, %v1766, 0.0
      %v1769 = vsel %vm927, %v1765, 0.0
      %v1770 = vsel %vm928, %v1764, 0.0
      %v1771 = vsel %vm929, %v1767, 0.0
      %v1773 = vsel %vm619, %v1752, 0
      %v1776 = vsel %vm623, %v1768, 0
      %v1779 = vsel %vm623, %v1769, 0
      %v1782 = vsel %vm623, %v1770, 0
      %v1785 = vsel %vm623, %v1771, 0
      %1787 = vmatpush.msra.mxu0 0.0
      %1788 = vmatpush.msra.mxu0 0.0
      %1789 = vmatpush.msra.mxu0 0.0
      %1790 = vmatpush.msra.mxu0 0.0
      %1791 = vmatpush.msra.mxu0 0.0
      %1792 = vmatpush.msra.mxu0 0.0
      %1793 = vmatpush.msra.mxu0 0.0
      %1794 = vmatpush.msra.mxu0 0.0
      %1795 = vmatpush.msra.mxu0 0.0
      %1796 = vmatpush.msra.mxu0 0.0
      %1797 = vmatpush.msra.mxu0 0.0
      %1798 = vmatpush.msra.mxu0 0.0
      %1799 = vmatpush.msra.mxu0 0.0
      %1800 = vmatpush.msra.mxu0 0.0
      %1801 = vmatpush.msra.mxu0 0.0
      %1802 = vmatpush.msra.mxu0 %v1776
      %1803 = vmatmul.f32.gmra.mxu0 %v1773
      %v1804 = vpop.f32.mrf.mxu0
      %v1805 = vadd.f32 0.0, %v1804
      %1806 = vdwg.mxu0
      %1807 = vmatpush.msra.mxu0 0.0
      %1808 = vmatpush.msra.mxu0 0.0
      %1809 = vmatpush.msra.mxu0 0.0
      %1810 = vmatpush.msra.mxu0 0.0
      %1811 = vmatpush.msra.mxu0 0.0
      %1812 = vmatpush.msra.mxu0 0.0
      %1813 = vmatpush.msra.mxu0 0.0
      %1814 = vmatpush.msra.mxu0 0.0
      %1815 = vmatpush.msra.mxu0 0.0
      %1816 = vmatpush.msra.mxu0 0.0
      %1817 = vmatpush.msra.mxu0 0.0
      %1818 = vmatpush.msra.mxu0 0.0
      %1819 = vmatpush.msra.mxu0 0.0
      %1820 = vmatpush.msra.mxu0 0.0
      %1821 = vmatpush.msra.mxu0 0.0
      %1822 = vmatpush.msra.mxu0 %v1779
      %1823 = vmatmul.f32.gmra.mxu0 %v1773
      %v1824 = vpop.f32.mrf.mxu0
      %v1825 = vadd.f32 0.0, %v1824
      %1826 = vdwg.mxu0
      %1827 = vmatpush.msra.mxu0 0.0
      %1828 = vmatpush.msra.mxu0 0.0
      %1829 = vmatpush.msra.mxu0 0.0
      %1830 = vmatpush.msra.mxu0 0.0
      %1831 = vmatpush.msra.mxu0 0.0
      %1832 = vmatpush.msra.mxu0 0.0
      %1833 = vmatpush.msra.mxu0 0.0
      %1834 = vmatpush.msra.mxu0 0.0
      %1835 = vmatpush.msra.mxu0 0.0
      %1836 = vmatpush.msra.mxu0 0.0
      %1837 = vmatpush.msra.mxu0 0.0
      %1838 = vmatpush.msra.mxu0 0.0
      %1839 = vmatpush.msra.mxu0 0.0
      %1840 = vmatpush.msra.mxu0 0.0
      %1841 = vmatpush.msra.mxu0 0.0
      %1842 = vmatpush.msra.mxu0 %v1782
      %1843 = vmatmul.f32.gmra.mxu0 %v1773
      %v1844 = vpop.f32.mrf.mxu0
      %v1845 = vadd.f32 0.0, %v1844
      %1846 = vdwg.mxu0
      %1847 = vmatpush.msra.mxu0 0.0
      %1848 = vmatpush.msra.mxu0 0.0
      %1849 = vmatpush.msra.mxu0 0.0
      %1850 = vmatpush.msra.mxu0 0.0
      %1851 = vmatpush.msra.mxu0 0.0
      %1852 = vmatpush.msra.mxu0 0.0
      %1853 = vmatpush.msra.mxu0 0.0
      %1854 = vmatpush.msra.mxu0 0.0
      %1855 = vmatpush.msra.mxu0 0.0
      %1856 = vmatpush.msra.mxu0 0.0
      %1857 = vmatpush.msra.mxu0 0.0
      %1858 = vmatpush.msra.mxu0 0.0
      %1859 = vmatpush.msra.mxu0 0.0
      %1860 = vmatpush.msra.mxu0 0.0
      %1861 = vmatpush.msra.mxu0 0.0
      %1862 = vmatpush.msra.mxu0 %v1785
      %1863 = vmatmul.f32.gmra.mxu0 %v1773
      %v1864 = vpop.f32.mrf.mxu0
      %v1865 = vadd.f32 0.0, %v1864
      %1866 = vdwg.mxu0
      %v1868 = vsel %vm619, %v1751, 0
      %v1871 = vsel %vm623, %v1747, 0
      %v1874 = vsel %vm623, %v1748, 0
      %v1877 = vsel %vm623, %v1749, 0
      %v1880 = vsel %vm623, %v1750, 0
      %1882 = vmatpush.msra.mxu0 0.0
      %1883 = vmatpush.msra.mxu0 0.0
      %1884 = vmatpush.msra.mxu0 0.0
      %1885 = vmatpush.msra.mxu0 0.0
      %1886 = vmatpush.msra.mxu0 0.0
      %1887 = vmatpush.msra.mxu0 0.0
      %1888 = vmatpush.msra.mxu0 0.0
      %1889 = vmatpush.msra.mxu0 0.0
      %1890 = vmatpush.msra.mxu0 0.0
      %1891 = vmatpush.msra.mxu0 0.0
      %1892 = vmatpush.msra.mxu0 0.0
      %1893 = vmatpush.msra.mxu0 0.0
      %1894 = vmatpush.msra.mxu0 0.0
      %1895 = vmatpush.msra.mxu0 0.0
      %1896 = vmatpush.msra.mxu0 0.0
      %1897 = vmatpush.msra.mxu0 %v1871
      %1898 = vmatmul.f32.gmra.mxu0 %v1868
      %v1899 = vpop.f32.mrf.mxu0
      %v1900 = vadd.f32 %v1805, %v1899
      %1901 = vdwg.mxu0
      %1902 = vmatpush.msra.mxu0 0.0
      %1903 = vmatpush.msra.mxu0 0.0
      %1904 = vmatpush.msra.mxu0 0.0
      %1905 = vmatpush.msra.mxu0 0.0
      %1906 = vmatpush.msra.mxu0 0.0
      %1907 = vmatpush.msra.mxu0 0.0
      %1908 = vmatpush.msra.mxu0 0.0
      %1909 = vmatpush.msra.mxu0 0.0
      %1910 = vmatpush.msra.mxu0 0.0
      %1911 = vmatpush.msra.mxu0 0.0
      %1912 = vmatpush.msra.mxu0 0.0
      %1913 = vmatpush.msra.mxu0 0.0
      %1914 = vmatpush.msra.mxu0 0.0
      %1915 = vmatpush.msra.mxu0 0.0
      %1916 = vmatpush.msra.mxu0 0.0
      %1917 = vmatpush.msra.mxu0 %v1874
      %1918 = vmatmul.f32.gmra.mxu0 %v1868
      %v1919 = vpop.f32.mrf.mxu0
      %v1920 = vadd.f32 %v1825, %v1919
      %1921 = vdwg.mxu0
      %1922 = vmatpush.msra.mxu0 0.0
      %1923 = vmatpush.msra.mxu0 0.0
      %1924 = vmatpush.msra.mxu0 0.0
      %1925 = vmatpush.msra.mxu0 0.0
      %1926 = vmatpush.msra.mxu0 0.0
      %1927 = vmatpush.msra.mxu0 0.0
      %1928 = vmatpush.msra.mxu0 0.0
      %1929 = vmatpush.msra.mxu0 0.0
      %1930 = vmatpush.msra.mxu0 0.0
      %1931 = vmatpush.msra.mxu0 0.0
      %1932 = vmatpush.msra.mxu0 0.0
      %1933 = vmatpush.msra.mxu0 0.0
      %1934 = vmatpush.msra.mxu0 0.0
      %1935 = vmatpush.msra.mxu0 0.0
      %1936 = vmatpush.msra.mxu0 0.0
      %1937 = vmatpush.msra.mxu0 %v1877
      %1938 = vmatmul.f32.gmra.mxu0 %v1868
      %v1939 = vpop.f32.mrf.mxu0
      %v1940 = vadd.f32 %v1845, %v1939
      %1941 = vdwg.mxu0
      %1942 = vmatpush.msra.mxu0 0.0
      %1943 = vmatpush.msra.mxu0 0.0
      %1944 = vmatpush.msra.mxu0 0.0
      %1945 = vmatpush.msra.mxu0 0.0
      %1946 = vmatpush.msra.mxu0 0.0
      %1947 = vmatpush.msra.mxu0 0.0
      %1948 = vmatpush.msra.mxu0 0.0
      %1949 = vmatpush.msra.mxu0 0.0
      %1950 = vmatpush.msra.mxu0 0.0
      %1951 = vmatpush.msra.mxu0 0.0
      %1952 = vmatpush.msra.mxu0 0.0
      %1953 = vmatpush.msra.mxu0 0.0
      %1954 = vmatpush.msra.mxu0 0.0
      %1955 = vmatpush.msra.mxu0 0.0
      %1956 = vmatpush.msra.mxu0 0.0
      %1957 = vmatpush.msra.mxu0 %v1880
      %1958 = vmatmul.f32.gmra.mxu0 %v1868
      %v1959 = vpop.f32.mrf.mxu0
      %v1960 = vadd.f32 %v1865, %v1959
      %1961 = vdwg.mxu0
      %1962 = vrot.lane.b32.xlu0 %v1747, 126
      %v1963 = vpop.permute.xlu0 %1962
      %1964 = vrot.lane.b32.xlu0 %v1748, 126
      %v1965 = vpop.permute.xlu0 %1964
      %1966 = vrot.lane.b32.xlu0 %v1749, 126
      %v1967 = vpop.permute.xlu0 %1966
      %1968 = vrot.lane.b32.xlu0 %v1750, 126
      %v1969 = vpop.permute.xlu0 %1968
      %v1970 = vsel %vm506, %v1967, %v1969
      %v1971 = vsel %vm506, %v1965, %v1967
      %v1972 = vsel %vm506, %v1963, %v1965
      %v1973 = vsel %vm506, %v1969, %v1963
      %v1974 = vsel %vm1049, %v1972, 0.0
      %v1975 = vsel %vm1050, %v1971, 0.0
      %v1976 = vsel %vm1051, %v1970, 0.0
      %v1977 = vsel %vm1052, %v1973, 0.0
      %v1979 = vsel %vm619, %v1753, 0
      %v1982 = vsel %vm623, %v1974, 0
      %v1985 = vsel %vm623, %v1975, 0
      %v1988 = vsel %vm623, %v1976, 0
      %v1991 = vsel %vm623, %v1977, 0
      %1993 = vmatpush.msra.mxu0 0.0
      %1994 = vmatpush.msra.mxu0 0.0
      %1995 = vmatpush.msra.mxu0 0.0
      %1996 = vmatpush.msra.mxu0 0.0
      %1997 = vmatpush.msra.mxu0 0.0
      %1998 = vmatpush.msra.mxu0 0.0
      %1999 = vmatpush.msra.mxu0 0.0
      %2000 = vmatpush.msra.mxu0 0.0
      %2001 = vmatpush.msra.mxu0 0.0
      %2002 = vmatpush.msra.mxu0 0.0
      %2003 = vmatpush.msra.mxu0 0.0
      %2004 = vmatpush.msra.mxu0 0.0
      %2005 = vmatpush.msra.mxu0 0.0
      %2006 = vmatpush.msra.mxu0 0.0
      %2007 = vmatpush.msra.mxu0 0.0
      %2008 = vmatpush.msra.mxu0 %v1982
      %2009 = vmatmul.f32.gmra.mxu0 %v1979
      %v2010 = vpop.f32.mrf.mxu0
      %v2011 = vadd.f32 0.0, %v2010
      %2012 = vdwg.mxu0
      %2013 = vmatpush.msra.mxu0 0.0
      %2014 = vmatpush.msra.mxu0 0.0
      %2015 = vmatpush.msra.mxu0 0.0
      %2016 = vmatpush.msra.mxu0 0.0
      %2017 = vmatpush.msra.mxu0 0.0
      %2018 = vmatpush.msra.mxu0 0.0
      %2019 = vmatpush.msra.mxu0 0.0
      %2020 = vmatpush.msra.mxu0 0.0
      %2021 = vmatpush.msra.mxu0 0.0
      %2022 = vmatpush.msra.mxu0 0.0
      %2023 = vmatpush.msra.mxu0 0.0
      %2024 = vmatpush.msra.mxu0 0.0
      %2025 = vmatpush.msra.mxu0 0.0
      %2026 = vmatpush.msra.mxu0 0.0
      %2027 = vmatpush.msra.mxu0 0.0
      %2028 = vmatpush.msra.mxu0 %v1985
      %2029 = vmatmul.f32.gmra.mxu0 %v1979
      %v2030 = vpop.f32.mrf.mxu0
      %v2031 = vadd.f32 0.0, %v2030
      %2032 = vdwg.mxu0
      %2033 = vmatpush.msra.mxu0 0.0
      %2034 = vmatpush.msra.mxu0 0.0
      %2035 = vmatpush.msra.mxu0 0.0
      %2036 = vmatpush.msra.mxu0 0.0
      %2037 = vmatpush.msra.mxu0 0.0
      %2038 = vmatpush.msra.mxu0 0.0
      %2039 = vmatpush.msra.mxu0 0.0
      %2040 = vmatpush.msra.mxu0 0.0
      %2041 = vmatpush.msra.mxu0 0.0
      %2042 = vmatpush.msra.mxu0 0.0
      %2043 = vmatpush.msra.mxu0 0.0
      %2044 = vmatpush.msra.mxu0 0.0
      %2045 = vmatpush.msra.mxu0 0.0
      %2046 = vmatpush.msra.mxu0 0.0
      %2047 = vmatpush.msra.mxu0 0.0
      %2048 = vmatpush.msra.mxu0 %v1988
      %2049 = vmatmul.f32.gmra.mxu0 %v1979
      %v2050 = vpop.f32.mrf.mxu0
      %v2051 = vadd.f32 0.0, %v2050
      %2052 = vdwg.mxu0
      %2053 = vmatpush.msra.mxu0 0.0
      %2054 = vmatpush.msra.mxu0 0.0
      %2055 = vmatpush.msra.mxu0 0.0
      %2056 = vmatpush.msra.mxu0 0.0
      %2057 = vmatpush.msra.mxu0 0.0
      %2058 = vmatpush.msra.mxu0 0.0
      %2059 = vmatpush.msra.mxu0 0.0
      %2060 = vmatpush.msra.mxu0 0.0
      %2061 = vmatpush.msra.mxu0 0.0
      %2062 = vmatpush.msra.mxu0 0.0
      %2063 = vmatpush.msra.mxu0 0.0
      %2064 = vmatpush.msra.mxu0 0.0
      %2065 = vmatpush.msra.mxu0 0.0
      %2066 = vmatpush.msra.mxu0 0.0
      %2067 = vmatpush.msra.mxu0 0.0
      %2068 = vmatpush.msra.mxu0 %v1991
      %2069 = vmatmul.f32.gmra.mxu0 %v1979
      %v2070 = vpop.f32.mrf.mxu0
      %v2071 = vadd.f32 0.0, %v2070
      %2072 = vdwg.mxu0
      %v2073 = vadd.f32 %v1900, %v2011
      %v2074 = vadd.f32 %v1920, %v2031
      %v2075 = vadd.f32 %v1940, %v2051
      %v2076 = vadd.f32 %v1960, %v2071
      %2077 = vrot.lane.b32.xlu0 %v1747, 125
      %v2078 = vpop.permute.xlu0 %2077
      %2079 = vrot.lane.b32.xlu0 %v1748, 125
      %v2080 = vpop.permute.xlu0 %2079
      %2081 = vrot.lane.b32.xlu0 %v1749, 125
      %v2082 = vpop.permute.xlu0 %2081
      %2083 = vrot.lane.b32.xlu0 %v1750, 125
      %v2084 = vpop.permute.xlu0 %2083
      %vm2085 = vcmp.lt.s32.totalorder %v331, 125
      %v2086 = vsel %vm2085, %v2082, %v2084
      %v2087 = vsel %vm2085, %v2080, %v2082
      %v2088 = vsel %vm2085, %v2078, %v2080
      %v2089 = vsel %vm2085, %v2084, %v2078
      %vm2090 = vcmp.ge.s32.totalorder %v331, 4294967293
      %vm2091 = vcmp.ge.s32.totalorder %v332, 4294967293
      %vm2092 = vcmp.ge.s32.totalorder %v333, 4294967293
      %vm2093 = vcmp.ge.s32.totalorder %v334, 4294967293
      %vm2094 = vcmp.lt.s32.totalorder %v331, 509
      %vm2095 = vcmp.lt.s32.totalorder %v332, 509
      %vm2096 = vcmp.lt.s32.totalorder %v333, 509
      %vm2097 = vcmp.lt.s32.totalorder %v334, 509
      %vm2098 = vmand %vm2090, %vm2094
      %vm2099 = vmand %vm2091, %vm2095
      %vm2100 = vmand %vm2092, %vm2096
      %vm2101 = vmand %vm2093, %vm2097
      %v2102 = vsel %vm2098, 1, 0
      %v2103 = vsel %vm2099, 1, 0
      %v2104 = vsel %vm2100, 1, 0
      %v2105 = vsel %vm2101, 1, 0
      %vm2106 = vcmp.eq.s32.totalorder %v2102, 1
      %vm2107 = vcmp.eq.s32.totalorder %v2103, 1
      %vm2108 = vcmp.eq.s32.totalorder %v2104, 1
      %vm2109 = vcmp.eq.s32.totalorder %v2105, 1
      %v2110 = vsel %vm2106, %v2088, 0.0
      %v2111 = vsel %vm2107, %v2087, 0.0
      %v2112 = vsel %vm2108, %v2086, 0.0
      %v2113 = vsel %vm2109, %v2089, 0.0
      %v2115 = vsel %vm619, %v1754, 0
      %v2118 = vsel %vm623, %v2110, 0
      %v2121 = vsel %vm623, %v2111, 0
      %v2124 = vsel %vm623, %v2112, 0
      %v2127 = vsel %vm623, %v2113, 0
      %2129 = vmatpush.msra.mxu0 0.0
      %2130 = vmatpush.msra.mxu0 0.0
      %2131 = vmatpush.msra.mxu0 0.0
      %2132 = vmatpush.msra.mxu0 0.0
      %2133 = vmatpush.msra.mxu0 0.0
      %2134 = vmatpush.msra.mxu0 0.0
      %2135 = vmatpush.msra.mxu0 0.0
      %2136 = vmatpush.msra.mxu0 0.0
      %2137 = vmatpush.msra.mxu0 0.0
      %2138 = vmatpush.msra.mxu0 0.0
      %2139 = vmatpush.msra.mxu0 0.0
      %2140 = vmatpush.msra.mxu0 0.0
      %2141 = vmatpush.msra.mxu0 0.0
      %2142 = vmatpush.msra.mxu0 0.0
      %2143 = vmatpush.msra.mxu0 0.0
      %2144 = vmatpush.msra.mxu0 %v2118
      %2145 = vmatmul.f32.gmra.mxu0 %v2115
      %v2146 = vpop.f32.mrf.mxu0
      %v2147 = vadd.f32 0.0, %v2146
      %2148 = vdwg.mxu0
      %2149 = vmatpush.msra.mxu0 0.0
      %2150 = vmatpush.msra.mxu0 0.0
      %2151 = vmatpush.msra.mxu0 0.0
      %2152 = vmatpush.msra.mxu0 0.0
      %2153 = vmatpush.msra.mxu0 0.0
      %2154 = vmatpush.msra.mxu0 0.0
      %2155 = vmatpush.msra.mxu0 0.0
      %2156 = vmatpush.msra.mxu0 0.0
      %2157 = vmatpush.msra.mxu0 0.0
      %2158 = vmatpush.msra.mxu0 0.0
      %2159 = vmatpush.msra.mxu0 0.0
      %2160 = vmatpush.msra.mxu0 0.0
      %2161 = vmatpush.msra.mxu0 0.0
      %2162 = vmatpush.msra.mxu0 0.0
      %2163 = vmatpush.msra.mxu0 0.0
      %2164 = vmatpush.msra.mxu0 %v2121
      %2165 = vmatmul.f32.gmra.mxu0 %v2115
      %v2166 = vpop.f32.mrf.mxu0
      %v2167 = vadd.f32 0.0, %v2166
      %2168 = vdwg.mxu0
      %2169 = vmatpush.msra.mxu0 0.0
      %2170 = vmatpush.msra.mxu0 0.0
      %2171 = vmatpush.msra.mxu0 0.0
      %2172 = vmatpush.msra.mxu0 0.0
      %2173 = vmatpush.msra.mxu0 0.0
      %2174 = vmatpush.msra.mxu0 0.0
      %2175 = vmatpush.msra.mxu0 0.0
      %2176 = vmatpush.msra.mxu0 0.0
      %2177 = vmatpush.msra.mxu0 0.0
      %2178 = vmatpush.msra.mxu0 0.0
      %2179 = vmatpush.msra.mxu0 0.0
      %2180 = vmatpush.msra.mxu0 0.0
      %2181 = vmatpush.msra.mxu0 0.0
      %2182 = vmatpush.msra.mxu0 0.0
      %2183 = vmatpush.msra.mxu0 0.0
      %2184 = vmatpush.msra.mxu0 %v2124
      %2185 = vmatmul.f32.gmra.mxu0 %v2115
      %v2186 = vpop.f32.mrf.mxu0
      %v2187 = vadd.f32 0.0, %v2186
      %2188 = vdwg.mxu0
      %2189 = vmatpush.msra.mxu0 0.0
      %2190 = vmatpush.msra.mxu0 0.0
      %2191 = vmatpush.msra.mxu0 0.0
      %2192 = vmatpush.msra.mxu0 0.0
      %2193 = vmatpush.msra.mxu0 0.0
      %2194 = vmatpush.msra.mxu0 0.0
      %2195 = vmatpush.msra.mxu0 0.0
      %2196 = vmatpush.msra.mxu0 0.0
      %2197 = vmatpush.msra.mxu0 0.0
      %2198 = vmatpush.msra.mxu0 0.0
      %2199 = vmatpush.msra.mxu0 0.0
      %2200 = vmatpush.msra.mxu0 0.0
      %2201 = vmatpush.msra.mxu0 0.0
      %2202 = vmatpush.msra.mxu0 0.0
      %2203 = vmatpush.msra.mxu0 0.0
      %2204 = vmatpush.msra.mxu0 %v2127
      %2205 = vmatmul.f32.gmra.mxu0 %v2115
      %v2206 = vpop.f32.mrf.mxu0
      %v2207 = vadd.f32 0.0, %v2206
      %2208 = vdwg.mxu0
      %v2209 = vadd.f32 %v2073, %v2147
      %v2210 = vadd.f32 %v2074, %v2167
      %v2211 = vadd.f32 %v2075, %v2187
      %v2212 = vadd.f32 %v2076, %v2207
      %2214 = vset.pattern.permute.xlu0 0
      %2215 = vperm.xlu0 %2214, %v1755
      %v2216 = vpop.permute.xlu0 %2215
      %v2218 = vadd.f32 %v2209, %v2216
      %v2219 = vadd.f32 %v2210, %v2216
      %v2220 = vadd.f32 %v2211, %v2216
      %v2221 = vadd.f32 %v2212, %v2216
      %2222 = vst [vmem:[%s329] sm:$0xff] %v2218
      %2223 = vst [vmem:[%s329 + $0x8] sm:$0xff] %v2219
      %2224 = vst [vmem:[%s329 + $0x10] sm:$0xff] %v2220
      %2225 = vst [vmem:[%s329 + $0x18] sm:$0xff] %v2221
      %p2226 = scmp.lt.s32.totalorder %s20, 1
      %s2227 = scalar_select %p2226, %s20, 1
      %s2228 = smul.addr %s2227, 4
      %s2229 = smul.addr %s2228, 8
      %s2230 = scalar_lea.vmem %s9, %s2229
      // Predicated region
      $region57: #{multiscale_resnet_forward.3} parent=55 // pred_check
        %p2231 = pneg %p232
      $region58: #{multiscale_resnet_forward.3} parent=55 // pred_check_branch
        %2233 = sbr.rel (%p2231) target = $region60
      $region59: #{multiscale_resnet_forward.3} parent=55 // pred_region
        _
      $region60: #{multiscale_resnet_forward.3} parent=55 // pred_fallthru
        _
    $region56: #{multiscale_resnet_forward.3} parent=5 // pred_fallthru
      _
    %p2234 = scmp.le.s32.totalorder 2, %s15
    // Predicated region
    $region61: #{multiscale_resnet_forward.3} parent=5 // pred_check
      %p2235 = pneg %p2234
    $region62: #{multiscale_resnet_forward.3} parent=5 // pred_check_branch
      %2237 = sbr.rel (%p2235) target = $region64
    $region63: #{multiscale_resnet_forward.3} parent=5 // pred_region
      %s2238 = ssub.s32 %s15, 2
      // Predicated region
      $region65: #{multiscale_resnet_forward.3} parent=63 // pred_check
        %p2239 = pneg %p238
      $region66: #{multiscale_resnet_forward.3} parent=63 // pred_check_branch
        %2241 = sbr.rel (%p2239) target = $region68
      $region67: #{multiscale_resnet_forward.3} parent=63 // pred_region
        %p2242 = scmp.lt.s32.totalorder %s21, 1
        %s2243 = scalar_select %p2242, %s21, 1
        %s2244 = smul.addr %s2243, 4
        %s2245 = smul.addr %s2244, 8
        %s2246 = scalar_lea.vmem %s9, %s2245
      $region68: #{multiscale_resnet_forward.3} parent=63 // pred_fallthru
        _
    $region64: #{multiscale_resnet_forward.3} parent=5 // pred_fallthru
      _
  $region6: #{multiscale_resnet_forward.3} parent=0 // loop_footer
    %s19 = sadd.s32 1, %s15
  $region7: #{multiscale_resnet_forward.3} parent=0 // loop_footer_branch
    %14 = sbr.rel target = $region3
  $region8: #{multiscale_resnet_forward.3} parent=0 // loop_exit
    _

// kernel: multiscale_resnet_forward.5
$region0: #{multiscale_resnet_forward.5}
  #allocation0 [shape = 'u32[]', space=smem, size = 0x4, offset = 0x4, fixed_abs, tag = 'smem constant byte address 0x4 - core index']
  #allocation1 [shape = 'u32[72,128]{1,0:T(1,128)}', space=vmem, size = 0x9000, scoped, tag = 'internal scratch']
  #allocation2 [shape = 'f32[1,1]{1,0:T(1,128)S(1)}', space=vmem, size = 0x200, scoped, tag = 'scoped memory for multiscale_resnet_forward.5']
  %s0 = inlined_call_operand.vmem [shape: f32[2,4,512], index: 0, kind: input, shape index: {}]
  %s1 = inlined_call_operand.vmem [shape: f32[2,1,512], index: 1, kind: input, shape index: {}]
  %s2 = inlined_call_operand.vmem [shape: f32[5,4,4], index: 2, kind: input, shape index: {}]
  %s3 = inlined_call_operand.vmem [shape: f32[4,1], index: 3, kind: input, shape index: {}]
  %s4 = inlined_call_operand.vmem [shape: f32[5,4,4], index: 4, kind: input, shape index: {}]
  %s5 = inlined_call_operand.vmem [shape: f32[4,1], index: 5, kind: input, shape index: {}]
  %s6 = inlined_call_operand.vmem [shape: f32[5,4,1], index: 6, kind: input, shape index: {}]
  %s7 = inlined_call_operand.vmem [shape: f32[4,1], index: 7, kind: input, shape index: {}]
  %s8 = inlined_call_operand.vmem [shape: f32[1,4,8], index: 8, kind: input, shape index: {}]
  %s9 = inlined_call_operand.vmem [shape: f32[4,1], index: 9, kind: input, shape index: {}]
  %s10 = inlined_call_operand.vmem [shape: f32[5,1,4], index: 10, kind: input, shape index: {}]
  %s11 = inlined_call_operand.<no memory space> [shape: f32[1,1], index: 11, kind: input, shape index: {}]
  %s12 = inlined_call_operand.hbm [shape: f32[2,1,512], index: 12, kind: output, shape index: {}]
  %s13 = sld [smem:[#allocation0]]
  $region81: #{multiscale_resnet_forward.5} parent=0
    _
  %s15 = ssub.s32 1, %s13
  %s16 = scalar_select 0, %s15, %s13
  %v17 = vstv %s11
  %18 = vst [vmem:[#allocation2] sm:$0x1] %v17
  $region1: #{multiscale_resnet_forward.5} parent=0
    #allocation3 [shape = 'u8[4096]{0}', space=vmem, size = 0x1000, scoped, tag = 'output window, operand 0']
    #allocation4 [shape = 's32[2]{0}', space=sflag, size = 0x8, scoped, tag = 'scoped memory for multiscale_resnet_forward.5']
    %19 = vsyncpa [#allocation4], 0
    %s20 = scalar_lea.sflag [#allocation4], 1
    %21 = vsyncpa %s20, 0
    loop: start=0, step=1, limit=4
    $region2: #{multiscale_resnet_forward.5} parent=1 // loop_pre_header
      _
    $region3: #{multiscale_resnet_forward.5} parent=1 // loop_header
      %s23 = sphi 0, %s27
      %p24 = scmp.ge.s32.totalorder %s23, 4
      %s33 = sphi 0, %s35
      %s36 = sphi 0, %s33
      %s37 = sphi 0, %s36
      %s53 = sphi 0, %s37
      %s59 = sphi 0, %s61
      %s62 = sphi 0, %s59
      %s63 = sphi 0, %s62
      %s79 = sphi 0, %s63
      %s83 = sphi 0, %s83
      %s85 = sphi 0, %s83
      %s86 = sphi 0, %s85
      %s100 = sphi 0, %s86
      %s104 = sphi 0, %s104
      %s106 = sphi 0, %s104
      %s107 = sphi 0, %s106
      %s121 = sphi 0, %s107
      %s125 = sphi 0, %s125
      %s127 = sphi 0, %s125
      %s128 = sphi 0, %s127
      %s142 = sphi 0, %s128
      %s146 = sphi 0, %s146
      %s148 = sphi 0, %s146
      %s149 = sphi 0, %s148
      %s163 = sphi 0, %s149
      %s167 = sphi 0, %s167
      %s169 = sphi 0, %s167
      %s170 = sphi 0, %s169
      %s184 = sphi 0, %s170
      %s188 = sphi 0, %s188
      %s190 = sphi 0, %s188
      %s191 = sphi 0, %s190
      %s205 = sphi 0, %s191
      %s209 = sphi 0, %s209
      %s211 = sphi 0, %s209
      %s212 = sphi 0, %s211
      %s226 = sphi 0, %s212
      %s230 = sphi 0, %s230
      %s232 = sphi 0, %s230
      %s233 = sphi 0, %s232
      %s247 = sphi 0, %s233
      %s251 = sphi 0, %s251
      %s253 = sphi 0, %s251
      %s254 = sphi 0, %s253
      %s268 = sphi 0, %s254
      %s272 = sphi 0, %s272
      %s274 = sphi 0, %s272
      %s275 = sphi 0, %s274
      %s289 = sphi 0, %s275
      %s295 = sphi 0, %s297
      %s298 = sphi 0, %s295
      %s299 = sphi 0, %s298
      %s315 = sphi 0, %s299
    $region4: #{multiscale_resnet_forward.5} parent=1 // loop_header_branch
      %26 = sbr.rel (%p24) target = $region8
    $region5: #{multiscale_resnet_forward.5} parent=1 // loop_body
      %s28 = ssub.s32 %s23, 1
      %s29 = ssub.s32 %s23, 2
      %s30 = sadd.s32 %s23, 1
      %s31 = ssub.s32 %s23, %s30
      %p32 = scmp.eq.s32.totalorder %s31, 0
      %s34 = sadd.s32 %s33, 1
      %s35 = scalar_select %p32, %s33, %s34
      %p38 = pneg %p32
      %p39 = scmp.eq.s32.totalorder %s23, 1
      %p40 = por %p38, %p39
      %p41 = scmp.ne.s32.totalorder %s33, %s36
      %p42 = scmp.eq.s32.totalorder %s23, 0
      %p43 = por %p41, %p42
      %p44 = scmp.ne.s32.totalorder %s33, %s36
      %p45 = scmp.eq.s32.totalorder %s28, 1
      %p46 = por %p44, %p45
      %p47 = scmp.ne.s32.totalorder %s36, %s37
      %p48 = scmp.eq.s32.totalorder %s28, 0
      %p49 = por %p47, %p48
      %p50 = scmp.ne.s32.totalorder %s36, %s37
      %p51 = scmp.eq.s32.totalorder %s29, 1
      %p52 = por %p50, %p51
      %p54 = scmp.ne.s32.totalorder %s37, %s53
      %p55 = scmp.eq.s32.totalorder %s29, 0
      %p56 = por %p54, %p55
      %s57 = ssub.s32 %s23, %s30
      %p58 = scmp.eq.s32.totalorder %s57, 0
      %s60 = sadd.s32 %s59, 1
      %s61 = scalar_select %p58, %s59, %s60
      %p64 = pneg %p58
      %p65 = scmp.eq.s32.totalorder %s23, 1
      %p66 = por %p64, %p65
      %p67 = scmp.ne.s32.totalorder %s59, %s62
      %p68 = scmp.eq.s32.totalorder %s23, 0
      %p69 = por %p67, %p68
      %p70 = scmp.ne.s32.totalorder %s59, %s62
      %p71 = scmp.eq.s32.totalorder %s28, 1
      %p72 = por %p70, %p71
      %p73 = scmp.ne.s32.totalorder %s62, %s63
      %p74 = scmp.eq.s32.totalorder %s28, 0
      %p75 = por %p73, %p74
      %p76 = scmp.ne.s32.totalorder %s62, %s63
      %p77 = scmp.eq.s32.totalorder %s29, 1
      %p78 = por %p76, %p77
      %p80 = scmp.ne.s32.totalorder %s63, %s79
      %p81 = scmp.eq.s32.totalorder %s29, 0
      %p82 = por %p80, %p81
      %s84 = sadd.s32 %s83, 1
      %p87 = scmp.eq.s32.totalorder %s23, 1
      %p88 = scmp.ne.s32.totalorder %s83, %s85
      %p89 = scmp.eq.s32.totalorder %s23, 0
      %p90 = por %p88, %p89
      %p91 = scmp.ne.s32.totalorder %s83, %s85
      %p92 = scmp.eq.s32.totalorder %s28, 1
      %p93 = por %p91, %p92
      %p94 = scmp.ne.s32.totalorder %s85, %s86
      %p95 = scmp.eq.s32.totalorder %s28, 0
      %p96 = por %p94, %p95
      %p97 = scmp.ne.s32.totalorder %s85, %s86
      %p98 = scmp.eq.s32.totalorder %s29, 1
      %p99 = por %p97, %p98
      %p101 = scmp.ne.s32.totalorder %s86, %s100
      %p102 = scmp.eq.s32.totalorder %s29, 0
      %p103 = por %p101, %p102
      %s105 = sadd.s32 %s104, 1
      %p108 = scmp.eq.s32.totalorder %s23, 1
      %p109 = scmp.ne.s32.totalorder %s104, %s106
      %p110 = scmp.eq.s32.totalorder %s23, 0
      %p111 = por %p109, %p110
      %p112 = scmp.ne.s32.totalorder %s104, %s106
      %p113 = scmp.eq.s32.totalorder %s28, 1
      %p114 = por %p112, %p113
      %p115 = scmp.ne.s32.totalorder %s106, %s107
      %p116 = scmp.eq.s32.totalorder %s28, 0
      %p117 = por %p115, %p116
      %p118 = scmp.ne.s32.totalorder %s106, %s107
      %p119 = scmp.eq.s32.totalorder %s29, 1
      %p120 = por %p118, %p119
      %p122 = scmp.ne.s32.totalorder %s107, %s121
      %p123 = scmp.eq.s32.totalorder %s29, 0
      %p124 = por %p122, %p123
      %s126 = sadd.s32 %s125, 1
      %p129 = scmp.eq.s32.totalorder %s23, 1
      %p130 = scmp.ne.s32.totalorder %s125, %s127
      %p131 = scmp.eq.s32.totalorder %s23, 0
      %p132 = por %p130, %p131
      %p133 = scmp.ne.s32.totalorder %s125, %s127
      %p134 = scmp.eq.s32.totalorder %s28, 1
      %p135 = por %p133, %p134
      %p136 = scmp.ne.s32.totalorder %s127, %s128
      %p137 = scmp.eq.s32.totalorder %s28, 0
      %p138 = por %p136, %p137
      %p139 = scmp.ne.s32.totalorder %s127, %s128
      %p140 = scmp.eq.s32.totalorder %s29, 1
      %p141 = por %p139, %p140
      %p143 = scmp.ne.s32.totalorder %s128, %s142
      %p144 = scmp.eq.s32.totalorder %s29, 0
      %p145 = por %p143, %p144
      %s147 = sadd.s32 %s146, 1
      %p150 = scmp.eq.s32.totalorder %s23, 1
      %p151 = scmp.ne.s32.totalorder %s146, %s148
      %p152 = scmp.eq.s32.totalorder %s23, 0
      %p153 = por %p151, %p152
      %p154 = scmp.ne.s32.totalorder %s146, %s148
      %p155 = scmp.eq.s32.totalorder %s28, 1
      %p156 = por %p154, %p155
      %p157 = scmp.ne.s32.totalorder %s148, %s149
      %p158 = scmp.eq.s32.totalorder %s28, 0
      %p159 = por %p157, %p158
      %p160 = scmp.ne.s32.totalorder %s148, %s149
      %p161 = scmp.eq.s32.totalorder %s29, 1
      %p162 = por %p160, %p161
      %p164 = scmp.ne.s32.totalorder %s149, %s163
      %p165 = scmp.eq.s32.totalorder %s29, 0
      %p166 = por %p164, %p165
      %s168 = sadd.s32 %s167, 1
      %p171 = scmp.eq.s32.totalorder %s23, 1
      %p172 = scmp.ne.s32.totalorder %s167, %s169
      %p173 = scmp.eq.s32.totalorder %s23, 0
      %p174 = por %p172, %p173
      %p175 = scmp.ne.s32.totalorder %s167, %s169
      %p176 = scmp.eq.s32.totalorder %s28, 1
      %p177 = por %p175, %p176
      %p178 = scmp.ne.s32.totalorder %s169, %s170
      %p179 = scmp.eq.s32.totalorder %s28, 0
      %p180 = por %p178, %p179
      %p181 = scmp.ne.s32.totalorder %s169, %s170
      %p182 = scmp.eq.s32.totalorder %s29, 1
      %p183 = por %p181, %p182
      %p185 = scmp.ne.s32.totalorder %s170, %s184
      %p186 = scmp.eq.s32.totalorder %s29, 0
      %p187 = por %p185, %p186
      %s189 = sadd.s32 %s188, 1
      %p192 = scmp.eq.s32.totalorder %s23, 1
      %p193 = scmp.ne.s32.totalorder %s188, %s190
      %p194 = scmp.eq.s32.totalorder %s23, 0
      %p195 = por %p193, %p194
      %p196 = scmp.ne.s32.totalorder %s188, %s190
      %p197 = scmp.eq.s32.totalorder %s28, 1
      %p198 = por %p196, %p197
      %p199 = scmp.ne.s32.totalorder %s190, %s191
      %p200 = scmp.eq.s32.totalorder %s28, 0
      %p201 = por %p199, %p200
      %p202 = scmp.ne.s32.totalorder %s190, %s191
      %p203 = scmp.eq.s32.totalorder %s29, 1
      %p204 = por %p202, %p203
      %p206 = scmp.ne.s32.totalorder %s191, %s205
      %p207 = scmp.eq.s32.totalorder %s29, 0
      %p208 = por %p206, %p207
      %s210 = sadd.s32 %s209, 1
      %p213 = scmp.eq.s32.totalorder %s23, 1
      %p214 = scmp.ne.s32.totalorder %s209, %s211
      %p215 = scmp.eq.s32.totalorder %s23, 0
      %p216 = por %p214, %p215
      %p217 = scmp.ne.s32.totalorder %s209, %s211
      %p218 = scmp.eq.s32.totalorder %s28, 1
      %p219 = por %p217, %p218
      %p220 = scmp.ne.s32.totalorder %s211, %s212
      %p221 = scmp.eq.s32.totalorder %s28, 0
      %p222 = por %p220, %p221
      %p223 = scmp.ne.s32.totalorder %s211, %s212
      %p224 = scmp.eq.s32.totalorder %s29, 1
      %p225 = por %p223, %p224
      %p227 = scmp.ne.s32.totalorder %s212, %s226
      %p228 = scmp.eq.s32.totalorder %s29, 0
      %p229 = por %p227, %p228
      %s231 = sadd.s32 %s230, 1
      %p234 = scmp.eq.s32.totalorder %s23, 1
      %p235 = scmp.ne.s32.totalorder %s230, %s232
      %p236 = scmp.eq.s32.totalorder %s23, 0
      %p237 = por %p235, %p236
      %p238 = scmp.ne.s32.totalorder %s230, %s232
      %p239 = scmp.eq.s32.totalorder %s28, 1
      %p240 = por %p238, %p239
      %p241 = scmp.ne.s32.totalorder %s232, %s233
      %p242 = scmp.eq.s32.totalorder %s28, 0
      %p243 = por %p241, %p242
      %p244 = scmp.ne.s32.totalorder %s232, %s233
      %p245 = scmp.eq.s32.totalorder %s29, 1
      %p246 = por %p244, %p245
      %p248 = scmp.ne.s32.totalorder %s233, %s247
      %p249 = scmp.eq.s32.totalorder %s29, 0
      %p250 = por %p248, %p249
      %s252 = sadd.s32 %s251, 1
      %p255 = scmp.eq.s32.totalorder %s23, 1
      %p256 = scmp.ne.s32.totalorder %s251, %s253
      %p257 = scmp.eq.s32.totalorder %s23, 0
      %p258 = por %p256, %p257
      %p259 = scmp.ne.s32.totalorder %s251, %s253
      %p260 = scmp.eq.s32.totalorder %s28, 1
      %p261 = por %p259, %p260
      %p262 = scmp.ne.s32.totalorder %s253, %s254
      %p263 = scmp.eq.s32.totalorder %s28, 0
      %p264 = por %p262, %p263
      %p265 = scmp.ne.s32.totalorder %s253, %s254
      %p266 = scmp.eq.s32.totalorder %s29, 1
      %p267 = por %p265, %p266
      %p269 = scmp.ne.s32.totalorder %s254, %s268
      %p270 = scmp.eq.s32.totalorder %s29, 0
      %p271 = por %p269, %p270
      %s273 = sadd.s32 %s272, 1
      %p276 = scmp.eq.s32.totalorder %s23, 1
      %p277 = scmp.ne.s32.totalorder %s272, %s274
      %p278 = scmp.eq.s32.totalorder %s23, 0
      %p279 = por %p277, %p278
      %p280 = scmp.ne.s32.totalorder %s272, %s274
      %p281 = scmp.eq.s32.totalorder %s28, 1
      %p282 = por %p280, %p281
      %p283 = scmp.ne.s32.totalorder %s274, %s275
      %p284 = scmp.eq.s32.totalorder %s28, 0
      %p285 = por %p283, %p284
      %p286 = scmp.ne.s32.totalorder %s274, %s275
      %p287 = scmp.eq.s32.totalorder %s29, 1
      %p288 = por %p286, %p287
      %p290 = scmp.ne.s32.totalorder %s275, %s289
      %p291 = scmp.eq.s32.totalorder %s29, 0
      %p292 = por %p290, %p291
      %s293 = ssub.s32 %s23, %s30
      %p294 = scmp.eq.s32.totalorder %s293, 0
      %s296 = sadd.s32 %s295, 1
      %s297 = scalar_select %p294, %s295, %s296
      %p300 = pneg %p294
      %p301 = scmp.eq.s32.totalorder %s23, 1
      %p302 = por %p300, %p301
      %p303 = scmp.ne.s32.totalorder %s295, %s298
      %p304 = scmp.eq.s32.totalorder %s23, 0
      %p305 = por %p303, %p304
      %p306 = scmp.ne.s32.totalorder %s295, %s298
      %p307 = scmp.eq.s32.totalorder %s28, 1
      %p308 = por %p306, %p307
      %p309 = scmp.ne.s32.totalorder %s298, %s299
      %p310 = scmp.eq.s32.totalorder %s28, 0
      %p311 = por %p309, %p310
      %p312 = scmp.ne.s32.totalorder %s298, %s299
      %p313 = scmp.eq.s32.totalorder %s29, 1
      %p314 = por %p312, %p313
      %p316 = scmp.ne.s32.totalorder %s299, %s315
      %p317 = scmp.eq.s32.totalorder %s29, 0
      %p318 = por %p316, %p317
      %p319 = scmp.le.s32.totalorder 1, %s23
      %p320 = scmp.lt.s32.totalorder %s23, 3
      %p321 = pnand %p319, %p320
      %p322 = pneg %p321
      // Predicated region
      $region9: #{multiscale_resnet_forward.5} parent=5 // pred_check
        _
      $region10: #{multiscale_resnet_forward.5} parent=5 // pred_check_branch
        %324 = sbr.rel (%p321) target = $region12
      $region11: #{multiscale_resnet_forward.5} parent=5 // pred_region
        %s325 = ssub.s32 %s23, 1
        // Predicated region
        $region13: #{multiscale_resnet_forward.5} parent=11 // pred_check
          %p326 = pneg %p96
        $region14: #{multiscale_resnet_forward.5} parent=11 // pred_check_branch
          %328 = sbr.rel (%p326) target = $region16
        $region15: #{multiscale_resnet_forward.5} parent=11 // pred_region
          _
        $region16: #{multiscale_resnet_forward.5} parent=11 // pred_fallthru
          _
        // Predicated region
        $region17: #{multiscale_resnet_forward.5} parent=11 // pred_check
          %p329 = pneg %p117
        $region18: #{multiscale_resnet_forward.5} parent=11 // pred_check_branch
          %331 = sbr.rel (%p329) target = $region20
        $region19: #{multiscale_resnet_forward.5} parent=11 // pred_region
          _
        $region20: #{multiscale_resnet_forward.5} parent=11 // pred_fallthru
          _
        // Predicated region
        $region21: #{multiscale_resnet_forward.5} parent=11 // pred_check
          %p332 = pneg %p138
        $region22: #{multiscale_resnet_forward.5} parent=11 // pred_check_branch
          %334 = sbr.rel (%p332) target = $region24
        $region23: #{multiscale_resnet_forward.5} parent=11 // pred_region
          _
        $region24: #{multiscale_resnet_forward.5} parent=11 // pred_fallthru
          _
        // Predicated region
        $region25: #{multiscale_resnet_forward.5} parent=11 // pred_check
          %p335 = pneg %p159
        $region26: #{multiscale_resnet_forward.5} parent=11 // pred_check_branch
          %337 = sbr.rel (%p335) target = $region28
        $region27: #{multiscale_resnet_forward.5} parent=11 // pred_region
          _
        $region28: #{multiscale_resnet_forward.5} parent=11 // pred_fallthru
          _
        // Predicated region
        $region29: #{multiscale_resnet_forward.5} parent=11 // pred_check
          %p338 = pneg %p180
        $region30: #{multiscale_resnet_forward.5} parent=11 // pred_check_branch
          %340 = sbr.rel (%p338) target = $region32
        $region31: #{multiscale_resnet_forward.5} parent=11 // pred_region
          _
        $region32: #{multiscale_resnet_forward.5} parent=11 // pred_fallthru
          _
        // Predicated region
        $region33: #{multiscale_resnet_forward.5} parent=11 // pred_check
          %p341 = pneg %p201
        $region34: #{multiscale_resnet_forward.5} parent=11 // pred_check_branch
          %343 = sbr.rel (%p341) target = $region36
        $region35: #{multiscale_resnet_forward.5} parent=11 // pred_region
          _
        $region36: #{multiscale_resnet_forward.5} parent=11 // pred_fallthru
          _
        // Predicated region
        $region37: #{multiscale_resnet_forward.5} parent=11 // pred_check
          %p344 = pneg %p222
        $region38: #{multiscale_resnet_forward.5} parent=11 // pred_check_branch
          %346 = sbr.rel (%p344) target = $region40
        $region39: #{multiscale_resnet_forward.5} parent=11 // pred_region
          _
        $region40: #{multiscale_resnet_forward.5} parent=11 // pred_fallthru
          _
        // Predicated region
        $region41: #{multiscale_resnet_forward.5} parent=11 // pred_check
          %p347 = pneg %p243
        $region42: #{multiscale_resnet_forward.5} parent=11 // pred_check_branch
          %349 = sbr.rel (%p347) target = $region44
        $region43: #{multiscale_resnet_forward.5} parent=11 // pred_region
          _
        $region44: #{multiscale_resnet_forward.5} parent=11 // pred_fallthru
          _
        // Predicated region
        $region45: #{multiscale_resnet_forward.5} parent=11 // pred_check
          %p350 = pneg %p264
        $region46: #{multiscale_resnet_forward.5} parent=11 // pred_check_branch
          %352 = sbr.rel (%p350) target = $region48
        $region47: #{multiscale_resnet_forward.5} parent=11 // pred_region
          _
        $region48: #{multiscale_resnet_forward.5} parent=11 // pred_fallthru
          _
        // Predicated region
        $region49: #{multiscale_resnet_forward.5} parent=11 // pred_check
          %p353 = pneg %p285
        $region50: #{multiscale_resnet_forward.5} parent=11 // pred_check_branch
          %355 = sbr.rel (%p353) target = $region52
        $region51: #{multiscale_resnet_forward.5} parent=11 // pred_region
          _
        $region52: #{multiscale_resnet_forward.5} parent=11 // pred_fallthru
          _
      $region12: #{multiscale_resnet_forward.5} parent=5 // pred_fallthru
        _
      %p356 = scmp.lt.s32.totalorder %s23, 2
      // Predicated region
      $region53: #{multiscale_resnet_forward.5} parent=5 // pred_check
        %p357 = pneg %p356
      $region54: #{multiscale_resnet_forward.5} parent=5 // pred_check_branch
        %359 = sbr.rel (%p357) target = $region56
      $region55: #{multiscale_resnet_forward.5} parent=5 // pred_region
        // Predicated region
        $region57: #{multiscale_resnet_forward.5} parent=55 // pred_check
          %p360 = pneg %p43
        $region58: #{multiscale_resnet_forward.5} parent=55 // pred_check_branch
          %362 = sbr.rel (%p360) target = $region60
        $region59: #{multiscale_resnet_forward.5} parent=55 // pred_region
          %p363 = scmp.lt.s32.totalorder %s23, 1
          %s364 = scalar_select %p363, %s23, 1
          %s365 = smul.addr %s364, 4
          %s366 = smul.addr %s365, 4
          %s367 = scalar_lea.vmem %s0, %s366
        $region60: #{multiscale_resnet_forward.5} parent=55 // pred_fallthru
          _
        // Predicated region
        $region61: #{multiscale_resnet_forward.5} parent=55 // pred_check
          %p368 = pneg %p69
        $region62: #{multiscale_resnet_forward.5} parent=55 // pred_check_branch
          %370 = sbr.rel (%p368) target = $region64
        $region63: #{multiscale_resnet_forward.5} parent=55 // pred_region
          %p371 = scmp.lt.s32.totalorder %s23, 1
          %s372 = scalar_select %p371, %s23, 1
          %s373 = smul.addr %s372, 4
          %s374 = scalar_lea.vmem %s1, %s373
        $region64: #{multiscale_resnet_forward.5} parent=55 // pred_fallthru
          _
      $region56: #{multiscale_resnet_forward.5} parent=5 // pred_fallthru
        _
      %p375 = scmp.le.s32.totalorder 1, %s23
      %p376 = scmp.lt.s32.totalorder %s23, 3
      %p377 = pnand %p375, %p376
      %p378 = pneg %p377
      // Predicated region
      $region65: #{multiscale_resnet_forward.5} parent=5 // pred_check
        _
      $region66: #{multiscale_resnet_forward.5} parent=5 // pred_check_branch
        %380 = sbr.rel (%p377) target = $region68
      $region67: #{multiscale_resnet_forward.5} parent=5 // pred_region
        %s381 = ssub.s32 %s23, 1
        %p382 = scmp.lt.s32.totalorder %s28, 1
        %s383 = scalar_select %p382, %s28, 1
        %s384 = smul.addr %s383, 4
        %s385 = smul.addr %s384, 4
        %s386 = scalar_lea.vmem %s0, %s385
        %p387 = pneg %p49
        %p388 = pneg %p46
        %p389 = scmp.lt.s32.totalorder %s28, 1
        %s390 = scalar_select %p389, %s28, 1
        %s391 = smul.addr %s390, 4
        %s392 = scalar_lea.vmem %s1, %s391
        %p393 = pneg %p75
        %p394 = pneg %p72
        %p395 = pneg %p96
        %p396 = pneg %p93
        %p397 = pneg %p117
        %p398 = pneg %p114
        %p399 = pneg %p138
        %p400 = pneg %p135
        %p401 = pneg %p159
        %p402 = pneg %p156
        %p403 = pneg %p180
        %p404 = pneg %p177
        %p405 = pneg %p201
        %p406 = pneg %p198
        %p407 = pneg %p222
        %p408 = pneg %p219
        %p409 = pneg %p243
        %p410 = pneg %p240
        %p411 = pneg %p264
        %p412 = pneg %p261
        %p413 = pneg %p285
        %p414 = pneg %p282
        %p415 = pneg %p311
        %p416 = pneg %p308
        %s417 = sand.u32 %s298, 1
        %s418 = scalar_lea.sflag [#allocation4], %s417
        %s419 = sand.u32 %s298, 1
        %s420 = smul.addr %s419, 4
        %s421 = scalar_lea.vmem [#allocation3], %s420
        %p422 = scmp.lt.s32.totalorder %s28, 1
        %s423 = scalar_select %p422, %s28, 1
        %s424 = smul.addr %s423, 4
        %s425 = smul.addr %s424, 4
        %s426 = scalar_lea.vmem %s0, %s425
        %p427 = scmp.lt.s32.totalorder %s28, 1
        %s428 = scalar_select %p427, %s28, 1
        %s429 = smul.addr %s428, 4
        %s430 = scalar_lea.vmem %s1, %s429
        %v431 = vlaneseq
        %v432 = vand.u32 %v431, 127
        %v433 = vadd.s32 %v432, 128
        %v434 = vadd.s32 %v432, 256
        %v435 = vadd.s32 %v432, 384
        %v436 = vld [vmem:[%s426] sm:$0xff]
        %v437 = vld [vmem:[%s426 + $0x8] sm:$0xff]
        %v438 = vld [vmem:[%s2] sm:$0xf]
        %v439 = vld [vmem:[%s2 + $0x4] sm:$0xf]
        %v440 = vld [vmem:[%s2 + $0x8] sm:$0xf]
        %v441 = vld [vmem:[%s2 + $0xc] sm:$0xf]
        %v442 = vld [vmem:[%s2 + $0x10] sm:$0xf]
        %v443 = vld [vmem:[%s3] sm:$0xf]
        %vm444 = vcmp.ge.f32.partialorder %v436, 0.0
        %vm445 = vcmp.ge.f32.partialorder %v437, 0.0
        %v446 = vmul.f32 %v436, 0.01
        %v447 = vmul.f32 %v437, 0.01
        %v448 = vsel %vm444, %v436, %v446
        %v449 = vsel %vm445, %v437, %v447
        %452 = vst [vmem:[#allocation1] ss:$2 sm:$0xff] %v448
        %s453 = scalar_lea.vmem [#allocation1], 16
        %454 = vst [vmem:[%s453] ss:$2 sm:$0xff] %v449
        %v455 = vld.sshfl [vmem:[#allocation1] sm:$0xff pattern:$0x75316420]
        %v456 = vld.sshfl [vmem:[#allocation1 + $0x8] sm:$0xff pattern:$0x75316420]
        %v457 = vld.sshfl [vmem:[#allocation1 + $0x10] sm:$0xff pattern:$0x75316420]
        %v458 = vld.sshfl [vmem:[#allocation1 + $0x18] sm:$0xff pattern:$0x75316420]
        %463 = vrot.lane.b32.xlu0 %v455, 2
        %v464 = vpop.permute.xlu0 %463
        %465 = vrot.lane.b32.xlu0 %v456, 2
        %v466 = vpop.permute.xlu0 %465
        %467 = vrot.lane.b32.xlu0 %v457, 2
        %v468 = vpop.permute.xlu0 %467
        %469 = vrot.lane.b32.xlu0 %v458, 2
        %v470 = vpop.permute.xlu0 %469
        %vm471 = vcmp.lt.s32.totalorder %v432, 2
        %v472 = vsel %vm471, %v468, %v470
        %v473 = vsel %vm471, %v466, %v468
        %v474 = vsel %vm471, %v464, %v466
        %v475 = vsel %vm471, %v470, %v464
        %vm476 = vcmp.ge.s32.totalorder %v432, 2
        %vm477 = vcmp.ge.s32.totalorder %v433, 2
        %vm478 = vcmp.ge.s32.totalorder %v434, 2
        %vm479 = vcmp.ge.s32.totalorder %v435, 2
        %vm480 = vcmp.lt.s32.totalorder %v432, 514
        %vm481 = vcmp.lt.s32.totalorder %v433, 514
        %vm482 = vcmp.lt.s32.totalorder %v434, 514
        %vm483 = vcmp.lt.s32.totalorder %v435, 514
        %vm484 = vmand %vm476, %vm480
        %vm485 = vmand %vm477, %vm481
        %vm486 = vmand %vm478, %vm482
        %vm487 = vmand %vm479, %vm483
        %v488 = vsel %vm484, 1, 0
        %v489 = vsel %vm485, 1, 0
        %v490 = vsel %vm486, 1, 0
        %v491 = vsel %vm487, 1, 0
        %vm492 = vcmp.eq.s32.totalorder %v488, 1
        %vm493 = vcmp.eq.s32.totalorder %v489, 1
        %vm494 = vcmp.eq.s32.totalorder %v490, 1
        %vm495 = vcmp.eq.s32.totalorder %v491, 1
        %v496 = vsel %vm492, %v475, 0.0
        %v497 = vsel %vm493, %v474, 0.0
        %v498 = vsel %vm494, %v473, 0.0
        %v499 = vsel %vm495, %v472, 0.0
        %500 = vst [vmem:[#allocation1] ss:$2 sm:$0xff] %v448
        %s501 = scalar_lea.vmem [#allocation1], 16
        %502 = vst [vmem:[%s501] ss:$2 sm:$0xff] %v449
        %v503 = vld.sshfl [vmem:[#allocation1] sm:$0xff pattern:$0x75316420]
        %v504 = vld.sshfl [vmem:[#allocation1 + $0x8] sm:$0xff pattern:$0x75316420]
        %v505 = vld.sshfl [vmem:[#allocation1 + $0x10] sm:$0xff pattern:$0x75316420]
        %v506 = vld.sshfl [vmem:[#allocation1 + $0x18] sm:$0xff pattern:$0x75316420]
        %511 = vrot.lane.b32.xlu0 %v503, 1
        %v512 = vpop.permute.xlu0 %511
        %513 = vrot.lane.b32.xlu0 %v504, 1
        %v514 = vpop.permute.xlu0 %513
        %515 = vrot.lane.b32.xlu0 %v505, 1
        %v516 = vpop.permute.xlu0 %515
        %517 = vrot.lane.b32.xlu0 %v506, 1
        %v518 = vpop.permute.xlu0 %517
        %vm519 = vcmp.lt.s32.totalorder %v432, 1
        %v520 = vsel %vm519, %v516, %v518
        %v521 = vsel %vm519, %v514, %v516
        %v522 = vsel %vm519, %v512, %v514
        %v523 = vsel %vm519, %v518, %v512
        %vm524 = vcmp.ge.s32.totalorder %v432, 1
        %vm525 = vcmp.ge.s32.totalorder %v433, 1
        %vm526 = vcmp.ge.s32.totalorder %v434, 1
        %vm527 = vcmp.ge.s32.totalorder %v435, 1
        %vm528 = vcmp.lt.s32.totalorder %v432, 513
        %vm529 = vcmp.lt.s32.totalorder %v433, 513
        %vm530 = vcmp.lt.s32.totalorder %v434, 513
        %vm531 = vcmp.lt.s32.totalorder %v435, 513
        %vm532 = vmand %vm524, %vm528
        %vm533 = vmand %vm525, %vm529
        %vm534 = vmand %vm526, %vm530
        %vm535 = vmand %vm527, %vm531
        %v536 = vsel %vm532, 1, 0
        %v537 = vsel %vm533, 1, 0
        %v538 = vsel %vm534, 1, 0
        %v539 = vsel %vm535, 1, 0
        %vm540 = vcmp.eq.s32.totalorder %v536, 1
        %vm541 = vcmp.eq.s32.totalorder %v537, 1
        %vm542 = vcmp.eq.s32.totalorder %v538, 1
        %vm543 = vcmp.eq.s32.totalorder %v539, 1
        %v544 = vsel %vm540, %v523, 0.0
        %v545 = vsel %vm541, %v522, 0.0
        %v546 = vsel %vm542, %v521, 0.0
        %v547 = vsel %vm543, %v520, 0.0
        %vm548 = vcmask 31744
        %v550 = vsel %vm548, %v439, 0
        %vm552 = vcmask 1043456
        %v554 = vsel %vm552, %v544, 0
        %v557 = vsel %vm552, %v545, 0
        %v560 = vsel %vm552, %v546, 0
        %v563 = vsel %vm552, %v547, 0
        %565 = vmatpush.msra.mxu0 0.0
        %566 = vmatpush.msra.mxu0 0.0
        %567 = vmatpush.msra.mxu0 0.0
        %568 = vmatpush.msra.mxu0 0.0
        %569 = vmatpush.msra.mxu0 0.0
        %570 = vmatpush.msra.mxu0 0.0
        %571 = vmatpush.msra.mxu0 0.0
        %572 = vmatpush.msra.mxu0 0.0
        %573 = vmatpush.msra.mxu0 0.0
        %574 = vmatpush.msra.mxu0 0.0
        %575 = vmatpush.msra.mxu0 0.0
        %576 = vmatpush.msra.mxu0 0.0
        %577 = vmatpush.msra.mxu0 0.0
        %578 = vmatpush.msra.mxu0 0.0
        %579 = vmatpush.msra.mxu0 0.0
        %580 = vmatpush.msra.mxu0 %v554
        %581 = vmatmul.f32.gmra.mxu0 %v550
        %v582 = vpop.f32.mrf.mxu0
        %v583 = vadd.f32 0.0, %v582
        %584 = vdwg.mxu0
        %585 = vmatpush.msra.mxu0 0.0
        %586 = vmatpush.msra.mxu0 0.0
        %587 = vmatpush.msra.mxu0 0.0
        %588 = vmatpush.msra.mxu0 0.0
        %589 = vmatpush.msra.mxu0 0.0
        %590 = vmatpush.msra.mxu0 0.0
        %591 = vmatpush.msra.mxu0 0.0
        %592 = vmatpush.msra.mxu0 0.0
        %593 = vmatpush.msra.mxu0 0.0
        %594 = vmatpush.msra.mxu0 0.0
        %595 = vmatpush.msra.mxu0 0.0
        %596 = vmatpush.msra.mxu0 0.0
        %597 = vmatpush.msra.mxu0 0.0
        %598 = vmatpush.msra.mxu0 0.0
        %599 = vmatpush.msra.mxu0 0.0
        %600 = vmatpush.msra.mxu0 %v557
        %601 = vmatmul.f32.gmra.mxu0 %v550
        %v602 = vpop.f32.mrf.mxu0
        %v603 = vadd.f32 0.0, %v602
        %604 = vdwg.mxu0
        %605 = vmatpush.msra.mxu0 0.0
        %606 = vmatpush.msra.mxu0 0.0
        %607 = vmatpush.msra.mxu0 0.0
        %608 = vmatpush.msra.mxu0 0.0
        %609 = vmatpush.msra.mxu0 0.0
        %610 = vmatpush.msra.mxu0 0.0
        %611 = vmatpush.msra.mxu0 0.0
        %612 = vmatpush.msra.mxu0 0.0
        %613 = vmatpush.msra.mxu0 0.0
        %614 = vmatpush.msra.mxu0 0.0
        %615 = vmatpush.msra.mxu0 0.0
        %616 = vmatpush.msra.mxu0 0.0
        %617 = vmatpush.msra.mxu0 0.0
        %618 = vmatpush.msra.mxu0 0.0
        %619 = vmatpush.msra.mxu0 0.0
        %620 = vmatpush.msra.mxu0 %v560
        %621 = vmatmul.f32.gmra.mxu0 %v550
        %v622 = vpop.f32.mrf.mxu0
        %v623 = vadd.f32 0.0, %v622
        %624 = vdwg.mxu0
        %625 = vmatpush.msra.mxu0 0.0
        %626 = vmatpush.msra.mxu0 0.0
        %627 = vmatpush.msra.mxu0 0.0
        %628 = vmatpush.msra.mxu0 0.0
        %629 = vmatpush.msra.mxu0 0.0
        %630 = vmatpush.msra.mxu0 0.0
        %631 = vmatpush.msra.mxu0 0.0
        %632 = vmatpush.msra.mxu0 0.0
        %633 = vmatpush.msra.mxu0 0.0
        %634 = vmatpush.msra.mxu0 0.0
        %635 = vmatpush.msra.mxu0 0.0
        %636 = vmatpush.msra.mxu0 0.0
        %637 = vmatpush.msra.mxu0 0.0
        %638 = vmatpush.msra.mxu0 0.0
        %639 = vmatpush.msra.mxu0 0.0
        %640 = vmatpush.msra.mxu0 %v563
        %641 = vmatmul.f32.gmra.mxu0 %v550
        %v642 = vpop.f32.mrf.mxu0
        %v643 = vadd.f32 0.0, %v642
        %644 = vdwg.mxu0
        %v646 = vsel %vm548, %v438, 0
        %v649 = vsel %vm552, %v496, 0
        %v652 = vsel %vm552, %v497, 0
        %v655 = vsel %vm552, %v498, 0
        %v658 = vsel %vm552, %v499, 0
        %660 = vmatpush.msra.mxu0 0.0
        %661 = vmatpush.msra.mxu0 0.0
        %662 = vmatpush.msra.mxu0 0.0
        %663 = vmatpush.msra.mxu0 0.0
        %664 = vmatpush.msra.mxu0 0.0
        %665 = vmatpush.msra.mxu0 0.0
        %666 = vmatpush.msra.mxu0 0.0
        %667 = vmatpush.msra.mxu0 0.0
        %668 = vmatpush.msra.mxu0 0.0
        %669 = vmatpush.msra.mxu0 0.0
        %670 = vmatpush.msra.mxu0 0.0
        %671 = vmatpush.msra.mxu0 0.0
        %672 = vmatpush.msra.mxu0 0.0
        %673 = vmatpush.msra.mxu0 0.0
        %674 = vmatpush.msra.mxu0 0.0
        %675 = vmatpush.msra.mxu0 %v649
        %676 = vmatmul.f32.gmra.mxu0 %v646
        %v677 = vpop.f32.mrf.mxu0
        %v678 = vadd.f32 %v583, %v677
        %679 = vdwg.mxu0
        %680 = vmatpush.msra.mxu0 0.0
        %681 = vmatpush.msra.mxu0 0.0
        %682 = vmatpush.msra.mxu0 0.0
        %683 = vmatpush.msra.mxu0 0.0
        %684 = vmatpush.msra.mxu0 0.0
        %685 = vmatpush.msra.mxu0 0.0
        %686 = vmatpush.msra.mxu0 0.0
        %687 = vmatpush.msra.mxu0 0.0
        %688 = vmatpush.msra.mxu0 0.0
        %689 = vmatpush.msra.mxu0 0.0
        %690 = vmatpush.msra.mxu0 0.0
        %691 = vmatpush.msra.mxu0 0.0
        %692 = vmatpush.msra.mxu0 0.0
        %693 = vmatpush.msra.mxu0 0.0
        %694 = vmatpush.msra.mxu0 0.0
        %695 = vmatpush.msra.mxu0 %v652
        %696 = vmatmul.f32.gmra.mxu0 %v646
        %v697 = vpop.f32.mrf.mxu0
        %v698 = vadd.f32 %v603, %v697
        %699 = vdwg.mxu0
        %700 = vmatpush.msra.mxu0 0.0
        %701 = vmatpush.msra.mxu0 0.0
        %702 = vmatpush.msra.mxu0 0.0
        %703 = vmatpush.msra.mxu0 0.0
        %704 = vmatpush.msra.mxu0 0.0
        %705 = vmatpush.msra.mxu0 0.0
        %706 = vmatpush.msra.mxu0 0.0
        %707 = vmatpush.msra.mxu0 0.0
        %708 = vmatpush.msra.mxu0 0.0
        %709 = vmatpush.msra.mxu0 0.0
        %710 = vmatpush.msra.mxu0 0.0
        %711 = vmatpush.msra.mxu0 0.0
        %712 = vmatpush.msra.mxu0 0.0
        %713 = vmatpush.msra.mxu0 0.0
        %714 = vmatpush.msra.mxu0 0.0
        %715 = vmatpush.msra.mxu0 %v655
        %716 = vmatmul.f32.gmra.mxu0 %v646
        %v717 = vpop.f32.mrf.mxu0
        %v718 = vadd.f32 %v623, %v717
        %719 = vdwg.mxu0
        %720 = vmatpush.msra.mxu0 0.0
        %721 = vmatpush.msra.mxu0 0.0
        %722 = vmatpush.msra.mxu0 0.0
        %723 = vmatpush.msra.mxu0 0.0
        %724 = vmatpush.msra.mxu0 0.0
        %725 = vmatpush.msra.mxu0 0.0
        %726 = vmatpush.msra.mxu0 0.0
        %727 = vmatpush.msra.mxu0 0.0
        %728 = vmatpush.msra.mxu0 0.0
        %729 = vmatpush.msra.mxu0 0.0
        %730 = vmatpush.msra.mxu0 0.0
        %731 = vmatpush.msra.mxu0 0.0
        %732 = vmatpush.msra.mxu0 0.0
        %733 = vmatpush.msra.mxu0 0.0
        %734 = vmatpush.msra.mxu0 0.0
        %735 = vmatpush.msra.mxu0 %v658
        %736 = vmatmul.f32.gmra.mxu0 %v646
        %v737 = vpop.f32.mrf.mxu0
        %v738 = vadd.f32 %v643, %v737
        %739 = vdwg.mxu0
        %740 = vst [vmem:[#allocation1] ss:$2 sm:$0xff] %v448
        %s741 = scalar_lea.vmem [#allocation1], 16
        %742 = vst [vmem:[%s741] ss:$2 sm:$0xff] %v449
        %v743 = vld.sshfl [vmem:[#allocation1] sm:$0xff pattern:$0x75316420]
        %v744 = vld.sshfl [vmem:[#allocation1 + $0x8] sm:$0xff pattern:$0x75316420]
        %v745 = vld.sshfl [vmem:[#allocation1 + $0x10] sm:$0xff pattern:$0x75316420]
        %v746 = vld.sshfl [vmem:[#allocation1 + $0x18] sm:$0xff pattern:$0x75316420]
        %v748 = vsel %vm548, %v440, 0
        %v750 = vsel %vm552, %v743, 0
        %v752 = vsel %vm552, %v744, 0
        %v754 = vsel %vm552, %v745, 0
        %v756 = vsel %vm552, %v746, 0
        %758 = vmatpush.msra.mxu0 0.0
        %759 = vmatpush.msra.mxu0 0.0
        %760 = vmatpush.msra.mxu0 0.0
        %761 = vmatpush.msra.mxu0 0.0
        %762 = vmatpush.msra.mxu0 0.0
        %763 = vmatpush.msra.mxu0 0.0
        %764 = vmatpush.msra.mxu0 0.0
        %765 = vmatpush.msra.mxu0 0.0
        %766 = vmatpush.msra.mxu0 0.0
        %767 = vmatpush.msra.mxu0 0.0
        %768 = vmatpush.msra.mxu0 0.0
        %769 = vmatpush.msra.mxu0 0.0
        %770 = vmatpush.msra.mxu0 0.0
        %771 = vmatpush.msra.mxu0 0.0
        %772 = vmatpush.msra.mxu0 0.0
        %773 = vmatpush.msra.mxu0 %v750
        %774 = vmatmul.f32.gmra.mxu0 %v748
        %v775 = vpop.f32.mrf.mxu0
        %v776 = vadd.f32 0.0, %v775
        %777 = vdwg.mxu0
        %778 = vmatpush.msra.mxu0 0.0
        %779 = vmatpush.msra.mxu0 0.0
        %780 = vmatpush.msra.mxu0 0.0
        %781 = vmatpush.msra.mxu0 0.0
        %782 = vmatpush.msra.mxu0 0.0
        %783 = vmatpush.msra.mxu0 0.0
        %784 = vmatpush.msra.mxu0 0.0
        %785 = vmatpush.msra.mxu0 0.0
        %786 = vmatpush.msra.mxu0 0.0
        %787 = vmatpush.msra.mxu0 0.0
        %788 = vmatpush.msra.mxu0 0.0
        %789 = vmatpush.msra.mxu0 0.0
        %790 = vmatpush.msra.mxu0 0.0
        %791 = vmatpush.msra.mxu0 0.0
        %792 = vmatpush.msra.mxu0 0.0
        %793 = vmatpush.msra.mxu0 %v752
        %794 = vmatmul.f32.gmra.mxu0 %v748
        %v795 = vpop.f32.mrf.mxu0
        %v796 = vadd.f32 0.0, %v795
        %797 = vdwg.mxu0
        %798 = vmatpush.msra.mxu0 0.0
        %799 = vmatpush.msra.mxu0 0.0
        %800 = vmatpush.msra.mxu0 0.0
        %801 = vmatpush.msra.mxu0 0.0
        %802 = vmatpush.msra.mxu0 0.0
        %803 = vmatpush.msra.mxu0 0.0
        %804 = vmatpush.msra.mxu0 0.0
        %805 = vmatpush.msra.mxu0 0.0
        %806 = vmatpush.msra.mxu0 0.0
        %807 = vmatpush.msra.mxu0 0.0
        %808 = vmatpush.msra.mxu0 0.0
        %809 = vmatpush.msra.mxu0 0.0
        %810 = vmatpush.msra.mxu0 0.0
        %811 = vmatpush.msra.mxu0 0.0
        %812 = vmatpush.msra.mxu0 0.0
        %813 = vmatpush.msra.mxu0 %v754
        %814 = vmatmul.f32.gmra.mxu0 %v748
        %v815 = vpop.f32.mrf.mxu0
        %v816 = vadd.f32 0.0, %v815
        %817 = vdwg.mxu0
        %818 = vmatpush.msra.mxu0 0.0
        %819 = vmatpush.msra.mxu0 0.0
        %820 = vmatpush.msra.mxu0 0.0
        %821 = vmatpush.msra.mxu0 0.0
        %822 = vmatpush.msra.mxu0 0.0
        %823 = vmatpush.msra.mxu0 0.0
        %824 = vmatpush.msra.mxu0 0.0
        %825 = vmatpush.msra.mxu0 0.0
        %826 = vmatpush.msra.mxu0 0.0
        %827 = vmatpush.msra.mxu0 0.0
        %828 = vmatpush.msra.mxu0 0.0
        %829 = vmatpush.msra.mxu0 0.0
        %830 = vmatpush.msra.mxu0 0.0
        %831 = vmatpush.msra.mxu0 0.0
        %832 = vmatpush.msra.mxu0 0.0
        %833 = vmatpush.msra.mxu0 %v756
        %834 = vmatmul.f32.gmra.mxu0 %v748
        %v835 = vpop.f32.mrf.mxu0
        %v836 = vadd.f32 0.0, %v835
        %837 = vdwg.mxu0
        %v838 = vadd.f32 %v678, %v776
        %v839 = vadd.f32 %v698, %v796
        %v840 = vadd.f32 %v718, %v816
        %v841 = vadd.f32 %v738, %v836
        %842 = vst [vmem:[#allocation1] ss:$2 sm:$0xff] %v448
        %s843 = scalar_lea.vmem [#allocation1], 16
        %844 = vst [vmem:[%s843] ss:$2 sm:$0xff] %v449
        %v845 = vld.sshfl [vmem:[#allocation1] sm:$0xff pattern:$0x75316420]
        %v846 = vld.sshfl [vmem:[#allocation1 + $0x8] sm:$0xff pattern:$0x75316420]
        %v847 = vld.sshfl [vmem:[#allocation1 + $0x10] sm:$0xff pattern:$0x75316420]
        %v848 = vld.sshfl [vmem:[#allocation1 + $0x18] sm:$0xff pattern:$0x75316420]
        %853 = vrot.lane.b32.xlu0 %v845, 127
        %v854 = vpop.permute.xlu0 %853
        %855 = vrot.lane.b32.xlu0 %v846, 127
        %v856 = vpop.permute.xlu0 %855
        %857 = vrot.lane.b32.xlu0 %v847, 127
        %v858 = vpop.permute.xlu0 %857
        %859 = vrot.lane.b32.xlu0 %v848, 127
        %v860 = vpop.permute.xlu0 %859
        %vm861 = vcmp.lt.s32.totalorder %v432, 127
        %v862 = vsel %vm861, %v858, %v860
        %v863 = vsel %vm861, %v856, %v858
        %v864 = vsel %vm861, %v854, %v856
        %v865 = vsel %vm861, %v860, %v854
        %vm866 = vcmp.ge.s32.totalorder %v432, 4294967295
        %vm867 = vcmp.ge.s32.totalorder %v433, 4294967295
        %vm868 = vcmp.ge.s32.totalorder %v434, 4294967295
        %vm869 = vcmp.ge.s32.totalorder %v435, 4294967295
        %vm870 = vcmp.lt.s32.totalorder %v432, 511
        %vm871 = vcmp.lt.s32.totalorder %v433, 511
        %vm872 = vcmp.lt.s32.totalorder %v434, 511
        %vm873 = vcmp.lt.s32.totalorder %v435, 511
        %vm874 = vmand %vm866, %vm870
        %vm875 = vmand %vm867, %vm871
        %vm876 = vmand %vm868, %vm872
        %vm877 = vmand %vm869, %vm873
        %v878 = vsel %vm874, 1, 0
        %v879 = vsel %vm875, 1, 0
        %v880 = vsel %vm876, 1, 0
        %v881 = vsel %vm877, 1, 0
        %vm882 = vcmp.eq.s32.totalorder %v878, 1
        %vm883 = vcmp.eq.s32.totalorder %v879, 1
        %vm884 = vcmp.eq.s32.totalorder %v880, 1
        %vm885 = vcmp.eq.s32.totalorder %v881, 1
        %v886 = vsel %vm882, %v864, 0.0
        %v887 = vsel %vm883, %v863, 0.0
        %v888 = vsel %vm884, %v862, 0.0
        %v889 = vsel %vm885, %v865, 0.0
        %v891 = vsel %vm548, %v441, 0
        %v894 = vsel %vm552, %v886, 0
        %v897 = vsel %vm552, %v887, 0
        %v900 = vsel %vm552, %v888, 0
        %v903 = vsel %vm552, %v889, 0
        %905 = vmatpush.msra.mxu0 0.0
        %906 = vmatpush.msra.mxu0 0.0
        %907 = vmatpush.msra.mxu0 0.0
        %908 = vmatpush.msra.mxu0 0.0
        %909 = vmatpush.msra.mxu0 0.0
        %910 = vmatpush.msra.mxu0 0.0
        %911 = vmatpush.msra.mxu0 0.0
        %912 = vmatpush.msra.mxu0 0.0
        %913 = vmatpush.msra.mxu0 0.0
        %914 = vmatpush.msra.mxu0 0.0
        %915 = vmatpush.msra.mxu0 0.0
        %916 = vmatpush.msra.mxu0 0.0
        %917 = vmatpush.msra.mxu0 0.0
        %918 = vmatpush.msra.mxu0 0.0
        %919 = vmatpush.msra.mxu0 0.0
        %920 = vmatpush.msra.mxu0 %v894
        %921 = vmatmul.f32.gmra.mxu0 %v891
        %v922 = vpop.f32.mrf.mxu0
        %v923 = vadd.f32 0.0, %v922
        %924 = vdwg.mxu0
        %925 = vmatpush.msra.mxu0 0.0
        %926 = vmatpush.msra.mxu0 0.0
        %927 = vmatpush.msra.mxu0 0.0
        %928 = vmatpush.msra.mxu0 0.0
        %929 = vmatpush.msra.mxu0 0.0
        %930 = vmatpush.msra.mxu0 0.0
        %931 = vmatpush.msra.mxu0 0.0
        %932 = vmatpush.msra.mxu0 0.0
        %933 = vmatpush.msra.mxu0 0.0
        %934 = vmatpush.msra.mxu0 0.0
        %935 = vmatpush.msra.mxu0 0.0
        %936 = vmatpush.msra.mxu0 0.0
        %937 = vmatpush.msra.mxu0 0.0
        %938 = vmatpush.msra.mxu0 0.0
        %939 = vmatpush.msra.mxu0 0.0
        %940 = vmatpush.msra.mxu0 %v897
        %941 = vmatmul.f32.gmra.mxu0 %v891
        %v942 = vpop.f32.mrf.mxu0
        %v943 = vadd.f32 0.0, %v942
        %944 = vdwg.mxu0
        %945 = vmatpush.msra.mxu0 0.0
        %946 = vmatpush.msra.mxu0 0.0
        %947 = vmatpush.msra.mxu0 0.0
        %948 = vmatpush.msra.mxu0 0.0
        %949 = vmatpush.msra.mxu0 0.0
        %950 = vmatpush.msra.mxu0 0.0
        %951 = vmatpush.msra.mxu0 0.0
        %952 = vmatpush.msra.mxu0 0.0
        %953 = vmatpush.msra.mxu0 0.0
        %954 = vmatpush.msra.mxu0 0.0
        %955 = vmatpush.msra.mxu0 0.0
        %956 = vmatpush.msra.mxu0 0.0
        %957 = vmatpush.msra.mxu0 0.0
        %958 = vmatpush.msra.mxu0 0.0
        %959 = vmatpush.msra.mxu0 0.0
        %960 = vmatpush.msra.mxu0 %v900
        %961 = vmatmul.f32.gmra.mxu0 %v891
        %v962 = vpop.f32.mrf.mxu0
        %v963 = vadd.f32 0.0, %v962
        %964 = vdwg.mxu0
        %965 = vmatpush.msra.mxu0 0.0
        %966 = vmatpush.msra.mxu0 0.0
        %967 = vmatpush.msra.mxu0 0.0
        %968 = vmatpush.msra.mxu0 0.0
        %969 = vmatpush.msra.mxu0 0.0
        %970 = vmatpush.msra.mxu0 0.0
        %971 = vmatpush.msra.mxu0 0.0
        %972 = vmatpush.msra.mxu0 0.0
        %973 = vmatpush.msra.mxu0 0.0
        %974 = vmatpush.msra.mxu0 0.0
        %975 = vmatpush.msra.mxu0 0.0
        %976 = vmatpush.msra.mxu0 0.0
        %977 = vmatpush.msra.mxu0 0.0
        %978 = vmatpush.msra.mxu0 0.0
        %979 = vmatpush.msra.mxu0 0.0
        %980 = vmatpush.msra.mxu0 %v903
        %981 = vmatmul.f32.gmra.mxu0 %v891
        %v982 = vpop.f32.mrf.mxu0
        %v983 = vadd.f32 0.0, %v982
        %984 = vdwg.mxu0
        %v985 = vadd.f32 %v838, %v923
        %v986 = vadd.f32 %v839, %v943
        %v987 = vadd.f32 %v840, %v963
        %v988 = vadd.f32 %v841, %v983
        %989 = vst [vmem:[#allocation1] ss:$2 sm:$0xff] %v448
        %s990 = scalar_lea.vmem [#allocation1], 16
        %991 = vst [vmem:[%s990] ss:$2 sm:$0xff] %v449
        %v992 = vld.sshfl [vmem:[#allocation1] sm:$0xff pattern:$0x75316420]
        %v993 = vld.sshfl [vmem:[#allocation1 + $0x8] sm:$0xff pattern:$0x75316420]
        %v994 = vld.sshfl [vmem:[#allocation1 + $0x10] sm:$0xff pattern:$0x75316420]
        %v995 = vld.sshfl [vmem:[#allocation1 + $0x18] sm:$0xff pattern:$0x75316420]
        %1000 = vrot.lane.b32.xlu0 %v992, 126
        %v1001 = vpop.permute.xlu0 %1000
        %1002 = vrot.lane.b32.xlu0 %v993, 126
        %v1003 = vpop.permute.xlu0 %1002
        %1004 = vrot.lane.b32.xlu0 %v994, 126
        %v1005 = vpop.permute.xlu0 %1004
        %1006 = vrot.lane.b32.xlu0 %v995, 126
        %v1007 = vpop.permute.xlu0 %1006
        %vm1008 = vcmp.lt.s32.totalorder %v432, 126
        %v1009 = vsel %vm1008, %v1005, %v1007
        %v1010 = vsel %vm1008, %v1003, %v1005
        %v1011 = vsel %vm1008, %v1001, %v1003
        %v1012 = vsel %vm1008, %v1007, %v1001
        %vm1013 = vcmp.ge.s32.totalorder %v432, 4294967294
        %vm1014 = vcmp.ge.s32.totalorder %v433, 4294967294
        %vm1015 = vcmp.ge.s32.totalorder %v434, 4294967294
        %vm1016 = vcmp.ge.s32.totalorder %v435, 4294967294
        %vm1017 = vcmp.lt.s32.totalorder %v432, 510
        %vm1018 = vcmp.lt.s32.totalorder %v433, 510
        %vm1019 = vcmp.lt.s32.totalorder %v434, 510
        %vm1020 = vcmp.lt.s32.totalorder %v435, 510
        %vm1021 = vmand %vm1013, %vm1017
        %vm1022 = vmand %vm1014, %vm1018
        %vm1023 = vmand %vm1015, %vm1019
        %vm1024 = vmand %vm1016, %vm1020
        %v1025 = vsel %vm1021, 1, 0
        %v1026 = vsel %vm1022, 1, 0
        %v1027 = vsel %vm1023, 1, 0
        %v1028 = vsel %vm1024, 1, 0
        %vm1029 = vcmp.eq.s32.totalorder %v1025, 1
        %vm1030 = vcmp.eq.s32.totalorder %v1026, 1
        %vm1031 = vcmp.eq.s32.totalorder %v1027, 1
        %vm1032 = vcmp.eq.s32.totalorder %v1028, 1
        %v1033 = vsel %vm1029, %v1011, 0.0
        %v1034 = vsel %vm1030, %v1010, 0.0
        %v1035 = vsel %vm1031, %v1009, 0.0
        %v1036 = vsel %vm1032, %v1012, 0.0
        %v1038 = vsel %vm548, %v442, 0
        %v1041 = vsel %vm552, %v1033, 0
        %v1044 = vsel %vm552, %v1034, 0
        %v1047 = vsel %vm552, %v1035, 0
        %v1050 = vsel %vm552, %v1036, 0
        %1052 = vmatpush.msra.mxu0 0.0
        %1053 = vmatpush.msra.mxu0 0.0
        %1054 = vmatpush.msra.mxu0 0.0
        %1055 = vmatpush.msra.mxu0 0.0
        %1056 = vmatpush.msra.mxu0 0.0
        %1057 = vmatpush.msra.mxu0 0.0
        %1058 = vmatpush.msra.mxu0 0.0
        %1059 = vmatpush.msra.mxu0 0.0
        %1060 = vmatpush.msra.mxu0 0.0
        %1061 = vmatpush.msra.mxu0 0.0
        %1062 = vmatpush.msra.mxu0 0.0
        %1063 = vmatpush.msra.mxu0 0.0
        %1064 = vmatpush.msra.mxu0 0.0
        %1065 = vmatpush.msra.mxu0 0.0
        %1066 = vmatpush.msra.mxu0 0.0
        %1067 = vmatpush.msra.mxu0 %v1041
        %1068 = vmatmul.f32.gmra.mxu0 %v1038
        %v1069 = vpop.f32.mrf.mxu0
        %v1070 = vadd.f32 0.0, %v1069
        %1071 = vdwg.mxu0
        %1072 = vmatpush.msra.mxu0 0.0
        %1073 = vmatpush.msra.mxu0 0.0
        %1074 = vmatpush.msra.mxu0 0.0
        %1075 = vmatpush.msra.mxu0 0.0
        %1076 = vmatpush.msra.mxu0 0.0
        %1077 = vmatpush.msra.mxu0 0.0
        %1078 = vmatpush.msra.mxu0 0.0
        %1079 = vmatpush.msra.mxu0 0.0
        %1080 = vmatpush.msra.mxu0 0.0
        %1081 = vmatpush.msra.mxu0 0.0
        %1082 = vmatpush.msra.mxu0 0.0
        %1083 = vmatpush.msra.mxu0 0.0
        %1084 = vmatpush.msra.mxu0 0.0
        %1085 = vmatpush.msra.mxu0 0.0
        %1086 = vmatpush.msra.mxu0 0.0
        %1087 = vmatpush.msra.mxu0 %v1044
        %1088 = vmatmul.f32.gmra.mxu0 %v1038
        %v1089 = vpop.f32.mrf.mxu0
        %v1090 = vadd.f32 0.0, %v1089
        %1091 = vdwg.mxu0
        %1092 = vmatpush.msra.mxu0 0.0
        %1093 = vmatpush.msra.mxu0 0.0
        %1094 = vmatpush.msra.mxu0 0.0
        %1095 = vmatpush.msra.mxu0 0.0
        %1096 = vmatpush.msra.mxu0 0.0
        %1097 = vmatpush.msra.mxu0 0.0
        %1098 = vmatpush.msra.mxu0 0.0
        %1099 = vmatpush.msra.mxu0 0.0
        %1100 = vmatpush.msra.mxu0 0.0
        %1101 = vmatpush.msra.mxu0 0.0
        %1102 = vmatpush.msra.mxu0 0.0
        %1103 = vmatpush.msra.mxu0 0.0
        %1104 = vmatpush.msra.mxu0 0.0
        %1105 = vmatpush.msra.mxu0 0.0
        %1106 = vmatpush.msra.mxu0 0.0
        %1107 = vmatpush.msra.mxu0 %v1047
        %1108 = vmatmul.f32.gmra.mxu0 %v1038
        %v1109 = vpop.f32.mrf.mxu0
        %v1110 = vadd.f32 0.0, %v1109
        %1111 = vdwg.mxu0
        %1112 = vmatpush.msra.mxu0 0.0
        %1113 = vmatpush.msra.mxu0 0.0
        %1114 = vmatpush.msra.mxu0 0.0
        %1115 = vmatpush.msra.mxu0 0.0
        %1116 = vmatpush.msra.mxu0 0.0
        %1117 = vmatpush.msra.mxu0 0.0
        %1118 = vmatpush.msra.mxu0 0.0
        %1119 = vmatpush.msra.mxu0 0.0
        %1120 = vmatpush.msra.mxu0 0.0
        %1121 = vmatpush.msra.mxu0 0.0
        %1122 = vmatpush.msra.mxu0 0.0
        %1123 = vmatpush.msra.mxu0 0.0
        %1124 = vmatpush.msra.mxu0 0.0
        %1125 = vmatpush.msra.mxu0 0.0
        %1126 = vmatpush.msra.mxu0 0.0
        %1127 = vmatpush.msra.mxu0 %v1050
        %1128 = vmatmul.f32.gmra.mxu0 %v1038
        %v1129 = vpop.f32.mrf.mxu0
        %v1130 = vadd.f32 0.0, %v1129
        %1131 = vdwg.mxu0
        %v1132 = vadd.f32 %v985, %v1070
        %v1133 = vadd.f32 %v986, %v1090
        %v1134 = vadd.f32 %v987, %v1110
        %v1135 = vadd.f32 %v988, %v1130
        %1137 = vset.pattern.permute.xlu0 0
        %1138 = vperm.xlu0 %1137, %v443
        %v1139 = vpop.permute.xlu0 %1138
        %v1141 = vadd.f32 %v1132, %v1139
        %v1142 = vadd.f32 %v1133, %v1139
        %v1143 = vadd.f32 %v1134, %v1139
        %v1144 = vadd.f32 %v1135, %v1139
        %1147 = vst [vmem:[#allocation1] ss:$2 sm:$0xff] %v436
        %s1148 = scalar_lea.vmem [#allocation1], 16
        %1149 = vst [vmem:[%s1148] ss:$2 sm:$0xff] %v437
        %v1150 = vld.sshfl [vmem:[#allocation1] sm:$0xff pattern:$0x75316420]
        %v1151 = vld.sshfl [vmem:[#allocation1 + $0x8] sm:$0xff pattern:$0x75316420]
        %v1152 = vld.sshfl [vmem:[#allocation1 + $0x10] sm:$0xff pattern:$0x75316420]
        %v1153 = vld.sshfl [vmem:[#allocation1 + $0x18] sm:$0xff pattern:$0x75316420]
        %v1158 = vadd.f32 %v1141, %v1150
        %v1159 = vadd.f32 %v1142, %v1151
        %v1160 = vadd.f32 %v1143, %v1152
        %v1161 = vadd.f32 %v1144, %v1153
        %v1162 = vld [vmem:[%s4] sm:$0xf]
        %v1163 = vld [vmem:[%s4 + $0x4] sm:$0xf]
        %v1164 = vld [vmem:[%s4 + $0x8] sm:$0xf]
        %v1165 = vld [vmem:[%s4 + $0xc] sm:$0xf]
        %v1166 = vld [vmem:[%s4 + $0x10] sm:$0xf]
        %v1167 = vld [vmem:[%s5] sm:$0xf]
        %vm1168 = vcmp.ge.f32.partialorder %v1158, 0.0
        %vm1169 = vcmp.ge.f32.partialorder %v1159, 0.0
        %vm1170 = vcmp.ge.f32.partialorder %v1160, 0.0
        %vm1171 = vcmp.ge.f32.partialorder %v1161, 0.0
        %v1172 = vmul.f32 %v1158, 0.01
        %v1173 = vmul.f32 %v1159, 0.01
        %v1174 = vmul.f32 %v1160, 0.01
        %v1175 = vmul.f32 %v1161, 0.01
        %v1176 = vsel %vm1168, %v1158, %v1172
        %v1177 = vsel %vm1169, %v1159, %v1173
        %v1178 = vsel %vm1170, %v1160, %v1174
        %v1179 = vsel %vm1171, %v1161, %v1175
        %1180 = vrot.lane.b32.xlu0 %v1176, 2
        %v1181 = vpop.permute.xlu0 %1180
        %1182 = vrot.lane.b32.xlu0 %v1177, 2
        %v1183 = vpop.permute.xlu0 %1182
        %1184 = vrot.lane.b32.xlu0 %v1178, 2
        %v1185 = vpop.permute.xlu0 %1184
        %1186 = vrot.lane.b32.xlu0 %v1179, 2
        %v1187 = vpop.permute.xlu0 %1186
        %v1188 = vsel %vm471, %v1185, %v1187
        %v1189 = vsel %vm471, %v1183, %v1185
        %v1190 = vsel %vm471, %v1181, %v1183
        %v1191 = vsel %vm471, %v1187, %v1181
        %v1192 = vsel %vm492, %v1191, 0.0
        %v1193 = vsel %vm493, %v1190, 0.0
        %v1194 = vsel %vm494, %v1189, 0.0
        %v1195 = vsel %vm495, %v1188, 0.0
        %1196 = vrot.lane.b32.xlu0 %v1176, 1
        %v1197 = vpop.permute.xlu0 %1196
        %1198 = vrot.lane.b32.xlu0 %v1177, 1
        %v1199 = vpop.permute.xlu0 %1198
        %1200 = vrot.lane.b32.xlu0 %v1178, 1
        %v1201 = vpop.permute.xlu0 %1200
        %1202 = vrot.lane.b32.xlu0 %v1179, 1
        %v1203 = vpop.permute.xlu0 %1202
        %v1204 = vsel %vm519, %v1201, %v1203
        %v1205 = vsel %vm519, %v1199, %v1201
        %v1206 = vsel %vm519, %v1197, %v1199
        %v1207 = vsel %vm519, %v1203, %v1197
        %v1208 = vsel %vm540, %v1207, 0.0
        %v1209 = vsel %vm541, %v1206, 0.0
        %v1210 = vsel %vm542, %v1205, 0.0
        %v1211 = vsel %vm543, %v1204, 0.0
        %v1213 = vsel %vm548, %v1163, 0
        %v1216 = vsel %vm552, %v1208, 0
        %v1219 = vsel %vm552, %v1209, 0
        %v1222 = vsel %vm552, %v1210, 0
        %v1225 = vsel %vm552, %v1211, 0
        %1227 = vmatpush.msra.mxu0 0.0
        %1228 = vmatpush.msra.mxu0 0.0
        %1229 = vmatpush.msra.mxu0 0.0
        %1230 = vmatpush.msra.mxu0 0.0
        %1231 = vmatpush.msra.mxu0 0.0
        %1232 = vmatpush.msra.mxu0 0.0
        %1233 = vmatpush.msra.mxu0 0.0
        %1234 = vmatpush.msra.mxu0 0.0
        %1235 = vmatpush.msra.mxu0 0.0
        %1236 = vmatpush.msra.mxu0 0.0
        %1237 = vmatpush.msra.mxu0 0.0
        %1238 = vmatpush.msra.mxu0 0.0
        %1239 = vmatpush.msra.mxu0 0.0
        %1240 = vmatpush.msra.mxu0 0.0
        %1241 = vmatpush.msra.mxu0 0.0
        %1242 = vmatpush.msra.mxu0 %v1216
        %1243 = vmatmul.f32.gmra.mxu0 %v1213
        %v1244 = vpop.f32.mrf.mxu0
        %v1245 = vadd.f32 0.0, %v1244
        %1246 = vdwg.mxu0
        %1247 = vmatpush.msra.mxu0 0.0
        %1248 = vmatpush.msra.mxu0 0.0
        %1249 = vmatpush.msra.mxu0 0.0
        %1250 = vmatpush.msra.mxu0 0.0
        %1251 = vmatpush.msra.mxu0 0.0
        %1252 = vmatpush.msra.mxu0 0.0
        %1253 = vmatpush.msra.mxu0 0.0
        %1254 = vmatpush.msra.mxu0 0.0
        %1255 = vmatpush.msra.mxu0 0.0
        %1256 = vmatpush.msra.mxu0 0.0
        %1257 = vmatpush.msra.mxu0 0.0
        %1258 = vmatpush.msra.mxu0 0.0
        %1259 = vmatpush.msra.mxu0 0.0
        %1260 = vmatpush.msra.mxu0 0.0
        %1261 = vmatpush.msra.mxu0 0.0
        %1262 = vmatpush.msra.mxu0 %v1219
        %1263 = vmatmul.f32.gmra.mxu0 %v1213
        %v1264 = vpop.f32.mrf.mxu0
        %v1265 = vadd.f32 0.0, %v1264
        %1266 = vdwg.mxu0
        %1267 = vmatpush.msra.mxu0 0.0
        %1268 = vmatpush.msra.mxu0 0.0
        %1269 = vmatpush.msra.mxu0 0.0
        %1270 = vmatpush.msra.mxu0 0.0
        %1271 = vmatpush.msra.mxu0 0.0
        %1272 = vmatpush.msra.mxu0 0.0
        %1273 = vmatpush.msra.mxu0 0.0
        %1274 = vmatpush.msra.mxu0 0.0
        %1275 = vmatpush.msra.mxu0 0.0
        %1276 = vmatpush.msra.mxu0 0.0
        %1277 = vmatpush.msra.mxu0 0.0
        %1278 = vmatpush.msra.mxu0 0.0
        %1279 = vmatpush.msra.mxu0 0.0
        %1280 = vmatpush.msra.mxu0 0.0
        %1281 = vmatpush.msra.mxu0 0.0
        %1282 = vmatpush.msra.mxu0 %v1222
        %1283 = vmatmul.f32.gmra.mxu0 %v1213
        %v1284 = vpop.f32.mrf.mxu0
        %v1285 = vadd.f32 0.0, %v1284
        %1286 = vdwg.mxu0
        %1287 = vmatpush.msra.mxu0 0.0
        %1288 = vmatpush.msra.mxu0 0.0
        %1289 = vmatpush.msra.mxu0 0.0
        %1290 = vmatpush.msra.mxu0 0.0
        %1291 = vmatpush.msra.mxu0 0.0
        %1292 = vmatpush.msra.mxu0 0.0
        %1293 = vmatpush.msra.mxu0 0.0
        %1294 = vmatpush.msra.mxu0 0.0
        %1295 = vmatpush.msra.mxu0 0.0
        %1296 = vmatpush.msra.mxu0 0.0
        %1297 = vmatpush.msra.mxu0 0.0
        %1298 = vmatpush.msra.mxu0 0.0
        %1299 = vmatpush.msra.mxu0 0.0
        %1300 = vmatpush.msra.mxu0 0.0
        %1301 = vmatpush.msra.mxu0 0.0
        %1302 = vmatpush.msra.mxu0 %v1225
        %1303 = vmatmul.f32.gmra.mxu0 %v1213
        %v1304 = vpop.f32.mrf.mxu0
        %v1305 = vadd.f32 0.0, %v1304
        %1306 = vdwg.mxu0
        %v1308 = vsel %vm548, %v1162, 0
        %v1311 = vsel %vm552, %v1192, 0
        %v1314 = vsel %vm552, %v1193, 0
        %v1317 = vsel %vm552, %v1194, 0
        %v1320 = vsel %vm552, %v1195, 0
        %1322 = vmatpush.msra.mxu0 0.0
        %1323 = vmatpush.msra.mxu0 0.0
        %1324 = vmatpush.msra.mxu0 0.0
        %1325 = vmatpush.msra.mxu0 0.0
        %1326 = vmatpush.msra.mxu0 0.0
        %1327 = vmatpush.msra.mxu0 0.0
        %1328 = vmatpush.msra.mxu0 0.0
        %1329 = vmatpush.msra.mxu0 0.0
        %1330 = vmatpush.msra.mxu0 0.0
        %1331 = vmatpush.msra.mxu0 0.0
        %1332 = vmatpush.msra.mxu0 0.0
        %1333 = vmatpush.msra.mxu0 0.0
        %1334 = vmatpush.msra.mxu0 0.0
        %1335 = vmatpush.msra.mxu0 0.0
        %1336 = vmatpush.msra.mxu0 0.0
        %1337 = vmatpush.msra.mxu0 %v1311
        %1338 = vmatmul.f32.gmra.mxu0 %v1308
        %v1339 = vpop.f32.mrf.mxu0
        %v1340 = vadd.f32 %v1245, %v1339
        %1341 = vdwg.mxu0
        %1342 = vmatpush.msra.mxu0 0.0
        %1343 = vmatpush.msra.mxu0 0.0
        %1344 = vmatpush.msra.mxu0 0.0
        %1345 = vmatpush.msra.mxu0 0.0
        %1346 = vmatpush.msra.mxu0 0.0
        %1347 = vmatpush.msra.mxu0 0.0
        %1348 = vmatpush.msra.mxu0 0.0
        %1349 = vmatpush.msra.mxu0 0.0
        %1350 = vmatpush.msra.mxu0 0.0
        %1351 = vmatpush.msra.mxu0 0.0
        %1352 = vmatpush.msra.mxu0 0.0
        %1353 = vmatpush.msra.mxu0 0.0
        %1354 = vmatpush.msra.mxu0 0.0
        %1355 = vmatpush.msra.mxu0 0.0
        %1356 = vmatpush.msra.mxu0 0.0
        %1357 = vmatpush.msra.mxu0 %v1314
        %1358 = vmatmul.f32.gmra.mxu0 %v1308
        %v1359 = vpop.f32.mrf.mxu0
        %v1360 = vadd.f32 %v1265, %v1359
        %1361 = vdwg.mxu0
        %1362 = vmatpush.msra.mxu0 0.0
        %1363 = vmatpush.msra.mxu0 0.0
        %1364 = vmatpush.msra.mxu0 0.0
        %1365 = vmatpush.msra.mxu0 0.0
        %1366 = vmatpush.msra.mxu0 0.0
        %1367 = vmatpush.msra.mxu0 0.0
        %1368 = vmatpush.msra.mxu0 0.0
        %1369 = vmatpush.msra.mxu0 0.0
        %1370 = vmatpush.msra.mxu0 0.0
        %1371 = vmatpush.msra.mxu0 0.0
        %1372 = vmatpush.msra.mxu0 0.0
        %1373 = vmatpush.msra.mxu0 0.0
        %1374 = vmatpush.msra.mxu0 0.0
        %1375 = vmatpush.msra.mxu0 0.0
        %1376 = vmatpush.msra.mxu0 0.0
        %1377 = vmatpush.msra.mxu0 %v1317
        %1378 = vmatmul.f32.gmra.mxu0 %v1308
        %v1379 = vpop.f32.mrf.mxu0
        %v1380 = vadd.f32 %v1285, %v1379
        %1381 = vdwg.mxu0
        %1382 = vmatpush.msra.mxu0 0.0
        %1383 = vmatpush.msra.mxu0 0.0
        %1384 = vmatpush.msra.mxu0 0.0
        %1385 = vmatpush.msra.mxu0 0.0
        %1386 = vmatpush.msra.mxu0 0.0
        %1387 = vmatpush.msra.mxu0 0.0
        %1388 = vmatpush.msra.mxu0 0.0
        %1389 = vmatpush.msra.mxu0 0.0
        %1390 = vmatpush.msra.mxu0 0.0
        %1391 = vmatpush.msra.mxu0 0.0
        %1392 = vmatpush.msra.mxu0 0.0
        %1393 = vmatpush.msra.mxu0 0.0
        %1394 = vmatpush.msra.mxu0 0.0
        %1395 = vmatpush.msra.mxu0 0.0
        %1396 = vmatpush.msra.mxu0 0.0
        %1397 = vmatpush.msra.mxu0 %v1320
        %1398 = vmatmul.f32.gmra.mxu0 %v1308
        %v1399 = vpop.f32.mrf.mxu0
        %v1400 = vadd.f32 %v1305, %v1399
        %1401 = vdwg.mxu0
        %v1403 = vsel %vm548, %v1164, 0
        %v1406 = vsel %vm552, %v1176, 0
        %v1409 = vsel %vm552, %v1177, 0
        %v1412 = vsel %vm552, %v1178, 0
        %v1415 = vsel %vm552, %v1179, 0
        %1417 = vmatpush.msra.mxu0 0.0
        %1418 = vmatpush.msra.mxu0 0.0
        %1419 = vmatpush.msra.mxu0 0.0
        %1420 = vmatpush.msra.mxu0 0.0
        %1421 = vmatpush.msra.mxu0 0.0
        %1422 = vmatpush.msra.mxu0 0.0
        %1423 = vmatpush.msra.mxu0 0.0
        %1424 = vmatpush.msra.mxu0 0.0
        %1425 = vmatpush.msra.mxu0 0.0
        %1426 = vmatpush.msra.mxu0 0.0
        %1427 = vmatpush.msra.mxu0 0.0
        %1428 = vmatpush.msra.mxu0 0.0
        %1429 = vmatpush.msra.mxu0 0.0
        %1430 = vmatpush.msra.mxu0 0.0
        %1431 = vmatpush.msra.mxu0 0.0
        %1432 = vmatpush.msra.mxu0 %v1406
        %1433 = vmatmul.f32.gmra.mxu0 %v1403
        %v1434 = vpop.f32.mrf.mxu0
        %v1435 = vadd.f32 0.0, %v1434
        %1436 = vdwg.mxu0
        %1437 = vmatpush.msra.mxu0 0.0
        %1438 = vmatpush.msra.mxu0 0.0
        %1439 = vmatpush.msra.mxu0 0.0
        %1440 = vmatpush.msra.mxu0 0.0
        %1441 = vmatpush.msra.mxu0 0.0
        %1442 = vmatpush.msra.mxu0 0.0
        %1443 = vmatpush.msra.mxu0 0.0
        %1444 = vmatpush.msra.mxu0 0.0
        %1445 = vmatpush.msra.mxu0 0.0
        %1446 = vmatpush.msra.mxu0 0.0
        %1447 = vmatpush.msra.mxu0 0.0
        %1448 = vmatpush.msra.mxu0 0.0
        %1449 = vmatpush.msra.mxu0 0.0
        %1450 = vmatpush.msra.mxu0 0.0
        %1451 = vmatpush.msra.mxu0 0.0
        %1452 = vmatpush.msra.mxu0 %v1409
        %1453 = vmatmul.f32.gmra.mxu0 %v1403
        %v1454 = vpop.f32.mrf.mxu0
        %v1455 = vadd.f32 0.0, %v1454
        %1456 = vdwg.mxu0
        %1457 = vmatpush.msra.mxu0 0.0
        %1458 = vmatpush.msra.mxu0 0.0
        %1459 = vmatpush.msra.mxu0 0.0
        %1460 = vmatpush.msra.mxu0 0.0
        %1461 = vmatpush.msra.mxu0 0.0
        %1462 = vmatpush.msra.mxu0 0.0
        %1463 = vmatpush.msra.mxu0 0.0
        %1464 = vmatpush.msra.mxu0 0.0
        %1465 = vmatpush.msra.mxu0 0.0
        %1466 = vmatpush.msra.mxu0 0.0
        %1467 = vmatpush.msra.mxu0 0.0
        %1468 = vmatpush.msra.mxu0 0.0
        %1469 = vmatpush.msra.mxu0 0.0
        %1470 = vmatpush.msra.mxu0 0.0
        %1471 = vmatpush.msra.mxu0 0.0
        %1472 = vmatpush.msra.mxu0 %v1412
        %1473 = vmatmul.f32.gmra.mxu0 %v1403
        %v1474 = vpop.f32.mrf.mxu0
        %v1475 = vadd.f32 0.0, %v1474
        %1476 = vdwg.mxu0
        %1477 = vmatpush.msra.mxu0 0.0
        %1478 = vmatpush.msra.mxu0 0.0
        %1479 = vmatpush.msra.mxu0 0.0
        %1480 = vmatpush.msra.mxu0 0.0
        %1481 = vmatpush.msra.mxu0 0.0
        %1482 = vmatpush.msra.mxu0 0.0
        %1483 = vmatpush.msra.mxu0 0.0
        %1484 = vmatpush.msra.mxu0 0.0
        %1485 = vmatpush.msra.mxu0 0.0
        %1486 = vmatpush.msra.mxu0 0.0
        %1487 = vmatpush.msra.mxu0 0.0
        %1488 = vmatpush.msra.mxu0 0.0
        %1489 = vmatpush.msra.mxu0 0.0
        %1490 = vmatpush.msra.mxu0 0.0
        %1491 = vmatpush.msra.mxu0 0.0
        %1492 = vmatpush.msra.mxu0 %v1415
        %1493 = vmatmul.f32.gmra.mxu0 %v1403
        %v1494 = vpop.f32.mrf.mxu0
        %v1495 = vadd.f32 0.0, %v1494
        %1496 = vdwg.mxu0
        %v1497 = vadd.f32 %v1340, %v1435
        %v1498 = vadd.f32 %v1360, %v1455
        %v1499 = vadd.f32 %v1380, %v1475
        %v1500 = vadd.f32 %v1400, %v1495
        %1501 = vrot.lane.b32.xlu0 %v1176, 127
        %v1502 = vpop.permute.xlu0 %1501
        %1503 = vrot.lane.b32.xlu0 %v1177, 127
        %v1504 = vpop.permute.xlu0 %1503
        %1505 = vrot.lane.b32.xlu0 %v1178, 127
        %v1506 = vpop.permute.xlu0 %1505
        %1507 = vrot.lane.b32.xlu0 %v1179, 127
        %v1508 = vpop.permute.xlu0 %1507
        %v1509 = vsel %vm861, %v1506, %v1508
        %v1510 = vsel %vm861, %v1504, %v1506
        %v1511 = vsel %vm861, %v1502, %v1504
        %v1512 = vsel %vm861, %v1508, %v1502
        %v1513 = vsel %vm882, %v1511, 0.0
        %v1514 = vsel %vm883, %v1510, 0.0
        %v1515 = vsel %vm884, %v1509, 0.0
        %v1516 = vsel %vm885, %v1512, 0.0
        %v1518 = vsel %vm548, %v1165, 0
        %v1521 = vsel %vm552, %v1513, 0
        %v1524 = vsel %vm552, %v1514, 0
        %v1527 = vsel %vm552, %v1515, 0
        %v1530 = vsel %vm552, %v1516, 0
        %1532 = vmatpush.msra.mxu0 0.0
        %1533 = vmatpush.msra.mxu0 0.0
        %1534 = vmatpush.msra.mxu0 0.0
        %1535 = vmatpush.msra.mxu0 0.0
        %1536 = vmatpush.msra.mxu0 0.0
        %1537 = vmatpush.msra.mxu0 0.0
        %1538 = vmatpush.msra.mxu0 0.0
        %1539 = vmatpush.msra.mxu0 0.0
        %1540 = vmatpush.msra.mxu0 0.0
        %1541 = vmatpush.msra.mxu0 0.0
        %1542 = vmatpush.msra.mxu0 0.0
        %1543 = vmatpush.msra.mxu0 0.0
        %1544 = vmatpush.msra.mxu0 0.0
        %1545 = vmatpush.msra.mxu0 0.0
        %1546 = vmatpush.msra.mxu0 0.0
        %1547 = vmatpush.msra.mxu0 %v1521
        %1548 = vmatmul.f32.gmra.mxu0 %v1518
        %v1549 = vpop.f32.mrf.mxu0
        %v1550 = vadd.f32 0.0, %v1549
        %1551 = vdwg.mxu0
        %1552 = vmatpush.msra.mxu0 0.0
        %1553 = vmatpush.msra.mxu0 0.0
        %1554 = vmatpush.msra.mxu0 0.0
        %1555 = vmatpush.msra.mxu0 0.0
        %1556 = vmatpush.msra.mxu0 0.0
        %1557 = vmatpush.msra.mxu0 0.0
        %1558 = vmatpush.msra.mxu0 0.0
        %1559 = vmatpush.msra.mxu0 0.0
        %1560 = vmatpush.msra.mxu0 0.0
        %1561 = vmatpush.msra.mxu0 0.0
        %1562 = vmatpush.msra.mxu0 0.0
        %1563 = vmatpush.msra.mxu0 0.0
        %1564 = vmatpush.msra.mxu0 0.0
        %1565 = vmatpush.msra.mxu0 0.0
        %1566 = vmatpush.msra.mxu0 0.0
        %1567 = vmatpush.msra.mxu0 %v1524
        %1568 = vmatmul.f32.gmra.mxu0 %v1518
        %v1569 = vpop.f32.mrf.mxu0
        %v1570 = vadd.f32 0.0, %v1569
        %1571 = vdwg.mxu0
        %1572 = vmatpush.msra.mxu0 0.0
        %1573 = vmatpush.msra.mxu0 0.0
        %1574 = vmatpush.msra.mxu0 0.0
        %1575 = vmatpush.msra.mxu0 0.0
        %1576 = vmatpush.msra.mxu0 0.0
        %1577 = vmatpush.msra.mxu0 0.0
        %1578 = vmatpush.msra.mxu0 0.0
        %1579 = vmatpush.msra.mxu0 0.0
        %1580 = vmatpush.msra.mxu0 0.0
        %1581 = vmatpush.msra.mxu0 0.0
        %1582 = vmatpush.msra.mxu0 0.0
        %1583 = vmatpush.msra.mxu0 0.0
        %1584 = vmatpush.msra.mxu0 0.0
        %1585 = vmatpush.msra.mxu0 0.0
        %1586 = vmatpush.msra.mxu0 0.0
        %1587 = vmatpush.msra.mxu0 %v1527
        %1588 = vmatmul.f32.gmra.mxu0 %v1518
        %v1589 = vpop.f32.mrf.mxu0
        %v1590 = vadd.f32 0.0, %v1589
        %1591 = vdwg.mxu0
        %1592 = vmatpush.msra.mxu0 0.0
        %1593 = vmatpush.msra.mxu0 0.0
        %1594 = vmatpush.msra.mxu0 0.0
        %1595 = vmatpush.msra.mxu0 0.0
        %1596 = vmatpush.msra.mxu0 0.0
        %1597 = vmatpush.msra.mxu0 0.0
        %1598 = vmatpush.msra.mxu0 0.0
        %1599 = vmatpush.msra.mxu0 0.0
        %1600 = vmatpush.msra.mxu0 0.0
        %1601 = vmatpush.msra.mxu0 0.0
        %1602 = vmatpush.msra.mxu0 0.0
        %1603 = vmatpush.msra.mxu0 0.0
        %1604 = vmatpush.msra.mxu0 0.0
        %1605 = vmatpush.msra.mxu0 0.0
        %1606 = vmatpush.msra.mxu0 0.0
        %1607 = vmatpush.msra.mxu0 %v1530
        %1608 = vmatmul.f32.gmra.mxu0 %v1518
        %v1609 = vpop.f32.mrf.mxu0
        %v1610 = vadd.f32 0.0, %v1609
        %1611 = vdwg.mxu0
        %v1612 = vadd.f32 %v1497, %v1550
        %v1613 = vadd.f32 %v1498, %v1570
        %v1614 = vadd.f32 %v1499, %v1590
        %v1615 = vadd.f32 %v1500, %v1610
        %1616 = vrot.lane.b32.xlu0 %v1176, 126
        %v1617 = vpop.permute.xlu0 %1616
        %1618 = vrot.lane.b32.xlu0 %v1177, 126
        %v1619 = vpop.permute.xlu0 %1618
        %1620 = vrot.lane.b32.xlu0 %v1178, 126
        %v1621 = vpop.permute.xlu0 %1620
        %1622 = vrot.lane.b32.xlu0 %v1179, 126
        %v1623 = vpop.permute.xlu0 %1622
        %v1624 = vsel %vm1008, %v1621, %v1623
        %v1625 = vsel %vm1008, %v1619, %v1621
        %v1626 = vsel %vm1008, %v1617, %v1619
        %v1627 = vsel %vm1008, %v1623, %v1617
        %v1628 = vsel %vm1029, %v1626, 0.0
        %v1629 = vsel %vm1030, %v1625, 0.0
        %v1630 = vsel %vm1031, %v1624, 0.0
        %v1631 = vsel %vm1032, %v1627, 0.0
        %v1633 = vsel %vm548, %v1166, 0
        %v1636 = vsel %vm552, %v1628, 0
        %v1639 = vsel %vm552, %v1629, 0
        %v1642 = vsel %vm552, %v1630, 0
        %v1645 = vsel %vm552, %v1631, 0
        %1647 = vmatpush.msra.mxu0 0.0
        %1648 = vmatpush.msra.mxu0 0.0
        %1649 = vmatpush.msra.mxu0 0.0
        %1650 = vmatpush.msra.mxu0 0.0
        %1651 = vmatpush.msra.mxu0 0.0
        %1652 = vmatpush.msra.mxu0 0.0
        %1653 = vmatpush.msra.mxu0 0.0
        %1654 = vmatpush.msra.mxu0 0.0
        %1655 = vmatpush.msra.mxu0 0.0
        %1656 = vmatpush.msra.mxu0 0.0
        %1657 = vmatpush.msra.mxu0 0.0
        %1658 = vmatpush.msra.mxu0 0.0
        %1659 = vmatpush.msra.mxu0 0.0
        %1660 = vmatpush.msra.mxu0 0.0
        %1661 = vmatpush.msra.mxu0 0.0
        %1662 = vmatpush.msra.mxu0 %v1636
        %1663 = vmatmul.f32.gmra.mxu0 %v1633
        %v1664 = vpop.f32.mrf.mxu0
        %v1665 = vadd.f32 0.0, %v1664
        %1666 = vdwg.mxu0
        %1667 = vmatpush.msra.mxu0 0.0
        %1668 = vmatpush.msra.mxu0 0.0
        %1669 = vmatpush.msra.mxu0 0.0
        %1670 = vmatpush.msra.mxu0 0.0
        %1671 = vmatpush.msra.mxu0 0.0
        %1672 = vmatpush.msra.mxu0 0.0
        %1673 = vmatpush.msra.mxu0 0.0
        %1674 = vmatpush.msra.mxu0 0.0
        %1675 = vmatpush.msra.mxu0 0.0
        %1676 = vmatpush.msra.mxu0 0.0
        %1677 = vmatpush.msra.mxu0 0.0
        %1678 = vmatpush.msra.mxu0 0.0
        %1679 = vmatpush.msra.mxu0 0.0
        %1680 = vmatpush.msra.mxu0 0.0
        %1681 = vmatpush.msra.mxu0 0.0
        %1682 = vmatpush.msra.mxu0 %v1639
        %1683 = vmatmul.f32.gmra.mxu0 %v1633
        %v1684 = vpop.f32.mrf.mxu0
        %v1685 = vadd.f32 0.0, %v1684
        %1686 = vdwg.mxu0
        %1687 = vmatpush.msra.mxu0 0.0
        %1688 = vmatpush.msra.mxu0 0.0
        %1689 = vmatpush.msra.mxu0 0.0
        %1690 = vmatpush.msra.mxu0 0.0
        %1691 = vmatpush.msra.mxu0 0.0
        %1692 = vmatpush.msra.mxu0 0.0
        %1693 = vmatpush.msra.mxu0 0.0
        %1694 = vmatpush.msra.mxu0 0.0
        %1695 = vmatpush.msra.mxu0 0.0
        %1696 = vmatpush.msra.mxu0 0.0
        %1697 = vmatpush.msra.mxu0 0.0
        %1698 = vmatpush.msra.mxu0 0.0
        %1699 = vmatpush.msra.mxu0 0.0
        %1700 = vmatpush.msra.mxu0 0.0
        %1701 = vmatpush.msra.mxu0 0.0
        %1702 = vmatpush.msra.mxu0 %v1642
        %1703 = vmatmul.f32.gmra.mxu0 %v1633
        %v1704 = vpop.f32.mrf.mxu0
        %v1705 = vadd.f32 0.0, %v1704
        %1706 = vdwg.mxu0
        %1707 = vmatpush.msra.mxu0 0.0
        %1708 = vmatpush.msra.mxu0 0.0
        %1709 = vmatpush.msra.mxu0 0.0
        %1710 = vmatpush.msra.mxu0 0.0
        %1711 = vmatpush.msra.mxu0 0.0
        %1712 = vmatpush.msra.mxu0 0.0
        %1713 = vmatpush.msra.mxu0 0.0
        %1714 = vmatpush.msra.mxu0 0.0
        %1715 = vmatpush.msra.mxu0 0.0
        %1716 = vmatpush.msra.mxu0 0.0
        %1717 = vmatpush.msra.mxu0 0.0
        %1718 = vmatpush.msra.mxu0 0.0
        %1719 = vmatpush.msra.mxu0 0.0
        %1720 = vmatpush.msra.mxu0 0.0
        %1721 = vmatpush.msra.mxu0 0.0
        %1722 = vmatpush.msra.mxu0 %v1645
        %1723 = vmatmul.f32.gmra.mxu0 %v1633
        %v1724 = vpop.f32.mrf.mxu0
        %v1725 = vadd.f32 0.0, %v1724
        %1726 = vdwg.mxu0
        %v1727 = vadd.f32 %v1612, %v1665
        %v1728 = vadd.f32 %v1613, %v1685
        %v1729 = vadd.f32 %v1614, %v1705
        %v1730 = vadd.f32 %v1615, %v1725
        %1732 = vset.pattern.permute.xlu0 0
        %1733 = vperm.xlu0 %1732, %v1167
        %v1734 = vpop.permute.xlu0 %1733
        %v1736 = vadd.f32 %v1727, %v1734
        %v1737 = vadd.f32 %v1728, %v1734
        %v1738 = vadd.f32 %v1729, %v1734
        %v1739 = vadd.f32 %v1730, %v1734
        %v1740 = vadd.f32 %v1736, %v1158
        %v1741 = vadd.f32 %v1737, %v1159
        %v1742 = vadd.f32 %v1738, %v1160
        %v1743 = vadd.f32 %v1739, %v1161
        %v1744 = vld [vmem:[%s430] sm:$0xf]
        %v1745 = vld [vmem:[%s6] sm:$0xf]
        %v1746 = vld [vmem:[%s6 + $0x4] sm:$0xf]
        %v1747 = vld [vmem:[%s6 + $0x8] sm:$0xf]
        %v1748 = vld [vmem:[%s6 + $0xc] sm:$0xf]
        %v1749 = vld [vmem:[%s6 + $0x10] sm:$0xf]
        %v1750 = vld [vmem:[%s7] sm:$0xf]
        %v1752 = vperm.slane %v1744, 0
        %v1753 = vperm.slane %v1744, 1
        %v1754 = vperm.slane %v1744, 2
        %v1755 = vperm.slane %v1744, 3
        %1760 = vrot.lane.b32.xlu0 %v1752, 2
        %v1761 = vpop.permute.xlu0 %1760
        %1762 = vrot.lane.b32.xlu0 %v1753, 2
        %v1763 = vpop.permute.xlu0 %1762
        %1764 = vrot.lane.b32.xlu0 %v1754, 2
        %v1765 = vpop.permute.xlu0 %1764
        %1766 = vrot.lane.b32.xlu0 %v1755, 2
        %v1767 = vpop.permute.xlu0 %1766
        %v1768 = vsel %vm471, %v1765, %v1767
        %v1769 = vsel %vm471, %v1763, %v1765
        %v1770 = vsel %vm471, %v1761, %v1763
        %v1771 = vsel %vm471, %v1767, %v1761
        %v1772 = vsel %vm484, %v1771, 0.0
        %v1773 = vsel %vm485, %v1770, 0.0
        %v1774 = vsel %vm486, %v1769, 0.0
        %v1775 = vsel %vm487, %v1768, 0.0
        %1777 = vset.pattern.permute.xlu0 0
        %1778 = vperm.xlu0 %1777, %v1745
        %v1779 = vpop.permute.xlu0 %1778
        %v1781 = vperm.slane %v1772, 0
        %v1782 = vperm.slane %v1773, 0
        %v1783 = vperm.slane %v1774, 0
        %v1784 = vperm.slane %v1775, 0
        %v1785 = vmul.f32 %v1779, %v1781
        %v1786 = vmul.f32 %v1779, %v1782
        %v1787 = vmul.f32 %v1779, %v1783
        %v1788 = vmul.f32 %v1779, %v1784
        %1789 = vrot.lane.b32.xlu0 %v1752, 1
        %v1790 = vpop.permute.xlu0 %1789
        %1791 = vrot.lane.b32.xlu0 %v1753, 1
        %v1792 = vpop.permute.xlu0 %1791
        %1793 = vrot.lane.b32.xlu0 %v1754, 1
        %v1794 = vpop.permute.xlu0 %1793
        %1795 = vrot.lane.b32.xlu0 %v1755, 1
        %v1796 = vpop.permute.xlu0 %1795
        %v1797 = vsel %vm519, %v1794, %v1796
        %v1798 = vsel %vm519, %v1792, %v1794
        %v1799 = vsel %vm519, %v1790, %v1792
        %v1800 = vsel %vm519, %v1796, %v1790
        %v1801 = vsel %vm532, %v1800, 0.0
        %v1802 = vsel %vm533, %v1799, 0.0
        %v1803 = vsel %vm534, %v1798, 0.0
        %v1804 = vsel %vm535, %v1797, 0.0
        %1806 = vset.pattern.permute.xlu0 0
        %1807 = vperm.xlu0 %1806, %v1746
        %v1808 = vpop.permute.xlu0 %1807
        %v1810 = vperm.slane %v1801, 0
        %v1811 = vperm.slane %v1802, 0
        %v1812 = vperm.slane %v1803, 0
        %v1813 = vperm.slane %v1804, 0
        %v1814 = vmul.f32 %v1808, %v1810
        %v1815 = vmul.f32 %v1808, %v1811
        %v1816 = vmul.f32 %v1808, %v1812
        %v1817 = vmul.f32 %v1808, %v1813
        %v1818 = vadd.f32 %v1785, %v1814
        %v1819 = vadd.f32 %v1786, %v1815
        %v1820 = vadd.f32 %v1787, %v1816
        %v1821 = vadd.f32 %v1788, %v1817
        %1823 = vset.pattern.permute.xlu0 0
        %1824 = vperm.xlu0 %1823, %v1747
        %v1825 = vpop.permute.xlu0 %1824
        %v1827 = vmul.f32 %v1825, %v1752
        %v1828 = vmul.f32 %v1825, %v1753
        %v1829 = vmul.f32 %v1825, %v1754
        %v1830 = vmul.f32 %v1825, %v1755
        %v1831 = vadd.f32 %v1818, %v1827
        %v1832 = vadd.f32 %v1819, %v1828
        %v1833 = vadd.f32 %v1820, %v1829
        %v1834 = vadd.f32 %v1821, %v1830
        %1835 = vrot.lane.b32.xlu0 %v1752, 127
        %v1836 = vpop.permute.xlu0 %1835
        %1837 = vrot.lane.b32.xlu0 %v1753, 127
        %v1838 = vpop.permute.xlu0 %1837
        %1839 = vrot.lane.b32.xlu0 %v1754, 127
        %v1840 = vpop.permute.xlu0 %1839
        %1841 = vrot.lane.b32.xlu0 %v1755, 127
        %v1842 = vpop.permute.xlu0 %1841
        %v1843 = vsel %vm861, %v1840, %v1842
        %v1844 = vsel %vm861, %v1838, %v1840
        %v1845 = vsel %vm861, %v1836, %v1838
        %v1846 = vsel %vm861, %v1842, %v1836
        %v1847 = vsel %vm874, %v1845, 0.0
        %v1848 = vsel %vm875, %v1844, 0.0
        %v1849 = vsel %vm876, %v1843, 0.0
        %v1850 = vsel %vm877, %v1846, 0.0
        %1852 = vset.pattern.permute.xlu0 0
        %1853 = vperm.xlu0 %1852, %v1748
        %v1854 = vpop.permute.xlu0 %1853
        %v1856 = vperm.slane %v1847, 0
        %v1857 = vperm.slane %v1848, 0
        %v1858 = vperm.slane %v1849, 0
        %v1859 = vperm.slane %v1850, 0
        %v1860 = vmul.f32 %v1854, %v1856
        %v1861 = vmul.f32 %v1854, %v1857
        %v1862 = vmul.f32 %v1854, %v1858
        %v1863 = vmul.f32 %v1854, %v1859
        %v1864 = vadd.f32 %v1831, %v1860
        %v1865 = vadd.f32 %v1832, %v1861
        %v1866 = vadd.f32 %v1833, %v1862
        %v1867 = vadd.f32 %v1834, %v1863
        %1868 = vrot.lane.b32.xlu0 %v1752, 126
        %v1869 = vpop.permute.xlu0 %1868
        %1870 = vrot.lane.b32.xlu0 %v1753, 126
        %v1871 = vpop.permute.xlu0 %1870
        %1872 = vrot.lane.b32.xlu0 %v1754, 126
        %v1873 = vpop.permute.xlu0 %1872
        %1874 = vrot.lane.b32.xlu0 %v1755, 126
        %v1875 = vpop.permute.xlu0 %1874
        %v1876 = vsel %vm1008, %v1873, %v1875
        %v1877 = vsel %vm1008, %v1871, %v1873
        %v1878 = vsel %vm1008, %v1869, %v1871
        %v1879 = vsel %vm1008, %v1875, %v1869
        %v1880 = vsel %vm1021, %v1878, 0.0
        %v1881 = vsel %vm1022, %v1877, 0.0
        %v1882 = vsel %vm1023, %v1876, 0.0
        %v1883 = vsel %vm1024, %v1879, 0.0
        %1885 = vset.pattern.permute.xlu0 0
        %1886 = vperm.xlu0 %1885, %v1749
        %v1887 = vpop.permute.xlu0 %1886
        %v1889 = vperm.slane %v1880, 0
        %v1890 = vperm.slane %v1881, 0
        %v1891 = vperm.slane %v1882, 0
        %v1892 = vperm.slane %v1883, 0
        %v1893 = vmul.f32 %v1887, %v1889
        %v1894 = vmul.f32 %v1887, %v1890
        %v1895 = vmul.f32 %v1887, %v1891
        %v1896 = vmul.f32 %v1887, %v1892
        %v1897 = vadd.f32 %v1864, %v1893
        %v1898 = vadd.f32 %v1865, %v1894
        %v1899 = vadd.f32 %v1866, %v1895
        %v1900 = vadd.f32 %v1867, %v1896
        %1902 = vset.pattern.permute.xlu0 0
        %1903 = vperm.xlu0 %1902, %v1750
        %v1904 = vpop.permute.xlu0 %1903
        %v1906 = vadd.f32 %v1897, %v1904
        %v1907 = vadd.f32 %v1898, %v1904
        %v1908 = vadd.f32 %v1899, %v1904
        %v1909 = vadd.f32 %v1900, %v1904
        %v1914 = vrot.slane %v1740, 4
        %v1915 = vrot.slane %v1741, 4
        %v1916 = vrot.slane %v1742, 4
        %v1917 = vrot.slane %v1743, 4
        %v1922 = vsel %vm552, %v1906, %v1914
        %v1923 = vsel %vm552, %v1907, %v1915
        %v1924 = vsel %vm552, %v1908, %v1916
        %v1925 = vsel %vm552, %v1909, %v1917
        %v1926 = vld [vmem:[%s8] sm:$0xf]
        %v1927 = vld [vmem:[%s9] sm:$0xf]
        %1929 = vset.pattern.permute.xlu0 0
        %1930 = vperm.xlu0 %1929, %v1927
        %v1931 = vpop.permute.xlu0 %1930
        %vm1933 = vcmask 64512
        %v1935 = vsel %vm1933, %v1926, 0
        %1937 = vmatpush.msra.mxu0 0.0
        %1938 = vmatpush.msra.mxu0 0.0
        %1939 = vmatpush.msra.mxu0 0.0
        %1940 = vmatpush.msra.mxu0 0.0
        %1941 = vmatpush.msra.mxu0 0.0
        %1942 = vmatpush.msra.mxu0 0.0
        %1943 = vmatpush.msra.mxu0 0.0
        %1944 = vmatpush.msra.mxu0 0.0
        %1945 = vmatpush.msra.mxu0 0.0
        %1946 = vmatpush.msra.mxu0 0.0
        %1947 = vmatpush.msra.mxu0 0.0
        %1948 = vmatpush.msra.mxu0 0.0
        %1949 = vmatpush.msra.mxu0 0.0
        %1950 = vmatpush.msra.mxu0 0.0
        %1951 = vmatpush.msra.mxu0 0.0
        %1952 = vmatpush.msra.mxu0 %v1922
        %1953 = vmatmul.f32.gmra.mxu0 %v1935
        %v1954 = vpop.f32.mrf.mxu0
        %v1955 = vadd.f32 %v1931, %v1954
        %1956 = vdwg.mxu0
        %1957 = vmatpush.msra.mxu0 0.0
        %1958 = vmatpush.msra.mxu0 0.0
        %1959 = vmatpush.msra.mxu0 0.0
        %1960 = vmatpush.msra.mxu0 0.0
        %1961 = vmatpush.msra.mxu0 0.0
        %1962 = vmatpush.msra.mxu0 0.0
        %1963 = vmatpush.msra.mxu0 0.0
        %1964 = vmatpush.msra.mxu0 0.0
        %1965 = vmatpush.msra.mxu0 0.0
        %1966 = vmatpush.msra.mxu0 0.0
        %1967 = vmatpush.msra.mxu0 0.0
        %1968 = vmatpush.msra.mxu0 0.0
        %1969 = vmatpush.msra.mxu0 0.0
        %1970 = vmatpush.msra.mxu0 0.0
        %1971 = vmatpush.msra.mxu0 0.0
        %1972 = vmatpush.msra.mxu0 %v1923
        %1973 = vmatmul.f32.gmra.mxu0 %v1935
        %v1974 = vpop.f32.mrf.mxu0
        %v1975 = vadd.f32 %v1931, %v1974
        %1976 = vdwg.mxu0
        %1977 = vmatpush.msra.mxu0 0.0
        %1978 = vmatpush.msra.mxu0 0.0
        %1979 = vmatpush.msra.mxu0 0.0
        %1980 = vmatpush.msra.mxu0 0.0
        %1981 = vmatpush.msra.mxu0 0.0
        %1982 = vmatpush.msra.mxu0 0.0
        %1983 = vmatpush.msra.mxu0 0.0
        %1984 = vmatpush.msra.mxu0 0.0
        %1985 = vmatpush.msra.mxu0 0.0
        %1986 = vmatpush.msra.mxu0 0.0
        %1987 = vmatpush.msra.mxu0 0.0
        %1988 = vmatpush.msra.mxu0 0.0
        %1989 = vmatpush.msra.mxu0 0.0
        %1990 = vmatpush.msra.mxu0 0.0
        %1991 = vmatpush.msra.mxu0 0.0
        %1992 = vmatpush.msra.mxu0 %v1924
        %1993 = vmatmul.f32.gmra.mxu0 %v1935
        %v1994 = vpop.f32.mrf.mxu0
        %v1995 = vadd.f32 %v1931, %v1994
        %1996 = vdwg.mxu0
        %1997 = vmatpush.msra.mxu0 0.0
        %1998 = vmatpush.msra.mxu0 0.0
        %1999 = vmatpush.msra.mxu0 0.0
        %2000 = vmatpush.msra.mxu0 0.0
        %2001 = vmatpush.msra.mxu0 0.0
        %2002 = vmatpush.msra.mxu0 0.0
        %2003 = vmatpush.msra.mxu0 0.0
        %2004 = vmatpush.msra.mxu0 0.0
        %2005 = vmatpush.msra.mxu0 0.0
        %2006 = vmatpush.msra.mxu0 0.0
        %2007 = vmatpush.msra.mxu0 0.0
        %2008 = vmatpush.msra.mxu0 0.0
        %2009 = vmatpush.msra.mxu0 0.0
        %2010 = vmatpush.msra.mxu0 0.0
        %2011 = vmatpush.msra.mxu0 0.0
        %2012 = vmatpush.msra.mxu0 %v1925
        %2013 = vmatmul.f32.gmra.mxu0 %v1935
        %v2014 = vpop.f32.mrf.mxu0
        %v2015 = vadd.f32 %v1931, %v2014
        %2016 = vdwg.mxu0
        %v2017 = vld [vmem:[%s10] sm:$0x1]
        %v2018 = vld [vmem:[%s10 + $0x1] sm:$0x1]
        %v2019 = vld [vmem:[%s10 + $0x2] sm:$0x1]
        %v2020 = vld [vmem:[%s10 + $0x3] sm:$0x1]
        %v2021 = vld [vmem:[%s10 + $0x4] sm:$0x1]
        %v2022 = vld [vmem:[#allocation2] sm:$0x1]
        %2023 = vrot.lane.b32.xlu0 %v1955, 2
        %v2024 = vpop.permute.xlu0 %2023
        %2025 = vrot.lane.b32.xlu0 %v1975, 2
        %v2026 = vpop.permute.xlu0 %2025
        %2027 = vrot.lane.b32.xlu0 %v1995, 2
        %v2028 = vpop.permute.xlu0 %2027
        %2029 = vrot.lane.b32.xlu0 %v2015, 2
        %v2030 = vpop.permute.xlu0 %2029
        %v2031 = vsel %vm471, %v2028, %v2030
        %v2032 = vsel %vm471, %v2026, %v2028
        %v2033 = vsel %vm471, %v2024, %v2026
        %v2034 = vsel %vm471, %v2030, %v2024
        %v2035 = vsel %vm492, %v2034, 0.0
        %v2036 = vsel %vm493, %v2033, 0.0
        %v2037 = vsel %vm494, %v2032, 0.0
        %v2038 = vsel %vm495, %v2031, 0.0
        %2039 = vrot.lane.b32.xlu0 %v1955, 1
        %v2040 = vpop.permute.xlu0 %2039
        %2041 = vrot.lane.b32.xlu0 %v1975, 1
        %v2042 = vpop.permute.xlu0 %2041
        %2043 = vrot.lane.b32.xlu0 %v1995, 1
        %v2044 = vpop.permute.xlu0 %2043
        %2045 = vrot.lane.b32.xlu0 %v2015, 1
        %v2046 = vpop.permute.xlu0 %2045
        %v2047 = vsel %vm519, %v2044, %v2046
        %v2048 = vsel %vm519, %v2042, %v2044
        %v2049 = vsel %vm519, %v2040, %v2042
        %v2050 = vsel %vm519, %v2046, %v2040
        %v2051 = vsel %vm540, %v2050, 0.0
        %v2052 = vsel %vm541, %v2049, 0.0
        %v2053 = vsel %vm542, %v2048, 0.0
        %v2054 = vsel %vm543, %v2047, 0.0
        %v2056 = vsel %vm548, %v2018, 0
        %v2059 = vsel %vm552, %v2051, 0
        %v2062 = vsel %vm552, %v2052, 0
        %v2065 = vsel %vm552, %v2053, 0
        %v2068 = vsel %vm552, %v2054, 0
        %2070 = vmatpush.msra.mxu0 0.0
        %2071 = vmatpush.msra.mxu0 0.0
        %2072 = vmatpush.msra.mxu0 0.0
        %2073 = vmatpush.msra.mxu0 0.0
        %2074 = vmatpush.msra.mxu0 0.0
        %2075 = vmatpush.msra.mxu0 0.0
        %2076 = vmatpush.msra.mxu0 0.0
        %2077 = vmatpush.msra.mxu0 0.0
        %2078 = vmatpush.msra.mxu0 0.0
        %2079 = vmatpush.msra.mxu0 0.0
        %2080 = vmatpush.msra.mxu0 0.0
        %2081 = vmatpush.msra.mxu0 0.0
        %2082 = vmatpush.msra.mxu0 0.0
        %2083 = vmatpush.msra.mxu0 0.0
        %2084 = vmatpush.msra.mxu0 0.0
        %2085 = vmatpush.msra.mxu0 %v2059
        %2086 = vmatmul.f32.gmra.mxu0 %v2056
        %v2087 = vpop.f32.mrf.mxu0
        %v2088 = vadd.f32 0.0, %v2087
        %2089 = vdwg.mxu0
        %2090 = vmatpush.msra.mxu0 0.0
        %2091 = vmatpush.msra.mxu0 0.0
        %2092 = vmatpush.msra.mxu0 0.0
        %2093 = vmatpush.msra.mxu0 0.0
        %2094 = vmatpush.msra.mxu0 0.0
        %2095 = vmatpush.msra.mxu0 0.0
        %2096 = vmatpush.msra.mxu0 0.0
        %2097 = vmatpush.msra.mxu0 0.0
        %2098 = vmatpush.msra.mxu0 0.0
        %2099 = vmatpush.msra.mxu0 0.0
        %2100 = vmatpush.msra.mxu0 0.0
        %2101 = vmatpush.msra.mxu0 0.0
        %2102 = vmatpush.msra.mxu0 0.0
        %2103 = vmatpush.msra.mxu0 0.0
        %2104 = vmatpush.msra.mxu0 0.0
        %2105 = vmatpush.msra.mxu0 %v2062
        %2106 = vmatmul.f32.gmra.mxu0 %v2056
        %v2107 = vpop.f32.mrf.mxu0
        %v2108 = vadd.f32 0.0, %v2107
        %2109 = vdwg.mxu0
        %2110 = vmatpush.msra.mxu0 0.0
        %2111 = vmatpush.msra.mxu0 0.0
        %2112 = vmatpush.msra.mxu0 0.0
        %2113 = vmatpush.msra.mxu0 0.0
        %2114 = vmatpush.msra.mxu0 0.0
        %2115 = vmatpush.msra.mxu0 0.0
        %2116 = vmatpush.msra.mxu0 0.0
        %2117 = vmatpush.msra.mxu0 0.0
        %2118 = vmatpush.msra.mxu0 0.0
        %2119 = vmatpush.msra.mxu0 0.0
        %2120 = vmatpush.msra.mxu0 0.0
        %2121 = vmatpush.msra.mxu0 0.0
        %2122 = vmatpush.msra.mxu0 0.0
        %2123 = vmatpush.msra.mxu0 0.0
        %2124 = vmatpush.msra.mxu0 0.0
        %2125 = vmatpush.msra.mxu0 %v2065
        %2126 = vmatmul.f32.gmra.mxu0 %v2056
        %v2127 = vpop.f32.mrf.mxu0
        %v2128 = vadd.f32 0.0, %v2127
        %2129 = vdwg.mxu0
        %2130 = vmatpush.msra.mxu0 0.0
        %2131 = vmatpush.msra.mxu0 0.0
        %2132 = vmatpush.msra.mxu0 0.0
        %2133 = vmatpush.msra.mxu0 0.0
        %2134 = vmatpush.msra.mxu0 0.0
        %2135 = vmatpush.msra.mxu0 0.0
        %2136 = vmatpush.msra.mxu0 0.0
        %2137 = vmatpush.msra.mxu0 0.0
        %2138 = vmatpush.msra.mxu0 0.0
        %2139 = vmatpush.msra.mxu0 0.0
        %2140 = vmatpush.msra.mxu0 0.0
        %2141 = vmatpush.msra.mxu0 0.0
        %2142 = vmatpush.msra.mxu0 0.0
        %2143 = vmatpush.msra.mxu0 0.0
        %2144 = vmatpush.msra.mxu0 0.0
        %2145 = vmatpush.msra.mxu0 %v2068
        %2146 = vmatmul.f32.gmra.mxu0 %v2056
        %v2147 = vpop.f32.mrf.mxu0
        %v2148 = vadd.f32 0.0, %v2147
        %2149 = vdwg.mxu0
        %v2151 = vsel %vm548, %v2017, 0
        %v2154 = vsel %vm552, %v2035, 0
        %v2157 = vsel %vm552, %v2036, 0
        %v2160 = vsel %vm552, %v2037, 0
        %v2163 = vsel %vm552, %v2038, 0
        %2165 = vmatpush.msra.mxu0 0.0
        %2166 = vmatpush.msra.mxu0 0.0
        %2167 = vmatpush.msra.mxu0 0.0
        %2168 = vmatpush.msra.mxu0 0.0
        %2169 = vmatpush.msra.mxu0 0.0
        %2170 = vmatpush.msra.mxu0 0.0
        %2171 = vmatpush.msra.mxu0 0.0
        %2172 = vmatpush.msra.mxu0 0.0
        %2173 = vmatpush.msra.mxu0 0.0
        %2174 = vmatpush.msra.mxu0 0.0
        %2175 = vmatpush.msra.mxu0 0.0
        %2176 = vmatpush.msra.mxu0 0.0
        %2177 = vmatpush.msra.mxu0 0.0
        %2178 = vmatpush.msra.mxu0 0.0
        %2179 = vmatpush.msra.mxu0 0.0
        %2180 = vmatpush.msra.mxu0 %v2154
        %2181 = vmatmul.f32.gmra.mxu0 %v2151
        %v2182 = vpop.f32.mrf.mxu0
        %v2183 = vadd.f32 %v2088, %v2182
        %2184 = vdwg.mxu0
        %2185 = vmatpush.msra.mxu0 0.0
        %2186 = vmatpush.msra.mxu0 0.0
        %2187 = vmatpush.msra.mxu0 0.0
        %2188 = vmatpush.msra.mxu0 0.0
        %2189 = vmatpush.msra.mxu0 0.0
        %2190 = vmatpush.msra.mxu0 0.0
        %2191 = vmatpush.msra.mxu0 0.0
        %2192 = vmatpush.msra.mxu0 0.0
        %2193 = vmatpush.msra.mxu0 0.0
        %2194 = vmatpush.msra.mxu0 0.0
        %2195 = vmatpush.msra.mxu0 0.0
        %2196 = vmatpush.msra.mxu0 0.0
        %2197 = vmatpush.msra.mxu0 0.0
        %2198 = vmatpush.msra.mxu0 0.0
        %2199 = vmatpush.msra.mxu0 0.0
        %2200 = vmatpush.msra.mxu0 %v2157
        %2201 = vmatmul.f32.gmra.mxu0 %v2151
        %v2202 = vpop.f32.mrf.mxu0
        %v2203 = vadd.f32 %v2108, %v2202
        %2204 = vdwg.mxu0
        %2205 = vmatpush.msra.mxu0 0.0
        %2206 = vmatpush.msra.mxu0 0.0
        %2207 = vmatpush.msra.mxu0 0.0
        %2208 = vmatpush.msra.mxu0 0.0
        %2209 = vmatpush.msra.mxu0 0.0
        %2210 = vmatpush.msra.mxu0 0.0
        %2211 = vmatpush.msra.mxu0 0.0
        %2212 = vmatpush.msra.mxu0 0.0
        %2213 = vmatpush.msra.mxu0 0.0
        %2214 = vmatpush.msra.mxu0 0.0
        %2215 = vmatpush.msra.mxu0 0.0
        %2216 = vmatpush.msra.mxu0 0.0
        %2217 = vmatpush.msra.mxu0 0.0
        %2218 = vmatpush.msra.mxu0 0.0
        %2219 = vmatpush.msra.mxu0 0.0
        %2220 = vmatpush.msra.mxu0 %v2160
        %2221 = vmatmul.f32.gmra.mxu0 %v2151
        %v2222 = vpop.f32.mrf.mxu0
        %v2223 = vadd.f32 %v2128, %v2222
        %2224 = vdwg.mxu0
        %2225 = vmatpush.msra.mxu0 0.0
        %2226 = vmatpush.msra.mxu0 0.0
        %2227 = vmatpush.msra.mxu0 0.0
        %2228 = vmatpush.msra.mxu0 0.0
        %2229 = vmatpush.msra.mxu0 0.0
        %2230 = vmatpush.msra.mxu0 0.0
        %2231 = vmatpush.msra.mxu0 0.0
        %2232 = vmatpush.msra.mxu0 0.0
        %2233 = vmatpush.msra.mxu0 0.0
        %2234 = vmatpush.msra.mxu0 0.0
        %2235 = vmatpush.msra.mxu0 0.0
        %2236 = vmatpush.msra.mxu0 0.0
        %2237 = vmatpush.msra.mxu0 0.0
        %2238 = vmatpush.msra.mxu0 0.0
        %2239 = vmatpush.msra.mxu0 0.0
        %2240 = vmatpush.msra.mxu0 %v2163
        %2241 = vmatmul.f32.gmra.mxu0 %v2151
        %v2242 = vpop.f32.mrf.mxu0
        %v2243 = vadd.f32 %v2148, %v2242
        %2244 = vdwg.mxu0
        %v2246 = vsel %vm548, %v2019, 0
        %v2249 = vsel %vm552, %v1955, 0
        %v2252 = vsel %vm552, %v1975, 0
        %v2255 = vsel %vm552, %v1995, 0
        %v2258 = vsel %vm552, %v2015, 0
        %2260 = vmatpush.msra.mxu0 0.0
        %2261 = vmatpush.msra.mxu0 0.0
        %2262 = vmatpush.msra.mxu0 0.0
        %2263 = vmatpush.msra.mxu0 0.0
        %2264 = vmatpush.msra.mxu0 0.0
        %2265 = vmatpush.msra.mxu0 0.0
        %2266 = vmatpush.msra.mxu0 0.0
        %2267 = vmatpush.msra.mxu0 0.0
        %2268 = vmatpush.msra.mxu0 0.0
        %2269 = vmatpush.msra.mxu0 0.0
        %2270 = vmatpush.msra.mxu0 0.0
        %2271 = vmatpush.msra.mxu0 0.0
        %2272 = vmatpush.msra.mxu0 0.0
        %2273 = vmatpush.msra.mxu0 0.0
        %2274 = vmatpush.msra.mxu0 0.0
        %2275 = vmatpush.msra.mxu0 %v2249
        %2276 = vmatmul.f32.gmra.mxu0 %v2246
        %v2277 = vpop.f32.mrf.mxu0
        %v2278 = vadd.f32 0.0, %v2277
        %2279 = vdwg.mxu0
        %2280 = vmatpush.msra.mxu0 0.0
        %2281 = vmatpush.msra.mxu0 0.0
        %2282 = vmatpush.msra.mxu0 0.0
        %2283 = vmatpush.msra.mxu0 0.0
        %2284 = vmatpush.msra.mxu0 0.0
        %2285 = vmatpush.msra.mxu0 0.0
        %2286 = vmatpush.msra.mxu0 0.0
        %2287 = vmatpush.msra.mxu0 0.0
        %2288 = vmatpush.msra.mxu0 0.0
        %2289 = vmatpush.msra.mxu0 0.0
        %2290 = vmatpush.msra.mxu0 0.0
        %2291 = vmatpush.msra.mxu0 0.0
        %2292 = vmatpush.msra.mxu0 0.0
        %2293 = vmatpush.msra.mxu0 0.0
        %2294 = vmatpush.msra.mxu0 0.0
        %2295 = vmatpush.msra.mxu0 %v2252
        %2296 = vmatmul.f32.gmra.mxu0 %v2246
        %v2297 = vpop.f32.mrf.mxu0
        %v2298 = vadd.f32 0.0, %v2297
        %2299 = vdwg.mxu0
        %2300 = vmatpush.msra.mxu0 0.0
        %2301 = vmatpush.msra.mxu0 0.0
        %2302 = vmatpush.msra.mxu0 0.0
        %2303 = vmatpush.msra.mxu0 0.0
        %2304 = vmatpush.msra.mxu0 0.0
        %2305 = vmatpush.msra.mxu0 0.0
        %2306 = vmatpush.msra.mxu0 0.0
        %2307 = vmatpush.msra.mxu0 0.0
        %2308 = vmatpush.msra.mxu0 0.0
        %2309 = vmatpush.msra.mxu0 0.0
        %2310 = vmatpush.msra.mxu0 0.0
        %2311 = vmatpush.msra.mxu0 0.0
        %2312 = vmatpush.msra.mxu0 0.0
        %2313 = vmatpush.msra.mxu0 0.0
        %2314 = vmatpush.msra.mxu0 0.0
        %2315 = vmatpush.msra.mxu0 %v2255
        %2316 = vmatmul.f32.gmra.mxu0 %v2246
        %v2317 = vpop.f32.mrf.mxu0
        %v2318 = vadd.f32 0.0, %v2317
        %2319 = vdwg.mxu0
        %2320 = vmatpush.msra.mxu0 0.0
        %2321 = vmatpush.msra.mxu0 0.0
        %2322 = vmatpush.msra.mxu0 0.0
        %2323 = vmatpush.msra.mxu0 0.0
        %2324 = vmatpush.msra.mxu0 0.0
        %2325 = vmatpush.msra.mxu0 0.0
        %2326 = vmatpush.msra.mxu0 0.0
        %2327 = vmatpush.msra.mxu0 0.0
        %2328 = vmatpush.msra.mxu0 0.0
        %2329 = vmatpush.msra.mxu0 0.0
        %2330 = vmatpush.msra.mxu0 0.0
        %2331 = vmatpush.msra.mxu0 0.0
        %2332 = vmatpush.msra.mxu0 0.0
        %2333 = vmatpush.msra.mxu0 0.0
        %2334 = vmatpush.msra.mxu0 0.0
        %2335 = vmatpush.msra.mxu0 %v2258
        %2336 = vmatmul.f32.gmra.mxu0 %v2246
        %v2337 = vpop.f32.mrf.mxu0
        %v2338 = vadd.f32 0.0, %v2337
        %2339 = vdwg.mxu0
        %v2340 = vadd.f32 %v2183, %v2278
        %v2341 = vadd.f32 %v2203, %v2298
        %v2342 = vadd.f32 %v2223, %v2318
        %v2343 = vadd.f32 %v2243, %v2338
        %2344 = vrot.lane.b32.xlu0 %v1955, 127
        %v2345 = vpop.permute.xlu0 %2344
        %2346 = vrot.lane.b32.xlu0 %v1975, 127
        %v2347 = vpop.permute.xlu0 %2346
        %2348 = vrot.lane.b32.xlu0 %v1995, 127
        %v2349 = vpop.permute.xlu0 %2348
        %2350 = vrot.lane.b32.xlu0 %v2015, 127
        %v2351 = vpop.permute.xlu0 %2350
        %v2352 = vsel %vm861, %v2349, %v2351
        %v2353 = vsel %vm861, %v2347, %v2349
        %v2354 = vsel %vm861, %v2345, %v2347
        %v2355 = vsel %vm861, %v2351, %v2345
        %v2356 = vsel %vm882, %v2354, 0.0
        %v2357 = vsel %vm883, %v2353, 0.0
        %v2358 = vsel %vm884, %v2352, 0.0
        %v2359 = vsel %vm885, %v2355, 0.0
        %v2361 = vsel %vm548, %v2020, 0
        %v2364 = vsel %vm552, %v2356, 0
        %v2367 = vsel %vm552, %v2357, 0
        %v2370 = vsel %vm552, %v2358, 0
        %v2373 = vsel %vm552, %v2359, 0
        %2375 = vmatpush.msra.mxu0 0.0
        %2376 = vmatpush.msra.mxu0 0.0
        %2377 = vmatpush.msra.mxu0 0.0
        %2378 = vmatpush.msra.mxu0 0.0
        %2379 = vmatpush.msra.mxu0 0.0
        %2380 = vmatpush.msra.mxu0 0.0
        %2381 = vmatpush.msra.mxu0 0.0
        %2382 = vmatpush.msra.mxu0 0.0
        %2383 = vmatpush.msra.mxu0 0.0
        %2384 = vmatpush.msra.mxu0 0.0
        %2385 = vmatpush.msra.mxu0 0.0
        %2386 = vmatpush.msra.mxu0 0.0
        %2387 = vmatpush.msra.mxu0 0.0
        %2388 = vmatpush.msra.mxu0 0.0
        %2389 = vmatpush.msra.mxu0 0.0
        %2390 = vmatpush.msra.mxu0 %v2364
        %2391 = vmatmul.f32.gmra.mxu0 %v2361
        %v2392 = vpop.f32.mrf.mxu0
        %v2393 = vadd.f32 0.0, %v2392
        %2394 = vdwg.mxu0
        %2395 = vmatpush.msra.mxu0 0.0
        %2396 = vmatpush.msra.mxu0 0.0
        %2397 = vmatpush.msra.mxu0 0.0
        %2398 = vmatpush.msra.mxu0 0.0
        %2399 = vmatpush.msra.mxu0 0.0
        %2400 = vmatpush.msra.mxu0 0.0
        %2401 = vmatpush.msra.mxu0 0.0
        %2402 = vmatpush.msra.mxu0 0.0
        %2403 = vmatpush.msra.mxu0 0.0
        %2404 = vmatpush.msra.mxu0 0.0
        %2405 = vmatpush.msra.mxu0 0.0
        %2406 = vmatpush.msra.mxu0 0.0
        %2407 = vmatpush.msra.mxu0 0.0
        %2408 = vmatpush.msra.mxu0 0.0
        %2409 = vmatpush.msra.mxu0 0.0
        %2410 = vmatpush.msra.mxu0 %v2367
        %2411 = vmatmul.f32.gmra.mxu0 %v2361
        %v2412 = vpop.f32.mrf.mxu0
        %v2413 = vadd.f32 0.0, %v2412
        %2414 = vdwg.mxu0
        %2415 = vmatpush.msra.mxu0 0.0
        %2416 = vmatpush.msra.mxu0 0.0
        %2417 = vmatpush.msra.mxu0 0.0
        %2418 = vmatpush.msra.mxu0 0.0
        %2419 = vmatpush.msra.mxu0 0.0
        %2420 = vmatpush.msra.mxu0 0.0
        %2421 = vmatpush.msra.mxu0 0.0
        %2422 = vmatpush.msra.mxu0 0.0
        %2423 = vmatpush.msra.mxu0 0.0
        %2424 = vmatpush.msra.mxu0 0.0
        %2425 = vmatpush.msra.mxu0 0.0
        %2426 = vmatpush.msra.mxu0 0.0
        %2427 = vmatpush.msra.mxu0 0.0
        %2428 = vmatpush.msra.mxu0 0.0
        %2429 = vmatpush.msra.mxu0 0.0
        %2430 = vmatpush.msra.mxu0 %v2370
        %2431 = vmatmul.f32.gmra.mxu0 %v2361
        %v2432 = vpop.f32.mrf.mxu0
        %v2433 = vadd.f32 0.0, %v2432
        %2434 = vdwg.mxu0
        %2435 = vmatpush.msra.mxu0 0.0
        %2436 = vmatpush.msra.mxu0 0.0
        %2437 = vmatpush.msra.mxu0 0.0
        %2438 = vmatpush.msra.mxu0 0.0
        %2439 = vmatpush.msra.mxu0 0.0
        %2440 = vmatpush.msra.mxu0 0.0
        %2441 = vmatpush.msra.mxu0 0.0
        %2442 = vmatpush.msra.mxu0 0.0
        %2443 = vmatpush.msra.mxu0 0.0
        %2444 = vmatpush.msra.mxu0 0.0
        %2445 = vmatpush.msra.mxu0 0.0
        %2446 = vmatpush.msra.mxu0 0.0
        %2447 = vmatpush.msra.mxu0 0.0
        %2448 = vmatpush.msra.mxu0 0.0
        %2449 = vmatpush.msra.mxu0 0.0
        %2450 = vmatpush.msra.mxu0 %v2373
        %2451 = vmatmul.f32.gmra.mxu0 %v2361
        %v2452 = vpop.f32.mrf.mxu0
        %v2453 = vadd.f32 0.0, %v2452
        %2454 = vdwg.mxu0
        %v2455 = vadd.f32 %v2340, %v2393
        %v2456 = vadd.f32 %v2341, %v2413
        %v2457 = vadd.f32 %v2342, %v2433
        %v2458 = vadd.f32 %v2343, %v2453
        %2459 = vrot.lane.b32.xlu0 %v1955, 126
        %v2460 = vpop.permute.xlu0 %2459
        %2461 = vrot.lane.b32.xlu0 %v1975, 126
        %v2462 = vpop.permute.xlu0 %2461
        %2463 = vrot.lane.b32.xlu0 %v1995, 126
        %v2464 = vpop.permute.xlu0 %2463
        %2465 = vrot.lane.b32.xlu0 %v2015, 126
        %v2466 = vpop.permute.xlu0 %2465
        %v2467 = vsel %vm1008, %v2464, %v2466
        %v2468 = vsel %vm1008, %v2462, %v2464
        %v2469 = vsel %vm1008, %v2460, %v2462
        %v2470 = vsel %vm1008, %v2466, %v2460
        %v2471 = vsel %vm1029, %v2469, 0.0
        %v2472 = vsel %vm1030, %v2468, 0.0
        %v2473 = vsel %vm1031, %v2467, 0.0
        %v2474 = vsel %vm1032, %v2470, 0.0
        %v2476 = vsel %vm548, %v2021, 0
        %v2479 = vsel %vm552, %v2471, 0
        %v2482 = vsel %vm552, %v2472, 0
        %v2485 = vsel %vm552, %v2473, 0
        %v2488 = vsel %vm552, %v2474, 0
        %2490 = vmatpush.msra.mxu0 0.0
        %2491 = vmatpush.msra.mxu0 0.0
        %2492 = vmatpush.msra.mxu0 0.0
        %2493 = vmatpush.msra.mxu0 0.0
        %2494 = vmatpush.msra.mxu0 0.0
        %2495 = vmatpush.msra.mxu0 0.0
        %2496 = vmatpush.msra.mxu0 0.0
        %2497 = vmatpush.msra.mxu0 0.0
        %2498 = vmatpush.msra.mxu0 0.0
        %2499 = vmatpush.msra.mxu0 0.0
        %2500 = vmatpush.msra.mxu0 0.0
        %2501 = vmatpush.msra.mxu0 0.0
        %2502 = vmatpush.msra.mxu0 0.0
        %2503 = vmatpush.msra.mxu0 0.0
        %2504 = vmatpush.msra.mxu0 0.0
        %2505 = vmatpush.msra.mxu0 %v2479
        %2506 = vmatmul.f32.gmra.mxu0 %v2476
        %v2507 = vpop.f32.mrf.mxu0
        %v2508 = vadd.f32 0.0, %v2507
        %2509 = vdwg.mxu0
        %2510 = vmatpush.msra.mxu0 0.0
        %2511 = vmatpush.msra.mxu0 0.0
        %2512 = vmatpush.msra.mxu0 0.0
        %2513 = vmatpush.msra.mxu0 0.0
        %2514 = vmatpush.msra.mxu0 0.0
        %2515 = vmatpush.msra.mxu0 0.0
        %2516 = vmatpush.msra.mxu0 0.0
        %2517 = vmatpush.msra.mxu0 0.0
        %2518 = vmatpush.msra.mxu0 0.0
        %2519 = vmatpush.msra.mxu0 0.0
        %2520 = vmatpush.msra.mxu0 0.0
        %2521 = vmatpush.msra.mxu0 0.0
        %2522 = vmatpush.msra.mxu0 0.0
        %2523 = vmatpush.msra.mxu0 0.0
        %2524 = vmatpush.msra.mxu0 0.0
        %2525 = vmatpush.msra.mxu0 %v2482
        %2526 = vmatmul.f32.gmra.mxu0 %v2476
        %v2527 = vpop.f32.mrf.mxu0
        %v2528 = vadd.f32 0.0, %v2527
        %2529 = vdwg.mxu0
        %2530 = vmatpush.msra.mxu0 0.0
        %2531 = vmatpush.msra.mxu0 0.0
        %2532 = vmatpush.msra.mxu0 0.0
        %2533 = vmatpush.msra.mxu0 0.0
        %2534 = vmatpush.msra.mxu0 0.0
        %2535 = vmatpush.msra.mxu0 0.0
        %2536 = vmatpush.msra.mxu0 0.0
        %2537 = vmatpush.msra.mxu0 0.0
        %2538 = vmatpush.msra.mxu0 0.0
        %2539 = vmatpush.msra.mxu0 0.0
        %2540 = vmatpush.msra.mxu0 0.0
        %2541 = vmatpush.msra.mxu0 0.0
        %2542 = vmatpush.msra.mxu0 0.0
        %2543 = vmatpush.msra.mxu0 0.0
        %2544 = vmatpush.msra.mxu0 0.0
        %2545 = vmatpush.msra.mxu0 %v2485
        %2546 = vmatmul.f32.gmra.mxu0 %v2476
        %v2547 = vpop.f32.mrf.mxu0
        %v2548 = vadd.f32 0.0, %v2547
        %2549 = vdwg.mxu0
        %2550 = vmatpush.msra.mxu0 0.0
        %2551 = vmatpush.msra.mxu0 0.0
        %2552 = vmatpush.msra.mxu0 0.0
        %2553 = vmatpush.msra.mxu0 0.0
        %2554 = vmatpush.msra.mxu0 0.0
        %2555 = vmatpush.msra.mxu0 0.0
        %2556 = vmatpush.msra.mxu0 0.0
        %2557 = vmatpush.msra.mxu0 0.0
        %2558 = vmatpush.msra.mxu0 0.0
        %2559 = vmatpush.msra.mxu0 0.0
        %2560 = vmatpush.msra.mxu0 0.0
        %2561 = vmatpush.msra.mxu0 0.0
        %2562 = vmatpush.msra.mxu0 0.0
        %2563 = vmatpush.msra.mxu0 0.0
        %2564 = vmatpush.msra.mxu0 0.0
        %2565 = vmatpush.msra.mxu0 %v2488
        %2566 = vmatmul.f32.gmra.mxu0 %v2476
        %v2567 = vpop.f32.mrf.mxu0
        %v2568 = vadd.f32 0.0, %v2567
        %2569 = vdwg.mxu0
        %v2570 = vadd.f32 %v2455, %v2508
        %v2571 = vadd.f32 %v2456, %v2528
        %v2572 = vadd.f32 %v2457, %v2548
        %v2573 = vadd.f32 %v2458, %v2568
        %2575 = vset.pattern.permute.xlu0 0
        %2576 = vperm.xlu0 %2575, %v2022
        %v2577 = vpop.permute.xlu0 %2576
        %v2579 = vperm.slane %v2577, 0
        %v2580 = vadd.f32 %v2570, %v2579
        %v2581 = vadd.f32 %v2571, %v2579
        %v2582 = vadd.f32 %v2572, %v2579
        %v2583 = vadd.f32 %v2573, %v2579
        %v2588 = vrot.slane %v2581, 7
        %v2589 = vrot.slane %v2582, 6
        %v2590 = vrot.slane %v2583, 5
        %vm2591 = vcmask 1040384
        %v2592 = vsel %vm2591, %v2580, %v2588
        %vm2593 = vcmask 1042434
        %v2594 = vsel %vm2593, %v2589, %v2590
        %vm2595 = vcmask 1041408
        %v2596 = vsel %vm2595, %v2592, %v2594
        %v2598 = vlaneseq
        %vm2599 = vcmp.ge.s32.totalorder %v2598, 0
        %vm2600 = vcmp.lt.s32.totalorder %v2598, 512
        %vm2601 = vmand %vm2599, %vm2600
        %2602 = vst.msk [vmem:[%s421] sm:$0xf] %vm2601, %v2596
        %s2603 = sand.u32 %s298, 1
        %s2604 = scalar_lea.sflag [#allocation4], %s2603
        %s2605 = sand.u32 %s298, 1
        %s2606 = smul.addr %s2605, 4
        %s2607 = scalar_lea.vmem [#allocation3], %s2606
        // Predicated region
        $region69: #{multiscale_resnet_forward.5} parent=67 // pred_check
          %p2608 = pneg %p308
        $region70: #{multiscale_resnet_forward.5} parent=67 // pred_check_branch
          %2610 = sbr.rel (%p2608) target = $region72
        $region71: #{multiscale_resnet_forward.5} parent=67 // pred_region
          %2612 = vsyncadd %s2604, 0
          %s2613 = smul.addr %s28, 4
          %s2614 = scalar_lea.hbm %s12, %s2613
          %s2616 = sshll.u32 %s2607, 4
          %s2617 = int_to_ptr.vmem [resolvable:$true] %s2616
          %s2618 = sshll.u32 %s2614, 4
          %s2619 = int_to_ptr.hbm [resolvable:$true] %s2618
          %2621 = dma.vmem_to_hbm [thread:$0]  %s2617, 64, %s2619, %s2604
        $region72: #{multiscale_resnet_forward.5} parent=67 // pred_fallthru
          _
      $region68: #{multiscale_resnet_forward.5} parent=5 // pred_fallthru
        _
      %p2622 = scmp.le.s32.totalorder 2, %s23
      // Predicated region
      $region73: #{multiscale_resnet_forward.5} parent=5 // pred_check
        %p2623 = pneg %p2622
      $region74: #{multiscale_resnet_forward.5} parent=5 // pred_check_branch
        %2625 = sbr.rel (%p2623) target = $region76
      $region75: #{multiscale_resnet_forward.5} parent=5 // pred_region
        %s2626 = ssub.s32 %s23, 2
        // Predicated region
        $region77: #{multiscale_resnet_forward.5} parent=75 // pred_check
          %p2627 = pneg %p314
        $region78: #{multiscale_resnet_forward.5} parent=75 // pred_check_branch
          %2629 = sbr.rel (%p2627) target = $region80
        $region79: #{multiscale_resnet_forward.5} parent=75 // pred_region
          %s2630 = sand.u32 %s299, 1
          %s2631 = scalar_lea.sflag [#allocation4], %s2630
          %s2632 = sand.u32 %s299, 1
          %s2633 = smul.addr %s2632, 4
          %s2634 = scalar_lea.vmem [#allocation3], %s2633
          %2636 = dma.done %s2631, 64
        $region80: #{multiscale_resnet_forward.5} parent=75 // pred_fallthru
          _
      $region76: #{multiscale_resnet_forward.5} parent=5 // pred_fallthru
        _
    $region6: #{multiscale_resnet_forward.5} parent=1 // loop_footer
      %s27 = sadd.s32 1, %s23
    $region7: #{multiscale_resnet_forward.5} parent=1 // loop_footer_branch
      %22 = sbr.rel target = $region3
    $region8: #{multiscale_resnet_forward.5} parent=1 // loop_exit
      _
    %2637 = vsyncpa [#allocation4], 1
    %s2638 = scalar_lea.sflag [#allocation4], 1
    %2639 = vsyncpa %s2638, 1

</llo_original>
